<compile_context>
chip_gen: v7x
topology: tpu7x:2x2x1
jax: 0.10.0
libtpu: 0.0.40
codegen_flags: <defaults>
</compile_context>

<pallas_src>
import functools

import jax
import jax.numpy as jnp
import numpy as np
from jax import lax
from jax.experimental import pallas as pl
from jax.experimental.pallas import tpu as pltpu


# ----------------------------------------------------------------------------
# Fused kernel: ConvTranspose2d(2x2,s=2) + num_layers x [Conv3x3 + BN + ReLU]
# Activation layout inside the kernel: rows = stacked (image, height), lanes = W*C.
# ----------------------------------------------------------------------------
def _make_fused_kernel(num_layers, B, H, W, in_channels):
    H2, W2 = 2 * H, 2 * W
    P = H2 + 2              # per-image slab height in scratch (1 zero pad row top/bottom)
    Mt = B * P              # total scratch rows
    L_in = W2 * in_channels

    def kernel(x_ref, mcat_ref, rs0_ref, rs1_ref, bt_ref, *rest):
        layer_refs = rest[: 3 * num_layers]          # (G, scale, shift) per layer
        o_ref = rest[3 * num_layers]                 # (B*H2, W2*Cout) output tile
        buf = rest[3 * num_layers + 1]               # (B*(H2+2), W2*Cin) bf16 scratch

        lanes = buf.shape[1]
        zrow = jnp.zeros((1, lanes), buf.dtype)
        # Zero the per-image pad rows EVERY grid step (each core owns its own
        # scratch under "parallel" megacore sharding; do NOT gate on program_id).
        for b in range(B):
            buf[b * P: b * P + 1, :] = zrow
            buf[b * P + H2 + 1: b * P + H2 + 2, :] = zrow

        # --- ConvTranspose2d(k=2, s=2) ------------------------------------
        # One column-scatter matmul (M0|M1 merged), then two row-scatter/
        # interleave matmuls whose K = B*H (batch-slab placement folded in).
        x = x_ref[...]                                            # (B*H, W*Cin) bf16
        t = jnp.dot(x, mcat_ref[...],
                    preferred_element_type=jnp.float32)           # (B*H, 2*W2*Cin)
        t0 = t[:, :L_in].astype(jnp.bfloat16)                     # di = 0 rows
        t1 = t[:, L_in:].astype(jnp.bfloat16)                     # di = 1 rows
        up = (jnp.dot(rs0_ref[...], t0, preferred_element_type=jnp.float32)
              + jnp.dot(rs1_ref[...], t1, preferred_element_type=jnp.float32)
              + bt_ref[...])                                      # (B*H2, W2*Cin) f32
        for b in range(B):
            buf[b * P + 1: b * P + 1 + H2, :] = (
                up[b * H2:(b + 1) * H2, :].astype(buf.dtype))

        # --- Conv3x3(pad=1) + BN(eval) + ReLU layers; intermediates stay in buf.
        cur = L_in
        for l in range(num_layers):
            g_ref = layer_refs[3 * l]                # (3, W2*Ci, W2*Co) banded bf16
            s_ref = layer_refs[3 * l + 1]            # (1, W2*Co) f32 BN scale
            sh_ref = layer_refs[3 * l + 2]           # (1, W2*Co) f32 BN shift (+bias)
            n_out = g_ref.shape[-1]

            # 3 big matmuls over the whole batch-stacked slab (M ~ B*H2).  The
            # 2*(B-1) rows straddling image boundaries are garbage and simply
            # never stored back.
            acc = jnp.dot(buf[0:Mt - 2, 0:cur], g_ref[0],
                          preferred_element_type=jnp.float32)
            acc = acc + jnp.dot(buf[1:Mt - 1, 0:cur], g_ref[1],
                                preferred_element_type=jnp.float32)
            acc = acc + jnp.dot(buf[2:Mt, 0:cur], g_ref[2],
                                preferred_element_type=jnp.float32)
            y = jnp.maximum(acc * s_ref[...] + sh_ref[...], 0.0)  # f32 epilogue
            # Dropout(0.1): identity in inference mode.

            if l == num_layers - 1:
                for b in range(B):
                    o_ref[b * H2:(b + 1) * H2, :] = (
                        y[b * P: b * P + H2, :].astype(o_ref.dtype))
            else:
                for b in range(B):
                    buf[b * P + 1: b * P + 1 + H2, 0:n_out] = (
                        y[b * P: b * P + H2, :].astype(buf.dtype))
                cur = n_out

    return kernel


def decoder_block_forward(x_nchw, packed, *, out_channels, batch_tile=4,
                          use_buffered_weights=True):
    """NCHW in / NCHW out, matching the PyTorch module's convention."""
    N, Cin, H, W = x_nchw.shape
    H2, W2 = 2 * H, 2 * W
    num_layers = len(packed["layers"])
    B = batch_tile
    N_pad = ((N + B - 1) // B) * B

    # NCHW -> lane-dense (N*H, W*C) layout (boundary glue only; keep this layout
    # between consecutive decoder blocks in a full model).
    x = jnp.transpose(x_nchw, (0, 2, 3, 1)).reshape(N, H, W * Cin)
    if N_pad != N:
        x = jnp.concatenate(
            [x, jnp.zeros((N_pad - N, H, W * Cin), x.dtype)], axis=0)
    x = x.reshape(N_pad * H, W * Cin).astype(jnp.bfloat16)

    kernel = _make_fused_kernel(num_layers, B, H, W, Cin)

    weight_args = [packed["Mcat"], packed["RS0"], packed["RS1"], packed["bt"]]
    for (G, st, sht) in packed["layers"]:
        weight_args += [G, st, sht]

    def weight_spec(a):
        idx = lambda i, _nd=a.ndim: (0,) * _nd
        if use_buffered_weights:
            # Constant blocks: single-buffer to halve their VMEM footprint.
            return pl.BlockSpec(a.shape, idx, pipeline_mode=pl.Buffered(1))
        return pl.BlockSpec(a.shape, idx)

    in_specs = [pl.BlockSpec((B * H, W * Cin), lambda i: (i, 0))]
    in_specs += [weight_spec(a) for a in weight_args]
    out_spec = pl.BlockSpec((B * H2, W2 * out_channels), lambda i: (i, 0))

    # VMEM budget from actual sizes (review item): weights * buffer_count +
    # double-buffered in/out tiles + scratch, with headroom.
    w_bytes = sum(int(np.prod(a.shape)) * a.dtype.itemsize for a in weight_args)
    in_tile = B * H * W * Cin * 2
    out_tile = B * H2 * W2 * out_channels * 4
    scratch_bytes = B * (H2 + 2) * W2 * Cin * 2
    wbuf = 1 if use_buffered_weights else 2
    vmem_limit = min(
        int(1.5 * (2 * in_tile + 2 * out_tile + wbuf * w_bytes + scratch_bytes))
        + (2 << 20),
        64 << 20)

    out = pl.pallas_call(
        kernel,
        out_shape=jax.ShapeDtypeStruct((N_pad * H2, W2 * out_channels),
                                       jnp.float32),
        grid=(N_pad // B,),
        in_specs=in_specs,
        out_specs=out_spec,
        scratch_shapes=[pltpu.VMEM((B * (H2 + 2), W2 * Cin), jnp.bfloat16)],
        compiler_params=pltpu.CompilerParams(
            dimension_semantics=("parallel",),
            vmem_limit_bytes=vmem_limit,
        ),
    )(x, *weight_args)

    # (N_pad*H2, W2*Cout) -> NCHW (contiguous reshape + transpose glue).
    out = out.reshape(N_pad, H2, W2, out_channels)[:N]
    return jnp.transpose(out, (0, 3, 1, 2))


# ----------------------------------------------------------------------------
# Parameter construction (deterministic, synthetic) and host-side repacking of
# the weights into the lane-dense bf16 matmul form used by the fused kernel.
# ----------------------------------------------------------------------------
def _nrm(key, shape, scale=0.1):
    return jax.random.normal(key, shape, jnp.float32) * scale


def init_decoder_params(key, in_channels, out_channels, num_conv_layers):
    mid = in_channels // 2
    keys = iter(jax.random.split(key, 8 * (num_conv_layers + 1)))
    eps = 1e-5

    params = {
        "convt_w": _nrm(next(keys), (2, 2, in_channels, in_channels)),
        "convt_b": _nrm(next(keys), (1, in_channels)),
        "convs": [],
    }
    chans = ([(in_channels, mid)]
             + [(mid, mid)] * (num_conv_layers - 2)
             + [(mid, out_channels)])
    for ci, co in chans:
        w = _nrm(next(keys), (3, 3, ci, co))
        b = _nrm(next(keys), (co,))
        gamma = 1.0 + _nrm(next(keys), (co,))
        beta = _nrm(next(keys), (co,))
        r_mean = _nrm(next(keys), (co,))
        r_var = 1.0 + jnp.abs(_nrm(next(keys), (co,)))
        s = gamma / jnp.sqrt(r_var + eps)               # BN scale
        shift = (b - r_mean) * s + beta                 # conv bias + BN shift, folded
        params["convs"].append((w, s.reshape(1, co), shift.reshape(1, co)))
    return params


def pack_params(params, H, W, in_channels, batch_tile):
    """Host-side (one-time) repack into bf16 lane-dense matmul weights."""
    H2, W2 = 2 * H, 2 * W
    Cin = in_channels
    B = batch_tile
    wdt = jnp.bfloat16

    # --- ConvTranspose2d(k=2, s=2) ---
    wt = params["convt_w"]                              # (2, 2, Cin, Cin)
    bias = params["convt_b"].reshape(-1)                # (Cin,)

    # Column scatter j -> 2j+dj fused with the channel mix; M0|M1 concatenated.
    S = np.zeros((2, W, W2), np.float32)
    for dj in range(2):
        for j in range(W):
            S[dj, j, 2 * j + dj] = 1.0
    S = jnp.asarray(S)
    M = []
    for di in range(2):
        m = sum(jnp.einsum("jw,io->jiwo", S[dj], wt[di, dj]) for dj in range(2))
        M.append(m.reshape(W * Cin, W2 * Cin))
    Mcat = jnp.concatenate(M, axis=1).astype(wdt)       # (W*Cin, 2*W2*Cin)

    # Row scatter h -> 2h+di, interleave + batch-slab placement folded in.
    RS = np.zeros((2, B * H2, B * H), np.float32)
    for b in range(B):
        for h in range(H):
            RS[0, b * H2 + 2 * h, b * H + h] = 1.0
            RS[1, b * H2 + 2 * h + 1, b * H + h] = 1.0
    RS0 = jnp.asarray(RS[0]).astype(wdt)
    RS1 = jnp.asarray(RS[1]).astype(wdt)

    bt = jnp.tile(bias, W2).reshape(1, W2 * Cin).astype(jnp.float32)

    # --- Conv3x3 layers: fold the 3 dw taps + horizontal pad into banded G_dh ---
    Tm = np.zeros((3, W2, W2), np.float32)              # Tm[dw, w_in, w_out]
    for dw in range(3):
        for wo in range(W2):
            wi = wo + dw - 1
            if 0 <= wi < W2:
                Tm[dw, wi, wo] = 1.0
    Tm = jnp.asarray(Tm)

    layers = []
    for (k, s, sh) in params["convs"]:
        ci, co = k.shape[2], k.shape[3]
        G = []
        for dh in range(3):
            g = sum(jnp.einsum("ab,io->aibo", Tm[dw], k[dh, dw]) for dw in range(3))
            G.append(g.reshape(W2 * ci, W2 * co))
        G = jnp.stack(G, axis=0).astype(wdt)            # (3, W2*ci, W2*co) bf16
        st = jnp.tile(s.reshape(-1), W2).reshape(1, W2 * co).astype(jnp.float32)
        sht = jnp.tile(sh.reshape(-1), W2).reshape(1, W2 * co).astype(jnp.float32)
        layers.append((G, st, sht))

    # VMEM-budget guard: the banded-weight trick multiplies weight bytes ~W2^2/9.
    g_bytes = sum(int(np.prod(G.shape)) * 2 for (G, _, _) in layers)
    if g_bytes > 24 << 20:
        # TODO(synk): lane-tile the G matmuls with an extra grid axis (or fall
        # back to nine per-tap (rows,Ci)@(Ci,Co) matmuls) when banded weights
        # outgrow VMEM at production SegNet widths.
        raise NotImplementedError("banded conv weights exceed the VMEM budget")

    return {"Mcat": Mcat, "RS0": RS0, "RS1": RS1, "bt": bt, "layers": layers}


# ----------------------------------------------------------------------------
# Pure-JAX reference (f32) for a correctness check of the Pallas path.
# ----------------------------------------------------------------------------
def decoder_block_reference(x_nchw, params):
    x = jnp.transpose(x_nchw, (0, 2, 3, 1))
    N, H, W, Cin = x.shape
    w, b = params["convt_w"], params["convt_b"]
    Cout = w.shape[-1]
    # ConvTranspose k=2, s=2: per-pixel 2x2 expansion.
    t = jnp.einsum("nhwi,pqio->nhpwqo", x, w) + b[0]
    x = t.reshape(N, 2 * H, 2 * W, Cout)
    for w3, scale, shift in params["convs"]:
        y = lax.conv_general_dilated(
            x, w3, window_strides=(1, 1), padding="SAME",
            dimension_numbers=("NHWC", "HWIO", "NHWC"))
        x = jnp.maximum(y * scale[0] + shift[0], 0.0)
    return jnp.transpose(x, (0, 3, 1, 2))


if __name__ == "__main__":
    # _DecoderBlock(in_channels=8, out_channels=4, num_conv_layers=3)
    in_channels, out_channels, num_conv_layers = 8, 4, 3
    N, H, W = 16, 16, 16
    # B_tile=4 -> conv matmul M ~= 128 rows (saturates v5e MXU; use 8 for 256 on
    # v6e/v7x), grid of 4 steps -> 2 steps per TensorCore on v7x.
    B_tile = 4

    key = jax.random.PRNGKey(0)
    k_x, k_p = jax.random.split(key)
    x = jax.random.normal(k_x, (N, in_channels, H, W), jnp.float32)  # NCHW
    params = init_decoder_params(k_p, in_channels, out_channels, num_conv_layers)
    packed = pack_params(params, H, W, in_channels, B_tile)

    def build(use_buffered):
        return jax.jit(functools.partial(
            decoder_block_forward, packed=packed, out_channels=out_channels,
            batch_tile=B_tile, use_buffered_weights=use_buffered))

    try:
        out = jax.block_until_ready(build(True)(x))
    except Exception:
        # Fallback if this runtime rejects single-buffered (Buffered(1)) specs.
        out = jax.block_until_ready(build(False)(x))

    assert out.shape == (N, out_channels, 2 * H, 2 * W), out.shape

    ref = jax.block_until_ready(decoder_block_reference(x, params))
    # bf16 matmul operands -> looser tolerance than the all-f32 version.
    np.testing.assert_allclose(np.asarray(out), np.asarray(ref),
                               rtol=4e-2, atol=4e-2)

    print("KERNEL_OK")
</pallas_src>

<mosaic_0001>
module attributes {stable_mosaic.version = 11 : i64} {
  func.func @kernel(%arg0: i32, %arg1: memref<64x128xbf16, #tpu.memory_space<vmem>>, %arg2: memref<128x512xbf16, #tpu.memory_space<vmem>>, %arg3: memref<128x64xbf16, #tpu.memory_space<vmem>>, %arg4: memref<128x64xbf16, #tpu.memory_space<vmem>>, %arg5: memref<1x256xf32, #tpu.memory_space<vmem>>, %arg6: memref<3x256x128xbf16, #tpu.memory_space<vmem>>, %arg7: memref<1x128xf32, #tpu.memory_space<vmem>>, %arg8: memref<1x128xf32, #tpu.memory_space<vmem>>, %arg9: memref<3x128x128xbf16, #tpu.memory_space<vmem>>, %arg10: memref<1x128xf32, #tpu.memory_space<vmem>>, %arg11: memref<1x128xf32, #tpu.memory_space<vmem>>, %arg12: memref<3x128x128xbf16, #tpu.memory_space<vmem>>, %arg13: memref<1x128xf32, #tpu.memory_space<vmem>>, %arg14: memref<1x128xf32, #tpu.memory_space<vmem>>, %arg15: memref<128x128xf32, #tpu.memory_space<vmem>>, %arg16: memref<136x256xbf16, #tpu.memory_space<vmem>>) attributes {dimension_semantics = [#tpu.dimension_semantics<parallel>], iteration_bounds = array<i64: 4>, scalar_prefetch = 0 : i64, scratch_operands = 1 : i64, tpu.core_type = #tpu.core_type<tc>, window_params = [{transform_indices = @transform_0, window_bounds = array<i64: 64, 128>}, {pipeline_mode = #tpu.pipeline_mode<synchronous>, transform_indices = @transform_1, window_bounds = array<i64: 128, 512>}, {pipeline_mode = #tpu.pipeline_mode<synchronous>, transform_indices = @transform_2, window_bounds = array<i64: 128, 64>}, {pipeline_mode = #tpu.pipeline_mode<synchronous>, transform_indices = @transform_3, window_bounds = array<i64: 128, 64>}, {pipeline_mode = #tpu.pipeline_mode<synchronous>, transform_indices = @transform_4, window_bounds = array<i64: 1, 256>}, {pipeline_mode = #tpu.pipeline_mode<synchronous>, transform_indices = @transform_5, window_bounds = array<i64: 3, 256, 128>}, {pipeline_mode = #tpu.pipeline_mode<synchronous>, transform_indices = @transform_6, window_bounds = array<i64: 1, 128>}, {pipeline_mode = #tpu.pipeline_mode<synchronous>, transform_indices = @transform_7, window_bounds = array<i64: 1, 128>}, {pipeline_mode = #tpu.pipeline_mode<synchronous>, transform_indices = @transform_8, window_bounds = array<i64: 3, 128, 128>}, {pipeline_mode = #tpu.pipeline_mode<synchronous>, transform_indices = @transform_9, window_bounds = array<i64: 1, 128>}, {pipeline_mode = #tpu.pipeline_mode<synchronous>, transform_indices = @transform_10, window_bounds = array<i64: 1, 128>}, {pipeline_mode = #tpu.pipeline_mode<synchronous>, transform_indices = @transform_11, window_bounds = array<i64: 3, 128, 128>}, {pipeline_mode = #tpu.pipeline_mode<synchronous>, transform_indices = @transform_12, window_bounds = array<i64: 1, 128>}, {pipeline_mode = #tpu.pipeline_mode<synchronous>, transform_indices = @transform_13, window_bounds = array<i64: 1, 128>}, {transform_indices = @transform_14, window_bounds = array<i64: 128, 128>}]} {
    %cst = arith.constant 0.000000e+00 : bf16
    %0 = vector.broadcast %cst : bf16 to vector<1x256xbf16>
    %c0 = arith.constant 0 : index
    %c0_0 = arith.constant 0 : index
    %1 = vector.load %arg16[%c0, %c0_0] : memref<136x256xbf16, #tpu.memory_space<vmem>>, vector<1x256xbf16>
    tpu.vector_store %arg16[%c0, %c0_0], %0 {strides = array<i32>} : memref<136x256xbf16, #tpu.memory_space<vmem>>, vector<1x256xbf16>,
    %c33 = arith.constant 33 : index
    %c0_1 = arith.constant 0 : index
    %2 = vector.load %arg16[%c33, %c0_1] : memref<136x256xbf16, #tpu.memory_space<vmem>>, vector<1x256xbf16>
    tpu.vector_store %arg16[%c33, %c0_1], %0 {strides = array<i32>} : memref<136x256xbf16, #tpu.memory_space<vmem>>, vector<1x256xbf16>,
    %c34 = arith.constant 34 : index
    %c0_2 = arith.constant 0 : index
    %3 = vector.load %arg16[%c34, %c0_2] : memref<136x256xbf16, #tpu.memory_space<vmem>>, vector<1x256xbf16>
    tpu.vector_store %arg16[%c34, %c0_2], %0 {strides = array<i32>} : memref<136x256xbf16, #tpu.memory_space<vmem>>, vector<1x256xbf16>,
    %c67 = arith.constant 67 : index
    %c0_3 = arith.constant 0 : index
    %4 = vector.load %arg16[%c67, %c0_3] : memref<136x256xbf16, #tpu.memory_space<vmem>>, vector<1x256xbf16>
    tpu.vector_store %arg16[%c67, %c0_3], %0 {strides = array<i32>} : memref<136x256xbf16, #tpu.memory_space<vmem>>, vector<1x256xbf16>,
    %c68 = arith.constant 68 : index
    %c0_4 = arith.constant 0 : index
    %5 = vector.load %arg16[%c68, %c0_4] : memref<136x256xbf16, #tpu.memory_space<vmem>>, vector<1x256xbf16>
    tpu.vector_store %arg16[%c68, %c0_4], %0 {strides = array<i32>} : memref<136x256xbf16, #tpu.memory_space<vmem>>, vector<1x256xbf16>,
    %c101 = arith.constant 101 : index
    %c0_5 = arith.constant 0 : index
    %6 = vector.load %arg16[%c101, %c0_5] : memref<136x256xbf16, #tpu.memory_space<vmem>>, vector<1x256xbf16>
    tpu.vector_store %arg16[%c101, %c0_5], %0 {strides = array<i32>} : memref<136x256xbf16, #tpu.memory_space<vmem>>, vector<1x256xbf16>,
    %c102 = arith.constant 102 : index
    %c0_6 = arith.constant 0 : index
    %7 = vector.load %arg16[%c102, %c0_6] : memref<136x256xbf16, #tpu.memory_space<vmem>>, vector<1x256xbf16>
    tpu.vector_store %arg16[%c102, %c0_6], %0 {strides = array<i32>} : memref<136x256xbf16, #tpu.memory_space<vmem>>, vector<1x256xbf16>,
    %c135 = arith.constant 135 : index
    %c0_7 = arith.constant 0 : index
    %8 = vector.load %arg16[%c135, %c0_7] : memref<136x256xbf16, #tpu.memory_space<vmem>>, vector<1x256xbf16>
    tpu.vector_store %arg16[%c135, %c0_7], %0 {strides = array<i32>} : memref<136x256xbf16, #tpu.memory_space<vmem>>, vector<1x256xbf16>,
    %c0_8 = arith.constant 0 : index
    %c0_9 = arith.constant 0 : index
    %9 = vector.load %arg1[%c0_8, %c0_9] : memref<64x128xbf16, #tpu.memory_space<vmem>>, vector<64x128xbf16>
    %c0_10 = arith.constant 0 : index
    %c0_11 = arith.constant 0 : index
    %10 = vector.load %arg2[%c0_10, %c0_11] : memref<128x512xbf16, #tpu.memory_space<vmem>>, vector<128x512xbf16>
    %cst_12 = arith.constant dense<0.000000e+00> : vector<64x512xf32>
    %11 = tpu.matmul %9, %10, %cst_12 {dimension_numbers = #tpu.dot_dimension_numbers<[1], [0], [0], [1], [0, 0, 1, 1], [], []>} : vector<64x128xbf16>, vector<128x512xbf16>, vector<64x512xf32> -> vector<64x512xf32>
    %12 = vector.extract_strided_slice %11 {offsets = [0, 0], sizes = [64, 256], strides = [1, 1]} : vector<64x512xf32> to vector<64x256xf32>
    %13 = arith.truncf %12 : vector<64x256xf32> to vector<64x256xbf16>
    %14 = vector.extract_strided_slice %11 {offsets = [0, 256], sizes = [64, 256], strides = [1, 1]} : vector<64x512xf32> to vector<64x256xf32>
    %15 = arith.truncf %14 : vector<64x256xf32> to vector<64x256xbf16>
    %c0_13 = arith.constant 0 : index
    %c0_14 = arith.constant 0 : index
    %16 = vector.load %arg3[%c0_13, %c0_14] : memref<128x64xbf16, #tpu.memory_space<vmem>>, vector<128x64xbf16>
    %cst_15 = arith.constant dense<0.000000e+00> : vector<128x256xf32>
    %17 = tpu.matmul %16, %13, %cst_15 {dimension_numbers = #tpu.dot_dimension_numbers<[1], [0], [0], [1], [0, 0, 1, 1], [], []>} : vector<128x64xbf16>, vector<64x256xbf16>, vector<128x256xf32> -> vector<128x256xf32>
    %c0_16 = arith.constant 0 : index
    %c0_17 = arith.constant 0 : index
    %18 = vector.load %arg4[%c0_16, %c0_17] : memref<128x64xbf16, #tpu.memory_space<vmem>>, vector<128x64xbf16>
    %cst_18 = arith.constant dense<0.000000e+00> : vector<128x256xf32>
    %19 = tpu.matmul %18, %15, %cst_18 {dimension_numbers = #tpu.dot_dimension_numbers<[1], [0], [0], [1], [0, 0, 1, 1], [], []>} : vector<128x64xbf16>, vector<64x256xbf16>, vector<128x256xf32> -> vector<128x256xf32>
    %20 = arith.addf %17, %19 : vector<128x256xf32>
    %c0_19 = arith.constant 0 : index
    %c0_20 = arith.constant 0 : index
    %21 = vector.load %arg5[%c0_19, %c0_20] : memref<1x256xf32, #tpu.memory_space<vmem>>, vector<1x256xf32>
    %22 = vector.broadcast %21 : vector<1x256xf32> to vector<128x256xf32>
    %23 = arith.addf %20, %22 : vector<128x256xf32>
    %24 = vector.extract_strided_slice %23 {offsets = [0, 0], sizes = [32, 256], strides = [1, 1]} : vector<128x256xf32> to vector<32x256xf32>
    %25 = arith.truncf %24 : vector<32x256xf32> to vector<32x256xbf16>
    %c1 = arith.constant 1 : index
    %c0_21 = arith.constant 0 : index
    %26 = vector.load %arg16[%c1, %c0_21] : memref<136x256xbf16, #tpu.memory_space<vmem>>, vector<32x256xbf16>
    tpu.vector_store %arg16[%c1, %c0_21], %25 {strides = array<i32>} : memref<136x256xbf16, #tpu.memory_space<vmem>>, vector<32x256xbf16>,
    %27 = vector.extract_strided_slice %23 {offsets = [32, 0], sizes = [32, 256], strides = [1, 1]} : vector<128x256xf32> to vector<32x256xf32>
    %28 = arith.truncf %27 : vector<32x256xf32> to vector<32x256xbf16>
    %c35 = arith.constant 35 : index
    %c0_22 = arith.constant 0 : index
    %29 = vector.load %arg16[%c35, %c0_22] : memref<136x256xbf16, #tpu.memory_space<vmem>>, vector<32x256xbf16>
    tpu.vector_store %arg16[%c35, %c0_22], %28 {strides = array<i32>} : memref<136x256xbf16, #tpu.memory_space<vmem>>, vector<32x256xbf16>,
    %30 = vector.extract_strided_slice %23 {offsets = [64, 0], sizes = [32, 256], strides = [1, 1]} : vector<128x256xf32> to vector<32x256xf32>
    %31 = arith.truncf %30 : vector<32x256xf32> to vector<32x256xbf16>
    %c69 = arith.constant 69 : index
    %c0_23 = arith.constant 0 : index
    %32 = vector.load %arg16[%c69, %c0_23] : memref<136x256xbf16, #tpu.memory_space<vmem>>, vector<32x256xbf16>
    tpu.vector_store %arg16[%c69, %c0_23], %31 {strides = array<i32>} : memref<136x256xbf16, #tpu.memory_space<vmem>>, vector<32x256xbf16>,
    %33 = vector.extract_strided_slice %23 {offsets = [96, 0], sizes = [32, 256], strides = [1, 1]} : vector<128x256xf32> to vector<32x256xf32>
    %34 = arith.truncf %33 : vector<32x256xf32> to vector<32x256xbf16>
    %c103 = arith.constant 103 : index
    %c0_24 = arith.constant 0 : index
    %35 = vector.load %arg16[%c103, %c0_24] : memref<136x256xbf16, #tpu.memory_space<vmem>>, vector<32x256xbf16>
    tpu.vector_store %arg16[%c103, %c0_24], %34 {strides = array<i32>} : memref<136x256xbf16, #tpu.memory_space<vmem>>, vector<32x256xbf16>,
    %c0_25 = arith.constant 0 : index
    %c0_26 = arith.constant 0 : index
    %36 = vector.load %arg16[%c0_25, %c0_26] : memref<136x256xbf16, #tpu.memory_space<vmem>>, vector<134x256xbf16>
    %c0_27 = arith.constant 0 : index
    %c0_28 = arith.constant 0 : index
    %c0_29 = arith.constant 0 : index
    %37 = vector.load %arg6[%c0_27, %c0_28, %c0_29] : memref<3x256x128xbf16, #tpu.memory_space<vmem>>, vector<1x256x128xbf16>
    %38 = vector.shape_cast %37 : vector<1x256x128xbf16> to vector<256x128xbf16>
    %cst_30 = arith.constant dense<0.000000e+00> : vector<134x128xf32>
    %39 = tpu.matmul %36, %38, %cst_30 {dimension_numbers = #tpu.dot_dimension_numbers<[1], [0], [0], [1], [0, 0, 1, 1], [], []>} : vector<134x256xbf16>, vector<256x128xbf16>, vector<134x128xf32> -> vector<134x128xf32>
    %c1_31 = arith.constant 1 : index
    %c0_32 = arith.constant 0 : index
    %40 = vector.load %arg16[%c1_31, %c0_32] : memref<136x256xbf16, #tpu.memory_space<vmem>>, vector<134x256xbf16>
    %c1_33 = arith.constant 1 : index
    %c0_34 = arith.constant 0 : index
    %c0_35 = arith.constant 0 : index
    %41 = vector.load %arg6[%c1_33, %c0_34, %c0_35] : memref<3x256x128xbf16, #tpu.memory_space<vmem>>, vector<1x256x128xbf16>
    %42 = vector.shape_cast %41 : vector<1x256x128xbf16> to vector<256x128xbf16>
    %cst_36 = arith.constant dense<0.000000e+00> : vector<134x128xf32>
    %43 = tpu.matmul %40, %42, %cst_36 {dimension_numbers = #tpu.dot_dimension_numbers<[1], [0], [0], [1], [0, 0, 1, 1], [], []>} : vector<134x256xbf16>, vector<256x128xbf16>, vector<134x128xf32> -> vector<134x128xf32>
    %44 = arith.addf %39, %43 : vector<134x128xf32>
    %c2 = arith.constant 2 : index
    %c0_37 = arith.constant 0 : index
    %45 = vector.load %arg16[%c2, %c0_37] : memref<136x256xbf16, #tpu.memory_space<vmem>>, vector<134x256xbf16>
    %c2_38 = arith.constant 2 : index
    %c0_39 = arith.constant 0 : index
    %c0_40 = arith.constant 0 : index
    %46 = vector.load %arg6[%c2_38, %c0_39, %c0_40] : memref<3x256x128xbf16, #tpu.memory_space<vmem>>, vector<1x256x128xbf16>
    %47 = vector.shape_cast %46 : vector<1x256x128xbf16> to vector<256x128xbf16>
    %cst_41 = arith.constant dense<0.000000e+00> : vector<134x128xf32>
    %48 = tpu.matmul %45, %47, %cst_41 {dimension_numbers = #tpu.dot_dimension_numbers<[1], [0], [0], [1], [0, 0, 1, 1], [], []>} : vector<134x256xbf16>, vector<256x128xbf16>, vector<134x128xf32> -> vector<134x128xf32>
    %49 = arith.addf %44, %48 : vector<134x128xf32>
    %c0_42 = arith.constant 0 : index
    %c0_43 = arith.constant 0 : index
    %50 = vector.load %arg7[%c0_42, %c0_43] : memref<1x128xf32, #tpu.memory_space<vmem>>, vector<1x128xf32>
    %51 = vector.broadcast %50 : vector<1x128xf32> to vector<134x128xf32>
    %52 = arith.mulf %49, %51 : vector<134x128xf32>
    %c0_44 = arith.constant 0 : index
    %c0_45 = arith.constant 0 : index
    %53 = vector.load %arg8[%c0_44, %c0_45] : memref<1x128xf32, #tpu.memory_space<vmem>>, vector<1x128xf32>
    %54 = vector.broadcast %53 : vector<1x128xf32> to vector<134x128xf32>
    %55 = arith.addf %52, %54 : vector<134x128xf32>
    %cst_46 = arith.constant 0.000000e+00 : f32
    %56 = vector.broadcast %cst_46 : f32 to vector<134x128xf32>
    %57 = arith.maximumf %55, %56 : vector<134x128xf32>
    %58 = vector.extract_strided_slice %57 {offsets = [0, 0], sizes = [32, 128], strides = [1, 1]} : vector<134x128xf32> to vector<32x128xf32>
    %59 = arith.truncf %58 : vector<32x128xf32> to vector<32x128xbf16>
    %c1_47 = arith.constant 1 : index
    %c0_48 = arith.constant 0 : index
    %60 = vector.load %arg16[%c1_47, %c0_48] : memref<136x256xbf16, #tpu.memory_space<vmem>>, vector<32x128xbf16>
    tpu.vector_store %arg16[%c1_47, %c0_48], %59 {strides = array<i32>} : memref<136x256xbf16, #tpu.memory_space<vmem>>, vector<32x128xbf16>,
    %61 = vector.extract_strided_slice %57 {offsets = [34, 0], sizes = [32, 128], strides = [1, 1]} : vector<134x128xf32> to vector<32x128xf32>
    %62 = arith.truncf %61 : vector<32x128xf32> to vector<32x128xbf16>
    %c35_49 = arith.constant 35 : index
    %c0_50 = arith.constant 0 : index
    %63 = vector.load %arg16[%c35_49, %c0_50] : memref<136x256xbf16, #tpu.memory_space<vmem>>, vector<32x128xbf16>
    tpu.vector_store %arg16[%c35_49, %c0_50], %62 {strides = array<i32>} : memref<136x256xbf16, #tpu.memory_space<vmem>>, vector<32x128xbf16>,
    %64 = vector.extract_strided_slice %57 {offsets = [68, 0], sizes = [32, 128], strides = [1, 1]} : vector<134x128xf32> to vector<32x128xf32>
    %65 = arith.truncf %64 : vector<32x128xf32> to vector<32x128xbf16>
    %c69_51 = arith.constant 69 : index
    %c0_52 = arith.constant 0 : index
    %66 = vector.load %arg16[%c69_51, %c0_52] : memref<136x256xbf16, #tpu.memory_space<vmem>>, vector<32x128xbf16>
    tpu.vector_store %arg16[%c69_51, %c0_52], %65 {strides = array<i32>} : memref<136x256xbf16, #tpu.memory_space<vmem>>, vector<32x128xbf16>,
    %67 = vector.extract_strided_slice %57 {offsets = [102, 0], sizes = [32, 128], strides = [1, 1]} : vector<134x128xf32> to vector<32x128xf32>
    %68 = arith.truncf %67 : vector<32x128xf32> to vector<32x128xbf16>
    %c103_53 = arith.constant 103 : index
    %c0_54 = arith.constant 0 : index
    %69 = vector.load %arg16[%c103_53, %c0_54] : memref<136x256xbf16, #tpu.memory_space<vmem>>, vector<32x128xbf16>
    tpu.vector_store %arg16[%c103_53, %c0_54], %68 {strides = array<i32>} : memref<136x256xbf16, #tpu.memory_space<vmem>>, vector<32x128xbf16>,
    %c0_55 = arith.constant 0 : index
    %c0_56 = arith.constant 0 : index
    %70 = vector.load %arg16[%c0_55, %c0_56] : memref<136x256xbf16, #tpu.memory_space<vmem>>, vector<134x128xbf16>
    %c0_57 = arith.constant 0 : index
    %c0_58 = arith.constant 0 : index
    %c0_59 = arith.constant 0 : index
    %71 = vector.load %arg9[%c0_57, %c0_58, %c0_59] : memref<3x128x128xbf16, #tpu.memory_space<vmem>>, vector<1x128x128xbf16>
    %72 = vector.shape_cast %71 : vector<1x128x128xbf16> to vector<128x128xbf16>
    %cst_60 = arith.constant dense<0.000000e+00> : vector<134x128xf32>
    %73 = tpu.matmul %70, %72, %cst_60 {dimension_numbers = #tpu.dot_dimension_numbers<[1], [0], [0], [1], [0, 0, 1, 1], [], []>} : vector<134x128xbf16>, vector<128x128xbf16>, vector<134x128xf32> -> vector<134x128xf32>
    %c1_61 = arith.constant 1 : index
    %c0_62 = arith.constant 0 : index
    %74 = vector.load %arg16[%c1_61, %c0_62] : memref<136x256xbf16, #tpu.memory_space<vmem>>, vector<134x128xbf16>
    %c1_63 = arith.constant 1 : index
    %c0_64 = arith.constant 0 : index
    %c0_65 = arith.constant 0 : index
    %75 = vector.load %arg9[%c1_63, %c0_64, %c0_65] : memref<3x128x128xbf16, #tpu.memory_space<vmem>>, vector<1x128x128xbf16>
    %76 = vector.shape_cast %75 : vector<1x128x128xbf16> to vector<128x128xbf16>
    %cst_66 = arith.constant dense<0.000000e+00> : vector<134x128xf32>
    %77 = tpu.matmul %74, %76, %cst_66 {dimension_numbers = #tpu.dot_dimension_numbers<[1], [0], [0], [1], [0, 0, 1, 1], [], []>} : vector<134x128xbf16>, vector<128x128xbf16>, vector<134x128xf32> -> vector<134x128xf32>
    %78 = arith.addf %73, %77 : vector<134x128xf32>
    %c2_67 = arith.constant 2 : index
    %c0_68 = arith.constant 0 : index
    %79 = vector.load %arg16[%c2_67, %c0_68] : memref<136x256xbf16, #tpu.memory_space<vmem>>, vector<134x128xbf16>
    %c2_69 = arith.constant 2 : index
    %c0_70 = arith.constant 0 : index
    %c0_71 = arith.constant 0 : index
    %80 = vector.load %arg9[%c2_69, %c0_70, %c0_71] : memref<3x128x128xbf16, #tpu.memory_space<vmem>>, vector<1x128x128xbf16>
    %81 = vector.shape_cast %80 : vector<1x128x128xbf16> to vector<128x128xbf16>
    %cst_72 = arith.constant dense<0.000000e+00> : vector<134x128xf32>
    %82 = tpu.matmul %79, %81, %cst_72 {dimension_numbers = #tpu.dot_dimension_numbers<[1], [0], [0], [1], [0, 0, 1, 1], [], []>} : vector<134x128xbf16>, vector<128x128xbf16>, vector<134x128xf32> -> vector<134x128xf32>
    %83 = arith.addf %78, %82 : vector<134x128xf32>
    %c0_73 = arith.constant 0 : index
    %c0_74 = arith.constant 0 : index
    %84 = vector.load %arg10[%c0_73, %c0_74] : memref<1x128xf32, #tpu.memory_space<vmem>>, vector<1x128xf32>
    %85 = vector.broadcast %84 : vector<1x128xf32> to vector<134x128xf32>
    %86 = arith.mulf %83, %85 : vector<134x128xf32>
    %c0_75 = arith.constant 0 : index
    %c0_76 = arith.constant 0 : index
    %87 = vector.load %arg11[%c0_75, %c0_76] : memref<1x128xf32, #tpu.memory_space<vmem>>, vector<1x128xf32>
    %88 = vector.broadcast %87 : vector<1x128xf32> to vector<134x128xf32>
    %89 = arith.addf %86, %88 : vector<134x128xf32>
    %cst_77 = arith.constant 0.000000e+00 : f32
    %90 = vector.broadcast %cst_77 : f32 to vector<134x128xf32>
    %91 = arith.maximumf %89, %90 : vector<134x128xf32>
    %92 = vector.extract_strided_slice %91 {offsets = [0, 0], sizes = [32, 128], strides = [1, 1]} : vector<134x128xf32> to vector<32x128xf32>
    %93 = arith.truncf %92 : vector<32x128xf32> to vector<32x128xbf16>
    %c1_78 = arith.constant 1 : index
    %c0_79 = arith.constant 0 : index
    %94 = vector.load %arg16[%c1_78, %c0_79] : memref<136x256xbf16, #tpu.memory_space<vmem>>, vector<32x128xbf16>
    tpu.vector_store %arg16[%c1_78, %c0_79], %93 {strides = array<i32>} : memref<136x256xbf16, #tpu.memory_space<vmem>>, vector<32x128xbf16>,
    %95 = vector.extract_strided_slice %91 {offsets = [34, 0], sizes = [32, 128], strides = [1, 1]} : vector<134x128xf32> to vector<32x128xf32>
    %96 = arith.truncf %95 : vector<32x128xf32> to vector<32x128xbf16>
    %c35_80 = arith.constant 35 : index
    %c0_81 = arith.constant 0 : index
    %97 = vector.load %arg16[%c35_80, %c0_81] : memref<136x256xbf16, #tpu.memory_space<vmem>>, vector<32x128xbf16>
    tpu.vector_store %arg16[%c35_80, %c0_81], %96 {strides = array<i32>} : memref<136x256xbf16, #tpu.memory_space<vmem>>, vector<32x128xbf16>,
    %98 = vector.extract_strided_slice %91 {offsets = [68, 0], sizes = [32, 128], strides = [1, 1]} : vector<134x128xf32> to vector<32x128xf32>
    %99 = arith.truncf %98 : vector<32x128xf32> to vector<32x128xbf16>
    %c69_82 = arith.constant 69 : index
    %c0_83 = arith.constant 0 : index
    %100 = vector.load %arg16[%c69_82, %c0_83] : memref<136x256xbf16, #tpu.memory_space<vmem>>, vector<32x128xbf16>
    tpu.vector_store %arg16[%c69_82, %c0_83], %99 {strides = array<i32>} : memref<136x256xbf16, #tpu.memory_space<vmem>>, vector<32x128xbf16>,
    %101 = vector.extract_strided_slice %91 {offsets = [102, 0], sizes = [32, 128], strides = [1, 1]} : vector<134x128xf32> to vector<32x128xf32>
    %102 = arith.truncf %101 : vector<32x128xf32> to vector<32x128xbf16>
    %c103_84 = arith.constant 103 : index
    %c0_85 = arith.constant 0 : index
    %103 = vector.load %arg16[%c103_84, %c0_85] : memref<136x256xbf16, #tpu.memory_space<vmem>>, vector<32x128xbf16>
    tpu.vector_store %arg16[%c103_84, %c0_85], %102 {strides = array<i32>} : memref<136x256xbf16, #tpu.memory_space<vmem>>, vector<32x128xbf16>,
    %c0_86 = arith.constant 0 : index
    %c0_87 = arith.constant 0 : index
    %104 = vector.load %arg16[%c0_86, %c0_87] : memref<136x256xbf16, #tpu.memory_space<vmem>>, vector<134x128xbf16>
    %c0_88 = arith.constant 0 : index
    %c0_89 = arith.constant 0 : index
    %c0_90 = arith.constant 0 : index
    %105 = vector.load %arg12[%c0_88, %c0_89, %c0_90] : memref<3x128x128xbf16, #tpu.memory_space<vmem>>, vector<1x128x128xbf16>
    %106 = vector.shape_cast %105 : vector<1x128x128xbf16> to vector<128x128xbf16>
    %cst_91 = arith.constant dense<0.000000e+00> : vector<134x128xf32>
    %107 = tpu.matmul %104, %106, %cst_91 {dimension_numbers = #tpu.dot_dimension_numbers<[1], [0], [0], [1], [0, 0, 1, 1], [], []>} : vector<134x128xbf16>, vector<128x128xbf16>, vector<134x128xf32> -> vector<134x128xf32>
    %c1_92 = arith.constant 1 : index
    %c0_93 = arith.constant 0 : index
    %108 = vector.load %arg16[%c1_92, %c0_93] : memref<136x256xbf16, #tpu.memory_space<vmem>>, vector<134x128xbf16>
    %c1_94 = arith.constant 1 : index
    %c0_95 = arith.constant 0 : index
    %c0_96 = arith.constant 0 : index
    %109 = vector.load %arg12[%c1_94, %c0_95, %c0_96] : memref<3x128x128xbf16, #tpu.memory_space<vmem>>, vector<1x128x128xbf16>
    %110 = vector.shape_cast %109 : vector<1x128x128xbf16> to vector<128x128xbf16>
    %cst_97 = arith.constant dense<0.000000e+00> : vector<134x128xf32>
    %111 = tpu.matmul %108, %110, %cst_97 {dimension_numbers = #tpu.dot_dimension_numbers<[1], [0], [0], [1], [0, 0, 1, 1], [], []>} : vector<134x128xbf16>, vector<128x128xbf16>, vector<134x128xf32> -> vector<134x128xf32>
    %112 = arith.addf %107, %111 : vector<134x128xf32>
    %c2_98 = arith.constant 2 : index
    %c0_99 = arith.constant 0 : index
    %113 = vector.load %arg16[%c2_98, %c0_99] : memref<136x256xbf16, #tpu.memory_space<vmem>>, vector<134x128xbf16>
    %c2_100 = arith.constant 2 : index
    %c0_101 = arith.constant 0 : index
    %c0_102 = arith.constant 0 : index
    %114 = vector.load %arg12[%c2_100, %c0_101, %c0_102] : memref<3x128x128xbf16, #tpu.memory_space<vmem>>, vector<1x128x128xbf16>
    %115 = vector.shape_cast %114 : vector<1x128x128xbf16> to vector<128x128xbf16>
    %cst_103 = arith.constant dense<0.000000e+00> : vector<134x128xf32>
    %116 = tpu.matmul %113, %115, %cst_103 {dimension_numbers = #tpu.dot_dimension_numbers<[1], [0], [0], [1], [0, 0, 1, 1], [], []>} : vector<134x128xbf16>, vector<128x128xbf16>, vector<134x128xf32> -> vector<134x128xf32>
    %117 = arith.addf %112, %116 : vector<134x128xf32>
    %c0_104 = arith.constant 0 : index
    %c0_105 = arith.constant 0 : index
    %118 = vector.load %arg13[%c0_104, %c0_105] : memref<1x128xf32, #tpu.memory_space<vmem>>, vector<1x128xf32>
    %119 = vector.broadcast %118 : vector<1x128xf32> to vector<134x128xf32>
    %120 = arith.mulf %117, %119 : vector<134x128xf32>
    %c0_106 = arith.constant 0 : index
    %c0_107 = arith.constant 0 : index
    %121 = vector.load %arg14[%c0_106, %c0_107] : memref<1x128xf32, #tpu.memory_space<vmem>>, vector<1x128xf32>
    %122 = vector.broadcast %121 : vector<1x128xf32> to vector<134x128xf32>
    %123 = arith.addf %120, %122 : vector<134x128xf32>
    %cst_108 = arith.constant 0.000000e+00 : f32
    %124 = vector.broadcast %cst_108 : f32 to vector<134x128xf32>
    %125 = arith.maximumf %123, %124 : vector<134x128xf32>
    %126 = vector.extract_strided_slice %125 {offsets = [0, 0], sizes = [32, 128], strides = [1, 1]} : vector<134x128xf32> to vector<32x128xf32>
    %c0_109 = arith.constant 0 : index
    %c0_110 = arith.constant 0 : index
    %127 = vector.load %arg15[%c0_109, %c0_110] : memref<128x128xf32, #tpu.memory_space<vmem>>, vector<32x128xf32>
    tpu.vector_store %arg15[%c0_109, %c0_110], %126 {strides = array<i32>} : memref<128x128xf32, #tpu.memory_space<vmem>>, vector<32x128xf32>,
    %128 = vector.extract_strided_slice %125 {offsets = [34, 0], sizes = [32, 128], strides = [1, 1]} : vector<134x128xf32> to vector<32x128xf32>
    %c32 = arith.constant 32 : index
    %c0_111 = arith.constant 0 : index
    %129 = vector.load %arg15[%c32, %c0_111] : memref<128x128xf32, #tpu.memory_space<vmem>>, vector<32x128xf32>
    tpu.vector_store %arg15[%c32, %c0_111], %128 {strides = array<i32>} : memref<128x128xf32, #tpu.memory_space<vmem>>, vector<32x128xf32>,
    %130 = vector.extract_strided_slice %125 {offsets = [68, 0], sizes = [32, 128], strides = [1, 1]} : vector<134x128xf32> to vector<32x128xf32>
    %c64 = arith.constant 64 : index
    %c0_112 = arith.constant 0 : index
    %131 = vector.load %arg15[%c64, %c0_112] : memref<128x128xf32, #tpu.memory_space<vmem>>, vector<32x128xf32>
    tpu.vector_store %arg15[%c64, %c0_112], %130 {strides = array<i32>} : memref<128x128xf32, #tpu.memory_space<vmem>>, vector<32x128xf32>,
    %132 = vector.extract_strided_slice %125 {offsets = [102, 0], sizes = [32, 128], strides = [1, 1]} : vector<134x128xf32> to vector<32x128xf32>
    %c96 = arith.constant 96 : index
    %c0_113 = arith.constant 0 : index
    %133 = vector.load %arg15[%c96, %c0_113] : memref<128x128xf32, #tpu.memory_space<vmem>>, vector<32x128xf32>
    tpu.vector_store %arg15[%c96, %c0_113], %132 {strides = array<i32>} : memref<128x128xf32, #tpu.memory_space<vmem>>, vector<32x128xf32>,
    return
  }
  func.func @transform_0(%arg0: i32) -> (i32, i32) {
    %c0_i32 = arith.constant 0 : i32
    %c0_i32_0 = arith.constant 0 : i32
    return %arg0, %c0_i32 : i32, i32
  }
  func.func @transform_1(%arg0: i32) -> (i32, i32) {
    %c0_i32 = arith.constant 0 : i32
    %c0_i32_0 = arith.constant 0 : i32
    %c0_i32_1 = arith.constant 0 : i32
    return %c0_i32, %c0_i32_0 : i32, i32
  }
  func.func @transform_2(%arg0: i32) -> (i32, i32) {
    %c0_i32 = arith.constant 0 : i32
    %c0_i32_0 = arith.constant 0 : i32
    %c0_i32_1 = arith.constant 0 : i32
    return %c0_i32, %c0_i32_0 : i32, i32
  }
  func.func @transform_3(%arg0: i32) -> (i32, i32) {
    %c0_i32 = arith.constant 0 : i32
    %c0_i32_0 = arith.constant 0 : i32
    %c0_i32_1 = arith.constant 0 : i32
    return %c0_i32, %c0_i32_0 : i32, i32
  }
  func.func @transform_4(%arg0: i32) -> (i32, i32) {
    %c0_i32 = arith.constant 0 : i32
    %c0_i32_0 = arith.constant 0 : i32
    %c0_i32_1 = arith.constant 0 : i32
    return %c0_i32, %c0_i32_0 : i32, i32
  }
  func.func @transform_5(%arg0: i32) -> (i32, i32, i32) {
    %c0_i32 = arith.constant 0 : i32
    %c0_i32_0 = arith.constant 0 : i32
    %c0_i32_1 = arith.constant 0 : i32
    %c0_i32_2 = arith.constant 0 : i32
    return %c0_i32, %c0_i32_0, %c0_i32_1 : i32, i32, i32
  }
  func.func @transform_6(%arg0: i32) -> (i32, i32) {
    %c0_i32 = arith.constant 0 : i32
    %c0_i32_0 = arith.constant 0 : i32
    %c0_i32_1 = arith.constant 0 : i32
    return %c0_i32, %c0_i32_0 : i32, i32
  }
  func.func @transform_7(%arg0: i32) -> (i32, i32) {
    %c0_i32 = arith.constant 0 : i32
    %c0_i32_0 = arith.constant 0 : i32
    %c0_i32_1 = arith.constant 0 : i32
    return %c0_i32, %c0_i32_0 : i32, i32
  }
  func.func @transform_8(%arg0: i32) -> (i32, i32, i32) {
    %c0_i32 = arith.constant 0 : i32
    %c0_i32_0 = arith.constant 0 : i32
    %c0_i32_1 = arith.constant 0 : i32
    %c0_i32_2 = arith.constant 0 : i32
    return %c0_i32, %c0_i32_0, %c0_i32_1 : i32, i32, i32
  }
  func.func @transform_9(%arg0: i32) -> (i32, i32) {
    %c0_i32 = arith.constant 0 : i32
    %c0_i32_0 = arith.constant 0 : i32
    %c0_i32_1 = arith.constant 0 : i32
    return %c0_i32, %c0_i32_0 : i32, i32
  }
  func.func @transform_10(%arg0: i32) -> (i32, i32) {
    %c0_i32 = arith.constant 0 : i32
    %c0_i32_0 = arith.constant 0 : i32
    %c0_i32_1 = arith.constant 0 : i32
    return %c0_i32, %c0_i32_0 : i32, i32
  }
  func.func @transform_11(%arg0: i32) -> (i32, i32, i32) {
    %c0_i32 = arith.constant 0 : i32
    %c0_i32_0 = arith.constant 0 : i32
    %c0_i32_1 = arith.constant 0 : i32
    %c0_i32_2 = arith.constant 0 : i32
    return %c0_i32, %c0_i32_0, %c0_i32_1 : i32, i32, i32
  }
  func.func @transform_12(%arg0: i32) -> (i32, i32) {
    %c0_i32 = arith.constant 0 : i32
    %c0_i32_0 = arith.constant 0 : i32
    %c0_i32_1 = arith.constant 0 : i32
    return %c0_i32, %c0_i32_0 : i32, i32
  }
  func.func @transform_13(%arg0: i32) -> (i32, i32) {
    %c0_i32 = arith.constant 0 : i32
    %c0_i32_0 = arith.constant 0 : i32
    %c0_i32_1 = arith.constant 0 : i32
    return %c0_i32, %c0_i32_0 : i32, i32
  }
  func.func @transform_14(%arg0: i32) -> (i32, i32) {
    %c0_i32 = arith.constant 0 : i32
    %c0_i32_0 = arith.constant 0 : i32
    return %arg0, %c0_i32 : i32, i32
  }
}

module attributes {stable_mosaic.version = 11 : i64} {
  func.func @kernel(%arg0: i32, %arg1: memref<64x128xbf16, #tpu.memory_space<vmem>>, %arg2: memref<128x512xbf16, #tpu.memory_space<vmem>>, %arg3: memref<128x64xbf16, #tpu.memory_space<vmem>>, %arg4: memref<128x64xbf16, #tpu.memory_space<vmem>>, %arg5: memref<1x256xf32, #tpu.memory_space<vmem>>, %arg6: memref<3x256x128xbf16, #tpu.memory_space<vmem>>, %arg7: memref<1x128xf32, #tpu.memory_space<vmem>>, %arg8: memref<1x128xf32, #tpu.memory_space<vmem>>, %arg9: memref<3x128x128xbf16, #tpu.memory_space<vmem>>, %arg10: memref<1x128xf32, #tpu.memory_space<vmem>>, %arg11: memref<1x128xf32, #tpu.memory_space<vmem>>, %arg12: memref<3x128x128xbf16, #tpu.memory_space<vmem>>, %arg13: memref<1x128xf32, #tpu.memory_space<vmem>>, %arg14: memref<1x128xf32, #tpu.memory_space<vmem>>, %arg15: memref<128x128xf32, #tpu.memory_space<vmem>>, %arg16: memref<136x256xbf16, #tpu.memory_space<vmem>>) attributes {dimension_semantics = [#tpu.dimension_semantics<parallel>], iteration_bounds = array<i64: 4>, scalar_prefetch = 0 : i64, scratch_operands = 1 : i64, tpu.core_type = #tpu.core_type<tc>, window_params = [{transform_indices = @transform_0, window_bounds = array<i64: 64, 128>}, {pipeline_mode = #tpu.pipeline_mode<synchronous>, transform_indices = @transform_1, window_bounds = array<i64: 128, 512>}, {pipeline_mode = #tpu.pipeline_mode<synchronous>, transform_indices = @transform_2, window_bounds = array<i64: 128, 64>}, {pipeline_mode = #tpu.pipeline_mode<synchronous>, transform_indices = @transform_3, window_bounds = array<i64: 128, 64>}, {pipeline_mode = #tpu.pipeline_mode<synchronous>, transform_indices = @transform_4, window_bounds = array<i64: 1, 256>}, {pipeline_mode = #tpu.pipeline_mode<synchronous>, transform_indices = @transform_5, window_bounds = array<i64: 3, 256, 128>}, {pipeline_mode = #tpu.pipeline_mode<synchronous>, transform_indices = @transform_6, window_bounds = array<i64: 1, 128>}, {pipeline_mode = #tpu.pipeline_mode<synchronous>, transform_indices = @transform_7, window_bounds = array<i64: 1, 128>}, {pipeline_mode = #tpu.pipeline_mode<synchronous>, transform_indices = @transform_8, window_bounds = array<i64: 3, 128, 128>}, {pipeline_mode = #tpu.pipeline_mode<synchronous>, transform_indices = @transform_9, window_bounds = array<i64: 1, 128>}, {pipeline_mode = #tpu.pipeline_mode<synchronous>, transform_indices = @transform_10, window_bounds = array<i64: 1, 128>}, {pipeline_mode = #tpu.pipeline_mode<synchronous>, transform_indices = @transform_11, window_bounds = array<i64: 3, 128, 128>}, {pipeline_mode = #tpu.pipeline_mode<synchronous>, transform_indices = @transform_12, window_bounds = array<i64: 1, 128>}, {pipeline_mode = #tpu.pipeline_mode<synchronous>, transform_indices = @transform_13, window_bounds = array<i64: 1, 128>}, {transform_indices = @transform_14, window_bounds = array<i64: 128, 128>}]} {
    %cst = arith.constant 0.000000e+00 : bf16
    %0 = vector.broadcast %cst : bf16 to vector<1x256xbf16>
    %c0 = arith.constant 0 : index
    %c0_0 = arith.constant 0 : index
    %1 = vector.load %arg16[%c0, %c0_0] : memref<136x256xbf16, #tpu.memory_space<vmem>>, vector<1x256xbf16>
    tpu.vector_store %arg16[%c0, %c0_0], %0 {strides = array<i32>} : memref<136x256xbf16, #tpu.memory_space<vmem>>, vector<1x256xbf16>,
    %c33 = arith.constant 33 : index
    %c0_1 = arith.constant 0 : index
    %2 = vector.load %arg16[%c33, %c0_1] : memref<136x256xbf16, #tpu.memory_space<vmem>>, vector<1x256xbf16>
    tpu.vector_store %arg16[%c33, %c0_1], %0 {strides = array<i32>} : memref<136x256xbf16, #tpu.memory_space<vmem>>, vector<1x256xbf16>,
    %c34 = arith.constant 34 : index
    %c0_2 = arith.constant 0 : index
    %3 = vector.load %arg16[%c34, %c0_2] : memref<136x256xbf16, #tpu.memory_space<vmem>>, vector<1x256xbf16>
    tpu.vector_store %arg16[%c34, %c0_2], %0 {strides = array<i32>} : memref<136x256xbf16, #tpu.memory_space<vmem>>, vector<1x256xbf16>,
    %c67 = arith.constant 67 : index
    %c0_3 = arith.constant 0 : index
    %4 = vector.load %arg16[%c67, %c0_3] : memref<136x256xbf16, #tpu.memory_space<vmem>>, vector<1x256xbf16>
    tpu.vector_store %arg16[%c67, %c0_3], %0 {strides = array<i32>} : memref<136x256xbf16, #tpu.memory_space<vmem>>, vector<1x256xbf16>,
    %c68 = arith.constant 68 : index
    %c0_4 = arith.constant 0 : index
    %5 = vector.load %arg16[%c68, %c0_4] : memref<136x256xbf16, #tpu.memory_space<vmem>>, vector<1x256xbf16>
    tpu.vector_store %arg16[%c68, %c0_4], %0 {strides = array<i32>} : memref<136x256xbf16, #tpu.memory_space<vmem>>, vector<1x256xbf16>,
    %c101 = arith.constant 101 : index
    %c0_5 = arith.constant 0 : index
    %6 = vector.load %arg16[%c101, %c0_5] : memref<136x256xbf16, #tpu.memory_space<vmem>>, vector<1x256xbf16>
    tpu.vector_store %arg16[%c101, %c0_5], %0 {strides = array<i32>} : memref<136x256xbf16, #tpu.memory_space<vmem>>, vector<1x256xbf16>,
    %c102 = arith.constant 102 : index
    %c0_6 = arith.constant 0 : index
    %7 = vector.load %arg16[%c102, %c0_6] : memref<136x256xbf16, #tpu.memory_space<vmem>>, vector<1x256xbf16>
    tpu.vector_store %arg16[%c102, %c0_6], %0 {strides = array<i32>} : memref<136x256xbf16, #tpu.memory_space<vmem>>, vector<1x256xbf16>,
    %c135 = arith.constant 135 : index
    %c0_7 = arith.constant 0 : index
    %8 = vector.load %arg16[%c135, %c0_7] : memref<136x256xbf16, #tpu.memory_space<vmem>>, vector<1x256xbf16>
    tpu.vector_store %arg16[%c135, %c0_7], %0 {strides = array<i32>} : memref<136x256xbf16, #tpu.memory_space<vmem>>, vector<1x256xbf16>,
    %c0_8 = arith.constant 0 : index
    %c0_9 = arith.constant 0 : index
    %9 = vector.load %arg1[%c0_8, %c0_9] : memref<64x128xbf16, #tpu.memory_space<vmem>>, vector<64x128xbf16>
    %c0_10 = arith.constant 0 : index
    %c0_11 = arith.constant 0 : index
    %10 = vector.load %arg2[%c0_10, %c0_11] : memref<128x512xbf16, #tpu.memory_space<vmem>>, vector<128x512xbf16>
    %cst_12 = arith.constant dense<0.000000e+00> : vector<64x512xf32>
    %11 = tpu.matmul %9, %10, %cst_12 {dimension_numbers = #tpu.dot_dimension_numbers<[1], [0], [0], [1], [0, 0, 1, 1], [], []>} : vector<64x128xbf16>, vector<128x512xbf16>, vector<64x512xf32> -> vector<64x512xf32>
    %12 = vector.extract_strided_slice %11 {offsets = [0, 0], sizes = [64, 256], strides = [1, 1]} : vector<64x512xf32> to vector<64x256xf32>
    %13 = arith.truncf %12 : vector<64x256xf32> to vector<64x256xbf16>
    %14 = vector.extract_strided_slice %11 {offsets = [0, 256], sizes = [64, 256], strides = [1, 1]} : vector<64x512xf32> to vector<64x256xf32>
    %15 = arith.truncf %14 : vector<64x256xf32> to vector<64x256xbf16>
    %c0_13 = arith.constant 0 : index
    %c0_14 = arith.constant 0 : index
    %16 = vector.load %arg3[%c0_13, %c0_14] : memref<128x64xbf16, #tpu.memory_space<vmem>>, vector<128x64xbf16>
    %cst_15 = arith.constant dense<0.000000e+00> : vector<128x256xf32>
    %17 = tpu.matmul %16, %13, %cst_15 {dimension_numbers = #tpu.dot_dimension_numbers<[1], [0], [0], [1], [0, 0, 1, 1], [], []>} : vector<128x64xbf16>, vector<64x256xbf16>, vector<128x256xf32> -> vector<128x256xf32>
    %c0_16 = arith.constant 0 : index
    %c0_17 = arith.constant 0 : index
    %18 = vector.load %arg4[%c0_16, %c0_17] : memref<128x64xbf16, #tpu.memory_space<vmem>>, vector<128x64xbf16>
    %cst_18 = arith.constant dense<0.000000e+00> : vector<128x256xf32>
    %19 = tpu.matmul %18, %15, %cst_18 {dimension_numbers = #tpu.dot_dimension_numbers<[1], [0], [0], [1], [0, 0, 1, 1], [], []>} : vector<128x64xbf16>, vector<64x256xbf16>, vector<128x256xf32> -> vector<128x256xf32>
    %20 = arith.addf %17, %19 : vector<128x256xf32>
    %c0_19 = arith.constant 0 : index
    %c0_20 = arith.constant 0 : index
    %21 = vector.load %arg5[%c0_19, %c0_20] : memref<1x256xf32, #tpu.memory_space<vmem>>, vector<1x256xf32>
    %22 = vector.broadcast %21 : vector<1x256xf32> to vector<128x256xf32>
    %23 = arith.addf %20, %22 : vector<128x256xf32>
    %24 = vector.extract_strided_slice %23 {offsets = [0, 0], sizes = [32, 256], strides = [1, 1]} : vector<128x256xf32> to vector<32x256xf32>
    %25 = arith.truncf %24 : vector<32x256xf32> to vector<32x256xbf16>
    %c1 = arith.constant 1 : index
    %c0_21 = arith.constant 0 : index
    %26 = vector.load %arg16[%c1, %c0_21] : memref<136x256xbf16, #tpu.memory_space<vmem>>, vector<32x256xbf16>
    tpu.vector_store %arg16[%c1, %c0_21], %25 {strides = array<i32>} : memref<136x256xbf16, #tpu.memory_space<vmem>>, vector<32x256xbf16>,
    %27 = vector.extract_strided_slice %23 {offsets = [32, 0], sizes = [32, 256], strides = [1, 1]} : vector<128x256xf32> to vector<32x256xf32>
    %28 = arith.truncf %27 : vector<32x256xf32> to vector<32x256xbf16>
    %c35 = arith.constant 35 : index
    %c0_22 = arith.constant 0 : index
    %29 = vector.load %arg16[%c35, %c0_22] : memref<136x256xbf16, #tpu.memory_space<vmem>>, vector<32x256xbf16>
    tpu.vector_store %arg16[%c35, %c0_22], %28 {strides = array<i32>} : memref<136x256xbf16, #tpu.memory_space<vmem>>, vector<32x256xbf16>,
    %30 = vector.extract_strided_slice %23 {offsets = [64, 0], sizes = [32, 256], strides = [1, 1]} : vector<128x256xf32> to vector<32x256xf32>
    %31 = arith.truncf %30 : vector<32x256xf32> to vector<32x256xbf16>
    %c69 = arith.constant 69 : index
    %c0_23 = arith.constant 0 : index
    %32 = vector.load %arg16[%c69, %c0_23] : memref<136x256xbf16, #tpu.memory_space<vmem>>, vector<32x256xbf16>
    tpu.vector_store %arg16[%c69, %c0_23], %31 {strides = array<i32>} : memref<136x256xbf16, #tpu.memory_space<vmem>>, vector<32x256xbf16>,
    %33 = vector.extract_strided_slice %23 {offsets = [96, 0], sizes = [32, 256], strides = [1, 1]} : vector<128x256xf32> to vector<32x256xf32>
    %34 = arith.truncf %33 : vector<32x256xf32> to vector<32x256xbf16>
    %c103 = arith.constant 103 : index
    %c0_24 = arith.constant 0 : index
    %35 = vector.load %arg16[%c103, %c0_24] : memref<136x256xbf16, #tpu.memory_space<vmem>>, vector<32x256xbf16>
    tpu.vector_store %arg16[%c103, %c0_24], %34 {strides = array<i32>} : memref<136x256xbf16, #tpu.memory_space<vmem>>, vector<32x256xbf16>,
    %c0_25 = arith.constant 0 : index
    %c0_26 = arith.constant 0 : index
    %36 = vector.load %arg16[%c0_25, %c0_26] : memref<136x256xbf16, #tpu.memory_space<vmem>>, vector<134x256xbf16>
    %c0_27 = arith.constant 0 : index
    %c0_28 = arith.constant 0 : index
    %c0_29 = arith.constant 0 : index
    %37 = vector.load %arg6[%c0_27, %c0_28, %c0_29] : memref<3x256x128xbf16, #tpu.memory_space<vmem>>, vector<1x256x128xbf16>
    %38 = vector.shape_cast %37 : vector<1x256x128xbf16> to vector<256x128xbf16>
    %cst_30 = arith.constant dense<0.000000e+00> : vector<134x128xf32>
    %39 = tpu.matmul %36, %38, %cst_30 {dimension_numbers = #tpu.dot_dimension_numbers<[1], [0], [0], [1], [0, 0, 1, 1], [], []>} : vector<134x256xbf16>, vector<256x128xbf16>, vector<134x128xf32> -> vector<134x128xf32>
    %c1_31 = arith.constant 1 : index
    %c0_32 = arith.constant 0 : index
    %40 = vector.load %arg16[%c1_31, %c0_32] : memref<136x256xbf16, #tpu.memory_space<vmem>>, vector<134x256xbf16>
    %c1_33 = arith.constant 1 : index
    %c0_34 = arith.constant 0 : index
    %c0_35 = arith.constant 0 : index
    %41 = vector.load %arg6[%c1_33, %c0_34, %c0_35] : memref<3x256x128xbf16, #tpu.memory_space<vmem>>, vector<1x256x128xbf16>
    %42 = vector.shape_cast %41 : vector<1x256x128xbf16> to vector<256x128xbf16>
    %cst_36 = arith.constant dense<0.000000e+00> : vector<134x128xf32>
    %43 = tpu.matmul %40, %42, %cst_36 {dimension_numbers = #tpu.dot_dimension_numbers<[1], [0], [0], [1], [0, 0, 1, 1], [], []>} : vector<134x256xbf16>, vector<256x128xbf16>, vector<134x128xf32> -> vector<134x128xf32>
    %44 = arith.addf %39, %43 : vector<134x128xf32>
    %c2 = arith.constant 2 : index
    %c0_37 = arith.constant 0 : index
    %45 = vector.load %arg16[%c2, %c0_37] : memref<136x256xbf16, #tpu.memory_space<vmem>>, vector<134x256xbf16>
    %c2_38 = arith.constant 2 : index
    %c0_39 = arith.constant 0 : index
    %c0_40 = arith.constant 0 : index
    %46 = vector.load %arg6[%c2_38, %c0_39, %c0_40] : memref<3x256x128xbf16, #tpu.memory_space<vmem>>, vector<1x256x128xbf16>
    %47 = vector.shape_cast %46 : vector<1x256x128xbf16> to vector<256x128xbf16>
    %cst_41 = arith.constant dense<0.000000e+00> : vector<134x128xf32>
    %48 = tpu.matmul %45, %47, %cst_41 {dimension_numbers = #tpu.dot_dimension_numbers<[1], [0], [0], [1], [0, 0, 1, 1], [], []>} : vector<134x256xbf16>, vector<256x128xbf16>, vector<134x128xf32> -> vector<134x128xf32>
    %49 = arith.addf %44, %48 : vector<134x128xf32>
    %c0_42 = arith.constant 0 : index
    %c0_43 = arith.constant 0 : index
    %50 = vector.load %arg7[%c0_42, %c0_43] : memref<1x128xf32, #tpu.memory_space<vmem>>, vector<1x128xf32>
    %51 = vector.broadcast %50 : vector<1x128xf32> to vector<134x128xf32>
    %52 = arith.mulf %49, %51 : vector<134x128xf32>
    %c0_44 = arith.constant 0 : index
    %c0_45 = arith.constant 0 : index
    %53 = vector.load %arg8[%c0_44, %c0_45] : memref<1x128xf32, #tpu.memory_space<vmem>>, vector<1x128xf32>
    %54 = vector.broadcast %53 : vector<1x128xf32> to vector<134x128xf32>
    %55 = arith.addf %52, %54 : vector<134x128xf32>
    %cst_46 = arith.constant 0.000000e+00 : f32
    %56 = vector.broadcast %cst_46 : f32 to vector<134x128xf32>
    %57 = arith.maximumf %55, %56 : vector<134x128xf32>
    %58 = vector.extract_strided_slice %57 {offsets = [0, 0], sizes = [32, 128], strides = [1, 1]} : vector<134x128xf32> to vector<32x128xf32>
    %59 = arith.truncf %58 : vector<32x128xf32> to vector<32x128xbf16>
    %c1_47 = arith.constant 1 : index
    %c0_48 = arith.constant 0 : index
    %60 = vector.load %arg16[%c1_47, %c0_48] : memref<136x256xbf16, #tpu.memory_space<vmem>>, vector<32x128xbf16>
    tpu.vector_store %arg16[%c1_47, %c0_48], %59 {strides = array<i32>} : memref<136x256xbf16, #tpu.memory_space<vmem>>, vector<32x128xbf16>,
    %61 = vector.extract_strided_slice %57 {offsets = [34, 0], sizes = [32, 128], strides = [1, 1]} : vector<134x128xf32> to vector<32x128xf32>
    %62 = arith.truncf %61 : vector<32x128xf32> to vector<32x128xbf16>
    %c35_49 = arith.constant 35 : index
    %c0_50 = arith.constant 0 : index
    %63 = vector.load %arg16[%c35_49, %c0_50] : memref<136x256xbf16, #tpu.memory_space<vmem>>, vector<32x128xbf16>
    tpu.vector_store %arg16[%c35_49, %c0_50], %62 {strides = array<i32>} : memref<136x256xbf16, #tpu.memory_space<vmem>>, vector<32x128xbf16>,
    %64 = vector.extract_strided_slice %57 {offsets = [68, 0], sizes = [32, 128], strides = [1, 1]} : vector<134x128xf32> to vector<32x128xf32>
    %65 = arith.truncf %64 : vector<32x128xf32> to vector<32x128xbf16>
    %c69_51 = arith.constant 69 : index
    %c0_52 = arith.constant 0 : index
    %66 = vector.load %arg16[%c69_51, %c0_52] : memref<136x256xbf16, #tpu.memory_space<vmem>>, vector<32x128xbf16>
    tpu.vector_store %arg16[%c69_51, %c0_52], %65 {strides = array<i32>} : memref<136x256xbf16, #tpu.memory_space<vmem>>, vector<32x128xbf16>,
    %67 = vector.extract_strided_slice %57 {offsets = [102, 0], sizes = [32, 128], strides = [1, 1]} : vector<134x128xf32> to vector<32x128xf32>
    %68 = arith.truncf %67 : vector<32x128xf32> to vector<32x128xbf16>
    %c103_53 = arith.constant 103 : index
    %c0_54 = arith.constant 0 : index
    %69 = vector.load %arg16[%c103_53, %c0_54] : memref<136x256xbf16, #tpu.memory_space<vmem>>, vector<32x128xbf16>
    tpu.vector_store %arg16[%c103_53, %c0_54], %68 {strides = array<i32>} : memref<136x256xbf16, #tpu.memory_space<vmem>>, vector<32x128xbf16>,
    %c0_55 = arith.constant 0 : index
    %c0_56 = arith.constant 0 : index
    %70 = vector.load %arg16[%c0_55, %c0_56] : memref<136x256xbf16, #tpu.memory_space<vmem>>, vector<134x128xbf16>
    %c0_57 = arith.constant 0 : index
    %c0_58 = arith.constant 0 : index
    %c0_59 = arith.constant 0 : index
    %71 = vector.load %arg9[%c0_57, %c0_58, %c0_59] : memref<3x128x128xbf16, #tpu.memory_space<vmem>>, vector<1x128x128xbf16>
    %72 = vector.shape_cast %71 : vector<1x128x128xbf16> to vector<128x128xbf16>
    %cst_60 = arith.constant dense<0.000000e+00> : vector<134x128xf32>
    %73 = tpu.matmul %70, %72, %cst_60 {dimension_numbers = #tpu.dot_dimension_numbers<[1], [0], [0], [1], [0, 0, 1, 1], [], []>} : vector<134x128xbf16>, vector<128x128xbf16>, vector<134x128xf32> -> vector<134x128xf32>
    %c1_61 = arith.constant 1 : index
    %c0_62 = arith.constant 0 : index
    %74 = vector.load %arg16[%c1_61, %c0_62] : memref<136x256xbf16, #tpu.memory_space<vmem>>, vector<134x128xbf16>
    %c1_63 = arith.constant 1 : index
    %c0_64 = arith.constant 0 : index
    %c0_65 = arith.constant 0 : index
    %75 = vector.load %arg9[%c1_63, %c0_64, %c0_65] : memref<3x128x128xbf16, #tpu.memory_space<vmem>>, vector<1x128x128xbf16>
    %76 = vector.shape_cast %75 : vector<1x128x128xbf16> to vector<128x128xbf16>
    %cst_66 = arith.constant dense<0.000000e+00> : vector<134x128xf32>
    %77 = tpu.matmul %74, %76, %cst_66 {dimension_numbers = #tpu.dot_dimension_numbers<[1], [0], [0], [1], [0, 0, 1, 1], [], []>} : vector<134x128xbf16>, vector<128x128xbf16>, vector<134x128xf32> -> vector<134x128xf32>
    %78 = arith.addf %73, %77 : vector<134x128xf32>
    %c2_67 = arith.constant 2 : index
    %c0_68 = arith.constant 0 : index
    %79 = vector.load %arg16[%c2_67, %c0_68] : memref<136x256xbf16, #tpu.memory_space<vmem>>, vector<134x128xbf16>
    %c2_69 = arith.constant 2 : index
    %c0_70 = arith.constant 0 : index
    %c0_71 = arith.constant 0 : index
    %80 = vector.load %arg9[%c2_69, %c0_70, %c0_71] : memref<3x128x128xbf16, #tpu.memory_space<vmem>>, vector<1x128x128xbf16>
    %81 = vector.shape_cast %80 : vector<1x128x128xbf16> to vector<128x128xbf16>
    %cst_72 = arith.constant dense<0.000000e+00> : vector<134x128xf32>
    %82 = tpu.matmul %79, %81, %cst_72 {dimension_numbers = #tpu.dot_dimension_numbers<[1], [0], [0], [1], [0, 0, 1, 1], [], []>} : vector<134x128xbf16>, vector<128x128xbf16>, vector<134x128xf32> -> vector<134x128xf32>
    %83 = arith.addf %78, %82 : vector<134x128xf32>
    %c0_73 = arith.constant 0 : index
    %c0_74 = arith.constant 0 : index
    %84 = vector.load %arg10[%c0_73, %c0_74] : memref<1x128xf32, #tpu.memory_space<vmem>>, vector<1x128xf32>
    %85 = vector.broadcast %84 : vector<1x128xf32> to vector<134x128xf32>
    %86 = arith.mulf %83, %85 : vector<134x128xf32>
    %c0_75 = arith.constant 0 : index
    %c0_76 = arith.constant 0 : index
    %87 = vector.load %arg11[%c0_75, %c0_76] : memref<1x128xf32, #tpu.memory_space<vmem>>, vector<1x128xf32>
    %88 = vector.broadcast %87 : vector<1x128xf32> to vector<134x128xf32>
    %89 = arith.addf %86, %88 : vector<134x128xf32>
    %cst_77 = arith.constant 0.000000e+00 : f32
    %90 = vector.broadcast %cst_77 : f32 to vector<134x128xf32>
    %91 = arith.maximumf %89, %90 : vector<134x128xf32>
    %92 = vector.extract_strided_slice %91 {offsets = [0, 0], sizes = [32, 128], strides = [1, 1]} : vector<134x128xf32> to vector<32x128xf32>
    %93 = arith.truncf %92 : vector<32x128xf32> to vector<32x128xbf16>
    %c1_78 = arith.constant 1 : index
    %c0_79 = arith.constant 0 : index
    %94 = vector.load %arg16[%c1_78, %c0_79] : memref<136x256xbf16, #tpu.memory_space<vmem>>, vector<32x128xbf16>
    tpu.vector_store %arg16[%c1_78, %c0_79], %93 {strides = array<i32>} : memref<136x256xbf16, #tpu.memory_space<vmem>>, vector<32x128xbf16>,
    %95 = vector.extract_strided_slice %91 {offsets = [34, 0], sizes = [32, 128], strides = [1, 1]} : vector<134x128xf32> to vector<32x128xf32>
    %96 = arith.truncf %95 : vector<32x128xf32> to vector<32x128xbf16>
    %c35_80 = arith.constant 35 : index
    %c0_81 = arith.constant 0 : index
    %97 = vector.load %arg16[%c35_80, %c0_81] : memref<136x256xbf16, #tpu.memory_space<vmem>>, vector<32x128xbf16>
    tpu.vector_store %arg16[%c35_80, %c0_81], %96 {strides = array<i32>} : memref<136x256xbf16, #tpu.memory_space<vmem>>, vector<32x128xbf16>,
    %98 = vector.extract_strided_slice %91 {offsets = [68, 0], sizes = [32, 128], strides = [1, 1]} : vector<134x128xf32> to vector<32x128xf32>
    %99 = arith.truncf %98 : vector<32x128xf32> to vector<32x128xbf16>
    %c69_82 = arith.constant 69 : index
    %c0_83 = arith.constant 0 : index
    %100 = vector.load %arg16[%c69_82, %c0_83] : memref<136x256xbf16, #tpu.memory_space<vmem>>, vector<32x128xbf16>
    tpu.vector_store %arg16[%c69_82, %c0_83], %99 {strides = array<i32>} : memref<136x256xbf16, #tpu.memory_space<vmem>>, vector<32x128xbf16>,
    %101 = vector.extract_strided_slice %91 {offsets = [102, 0], sizes = [32, 128], strides = [1, 1]} : vector<134x128xf32> to vector<32x128xf32>
    %102 = arith.truncf %101 : vector<32x128xf32> to vector<32x128xbf16>
    %c103_84 = arith.constant 103 : index
    %c0_85 = arith.constant 0 : index
    %103 = vector.load %arg16[%c103_84, %c0_85] : memref<136x256xbf16, #tpu.memory_space<vmem>>, vector<32x128xbf16>
    tpu.vector_store %arg16[%c103_84, %c0_85], %102 {strides = array<i32>} : memref<136x256xbf16, #tpu.memory_space<vmem>>, vector<32x128xbf16>,
    %c0_86 = arith.constant 0 : index
    %c0_87 = arith.constant 0 : index
    %104 = vector.load %arg16[%c0_86, %c0_87] : memref<136x256xbf16, #tpu.memory_space<vmem>>, vector<134x128xbf16>
    %c0_88 = arith.constant 0 : index
    %c0_89 = arith.constant 0 : index
    %c0_90 = arith.constant 0 : index
    %105 = vector.load %arg12[%c0_88, %c0_89, %c0_90] : memref<3x128x128xbf16, #tpu.memory_space<vmem>>, vector<1x128x128xbf16>
    %106 = vector.shape_cast %105 : vector<1x128x128xbf16> to vector<128x128xbf16>
    %cst_91 = arith.constant dense<0.000000e+00> : vector<134x128xf32>
    %107 = tpu.matmul %104, %106, %cst_91 {dimension_numbers = #tpu.dot_dimension_numbers<[1], [0], [0], [1], [0, 0, 1, 1], [], []>} : vector<134x128xbf16>, vector<128x128xbf16>, vector<134x128xf32> -> vector<134x128xf32>
    %c1_92 = arith.constant 1 : index
    %c0_93 = arith.constant 0 : index
    %108 = vector.load %arg16[%c1_92, %c0_93] : memref<136x256xbf16, #tpu.memory_space<vmem>>, vector<134x128xbf16>
    %c1_94 = arith.constant 1 : index
    %c0_95 = arith.constant 0 : index
    %c0_96 = arith.constant 0 : index
    %109 = vector.load %arg12[%c1_94, %c0_95, %c0_96] : memref<3x128x128xbf16, #tpu.memory_space<vmem>>, vector<1x128x128xbf16>
    %110 = vector.shape_cast %109 : vector<1x128x128xbf16> to vector<128x128xbf16>
    %cst_97 = arith.constant dense<0.000000e+00> : vector<134x128xf32>
    %111 = tpu.matmul %108, %110, %cst_97 {dimension_numbers = #tpu.dot_dimension_numbers<[1], [0], [0], [1], [0, 0, 1, 1], [], []>} : vector<134x128xbf16>, vector<128x128xbf16>, vector<134x128xf32> -> vector<134x128xf32>
    %112 = arith.addf %107, %111 : vector<134x128xf32>
    %c2_98 = arith.constant 2 : index
    %c0_99 = arith.constant 0 : index
    %113 = vector.load %arg16[%c2_98, %c0_99] : memref<136x256xbf16, #tpu.memory_space<vmem>>, vector<134x128xbf16>
    %c2_100 = arith.constant 2 : index
    %c0_101 = arith.constant 0 : index
    %c0_102 = arith.constant 0 : index
    %114 = vector.load %arg12[%c2_100, %c0_101, %c0_102] : memref<3x128x128xbf16, #tpu.memory_space<vmem>>, vector<1x128x128xbf16>
    %115 = vector.shape_cast %114 : vector<1x128x128xbf16> to vector<128x128xbf16>
    %cst_103 = arith.constant dense<0.000000e+00> : vector<134x128xf32>
    %116 = tpu.matmul %113, %115, %cst_103 {dimension_numbers = #tpu.dot_dimension_numbers<[1], [0], [0], [1], [0, 0, 1, 1], [], []>} : vector<134x128xbf16>, vector<128x128xbf16>, vector<134x128xf32> -> vector<134x128xf32>
    %117 = arith.addf %112, %116 : vector<134x128xf32>
    %c0_104 = arith.constant 0 : index
    %c0_105 = arith.constant 0 : index
    %118 = vector.load %arg13[%c0_104, %c0_105] : memref<1x128xf32, #tpu.memory_space<vmem>>, vector<1x128xf32>
    %119 = vector.broadcast %118 : vector<1x128xf32> to vector<134x128xf32>
    %120 = arith.mulf %117, %119 : vector<134x128xf32>
    %c0_106 = arith.constant 0 : index
    %c0_107 = arith.constant 0 : index
    %121 = vector.load %arg14[%c0_106, %c0_107] : memref<1x128xf32, #tpu.memory_space<vmem>>, vector<1x128xf32>
    %122 = vector.broadcast %121 : vector<1x128xf32> to vector<134x128xf32>
    %123 = arith.addf %120, %122 : vector<134x128xf32>
    %cst_108 = arith.constant 0.000000e+00 : f32
    %124 = vector.broadcast %cst_108 : f32 to vector<134x128xf32>
    %125 = arith.maximumf %123, %124 : vector<134x128xf32>
    %126 = vector.extract_strided_slice %125 {offsets = [0, 0], sizes = [32, 128], strides = [1, 1]} : vector<134x128xf32> to vector<32x128xf32>
    %c0_109 = arith.constant 0 : index
    %c0_110 = arith.constant 0 : index
    %127 = vector.load %arg15[%c0_109, %c0_110] : memref<128x128xf32, #tpu.memory_space<vmem>>, vector<32x128xf32>
    tpu.vector_store %arg15[%c0_109, %c0_110], %126 {strides = array<i32>} : memref<128x128xf32, #tpu.memory_space<vmem>>, vector<32x128xf32>,
    %128 = vector.extract_strided_slice %125 {offsets = [34, 0], sizes = [32, 128], strides = [1, 1]} : vector<134x128xf32> to vector<32x128xf32>
    %c32 = arith.constant 32 : index
    %c0_111 = arith.constant 0 : index
    %129 = vector.load %arg15[%c32, %c0_111] : memref<128x128xf32, #tpu.memory_space<vmem>>, vector<32x128xf32>
    tpu.vector_store %arg15[%c32, %c0_111], %128 {strides = array<i32>} : memref<128x128xf32, #tpu.memory_space<vmem>>, vector<32x128xf32>,
    %130 = vector.extract_strided_slice %125 {offsets = [68, 0], sizes = [32, 128], strides = [1, 1]} : vector<134x128xf32> to vector<32x128xf32>
    %c64 = arith.constant 64 : index
    %c0_112 = arith.constant 0 : index
    %131 = vector.load %arg15[%c64, %c0_112] : memref<128x128xf32, #tpu.memory_space<vmem>>, vector<32x128xf32>
    tpu.vector_store %arg15[%c64, %c0_112], %130 {strides = array<i32>} : memref<128x128xf32, #tpu.memory_space<vmem>>, vector<32x128xf32>,
    %132 = vector.extract_strided_slice %125 {offsets = [102, 0], sizes = [32, 128], strides = [1, 1]} : vector<134x128xf32> to vector<32x128xf32>
    %c96 = arith.constant 96 : index
    %c0_113 = arith.constant 0 : index
    %133 = vector.load %arg15[%c96, %c0_113] : memref<128x128xf32, #tpu.memory_space<vmem>>, vector<32x128xf32>
    tpu.vector_store %arg15[%c96, %c0_113], %132 {strides = array<i32>} : memref<128x128xf32, #tpu.memory_space<vmem>>, vector<32x128xf32>,
    return
  }
  func.func @transform_0(%arg0: i32) -> (i32, i32) {
    %c0_i32 = arith.constant 0 : i32
    %c0_i32_0 = arith.constant 0 : i32
    return %arg0, %c0_i32 : i32, i32
  }
  func.func @transform_1(%arg0: i32) -> (i32, i32) {
    %c0_i32 = arith.constant 0 : i32
    %c0_i32_0 = arith.constant 0 : i32
    %c0_i32_1 = arith.constant 0 : i32
    return %c0_i32, %c0_i32_0 : i32, i32
  }
  func.func @transform_2(%arg0: i32) -> (i32, i32) {
    %c0_i32 = arith.constant 0 : i32
    %c0_i32_0 = arith.constant 0 : i32
    %c0_i32_1 = arith.constant 0 : i32
    return %c0_i32, %c0_i32_0 : i32, i32
  }
  func.func @transform_3(%arg0: i32) -> (i32, i32) {
    %c0_i32 = arith.constant 0 : i32
    %c0_i32_0 = arith.constant 0 : i32
    %c0_i32_1 = arith.constant 0 : i32
    return %c0_i32, %c0_i32_0 : i32, i32
  }
  func.func @transform_4(%arg0: i32) -> (i32, i32) {
    %c0_i32 = arith.constant 0 : i32
    %c0_i32_0 = arith.constant 0 : i32
    %c0_i32_1 = arith.constant 0 : i32
    return %c0_i32, %c0_i32_0 : i32, i32
  }
  func.func @transform_5(%arg0: i32) -> (i32, i32, i32) {
    %c0_i32 = arith.constant 0 : i32
    %c0_i32_0 = arith.constant 0 : i32
    %c0_i32_1 = arith.constant 0 : i32
    %c0_i32_2 = arith.constant 0 : i32
    return %c0_i32, %c0_i32_0, %c0_i32_1 : i32, i32, i32
  }
  func.func @transform_6(%arg0: i32) -> (i32, i32) {
    %c0_i32 = arith.constant 0 : i32
    %c0_i32_0 = arith.constant 0 : i32
    %c0_i32_1 = arith.constant 0 : i32
    return %c0_i32, %c0_i32_0 : i32, i32
  }
  func.func @transform_7(%arg0: i32) -> (i32, i32) {
    %c0_i32 = arith.constant 0 : i32
    %c0_i32_0 = arith.constant 0 : i32
    %c0_i32_1 = arith.constant 0 : i32
    return %c0_i32, %c0_i32_0 : i32, i32
  }
  func.func @transform_8(%arg0: i32) -> (i32, i32, i32) {
    %c0_i32 = arith.constant 0 : i32
    %c0_i32_0 = arith.constant 0 : i32
    %c0_i32_1 = arith.constant 0 : i32
    %c0_i32_2 = arith.constant 0 : i32
    return %c0_i32, %c0_i32_0, %c0_i32_1 : i32, i32, i32
  }
  func.func @transform_9(%arg0: i32) -> (i32, i32) {
    %c0_i32 = arith.constant 0 : i32
    %c0_i32_0 = arith.constant 0 : i32
    %c0_i32_1 = arith.constant 0 : i32
    return %c0_i32, %c0_i32_0 : i32, i32
  }
  func.func @transform_10(%arg0: i32) -> (i32, i32) {
    %c0_i32 = arith.constant 0 : i32
    %c0_i32_0 = arith.constant 0 : i32
    %c0_i32_1 = arith.constant 0 : i32
    return %c0_i32, %c0_i32_0 : i32, i32
  }
  func.func @transform_11(%arg0: i32) -> (i32, i32, i32) {
    %c0_i32 = arith.constant 0 : i32
    %c0_i32_0 = arith.constant 0 : i32
    %c0_i32_1 = arith.constant 0 : i32
    %c0_i32_2 = arith.constant 0 : i32
    return %c0_i32, %c0_i32_0, %c0_i32_1 : i32, i32, i32
  }
  func.func @transform_12(%arg0: i32) -> (i32, i32) {
    %c0_i32 = arith.constant 0 : i32
    %c0_i32_0 = arith.constant 0 : i32
    %c0_i32_1 = arith.constant 0 : i32
    return %c0_i32, %c0_i32_0 : i32, i32
  }
  func.func @transform_13(%arg0: i32) -> (i32, i32) {
    %c0_i32 = arith.constant 0 : i32
    %c0_i32_0 = arith.constant 0 : i32
    %c0_i32_1 = arith.constant 0 : i32
    return %c0_i32, %c0_i32_0 : i32, i32
  }
  func.func @transform_14(%arg0: i32) -> (i32, i32) {
    %c0_i32 = arith.constant 0 : i32
    %c0_i32_0 = arith.constant 0 : i32
    return %arg0, %c0_i32 : i32, i32
  }
}

</mosaic_0001>

<llo_original>
// kernel: decoder_block_forward.1
$region0: #{decoder_block_forward.1}
  #allocation0 [shape = 'u32[]', space=smem, size = 0x4, offset = 0x4, fixed_abs, tag = 'smem constant byte address 0x4 - core index']
  #allocation1 [shape = 'u32[144,128]{1,0:T(1,128)}', space=vmem, size = 0x12000, scoped, tag = 'internal scratch']
  #allocation2 [shape = 'bf16[136,256]{1,0:T(8,128)(2,1)}', space=vmem, size = 0x11000, scoped, tag = 'scratch operand']
  %s0 = inlined_call_operand.vmem [shape: bf16[256,128], index: 0, kind: input, shape index: {}]
  %s1 = inlined_call_operand.vmem [shape: bf16[128,512], index: 1, kind: input, shape index: {}]
  %s2 = inlined_call_operand.vmem [shape: bf16[128,64], index: 2, kind: input, shape index: {}]
  %s3 = inlined_call_operand.vmem [shape: bf16[128,64], index: 3, kind: input, shape index: {}]
  %s4 = inlined_call_operand.vmem [shape: f32[1,256], index: 4, kind: input, shape index: {}]
  %s5 = inlined_call_operand.vmem [shape: bf16[3,256,128], index: 5, kind: input, shape index: {}]
  %s6 = inlined_call_operand.vmem [shape: f32[1,128], index: 6, kind: input, shape index: {}]
  %s7 = inlined_call_operand.vmem [shape: f32[1,128], index: 7, kind: input, shape index: {}]
  %s8 = inlined_call_operand.vmem [shape: bf16[3,128,128], index: 8, kind: input, shape index: {}]
  %s9 = inlined_call_operand.vmem [shape: f32[1,128], index: 9, kind: input, shape index: {}]
  %s10 = inlined_call_operand.vmem [shape: f32[1,128], index: 10, kind: input, shape index: {}]
  %s11 = inlined_call_operand.vmem [shape: bf16[3,128,128], index: 11, kind: input, shape index: {}]
  %s12 = inlined_call_operand.vmem [shape: f32[1,128], index: 12, kind: input, shape index: {}]
  %s13 = inlined_call_operand.vmem [shape: f32[1,128], index: 13, kind: input, shape index: {}]
  %s14 = inlined_call_operand.vmem [shape: f32[512,128], index: 14, kind: output, shape index: {}]
  %s15 = sld [smem:[#allocation0]]
  $region89: #{decoder_block_forward.1} parent=0
    _
  %s17 = ssub.s32 1, %s15
  %s18 = scalar_select 0, %s17, %s15
  loop: start=0, step=1, limit=6
  $region2: #{decoder_block_forward.1} parent=0 // loop_pre_header
    _
  $region3: #{decoder_block_forward.1} parent=0 // loop_header
    %s20 = sphi 0, %s24
    %p21 = scmp.ge.s32.totalorder %s20, 6
    %s30 = sphi 0, %s32
    %s33 = sphi 0, %s30
    %s34 = sphi 0, %s33
    %s50 = sphi 0, %s34
    %s54 = sphi 0, %s54
    %s56 = sphi 0, %s54
    %s57 = sphi 0, %s56
    %s71 = sphi 0, %s57
    %s75 = sphi 0, %s75
    %s77 = sphi 0, %s75
    %s78 = sphi 0, %s77
    %s92 = sphi 0, %s78
    %s96 = sphi 0, %s96
    %s98 = sphi 0, %s96
    %s99 = sphi 0, %s98
    %s113 = sphi 0, %s99
    %s117 = sphi 0, %s117
    %s119 = sphi 0, %s117
    %s120 = sphi 0, %s119
    %s134 = sphi 0, %s120
    %s138 = sphi 0, %s138
    %s140 = sphi 0, %s138
    %s141 = sphi 0, %s140
    %s155 = sphi 0, %s141
    %s159 = sphi 0, %s159
    %s161 = sphi 0, %s159
    %s162 = sphi 0, %s161
    %s176 = sphi 0, %s162
    %s180 = sphi 0, %s180
    %s182 = sphi 0, %s180
    %s183 = sphi 0, %s182
    %s197 = sphi 0, %s183
    %s201 = sphi 0, %s201
    %s203 = sphi 0, %s201
    %s204 = sphi 0, %s203
    %s218 = sphi 0, %s204
    %s222 = sphi 0, %s222
    %s224 = sphi 0, %s222
    %s225 = sphi 0, %s224
    %s239 = sphi 0, %s225
    %s243 = sphi 0, %s243
    %s245 = sphi 0, %s243
    %s246 = sphi 0, %s245
    %s260 = sphi 0, %s246
    %s264 = sphi 0, %s264
    %s266 = sphi 0, %s264
    %s267 = sphi 0, %s266
    %s281 = sphi 0, %s267
    %s285 = sphi 0, %s285
    %s287 = sphi 0, %s285
    %s288 = sphi 0, %s287
    %s302 = sphi 0, %s288
    %s306 = sphi 0, %s306
    %s308 = sphi 0, %s306
    %s309 = sphi 0, %s308
    %s323 = sphi 0, %s309
    %s329 = sphi 0, %s331
    %s332 = sphi 0, %s329
    %s333 = sphi 0, %s332
    %s349 = sphi 0, %s333
  $region4: #{decoder_block_forward.1} parent=0 // loop_header_branch
    %23 = sbr.rel (%p21) target = $region8
  $region5: #{decoder_block_forward.1} parent=0 // loop_body
    %s25 = ssub.s32 %s20, 1
    %s26 = ssub.s32 %s20, 2
    %s27 = sadd.s32 %s20, 1
    %s28 = ssub.s32 %s20, %s27
    %p29 = scmp.eq.s32.totalorder %s28, 0
    %s31 = sadd.s32 %s30, 1
    %s32 = scalar_select %p29, %s30, %s31
    %p35 = pneg %p29
    %p36 = scmp.eq.s32.totalorder %s20, 3
    %p37 = por %p35, %p36
    %p38 = scmp.ne.s32.totalorder %s30, %s33
    %p39 = scmp.eq.s32.totalorder %s20, 0
    %p40 = por %p38, %p39
    %p41 = scmp.ne.s32.totalorder %s30, %s33
    %p42 = scmp.eq.s32.totalorder %s25, 3
    %p43 = por %p41, %p42
    %p44 = scmp.ne.s32.totalorder %s33, %s34
    %p45 = scmp.eq.s32.totalorder %s25, 0
    %p46 = por %p44, %p45
    %p47 = scmp.ne.s32.totalorder %s33, %s34
    %p48 = scmp.eq.s32.totalorder %s26, 3
    %p49 = por %p47, %p48
    %p51 = scmp.ne.s32.totalorder %s34, %s50
    %p52 = scmp.eq.s32.totalorder %s26, 0
    %p53 = por %p51, %p52
    %s55 = sadd.s32 %s54, 1
    %p58 = scmp.eq.s32.totalorder %s20, 3
    %p59 = scmp.ne.s32.totalorder %s54, %s56
    %p60 = scmp.eq.s32.totalorder %s20, 0
    %p61 = por %p59, %p60
    %p62 = scmp.ne.s32.totalorder %s54, %s56
    %p63 = scmp.eq.s32.totalorder %s25, 3
    %p64 = por %p62, %p63
    %p65 = scmp.ne.s32.totalorder %s56, %s57
    %p66 = scmp.eq.s32.totalorder %s25, 0
    %p67 = por %p65, %p66
    %p68 = scmp.ne.s32.totalorder %s56, %s57
    %p69 = scmp.eq.s32.totalorder %s26, 3
    %p70 = por %p68, %p69
    %p72 = scmp.ne.s32.totalorder %s57, %s71
    %p73 = scmp.eq.s32.totalorder %s26, 0
    %p74 = por %p72, %p73
    %s76 = sadd.s32 %s75, 1
    %p79 = scmp.eq.s32.totalorder %s20, 3
    %p80 = scmp.ne.s32.totalorder %s75, %s77
    %p81 = scmp.eq.s32.totalorder %s20, 0
    %p82 = por %p80, %p81
    %p83 = scmp.ne.s32.totalorder %s75, %s77
    %p84 = scmp.eq.s32.totalorder %s25, 3
    %p85 = por %p83, %p84
    %p86 = scmp.ne.s32.totalorder %s77, %s78
    %p87 = scmp.eq.s32.totalorder %s25, 0
    %p88 = por %p86, %p87
    %p89 = scmp.ne.s32.totalorder %s77, %s78
    %p90 = scmp.eq.s32.totalorder %s26, 3
    %p91 = por %p89, %p90
    %p93 = scmp.ne.s32.totalorder %s78, %s92
    %p94 = scmp.eq.s32.totalorder %s26, 0
    %p95 = por %p93, %p94
    %s97 = sadd.s32 %s96, 1
    %p100 = scmp.eq.s32.totalorder %s20, 3
    %p101 = scmp.ne.s32.totalorder %s96, %s98
    %p102 = scmp.eq.s32.totalorder %s20, 0
    %p103 = por %p101, %p102
    %p104 = scmp.ne.s32.totalorder %s96, %s98
    %p105 = scmp.eq.s32.totalorder %s25, 3
    %p106 = por %p104, %p105
    %p107 = scmp.ne.s32.totalorder %s98, %s99
    %p108 = scmp.eq.s32.totalorder %s25, 0
    %p109 = por %p107, %p108
    %p110 = scmp.ne.s32.totalorder %s98, %s99
    %p111 = scmp.eq.s32.totalorder %s26, 3
    %p112 = por %p110, %p111
    %p114 = scmp.ne.s32.totalorder %s99, %s113
    %p115 = scmp.eq.s32.totalorder %s26, 0
    %p116 = por %p114, %p115
    %s118 = sadd.s32 %s117, 1
    %p121 = scmp.eq.s32.totalorder %s20, 3
    %p122 = scmp.ne.s32.totalorder %s117, %s119
    %p123 = scmp.eq.s32.totalorder %s20, 0
    %p124 = por %p122, %p123
    %p125 = scmp.ne.s32.totalorder %s117, %s119
    %p126 = scmp.eq.s32.totalorder %s25, 3
    %p127 = por %p125, %p126
    %p128 = scmp.ne.s32.totalorder %s119, %s120
    %p129 = scmp.eq.s32.totalorder %s25, 0
    %p130 = por %p128, %p129
    %p131 = scmp.ne.s32.totalorder %s119, %s120
    %p132 = scmp.eq.s32.totalorder %s26, 3
    %p133 = por %p131, %p132
    %p135 = scmp.ne.s32.totalorder %s120, %s134
    %p136 = scmp.eq.s32.totalorder %s26, 0
    %p137 = por %p135, %p136
    %s139 = sadd.s32 %s138, 1
    %p142 = scmp.eq.s32.totalorder %s20, 3
    %p143 = scmp.ne.s32.totalorder %s138, %s140
    %p144 = scmp.eq.s32.totalorder %s20, 0
    %p145 = por %p143, %p144
    %p146 = scmp.ne.s32.totalorder %s138, %s140
    %p147 = scmp.eq.s32.totalorder %s25, 3
    %p148 = por %p146, %p147
    %p149 = scmp.ne.s32.totalorder %s140, %s141
    %p150 = scmp.eq.s32.totalorder %s25, 0
    %p151 = por %p149, %p150
    %p152 = scmp.ne.s32.totalorder %s140, %s141
    %p153 = scmp.eq.s32.totalorder %s26, 3
    %p154 = por %p152, %p153
    %p156 = scmp.ne.s32.totalorder %s141, %s155
    %p157 = scmp.eq.s32.totalorder %s26, 0
    %p158 = por %p156, %p157
    %s160 = sadd.s32 %s159, 1
    %p163 = scmp.eq.s32.totalorder %s20, 3
    %p164 = scmp.ne.s32.totalorder %s159, %s161
    %p165 = scmp.eq.s32.totalorder %s20, 0
    %p166 = por %p164, %p165
    %p167 = scmp.ne.s32.totalorder %s159, %s161
    %p168 = scmp.eq.s32.totalorder %s25, 3
    %p169 = por %p167, %p168
    %p170 = scmp.ne.s32.totalorder %s161, %s162
    %p171 = scmp.eq.s32.totalorder %s25, 0
    %p172 = por %p170, %p171
    %p173 = scmp.ne.s32.totalorder %s161, %s162
    %p174 = scmp.eq.s32.totalorder %s26, 3
    %p175 = por %p173, %p174
    %p177 = scmp.ne.s32.totalorder %s162, %s176
    %p178 = scmp.eq.s32.totalorder %s26, 0
    %p179 = por %p177, %p178
    %s181 = sadd.s32 %s180, 1
    %p184 = scmp.eq.s32.totalorder %s20, 3
    %p185 = scmp.ne.s32.totalorder %s180, %s182
    %p186 = scmp.eq.s32.totalorder %s20, 0
    %p187 = por %p185, %p186
    %p188 = scmp.ne.s32.totalorder %s180, %s182
    %p189 = scmp.eq.s32.totalorder %s25, 3
    %p190 = por %p188, %p189
    %p191 = scmp.ne.s32.totalorder %s182, %s183
    %p192 = scmp.eq.s32.totalorder %s25, 0
    %p193 = por %p191, %p192
    %p194 = scmp.ne.s32.totalorder %s182, %s183
    %p195 = scmp.eq.s32.totalorder %s26, 3
    %p196 = por %p194, %p195
    %p198 = scmp.ne.s32.totalorder %s183, %s197
    %p199 = scmp.eq.s32.totalorder %s26, 0
    %p200 = por %p198, %p199
    %s202 = sadd.s32 %s201, 1
    %p205 = scmp.eq.s32.totalorder %s20, 3
    %p206 = scmp.ne.s32.totalorder %s201, %s203
    %p207 = scmp.eq.s32.totalorder %s20, 0
    %p208 = por %p206, %p207
    %p209 = scmp.ne.s32.totalorder %s201, %s203
    %p210 = scmp.eq.s32.totalorder %s25, 3
    %p211 = por %p209, %p210
    %p212 = scmp.ne.s32.totalorder %s203, %s204
    %p213 = scmp.eq.s32.totalorder %s25, 0
    %p214 = por %p212, %p213
    %p215 = scmp.ne.s32.totalorder %s203, %s204
    %p216 = scmp.eq.s32.totalorder %s26, 3
    %p217 = por %p215, %p216
    %p219 = scmp.ne.s32.totalorder %s204, %s218
    %p220 = scmp.eq.s32.totalorder %s26, 0
    %p221 = por %p219, %p220
    %s223 = sadd.s32 %s222, 1
    %p226 = scmp.eq.s32.totalorder %s20, 3
    %p227 = scmp.ne.s32.totalorder %s222, %s224
    %p228 = scmp.eq.s32.totalorder %s20, 0
    %p229 = por %p227, %p228
    %p230 = scmp.ne.s32.totalorder %s222, %s224
    %p231 = scmp.eq.s32.totalorder %s25, 3
    %p232 = por %p230, %p231
    %p233 = scmp.ne.s32.totalorder %s224, %s225
    %p234 = scmp.eq.s32.totalorder %s25, 0
    %p235 = por %p233, %p234
    %p236 = scmp.ne.s32.totalorder %s224, %s225
    %p237 = scmp.eq.s32.totalorder %s26, 3
    %p238 = por %p236, %p237
    %p240 = scmp.ne.s32.totalorder %s225, %s239
    %p241 = scmp.eq.s32.totalorder %s26, 0
    %p242 = por %p240, %p241
    %s244 = sadd.s32 %s243, 1
    %p247 = scmp.eq.s32.totalorder %s20, 3
    %p248 = scmp.ne.s32.totalorder %s243, %s245
    %p249 = scmp.eq.s32.totalorder %s20, 0
    %p250 = por %p248, %p249
    %p251 = scmp.ne.s32.totalorder %s243, %s245
    %p252 = scmp.eq.s32.totalorder %s25, 3
    %p253 = por %p251, %p252
    %p254 = scmp.ne.s32.totalorder %s245, %s246
    %p255 = scmp.eq.s32.totalorder %s25, 0
    %p256 = por %p254, %p255
    %p257 = scmp.ne.s32.totalorder %s245, %s246
    %p258 = scmp.eq.s32.totalorder %s26, 3
    %p259 = por %p257, %p258
    %p261 = scmp.ne.s32.totalorder %s246, %s260
    %p262 = scmp.eq.s32.totalorder %s26, 0
    %p263 = por %p261, %p262
    %s265 = sadd.s32 %s264, 1
    %p268 = scmp.eq.s32.totalorder %s20, 3
    %p269 = scmp.ne.s32.totalorder %s264, %s266
    %p270 = scmp.eq.s32.totalorder %s20, 0
    %p271 = por %p269, %p270
    %p272 = scmp.ne.s32.totalorder %s264, %s266
    %p273 = scmp.eq.s32.totalorder %s25, 3
    %p274 = por %p272, %p273
    %p275 = scmp.ne.s32.totalorder %s266, %s267
    %p276 = scmp.eq.s32.totalorder %s25, 0
    %p277 = por %p275, %p276
    %p278 = scmp.ne.s32.totalorder %s266, %s267
    %p279 = scmp.eq.s32.totalorder %s26, 3
    %p280 = por %p278, %p279
    %p282 = scmp.ne.s32.totalorder %s267, %s281
    %p283 = scmp.eq.s32.totalorder %s26, 0
    %p284 = por %p282, %p283
    %s286 = sadd.s32 %s285, 1
    %p289 = scmp.eq.s32.totalorder %s20, 3
    %p290 = scmp.ne.s32.totalorder %s285, %s287
    %p291 = scmp.eq.s32.totalorder %s20, 0
    %p292 = por %p290, %p291
    %p293 = scmp.ne.s32.totalorder %s285, %s287
    %p294 = scmp.eq.s32.totalorder %s25, 3
    %p295 = por %p293, %p294
    %p296 = scmp.ne.s32.totalorder %s287, %s288
    %p297 = scmp.eq.s32.totalorder %s25, 0
    %p298 = por %p296, %p297
    %p299 = scmp.ne.s32.totalorder %s287, %s288
    %p300 = scmp.eq.s32.totalorder %s26, 3
    %p301 = por %p299, %p300
    %p303 = scmp.ne.s32.totalorder %s288, %s302
    %p304 = scmp.eq.s32.totalorder %s26, 0
    %p305 = por %p303, %p304
    %s307 = sadd.s32 %s306, 1
    %p310 = scmp.eq.s32.totalorder %s20, 3
    %p311 = scmp.ne.s32.totalorder %s306, %s308
    %p312 = scmp.eq.s32.totalorder %s20, 0
    %p313 = por %p311, %p312
    %p314 = scmp.ne.s32.totalorder %s306, %s308
    %p315 = scmp.eq.s32.totalorder %s25, 3
    %p316 = por %p314, %p315
    %p317 = scmp.ne.s32.totalorder %s308, %s309
    %p318 = scmp.eq.s32.totalorder %s25, 0
    %p319 = por %p317, %p318
    %p320 = scmp.ne.s32.totalorder %s308, %s309
    %p321 = scmp.eq.s32.totalorder %s26, 3
    %p322 = por %p320, %p321
    %p324 = scmp.ne.s32.totalorder %s309, %s323
    %p325 = scmp.eq.s32.totalorder %s26, 0
    %p326 = por %p324, %p325
    %s327 = ssub.s32 %s20, %s27
    %p328 = scmp.eq.s32.totalorder %s327, 0
    %s330 = sadd.s32 %s329, 1
    %s331 = scalar_select %p328, %s329, %s330
    %p334 = pneg %p328
    %p335 = scmp.eq.s32.totalorder %s20, 3
    %p336 = por %p334, %p335
    %p337 = scmp.ne.s32.totalorder %s329, %s332
    %p338 = scmp.eq.s32.totalorder %s20, 0
    %p339 = por %p337, %p338
    %p340 = scmp.ne.s32.totalorder %s329, %s332
    %p341 = scmp.eq.s32.totalorder %s25, 3
    %p342 = por %p340, %p341
    %p343 = scmp.ne.s32.totalorder %s332, %s333
    %p344 = scmp.eq.s32.totalorder %s25, 0
    %p345 = por %p343, %p344
    %p346 = scmp.ne.s32.totalorder %s332, %s333
    %p347 = scmp.eq.s32.totalorder %s26, 3
    %p348 = por %p346, %p347
    %p350 = scmp.ne.s32.totalorder %s333, %s349
    %p351 = scmp.eq.s32.totalorder %s26, 0
    %p352 = por %p350, %p351
    %p353 = scmp.le.s32.totalorder 1, %s20
    %p354 = scmp.lt.s32.totalorder %s20, 5
    %p355 = pnand %p353, %p354
    %p356 = pneg %p355
    // Predicated region
    $region9: #{decoder_block_forward.1} parent=5 // pred_check
      _
    $region10: #{decoder_block_forward.1} parent=5 // pred_check_branch
      %358 = sbr.rel (%p355) target = $region12
    $region11: #{decoder_block_forward.1} parent=5 // pred_region
      %s359 = ssub.s32 %s20, 1
      // Predicated region
      $region13: #{decoder_block_forward.1} parent=11 // pred_check
        %p360 = pneg %p67
      $region14: #{decoder_block_forward.1} parent=11 // pred_check_branch
        %362 = sbr.rel (%p360) target = $region16
      $region15: #{decoder_block_forward.1} parent=11 // pred_region
        _
      $region16: #{decoder_block_forward.1} parent=11 // pred_fallthru
        _
      // Predicated region
      $region17: #{decoder_block_forward.1} parent=11 // pred_check
        %p363 = pneg %p88
      $region18: #{decoder_block_forward.1} parent=11 // pred_check_branch
        %365 = sbr.rel (%p363) target = $region20
      $region19: #{decoder_block_forward.1} parent=11 // pred_region
        _
      $region20: #{decoder_block_forward.1} parent=11 // pred_fallthru
        _
      // Predicated region
      $region21: #{decoder_block_forward.1} parent=11 // pred_check
        %p366 = pneg %p109
      $region22: #{decoder_block_forward.1} parent=11 // pred_check_branch
        %368 = sbr.rel (%p366) target = $region24
      $region23: #{decoder_block_forward.1} parent=11 // pred_region
        _
      $region24: #{decoder_block_forward.1} parent=11 // pred_fallthru
        _
      // Predicated region
      $region25: #{decoder_block_forward.1} parent=11 // pred_check
        %p369 = pneg %p130
      $region26: #{decoder_block_forward.1} parent=11 // pred_check_branch
        %371 = sbr.rel (%p369) target = $region28
      $region27: #{decoder_block_forward.1} parent=11 // pred_region
        _
      $region28: #{decoder_block_forward.1} parent=11 // pred_fallthru
        _
      // Predicated region
      $region29: #{decoder_block_forward.1} parent=11 // pred_check
        %p372 = pneg %p151
      $region30: #{decoder_block_forward.1} parent=11 // pred_check_branch
        %374 = sbr.rel (%p372) target = $region32
      $region31: #{decoder_block_forward.1} parent=11 // pred_region
        _
      $region32: #{decoder_block_forward.1} parent=11 // pred_fallthru
        _
      // Predicated region
      $region33: #{decoder_block_forward.1} parent=11 // pred_check
        %p375 = pneg %p172
      $region34: #{decoder_block_forward.1} parent=11 // pred_check_branch
        %377 = sbr.rel (%p375) target = $region36
      $region35: #{decoder_block_forward.1} parent=11 // pred_region
        _
      $region36: #{decoder_block_forward.1} parent=11 // pred_fallthru
        _
      // Predicated region
      $region37: #{decoder_block_forward.1} parent=11 // pred_check
        %p378 = pneg %p193
      $region38: #{decoder_block_forward.1} parent=11 // pred_check_branch
        %380 = sbr.rel (%p378) target = $region40
      $region39: #{decoder_block_forward.1} parent=11 // pred_region
        _
      $region40: #{decoder_block_forward.1} parent=11 // pred_fallthru
        _
      // Predicated region
      $region41: #{decoder_block_forward.1} parent=11 // pred_check
        %p381 = pneg %p214
      $region42: #{decoder_block_forward.1} parent=11 // pred_check_branch
        %383 = sbr.rel (%p381) target = $region44
      $region43: #{decoder_block_forward.1} parent=11 // pred_region
        _
      $region44: #{decoder_block_forward.1} parent=11 // pred_fallthru
        _
      // Predicated region
      $region45: #{decoder_block_forward.1} parent=11 // pred_check
        %p384 = pneg %p235
      $region46: #{decoder_block_forward.1} parent=11 // pred_check_branch
        %386 = sbr.rel (%p384) target = $region48
      $region47: #{decoder_block_forward.1} parent=11 // pred_region
        _
      $region48: #{decoder_block_forward.1} parent=11 // pred_fallthru
        _
      // Predicated region
      $region49: #{decoder_block_forward.1} parent=11 // pred_check
        %p387 = pneg %p256
      $region50: #{decoder_block_forward.1} parent=11 // pred_check_branch
        %389 = sbr.rel (%p387) target = $region52
      $region51: #{decoder_block_forward.1} parent=11 // pred_region
        _
      $region52: #{decoder_block_forward.1} parent=11 // pred_fallthru
        _
      // Predicated region
      $region53: #{decoder_block_forward.1} parent=11 // pred_check
        %p390 = pneg %p277
      $region54: #{decoder_block_forward.1} parent=11 // pred_check_branch
        %392 = sbr.rel (%p390) target = $region56
      $region55: #{decoder_block_forward.1} parent=11 // pred_region
        _
      $region56: #{decoder_block_forward.1} parent=11 // pred_fallthru
        _
      // Predicated region
      $region57: #{decoder_block_forward.1} parent=11 // pred_check
        %p393 = pneg %p298
      $region58: #{decoder_block_forward.1} parent=11 // pred_check_branch
        %395 = sbr.rel (%p393) target = $region60
      $region59: #{decoder_block_forward.1} parent=11 // pred_region
        _
      $region60: #{decoder_block_forward.1} parent=11 // pred_fallthru
        _
      // Predicated region
      $region61: #{decoder_block_forward.1} parent=11 // pred_check
        %p396 = pneg %p319
      $region62: #{decoder_block_forward.1} parent=11 // pred_check_branch
        %398 = sbr.rel (%p396) target = $region64
      $region63: #{decoder_block_forward.1} parent=11 // pred_region
        _
      $region64: #{decoder_block_forward.1} parent=11 // pred_fallthru
        _
    $region12: #{decoder_block_forward.1} parent=5 // pred_fallthru
      _
    %p399 = scmp.lt.s32.totalorder %s20, 4
    // Predicated region
    $region65: #{decoder_block_forward.1} parent=5 // pred_check
      %p400 = pneg %p399
    $region66: #{decoder_block_forward.1} parent=5 // pred_check_branch
      %402 = sbr.rel (%p400) target = $region68
    $region67: #{decoder_block_forward.1} parent=5 // pred_region
      // Predicated region
      $region69: #{decoder_block_forward.1} parent=67 // pred_check
        %p403 = pneg %p40
      $region70: #{decoder_block_forward.1} parent=67 // pred_check_branch
        %405 = sbr.rel (%p403) target = $region72
      $region71: #{decoder_block_forward.1} parent=67 // pred_region
        %s406 = smul.u32 8, %s20
        %p407 = scmp.lt.s32.totalorder %s406, 31
        %s408 = scalar_select %p407, %s406, 31
        %s409 = smul.addr %s408, 4
        %s410 = scalar_lea.vmem %s0, %s409
        %s411 = smul.u32 8, %s20
      $region72: #{decoder_block_forward.1} parent=67 // pred_fallthru
        _
    $region68: #{decoder_block_forward.1} parent=5 // pred_fallthru
      _
    %p412 = scmp.le.s32.totalorder 1, %s20
    %p413 = scmp.lt.s32.totalorder %s20, 5
    %p414 = pnand %p412, %p413
    %p415 = pneg %p414
    // Predicated region
    $region73: #{decoder_block_forward.1} parent=5 // pred_check
      _
    $region74: #{decoder_block_forward.1} parent=5 // pred_check_branch
      %417 = sbr.rel (%p414) target = $region76
    $region75: #{decoder_block_forward.1} parent=5 // pred_region
      %s418 = ssub.s32 %s20, 1
      %s419 = smul.u32 8, %s25
      %p420 = scmp.lt.s32.totalorder %s419, 31
      %s421 = scalar_select %p420, %s419, 31
      %s422 = smul.addr %s421, 4
      %s423 = scalar_lea.vmem %s0, %s422
      %p424 = pneg %p46
      %p425 = pneg %p43
      %p426 = pneg %p67
      %p427 = pneg %p64
      %p428 = pneg %p88
      %p429 = pneg %p85
      %p430 = pneg %p109
      %p431 = pneg %p106
      %p432 = pneg %p130
      %p433 = pneg %p127
      %p434 = pneg %p151
      %p435 = pneg %p148
      %p436 = pneg %p172
      %p437 = pneg %p169
      %p438 = pneg %p193
      %p439 = pneg %p190
      %p440 = pneg %p214
      %p441 = pneg %p211
      %p442 = pneg %p235
      %p443 = pneg %p232
      %p444 = pneg %p256
      %p445 = pneg %p253
      %p446 = pneg %p277
      %p447 = pneg %p274
      %p448 = pneg %p298
      %p449 = pneg %p295
      %p450 = pneg %p319
      %p451 = pneg %p316
      %p452 = pneg %p345
      %p453 = pneg %p342
      %s454 = smul.u32 16, %s25
      %p455 = scmp.lt.s32.totalorder %s454, 63
      %s456 = scalar_select %p455, %s454, 63
      %s457 = smul.addr %s456, 8
      %s458 = scalar_lea.vmem %s14, %s457
      %s459 = smul.u32 8, %s25
      %p460 = scmp.lt.s32.totalorder %s459, 31
      %s461 = scalar_select %p460, %s459, 31
      %s462 = smul.addr %s461, 4
      %s463 = scalar_lea.vmem %s0, %s462
      %s464 = smul.u32 8, %s25
      %s465 = smul.u32 16, %s25
      %p466 = scmp.lt.s32.totalorder %s465, 63
      %s467 = scalar_select %p466, %s465, 63
      %s468 = smul.addr %s467, 8
      %s469 = scalar_lea.vmem %s14, %s468
      %s470 = smul.u32 16, %s25
      %vm472 = vcmask 1040384
      %vm473 = vsmask.f32 256
      %vm474 = vmand %vm472, %vm473
      %vm475 = vcmask 1044484
      %vm476 = vsmask.f32 4352
      %vm477 = vmand %vm475, %vm476
      %vm478 = vmor %vm477, %vm474
      %v479 = vld [vmem:[#allocation2] sm:$0x11]
      %v480 = vsel %vm478, 0, %v479
      %481 = vst [vmem:[#allocation2] sm:$0x11] %v480
      %vm482 = vsmask.f32 7938
      %vm483 = vmand %vm472, %vm482
      %vm484 = vsmask.f32 7954
      %vm485 = vmand %vm475, %vm484
      %vm486 = vmor %vm485, %vm483
      %v487 = vld [vmem:[#allocation2 + $0x20] sm:$0x11]
      %v488 = vsel %vm486, 0, %v487
      %489 = vst [vmem:[#allocation2 + $0x20] sm:$0x11] %v488
      %vm490 = vcmask 1041409
      %vm491 = vsmask.f32 1280
      %vm492 = vmand %vm490, %vm491
      %vm493 = vcmask 1045509
      %vm494 = vsmask.f32 5376
      %vm495 = vmand %vm493, %vm494
      %vm496 = vmor %vm495, %vm492
      %v497 = vld [vmem:[#allocation2 + $0x20] sm:$0x22]
      %v498 = vsel %vm496, 0, %v497
      %499 = vst [vmem:[#allocation2 + $0x20] sm:$0x22] %v498
      %vm500 = vsmask.f32 7942
      %vm501 = vmand %vm490, %vm500
      %vm502 = vsmask.f32 7958
      %vm503 = vmand %vm493, %vm502
      %vm504 = vmor %vm503, %vm501
      %v505 = vld [vmem:[#allocation2 + $0x40] sm:$0x22]
      %v506 = vsel %vm504, 0, %v505
      %507 = vst [vmem:[#allocation2 + $0x40] sm:$0x22] %v506
      %vm508 = vcmask 1042434
      %vm509 = vsmask.f32 2304
      %vm510 = vmand %vm508, %vm509
      %vm511 = vcmask 1046534
      %vm512 = vsmask.f32 6400
      %vm513 = vmand %vm511, %vm512
      %vm514 = vmor %vm513, %vm510
      %v515 = vld [vmem:[#allocation2 + $0x40] sm:$0x44]
      %v516 = vsel %vm514, 0, %v515
      %517 = vst [vmem:[#allocation2 + $0x40] sm:$0x44] %v516
      %vm518 = vsmask.f32 7946
      %vm519 = vmand %vm508, %vm518
      %vm520 = vsmask.f32 7962
      %vm521 = vmand %vm511, %vm520
      %vm522 = vmor %vm521, %vm519
      %v523 = vld [vmem:[#allocation2 + $0x60] sm:$0x44]
      %v524 = vsel %vm522, 0, %v523
      %525 = vst [vmem:[#allocation2 + $0x60] sm:$0x44] %v524
      %vm526 = vcmask 1043459
      %vm527 = vsmask.f32 3328
      %vm528 = vmand %vm526, %vm527
      %vm529 = vcmask 1047559
      %vm530 = vsmask.f32 7424
      %vm531 = vmand %vm529, %vm530
      %vm532 = vmor %vm531, %vm528
      %v533 = vld [vmem:[#allocation2 + $0x60] sm:$0x88]
      %v534 = vsel %vm532, 0, %v533
      %535 = vst [vmem:[#allocation2 + $0x60] sm:$0x88] %v534
      %vm536 = vsmask.f32 7950
      %vm537 = vmand %vm526, %vm536
      %vm538 = vsmask.f32 7966
      %vm539 = vmand %vm529, %vm538
      %vm540 = vmor %vm539, %vm537
      %v541 = vld [vmem:[#allocation2 + $0x80] sm:$0x88]
      %v542 = vsel %vm540, 0, %v541
      %543 = vst [vmem:[#allocation2 + $0x80] sm:$0x88] %v542
      %v544 = vld [vmem:[%s463] sm:$0xf]
      %v545 = vld [vmem:[%s463 + $0x4] sm:$0xf]
      %v546 = vld [vmem:[%s463 + $0x8] sm:$0xf]
      %v547 = vld [vmem:[%s463 + $0xc] sm:$0xf]
      %v548 = vld [vmem:[%s463 + $0x10] sm:$0xf]
      %v549 = vld [vmem:[%s463 + $0x14] sm:$0xf]
      %v550 = vld [vmem:[%s463 + $0x18] sm:$0xf]
      %v551 = vld [vmem:[%s463 + $0x1c] sm:$0xf]
      %v552 = vld [vmem:[%s1] sm:$0xff]
      %v553 = vld [vmem:[%s1 + $0x8] sm:$0xff]
      %v554 = vld [vmem:[%s1 + $0x10] sm:$0xff]
      %v555 = vld [vmem:[%s1 + $0x18] sm:$0xff]
      %v556 = vld [vmem:[%s1 + $0x20] sm:$0xff]
      %v557 = vld [vmem:[%s1 + $0x28] sm:$0xff]
      %v558 = vld [vmem:[%s1 + $0x30] sm:$0xff]
      %v559 = vld [vmem:[%s1 + $0x38] sm:$0xff]
      %v560 = vld [vmem:[%s1 + $0x40] sm:$0xff]
      %v561 = vld [vmem:[%s1 + $0x48] sm:$0xff]
      %v562 = vld [vmem:[%s1 + $0x50] sm:$0xff]
      %v563 = vld [vmem:[%s1 + $0x58] sm:$0xff]
      %v564 = vld [vmem:[%s1 + $0x60] sm:$0xff]
      %v565 = vld [vmem:[%s1 + $0x68] sm:$0xff]
      %v566 = vld [vmem:[%s1 + $0x70] sm:$0xff]
      %v567 = vld [vmem:[%s1 + $0x78] sm:$0xff]
      %v568 = vld [vmem:[%s1 + $0x80] sm:$0xff]
      %v569 = vld [vmem:[%s1 + $0x88] sm:$0xff]
      %v570 = vld [vmem:[%s1 + $0x90] sm:$0xff]
      %v571 = vld [vmem:[%s1 + $0x98] sm:$0xff]
      %v572 = vld [vmem:[%s1 + $0xa0] sm:$0xff]
      %v573 = vld [vmem:[%s1 + $0xa8] sm:$0xff]
      %v574 = vld [vmem:[%s1 + $0xb0] sm:$0xff]
      %v575 = vld [vmem:[%s1 + $0xb8] sm:$0xff]
      %v576 = vld [vmem:[%s1 + $0xc0] sm:$0xff]
      %v577 = vld [vmem:[%s1 + $0xc8] sm:$0xff]
      %v578 = vld [vmem:[%s1 + $0xd0] sm:$0xff]
      %v579 = vld [vmem:[%s1 + $0xd8] sm:$0xff]
      %v580 = vld [vmem:[%s1 + $0xe0] sm:$0xff]
      %v581 = vld [vmem:[%s1 + $0xe8] sm:$0xff]
      %v582 = vld [vmem:[%s1 + $0xf0] sm:$0xff]
      %v583 = vld [vmem:[%s1 + $0xf8] sm:$0xff]
      %v592 = vunpack.c.l.b16 %v544
      %v593 = vunpack.c.l.b16 %v545
      %v594 = vunpack.c.l.b16 %v546
      %v595 = vunpack.c.l.b16 %v547
      %v596 = vunpack.c.l.b16 %v548
      %v597 = vunpack.c.l.b16 %v549
      %v598 = vunpack.c.l.b16 %v550
      %v599 = vunpack.c.l.b16 %v551
      %v600 = vpack.c.b16 %v593, %v592
      %v601 = vpack.c.b16 %v595, %v594
      %v602 = vpack.c.b16 %v597, %v596
      %v603 = vpack.c.b16 %v599, %v598
      %v640 = vunpack.c.l.b16 %v552
      %v641 = vunpack.c.h.b16 %v552
      %v642 = vunpack.c.l.b16 %v553
      %v643 = vunpack.c.h.b16 %v553
      %v644 = vunpack.c.l.b16 %v554
      %v645 = vunpack.c.h.b16 %v554
      %v646 = vunpack.c.l.b16 %v555
      %v647 = vunpack.c.h.b16 %v555
      %v648 = vunpack.c.l.b16 %v556
      %v649 = vunpack.c.h.b16 %v556
      %v650 = vunpack.c.l.b16 %v557
      %v651 = vunpack.c.h.b16 %v557
      %v652 = vunpack.c.l.b16 %v558
      %v653 = vunpack.c.h.b16 %v558
      %v654 = vunpack.c.l.b16 %v559
      %v655 = vunpack.c.h.b16 %v559
      %v656 = vunpack.c.l.b16 %v560
      %v657 = vunpack.c.h.b16 %v560
      %v658 = vunpack.c.l.b16 %v561
      %v659 = vunpack.c.h.b16 %v561
      %v660 = vunpack.c.l.b16 %v562
      %v661 = vunpack.c.h.b16 %v562
      %v662 = vunpack.c.l.b16 %v563
      %v663 = vunpack.c.h.b16 %v563
      %v664 = vunpack.c.l.b16 %v564
      %v665 = vunpack.c.h.b16 %v564
      %v666 = vunpack.c.l.b16 %v565
      %v667 = vunpack.c.h.b16 %v565
      %v668 = vunpack.c.l.b16 %v566
      %v669 = vunpack.c.h.b16 %v566
      %v670 = vunpack.c.l.b16 %v567
      %v671 = vunpack.c.h.b16 %v567
      %v672 = vunpack.c.l.b16 %v568
      %v673 = vunpack.c.h.b16 %v568
      %v674 = vunpack.c.l.b16 %v569
      %v675 = vunpack.c.h.b16 %v569
      %v676 = vunpack.c.l.b16 %v570
      %v677 = vunpack.c.h.b16 %v570
      %v678 = vunpack.c.l.b16 %v571
      %v679 = vunpack.c.h.b16 %v571
      %v680 = vunpack.c.l.b16 %v572
      %v681 = vunpack.c.h.b16 %v572
      %v682 = vunpack.c.l.b16 %v573
      %v683 = vunpack.c.h.b16 %v573
      %v684 = vunpack.c.l.b16 %v574
      %v685 = vunpack.c.h.b16 %v574
      %v686 = vunpack.c.l.b16 %v575
      %v687 = vunpack.c.h.b16 %v575
      %v688 = vunpack.c.l.b16 %v576
      %v689 = vunpack.c.h.b16 %v576
      %v690 = vunpack.c.l.b16 %v577
      %v691 = vunpack.c.h.b16 %v577
      %v692 = vunpack.c.l.b16 %v578
      %v693 = vunpack.c.h.b16 %v578
      %v694 = vunpack.c.l.b16 %v579
      %v695 = vunpack.c.h.b16 %v579
      %v696 = vunpack.c.l.b16 %v580
      %v697 = vunpack.c.h.b16 %v580
      %v698 = vunpack.c.l.b16 %v581
      %v699 = vunpack.c.h.b16 %v581
      %v700 = vunpack.c.l.b16 %v582
      %v701 = vunpack.c.h.b16 %v582
      %v702 = vunpack.c.l.b16 %v583
      %v703 = vunpack.c.h.b16 %v583
      %v704 = vpack.c.b16 %v644, %v640
      %v705 = vpack.c.b16 %v645, %v641
      %v706 = vpack.c.b16 %v646, %v642
      %v707 = vpack.c.b16 %v647, %v643
      %v708 = vpack.c.b16 %v652, %v648
      %v709 = vpack.c.b16 %v653, %v649
      %v710 = vpack.c.b16 %v654, %v650
      %v711 = vpack.c.b16 %v655, %v651
      %v712 = vpack.c.b16 %v660, %v656
      %v713 = vpack.c.b16 %v661, %v657
      %v714 = vpack.c.b16 %v662, %v658
      %v715 = vpack.c.b16 %v663, %v659
      %v716 = vpack.c.b16 %v668, %v664
      %v717 = vpack.c.b16 %v669, %v665
      %v718 = vpack.c.b16 %v670, %v666
      %v719 = vpack.c.b16 %v671, %v667
      %v720 = vpack.c.b16 %v676, %v672
      %v721 = vpack.c.b16 %v677, %v673
      %v722 = vpack.c.b16 %v678, %v674
      %v723 = vpack.c.b16 %v679, %v675
      %v724 = vpack.c.b16 %v684, %v680
      %v725 = vpack.c.b16 %v685, %v681
      %v726 = vpack.c.b16 %v686, %v682
      %v727 = vpack.c.b16 %v687, %v683
      %v728 = vpack.c.b16 %v692, %v688
      %v729 = vpack.c.b16 %v693, %v689
      %v730 = vpack.c.b16 %v694, %v690
      %v731 = vpack.c.b16 %v695, %v691
      %v732 = vpack.c.b16 %v700, %v696
      %v733 = vpack.c.b16 %v701, %v697
      %v734 = vpack.c.b16 %v702, %v698
      %v735 = vpack.c.b16 %v703, %v699
      %768 = vmatprep.subr.bf16.mxu0 %v705
      %769 = vmatpush1.bf16.msra.mxu0 %v704
      %770 = vmatprep.subr.bf16.mxu0 %v709
      %771 = vmatpush1.bf16.msra.mxu0 %v708
      %772 = vmatprep.subr.bf16.mxu0 %v713
      %773 = vmatpush1.bf16.msra.mxu0 %v712
      %774 = vmatprep.subr.bf16.mxu0 %v717
      %775 = vmatpush1.bf16.msra.mxu0 %v716
      %776 = vmatprep.subr.bf16.mxu0 %v721
      %777 = vmatpush1.bf16.msra.mxu0 %v720
      %778 = vmatprep.subr.bf16.mxu0 %v725
      %779 = vmatpush1.bf16.msra.mxu0 %v724
      %780 = vmatprep.subr.bf16.mxu0 %v729
      %781 = vmatpush1.bf16.msra.mxu0 %v728
      %782 = vmatprep.subr.bf16.mxu0 %v733
      %783 = vmatpush1.bf16.msra.mxu0 %v732
      %784 = vmatprep.subr.bf16.mxu0 0
      %785 = vmatpush1.bf16.msra.mxu0 0
      %786 = vmatprep.subr.bf16.mxu0 0
      %787 = vmatpush1.bf16.msra.mxu0 0
      %788 = vmatprep.subr.bf16.mxu0 0
      %789 = vmatpush1.bf16.msra.mxu0 0
      %790 = vmatprep.subr.bf16.mxu0 0
      %791 = vmatpush1.bf16.msra.mxu0 0
      %792 = vmatprep.subr.bf16.mxu0 0
      %793 = vmatpush1.bf16.msra.mxu0 0
      %794 = vmatprep.subr.bf16.mxu0 0
      %795 = vmatpush1.bf16.msra.mxu0 0
      %796 = vmatprep.subr.bf16.mxu0 0
      %797 = vmatpush1.bf16.msra.mxu0 0
      %798 = vmatprep.subr.bf16.mxu0 0
      %799 = vmatpush1.bf16.msra.mxu0 0
      %800 = vmatprep.mubr.bf16.mxu0 0
      %801 = vmatmul.mubr.bf16.gmra.mrb[0].mxu0 %v600
      %v802 = vpop.f32.mrb[0].mxu0
      %v803 = vadd.f32 0.0, %v802
      %v804 = vpop.f32.mrb[0].mxu0
      %v805 = vadd.f32 0.0, %v804
      %v806 = vpop.f32.mrb[0].mxu0
      %v807 = vadd.f32 0.0, %v806
      %v808 = vpop.f32.mrb[0].mxu0
      %v809 = vadd.f32 0.0, %v808
      %810 = vmatprep.mubr.bf16.mxu0 0
      %811 = vmatmul.mubr.bf16.gmra.mrb[0].mxu0 %v601
      %v812 = vpop.f32.mrb[0].mxu0
      %v813 = vadd.f32 0.0, %v812
      %v814 = vpop.f32.mrb[0].mxu0
      %v815 = vadd.f32 0.0, %v814
      %v816 = vpop.f32.mrb[0].mxu0
      %v817 = vadd.f32 0.0, %v816
      %v818 = vpop.f32.mrb[0].mxu0
      %v819 = vadd.f32 0.0, %v818
      %820 = vmatprep.mubr.bf16.mxu0 0
      %821 = vmatmul.mubr.bf16.gmra.mrb[0].mxu0 %v602
      %v822 = vpop.f32.mrb[0].mxu0
      %v823 = vadd.f32 0.0, %v822
      %v824 = vpop.f32.mrb[0].mxu0
      %v825 = vadd.f32 0.0, %v824
      %v826 = vpop.f32.mrb[0].mxu0
      %v827 = vadd.f32 0.0, %v826
      %v828 = vpop.f32.mrb[0].mxu0
      %v829 = vadd.f32 0.0, %v828
      %830 = vmatprep.mubr.bf16.mxu0 0
      %831 = vmatmul.mubr.bf16.gmra.mrb[0].mxu0 %v603
      %v832 = vpop.f32.mrb[0].mxu0
      %v833 = vadd.f32 0.0, %v832
      %v834 = vpop.f32.mrb[0].mxu0
      %v835 = vadd.f32 0.0, %v834
      %v836 = vpop.f32.mrb[0].mxu0
      %v837 = vadd.f32 0.0, %v836
      %v838 = vpop.f32.mrb[0].mxu0
      %v839 = vadd.f32 0.0, %v838
      %840 = vdwg.mxu0
      %841 = vmatprep.subr.bf16.mxu0 %v707
      %842 = vmatpush1.bf16.msra.mxu0 %v706
      %843 = vmatprep.subr.bf16.mxu0 %v711
      %844 = vmatpush1.bf16.msra.mxu0 %v710
      %845 = vmatprep.subr.bf16.mxu0 %v715
      %846 = vmatpush1.bf16.msra.mxu0 %v714
      %847 = vmatprep.subr.bf16.mxu0 %v719
      %848 = vmatpush1.bf16.msra.mxu0 %v718
      %849 = vmatprep.subr.bf16.mxu0 %v723
      %850 = vmatpush1.bf16.msra.mxu0 %v722
      %851 = vmatprep.subr.bf16.mxu0 %v727
      %852 = vmatpush1.bf16.msra.mxu0 %v726
      %853 = vmatprep.subr.bf16.mxu0 %v731
      %854 = vmatpush1.bf16.msra.mxu0 %v730
      %855 = vmatprep.subr.bf16.mxu0 %v735
      %856 = vmatpush1.bf16.msra.mxu0 %v734
      %857 = vmatprep.subr.bf16.mxu0 0
      %858 = vmatpush1.bf16.msra.mxu0 0
      %859 = vmatprep.subr.bf16.mxu0 0
      %860 = vmatpush1.bf16.msra.mxu0 0
      %861 = vmatprep.subr.bf16.mxu0 0
      %862 = vmatpush1.bf16.msra.mxu0 0
      %863 = vmatprep.subr.bf16.mxu0 0
      %864 = vmatpush1.bf16.msra.mxu0 0
      %865 = vmatprep.subr.bf16.mxu0 0
      %866 = vmatpush1.bf16.msra.mxu0 0
      %867 = vmatprep.subr.bf16.mxu0 0
      %868 = vmatpush1.bf16.msra.mxu0 0
      %869 = vmatprep.subr.bf16.mxu0 0
      %870 = vmatpush1.bf16.msra.mxu0 0
      %871 = vmatprep.subr.bf16.mxu0 0
      %872 = vmatpush1.bf16.msra.mxu0 0
      %873 = vmatprep.mubr.bf16.mxu0 0
      %874 = vmatmul.mubr.bf16.gmra.mrb[0].mxu0 %v600
      %v875 = vpop.f32.mrb[0].mxu0
      %v876 = vadd.f32 0.0, %v875
      %v877 = vpop.f32.mrb[0].mxu0
      %v878 = vadd.f32 0.0, %v877
      %v879 = vpop.f32.mrb[0].mxu0
      %v880 = vadd.f32 0.0, %v879
      %v881 = vpop.f32.mrb[0].mxu0
      %v882 = vadd.f32 0.0, %v881
      %883 = vmatprep.mubr.bf16.mxu0 0
      %884 = vmatmul.mubr.bf16.gmra.mrb[0].mxu0 %v601
      %v885 = vpop.f32.mrb[0].mxu0
      %v886 = vadd.f32 0.0, %v885
      %v887 = vpop.f32.mrb[0].mxu0
      %v888 = vadd.f32 0.0, %v887
      %v889 = vpop.f32.mrb[0].mxu0
      %v890 = vadd.f32 0.0, %v889
      %v891 = vpop.f32.mrb[0].mxu0
      %v892 = vadd.f32 0.0, %v891
      %893 = vmatprep.mubr.bf16.mxu0 0
      %894 = vmatmul.mubr.bf16.gmra.mrb[0].mxu0 %v602
      %v895 = vpop.f32.mrb[0].mxu0
      %v896 = vadd.f32 0.0, %v895
      %v897 = vpop.f32.mrb[0].mxu0
      %v898 = vadd.f32 0.0, %v897
      %v899 = vpop.f32.mrb[0].mxu0
      %v900 = vadd.f32 0.0, %v899
      %v901 = vpop.f32.mrb[0].mxu0
      %v902 = vadd.f32 0.0, %v901
      %903 = vmatprep.mubr.bf16.mxu0 0
      %904 = vmatmul.mubr.bf16.gmra.mrb[0].mxu0 %v603
      %v905 = vpop.f32.mrb[0].mxu0
      %v906 = vadd.f32 0.0, %v905
      %v907 = vpop.f32.mrb[0].mxu0
      %v908 = vadd.f32 0.0, %v907
      %v909 = vpop.f32.mrb[0].mxu0
      %v910 = vadd.f32 0.0, %v909
      %v911 = vpop.f32.mrb[0].mxu0
      %v912 = vadd.f32 0.0, %v911
      %913 = vdwg.mxu0
      %v914 = vpack.c.bf16 %v807, %v803
      %v915 = vpack.c.bf16 %v809, %v805
      %v916 = vpack.c.bf16 %v817, %v813
      %v917 = vpack.c.bf16 %v819, %v815
      %v918 = vpack.c.bf16 %v827, %v823
      %v919 = vpack.c.bf16 %v829, %v825
      %v920 = vpack.c.bf16 %v837, %v833
      %v921 = vpack.c.bf16 %v839, %v835
      %v922 = vpack.c.bf16 %v880, %v876
      %v923 = vpack.c.bf16 %v882, %v878
      %v924 = vpack.c.bf16 %v890, %v886
      %v925 = vpack.c.bf16 %v892, %v888
      %v926 = vpack.c.bf16 %v900, %v896
      %v927 = vpack.c.bf16 %v902, %v898
      %v928 = vpack.c.bf16 %v910, %v906
      %v929 = vpack.c.bf16 %v912, %v908
      %v930 = vld [vmem:[%s2] sm:$0xf]
      %v931 = vld [vmem:[%s2 + $0x4] sm:$0xf]
      %v932 = vld [vmem:[%s2 + $0x8] sm:$0xf]
      %v933 = vld [vmem:[%s2 + $0xc] sm:$0xf]
      %v934 = vld [vmem:[%s2 + $0x10] sm:$0xf]
      %v935 = vld [vmem:[%s2 + $0x14] sm:$0xf]
      %v936 = vld [vmem:[%s2 + $0x18] sm:$0xf]
      %v937 = vld [vmem:[%s2 + $0x1c] sm:$0xf]
      %v938 = vld [vmem:[%s2 + $0x20] sm:$0xf]
      %v939 = vld [vmem:[%s2 + $0x24] sm:$0xf]
      %v940 = vld [vmem:[%s2 + $0x28] sm:$0xf]
      %v941 = vld [vmem:[%s2 + $0x2c] sm:$0xf]
      %v942 = vld [vmem:[%s2 + $0x30] sm:$0xf]
      %v943 = vld [vmem:[%s2 + $0x34] sm:$0xf]
      %v944 = vld [vmem:[%s2 + $0x38] sm:$0xf]
      %v945 = vld [vmem:[%s2 + $0x3c] sm:$0xf]
      %v946 = vld [vmem:[%s3] sm:$0xf]
      %v947 = vld [vmem:[%s3 + $0x4] sm:$0xf]
      %v948 = vld [vmem:[%s3 + $0x8] sm:$0xf]
      %v949 = vld [vmem:[%s3 + $0xc] sm:$0xf]
      %v950 = vld [vmem:[%s3 + $0x10] sm:$0xf]
      %v951 = vld [vmem:[%s3 + $0x14] sm:$0xf]
      %v952 = vld [vmem:[%s3 + $0x18] sm:$0xf]
      %v953 = vld [vmem:[%s3 + $0x1c] sm:$0xf]
      %v954 = vld [vmem:[%s3 + $0x20] sm:$0xf]
      %v955 = vld [vmem:[%s3 + $0x24] sm:$0xf]
      %v956 = vld [vmem:[%s3 + $0x28] sm:$0xf]
      %v957 = vld [vmem:[%s3 + $0x2c] sm:$0xf]
      %v958 = vld [vmem:[%s3 + $0x30] sm:$0xf]
      %v959 = vld [vmem:[%s3 + $0x34] sm:$0xf]
      %v960 = vld [vmem:[%s3 + $0x38] sm:$0xf]
      %v961 = vld [vmem:[%s3 + $0x3c] sm:$0xf]
      %v978 = vunpack.c.l.b16 %v946
      %v979 = vunpack.c.l.b16 %v947
      %v980 = vunpack.c.l.b16 %v948
      %v981 = vunpack.c.l.b16 %v949
      %v982 = vunpack.c.l.b16 %v950
      %v983 = vunpack.c.l.b16 %v951
      %v984 = vunpack.c.l.b16 %v952
      %v985 = vunpack.c.l.b16 %v953
      %v986 = vunpack.c.l.b16 %v954
      %v987 = vunpack.c.l.b16 %v955
      %v988 = vunpack.c.l.b16 %v956
      %v989 = vunpack.c.l.b16 %v957
      %v990 = vunpack.c.l.b16 %v958
      %v991 = vunpack.c.l.b16 %v959
      %v992 = vunpack.c.l.b16 %v960
      %v993 = vunpack.c.l.b16 %v961
      %v994 = vpack.c.b16 %v979, %v978
      %v995 = vpack.c.b16 %v981, %v980
      %v996 = vpack.c.b16 %v983, %v982
      %v997 = vpack.c.b16 %v985, %v984
      %v998 = vpack.c.b16 %v987, %v986
      %v999 = vpack.c.b16 %v989, %v988
      %v1000 = vpack.c.b16 %v991, %v990
      %v1001 = vpack.c.b16 %v993, %v992
      %vm1002 = vcmask 523264
      %v1004 = vsel %vm1002, %v994, 0
      %v1007 = vsel %vm1002, %v995, 0
      %v1010 = vsel %vm1002, %v996, 0
      %v1013 = vsel %vm1002, %v997, 0
      %v1016 = vsel %vm1002, %v998, 0
      %v1019 = vsel %vm1002, %v999, 0
      %v1022 = vsel %vm1002, %v1000, 0
      %v1025 = vsel %vm1002, %v1001, 0
      %1027 = vmatprep.subr.bf16.mxu0 %v923
      %1028 = vmatpush1.bf16.msra.mxu0 %v922
      %1029 = vmatprep.subr.bf16.mxu0 %v925
      %1030 = vmatpush1.bf16.msra.mxu0 %v924
      %1031 = vmatprep.subr.bf16.mxu0 %v927
      %1032 = vmatpush1.bf16.msra.mxu0 %v926
      %1033 = vmatprep.subr.bf16.mxu0 %v929
      %1034 = vmatpush1.bf16.msra.mxu0 %v928
      %1035 = vmatprep.subr.bf16.mxu0 0
      %1036 = vmatpush1.bf16.msra.mxu0 0
      %1037 = vmatprep.subr.bf16.mxu0 0
      %1038 = vmatpush1.bf16.msra.mxu0 0
      %1039 = vmatprep.subr.bf16.mxu0 0
      %1040 = vmatpush1.bf16.msra.mxu0 0
      %1041 = vmatprep.subr.bf16.mxu0 0
      %1042 = vmatpush1.bf16.msra.mxu0 0
      %1043 = vmatprep.subr.bf16.mxu0 0
      %1044 = vmatpush1.bf16.msra.mxu0 0
      %1045 = vmatprep.subr.bf16.mxu0 0
      %1046 = vmatpush1.bf16.msra.mxu0 0
      %1047 = vmatprep.subr.bf16.mxu0 0
      %1048 = vmatpush1.bf16.msra.mxu0 0
      %1049 = vmatprep.subr.bf16.mxu0 0
      %1050 = vmatpush1.bf16.msra.mxu0 0
      %1051 = vmatprep.subr.bf16.mxu0 0
      %1052 = vmatpush1.bf16.msra.mxu0 0
      %1053 = vmatprep.subr.bf16.mxu0 0
      %1054 = vmatpush1.bf16.msra.mxu0 0
      %1055 = vmatprep.subr.bf16.mxu0 0
      %1056 = vmatpush1.bf16.msra.mxu0 0
      %1057 = vmatprep.subr.bf16.mxu0 0
      %1058 = vmatpush1.bf16.msra.mxu0 0
      %1059 = vmatprep.mubr.bf16.mxu0 0
      %1060 = vmatmul.mubr.bf16.gmra.mrb[0].mxu0 %v1004
      %v1061 = vpop.f32.mrb[0].mxu0
      %v1062 = vadd.f32 0.0, %v1061
      %v1063 = vpop.f32.mrb[0].mxu0
      %v1064 = vadd.f32 0.0, %v1063
      %v1065 = vpop.f32.mrb[0].mxu0
      %v1066 = vadd.f32 0.0, %v1065
      %v1067 = vpop.f32.mrb[0].mxu0
      %v1068 = vadd.f32 0.0, %v1067
      %1069 = vmatprep.mubr.bf16.mxu0 0
      %1070 = vmatmul.mubr.bf16.gmra.mrb[0].mxu0 %v1007
      %v1071 = vpop.f32.mrb[0].mxu0
      %v1072 = vadd.f32 0.0, %v1071
      %v1073 = vpop.f32.mrb[0].mxu0
      %v1074 = vadd.f32 0.0, %v1073
      %v1075 = vpop.f32.mrb[0].mxu0
      %v1076 = vadd.f32 0.0, %v1075
      %v1077 = vpop.f32.mrb[0].mxu0
      %v1078 = vadd.f32 0.0, %v1077
      %1079 = vmatprep.mubr.bf16.mxu0 0
      %1080 = vmatmul.mubr.bf16.gmra.mrb[0].mxu0 %v1010
      %v1081 = vpop.f32.mrb[0].mxu0
      %v1082 = vadd.f32 0.0, %v1081
      %v1083 = vpop.f32.mrb[0].mxu0
      %v1084 = vadd.f32 0.0, %v1083
      %v1085 = vpop.f32.mrb[0].mxu0
      %v1086 = vadd.f32 0.0, %v1085
      %v1087 = vpop.f32.mrb[0].mxu0
      %v1088 = vadd.f32 0.0, %v1087
      %1089 = vmatprep.mubr.bf16.mxu0 0
      %1090 = vmatmul.mubr.bf16.gmra.mrb[0].mxu0 %v1013
      %v1091 = vpop.f32.mrb[0].mxu0
      %v1092 = vadd.f32 0.0, %v1091
      %v1093 = vpop.f32.mrb[0].mxu0
      %v1094 = vadd.f32 0.0, %v1093
      %v1095 = vpop.f32.mrb[0].mxu0
      %v1096 = vadd.f32 0.0, %v1095
      %v1097 = vpop.f32.mrb[0].mxu0
      %v1098 = vadd.f32 0.0, %v1097
      %1099 = vmatprep.mubr.bf16.mxu0 0
      %1100 = vmatmul.mubr.bf16.gmra.mrb[0].mxu0 %v1016
      %v1101 = vpop.f32.mrb[0].mxu0
      %v1102 = vadd.f32 0.0, %v1101
      %v1103 = vpop.f32.mrb[0].mxu0
      %v1104 = vadd.f32 0.0, %v1103
      %v1105 = vpop.f32.mrb[0].mxu0
      %v1106 = vadd.f32 0.0, %v1105
      %v1107 = vpop.f32.mrb[0].mxu0
      %v1108 = vadd.f32 0.0, %v1107
      %1109 = vmatprep.mubr.bf16.mxu0 0
      %1110 = vmatmul.mubr.bf16.gmra.mrb[0].mxu0 %v1019
      %v1111 = vpop.f32.mrb[0].mxu0
      %v1112 = vadd.f32 0.0, %v1111
      %v1113 = vpop.f32.mrb[0].mxu0
      %v1114 = vadd.f32 0.0, %v1113
      %v1115 = vpop.f32.mrb[0].mxu0
      %v1116 = vadd.f32 0.0, %v1115
      %v1117 = vpop.f32.mrb[0].mxu0
      %v1118 = vadd.f32 0.0, %v1117
      %1119 = vmatprep.mubr.bf16.mxu0 0
      %1120 = vmatmul.mubr.bf16.gmra.mrb[0].mxu0 %v1022
      %v1121 = vpop.f32.mrb[0].mxu0
      %v1122 = vadd.f32 0.0, %v1121
      %v1123 = vpop.f32.mrb[0].mxu0
      %v1124 = vadd.f32 0.0, %v1123
      %v1125 = vpop.f32.mrb[0].mxu0
      %v1126 = vadd.f32 0.0, %v1125
      %v1127 = vpop.f32.mrb[0].mxu0
      %v1128 = vadd.f32 0.0, %v1127
      %1129 = vmatprep.mubr.bf16.mxu0 0
      %1130 = vmatmul.mubr.bf16.gmra.mrb[0].mxu0 %v1025
      %v1131 = vpop.f32.mrb[0].mxu0
      %v1132 = vadd.f32 0.0, %v1131
      %v1133 = vpop.f32.mrb[0].mxu0
      %v1134 = vadd.f32 0.0, %v1133
      %v1135 = vpop.f32.mrb[0].mxu0
      %v1136 = vadd.f32 0.0, %v1135
      %v1137 = vpop.f32.mrb[0].mxu0
      %v1138 = vadd.f32 0.0, %v1137
      %1139 = vdwg.mxu0
      %v1156 = vunpack.c.l.b16 %v930
      %v1157 = vunpack.c.l.b16 %v931
      %v1158 = vunpack.c.l.b16 %v932
      %v1159 = vunpack.c.l.b16 %v933
      %v1160 = vunpack.c.l.b16 %v934
      %v1161 = vunpack.c.l.b16 %v935
      %v1162 = vunpack.c.l.b16 %v936
      %v1163 = vunpack.c.l.b16 %v937
      %v1164 = vunpack.c.l.b16 %v938
      %v1165 = vunpack.c.l.b16 %v939
      %v1166 = vunpack.c.l.b16 %v940
      %v1167 = vunpack.c.l.b16 %v941
      %v1168 = vunpack.c.l.b16 %v942
      %v1169 = vunpack.c.l.b16 %v943
      %v1170 = vunpack.c.l.b16 %v944
      %v1171 = vunpack.c.l.b16 %v945
      %v1172 = vpack.c.b16 %v1157, %v1156
      %v1173 = vpack.c.b16 %v1159, %v1158
      %v1174 = vpack.c.b16 %v1161, %v1160
      %v1175 = vpack.c.b16 %v1163, %v1162
      %v1176 = vpack.c.b16 %v1165, %v1164
      %v1177 = vpack.c.b16 %v1167, %v1166
      %v1178 = vpack.c.b16 %v1169, %v1168
      %v1179 = vpack.c.b16 %v1171, %v1170
      %v1181 = vsel %vm1002, %v1172, 0
      %v1184 = vsel %vm1002, %v1173, 0
      %v1187 = vsel %vm1002, %v1174, 0
      %v1190 = vsel %vm1002, %v1175, 0
      %v1193 = vsel %vm1002, %v1176, 0
      %v1196 = vsel %vm1002, %v1177, 0
      %v1199 = vsel %vm1002, %v1178, 0
      %v1202 = vsel %vm1002, %v1179, 0
      %1204 = vmatprep.subr.bf16.mxu0 %v915
      %1205 = vmatpush1.bf16.msra.mxu0 %v914
      %1206 = vmatprep.subr.bf16.mxu0 %v917
      %1207 = vmatpush1.bf16.msra.mxu0 %v916
      %1208 = vmatprep.subr.bf16.mxu0 %v919
      %1209 = vmatpush1.bf16.msra.mxu0 %v918
      %1210 = vmatprep.subr.bf16.mxu0 %v921
      %1211 = vmatpush1.bf16.msra.mxu0 %v920
      %1212 = vmatprep.subr.bf16.mxu0 0
      %1213 = vmatpush1.bf16.msra.mxu0 0
      %1214 = vmatprep.subr.bf16.mxu0 0
      %1215 = vmatpush1.bf16.msra.mxu0 0
      %1216 = vmatprep.subr.bf16.mxu0 0
      %1217 = vmatpush1.bf16.msra.mxu0 0
      %1218 = vmatprep.subr.bf16.mxu0 0
      %1219 = vmatpush1.bf16.msra.mxu0 0
      %1220 = vmatprep.subr.bf16.mxu0 0
      %1221 = vmatpush1.bf16.msra.mxu0 0
      %1222 = vmatprep.subr.bf16.mxu0 0
      %1223 = vmatpush1.bf16.msra.mxu0 0
      %1224 = vmatprep.subr.bf16.mxu0 0
      %1225 = vmatpush1.bf16.msra.mxu0 0
      %1226 = vmatprep.subr.bf16.mxu0 0
      %1227 = vmatpush1.bf16.msra.mxu0 0
      %1228 = vmatprep.subr.bf16.mxu0 0
      %1229 = vmatpush1.bf16.msra.mxu0 0
      %1230 = vmatprep.subr.bf16.mxu0 0
      %1231 = vmatpush1.bf16.msra.mxu0 0
      %1232 = vmatprep.subr.bf16.mxu0 0
      %1233 = vmatpush1.bf16.msra.mxu0 0
      %1234 = vmatprep.subr.bf16.mxu0 0
      %1235 = vmatpush1.bf16.msra.mxu0 0
      %1236 = vmatprep.mubr.bf16.mxu0 0
      %1237 = vmatmul.mubr.bf16.gmra.mrb[0].mxu0 %v1181
      %v1238 = vpop.f32.mrb[0].mxu0
      %v1239 = vadd.f32 %v1062, %v1238
      %v1240 = vpop.f32.mrb[0].mxu0
      %v1241 = vadd.f32 %v1064, %v1240
      %v1242 = vpop.f32.mrb[0].mxu0
      %v1243 = vadd.f32 %v1066, %v1242
      %v1244 = vpop.f32.mrb[0].mxu0
      %v1245 = vadd.f32 %v1068, %v1244
      %1246 = vmatprep.mubr.bf16.mxu0 0
      %1247 = vmatmul.mubr.bf16.gmra.mrb[0].mxu0 %v1184
      %v1248 = vpop.f32.mrb[0].mxu0
      %v1249 = vadd.f32 %v1072, %v1248
      %v1250 = vpop.f32.mrb[0].mxu0
      %v1251 = vadd.f32 %v1074, %v1250
      %v1252 = vpop.f32.mrb[0].mxu0
      %v1253 = vadd.f32 %v1076, %v1252
      %v1254 = vpop.f32.mrb[0].mxu0
      %v1255 = vadd.f32 %v1078, %v1254
      %1256 = vmatprep.mubr.bf16.mxu0 0
      %1257 = vmatmul.mubr.bf16.gmra.mrb[0].mxu0 %v1187
      %v1258 = vpop.f32.mrb[0].mxu0
      %v1259 = vadd.f32 %v1082, %v1258
      %v1260 = vpop.f32.mrb[0].mxu0
      %v1261 = vadd.f32 %v1084, %v1260
      %v1262 = vpop.f32.mrb[0].mxu0
      %v1263 = vadd.f32 %v1086, %v1262
      %v1264 = vpop.f32.mrb[0].mxu0
      %v1265 = vadd.f32 %v1088, %v1264
      %1266 = vmatprep.mubr.bf16.mxu0 0
      %1267 = vmatmul.mubr.bf16.gmra.mrb[0].mxu0 %v1190
      %v1268 = vpop.f32.mrb[0].mxu0
      %v1269 = vadd.f32 %v1092, %v1268
      %v1270 = vpop.f32.mrb[0].mxu0
      %v1271 = vadd.f32 %v1094, %v1270
      %v1272 = vpop.f32.mrb[0].mxu0
      %v1273 = vadd.f32 %v1096, %v1272
      %v1274 = vpop.f32.mrb[0].mxu0
      %v1275 = vadd.f32 %v1098, %v1274
      %1276 = vmatprep.mubr.bf16.mxu0 0
      %1277 = vmatmul.mubr.bf16.gmra.mrb[0].mxu0 %v1193
      %v1278 = vpop.f32.mrb[0].mxu0
      %v1279 = vadd.f32 %v1102, %v1278
      %v1280 = vpop.f32.mrb[0].mxu0
      %v1281 = vadd.f32 %v1104, %v1280
      %v1282 = vpop.f32.mrb[0].mxu0
      %v1283 = vadd.f32 %v1106, %v1282
      %v1284 = vpop.f32.mrb[0].mxu0
      %v1285 = vadd.f32 %v1108, %v1284
      %1286 = vmatprep.mubr.bf16.mxu0 0
      %1287 = vmatmul.mubr.bf16.gmra.mrb[0].mxu0 %v1196
      %v1288 = vpop.f32.mrb[0].mxu0
      %v1289 = vadd.f32 %v1112, %v1288
      %v1290 = vpop.f32.mrb[0].mxu0
      %v1291 = vadd.f32 %v1114, %v1290
      %v1292 = vpop.f32.mrb[0].mxu0
      %v1293 = vadd.f32 %v1116, %v1292
      %v1294 = vpop.f32.mrb[0].mxu0
      %v1295 = vadd.f32 %v1118, %v1294
      %1296 = vmatprep.mubr.bf16.mxu0 0
      %1297 = vmatmul.mubr.bf16.gmra.mrb[0].mxu0 %v1199
      %v1298 = vpop.f32.mrb[0].mxu0
      %v1299 = vadd.f32 %v1122, %v1298
      %v1300 = vpop.f32.mrb[0].mxu0
      %v1301 = vadd.f32 %v1124, %v1300
      %v1302 = vpop.f32.mrb[0].mxu0
      %v1303 = vadd.f32 %v1126, %v1302
      %v1304 = vpop.f32.mrb[0].mxu0
      %v1305 = vadd.f32 %v1128, %v1304
      %1306 = vmatprep.mubr.bf16.mxu0 0
      %1307 = vmatmul.mubr.bf16.gmra.mrb[0].mxu0 %v1202
      %v1308 = vpop.f32.mrb[0].mxu0
      %v1309 = vadd.f32 %v1132, %v1308
      %v1310 = vpop.f32.mrb[0].mxu0
      %v1311 = vadd.f32 %v1134, %v1310
      %v1312 = vpop.f32.mrb[0].mxu0
      %v1313 = vadd.f32 %v1136, %v1312
      %v1314 = vpop.f32.mrb[0].mxu0
      %v1315 = vadd.f32 %v1138, %v1314
      %1316 = vdwg.mxu0
      %v1317 = vld [vmem:[%s4] sm:$0x3]
      %v1319 = vlaneseq
      %v1320 = vshrl.u32 %v1319, 7
      %v1321 = vsub.s32 0, %v1320
      %v1322 = vrot.slane %v1317, %v1321
      %v1323 = vlaneseq
      %v1324 = vshrl.u32 %v1323, 7
      %v1325 = vsub.s32 1, %v1324
      %v1326 = vrot.slane %v1317, %v1325
      %v1329 = vadd.f32 %v1239, %v1322
      %v1330 = vadd.f32 %v1241, %v1326
      %v1331 = vadd.f32 %v1243, %v1322
      %v1332 = vadd.f32 %v1245, %v1326
      %v1333 = vadd.f32 %v1249, %v1322
      %v1334 = vadd.f32 %v1251, %v1326
      %v1335 = vadd.f32 %v1253, %v1322
      %v1336 = vadd.f32 %v1255, %v1326
      %v1337 = vadd.f32 %v1259, %v1322
      %v1338 = vadd.f32 %v1261, %v1326
      %v1339 = vadd.f32 %v1263, %v1322
      %v1340 = vadd.f32 %v1265, %v1326
      %v1341 = vadd.f32 %v1269, %v1322
      %v1342 = vadd.f32 %v1271, %v1326
      %v1343 = vadd.f32 %v1273, %v1322
      %v1344 = vadd.f32 %v1275, %v1326
      %v1345 = vadd.f32 %v1279, %v1322
      %v1346 = vadd.f32 %v1281, %v1326
      %v1347 = vadd.f32 %v1283, %v1322
      %v1348 = vadd.f32 %v1285, %v1326
      %v1349 = vadd.f32 %v1289, %v1322
      %v1350 = vadd.f32 %v1291, %v1326
      %v1351 = vadd.f32 %v1293, %v1322
      %v1352 = vadd.f32 %v1295, %v1326
      %v1353 = vadd.f32 %v1299, %v1322
      %v1354 = vadd.f32 %v1301, %v1326
      %v1355 = vadd.f32 %v1303, %v1322
      %v1356 = vadd.f32 %v1305, %v1326
      %v1357 = vadd.f32 %v1309, %v1322
      %v1358 = vadd.f32 %v1311, %v1326
      %v1359 = vadd.f32 %v1313, %v1322
      %v1360 = vadd.f32 %v1315, %v1326
      %v1361 = vpack.c.bf16 %v1331, %v1329
      %v1362 = vpack.c.bf16 %v1332, %v1330
      %v1363 = vpack.c.bf16 %v1335, %v1333
      %v1364 = vpack.c.bf16 %v1336, %v1334
      %v1369 = vunpack.c.l.b16 %v1361
      %v1370 = vunpack.c.l.b16 %v1362
      %v1371 = vunpack.c.h.b16 %v1361
      %v1372 = vunpack.c.h.b16 %v1362
      %v1373 = vunpack.c.l.b16 %v1363
      %v1374 = vunpack.c.l.b16 %v1364
      %v1375 = vunpack.c.h.b16 %v1363
      %v1376 = vunpack.c.h.b16 %v1364
      %v1377 = vpack.c.b16 %v1370, %v1369
      %v1378 = vpack.c.b16 %v1372, %v1371
      %v1379 = vpack.c.b16 %v1374, %v1373
      %v1380 = vpack.c.b16 %v1376, %v1375
      %vm1381 = vsmask.f32 4368
      %vm1382 = vmor %vm473, %vm1381
      %v1384 = vshrl.u32 %v1377, 16
      %v1386 = vrot.slane %v1384, 7
      %v1387 = vshll.u32 %v1377, 16
      %v1389 = vor.u32 %v1386, %v1387
      %v1390 = vrot.slane %v1386, 4
      %v1392 = vshrl.u32 %v1378, 16
      %v1394 = vrot.slane %v1392, 7
      %v1395 = vshll.u32 %v1378, 16
      %v1397 = vor.u32 %v1394, %v1395
      %v1398 = vsel %vm1382, %v1390, %v1397
      %v1399 = vrot.slane %v1394, 4
      %v1401 = vshrl.u32 %v1379, 16
      %v1403 = vrot.slane %v1401, 7
      %v1404 = vshll.u32 %v1379, 16
      %v1406 = vor.u32 %v1403, %v1404
      %v1407 = vsel %vm1382, %v1399, %v1406
      %v1408 = vrot.slane %v1403, 4
      %v1410 = vshrl.u32 %v1380, 16
      %v1412 = vrot.slane %v1410, 7
      %v1413 = vshll.u32 %v1380, 16
      %v1415 = vor.u32 %v1412, %v1413
      %v1416 = vsel %vm1382, %v1408, %v1415
      %v1417 = vrot.slane %v1412, 4
      %vm1423 = vcmask 1043456
      %vm1424 = vmand %vm1423, %vm482
      %vm1425 = vcmask 1047556
      %vm1426 = vmand %vm1425, %vm484
      %vm1427 = vmor %vm1426, %vm1424
      %v1428 = vld [vmem:[#allocation2] sm:$0xff]
      %v1429 = vsel %vm1427, %v1389, %v1428
      %1430 = vst [vmem:[#allocation2] sm:$0xff] %v1429
      %1431 = vst [vmem:[#allocation2 + $0x8] sm:$0xff] %v1398
      %1432 = vst [vmem:[#allocation2 + $0x10] sm:$0xff] %v1407
      %1433 = vst [vmem:[#allocation2 + $0x18] sm:$0xff] %v1416
      %v1434 = vld [vmem:[#allocation2 + $0x20] sm:$0x11]
      %v1435 = vsel %vm478, %v1417, %v1434
      %1436 = vst [vmem:[#allocation2 + $0x20] sm:$0x11] %v1435
      %v1437 = vpack.c.bf16 %v1339, %v1337
      %v1438 = vpack.c.bf16 %v1340, %v1338
      %v1439 = vpack.c.bf16 %v1343, %v1341
      %v1440 = vpack.c.bf16 %v1344, %v1342
      %v1445 = vunpack.c.l.b16 %v1437
      %v1446 = vunpack.c.l.b16 %v1438
      %v1447 = vunpack.c.h.b16 %v1437
      %v1448 = vunpack.c.h.b16 %v1438
      %v1449 = vunpack.c.l.b16 %v1439
      %v1450 = vunpack.c.l.b16 %v1440
      %v1451 = vunpack.c.h.b16 %v1439
      %v1452 = vunpack.c.h.b16 %v1440
      %v1453 = vpack.c.b16 %v1446, %v1445
      %v1454 = vpack.c.b16 %v1448, %v1447
      %v1455 = vpack.c.b16 %v1450, %v1449
      %v1456 = vpack.c.b16 %v1452, %v1451
      %vm1457 = vsmask.f32 5392
      %vm1458 = vmor %vm491, %vm1457
      %v1460 = vshrl.u32 %v1453, 16
      %v1462 = vrot.slane %v1460, 6
      %v1463 = vshll.u32 %v1453, 16
      %v1465 = vrot.slane %v1463, 7
      %v1466 = vor.u32 %v1462, %v1465
      %v1467 = vrot.slane %v1466, 4
      %v1469 = vshrl.u32 %v1454, 16
      %v1471 = vrot.slane %v1469, 6
      %v1472 = vshll.u32 %v1454, 16
      %v1474 = vrot.slane %v1472, 7
      %v1475 = vor.u32 %v1471, %v1474
      %v1476 = vsel %vm1458, %v1467, %v1475
      %v1477 = vrot.slane %v1475, 4
      %v1479 = vshrl.u32 %v1455, 16
      %v1481 = vrot.slane %v1479, 6
      %v1482 = vshll.u32 %v1455, 16
      %v1484 = vrot.slane %v1482, 7
      %v1485 = vor.u32 %v1481, %v1484
      %v1486 = vsel %vm1458, %v1477, %v1485
      %v1487 = vrot.slane %v1485, 4
      %v1489 = vshrl.u32 %v1456, 16
      %v1491 = vrot.slane %v1489, 6
      %v1492 = vshll.u32 %v1456, 16
      %v1494 = vrot.slane %v1492, 7
      %v1495 = vor.u32 %v1491, %v1494
      %v1496 = vsel %vm1458, %v1487, %v1495
      %v1497 = vrot.slane %v1495, 4
      %vm1503 = vcmask 1043457
      %vm1504 = vmand %vm1503, %vm500
      %vm1505 = vcmask 1047557
      %vm1506 = vmand %vm1505, %vm502
      %vm1507 = vmor %vm1506, %vm1504
      %v1508 = vld [vmem:[#allocation2 + $0x20] sm:$0xee]
      %v1509 = vsel %vm1507, %v1466, %v1508
      %1510 = vst [vmem:[#allocation2 + $0x20] sm:$0xee] %v1509
      %1511 = vst [vmem:[#allocation2 + $0x28] sm:$0xff] %v1476
      %1512 = vst [vmem:[#allocation2 + $0x30] sm:$0xff] %v1486
      %1513 = vst [vmem:[#allocation2 + $0x38] sm:$0xff] %v1496
      %vm1514 = vcmask 1041408
      %vm1515 = vmand %vm1514, %vm491
      %vm1516 = vcmask 1045508
      %vm1517 = vmand %vm1516, %vm494
      %vm1518 = vmor %vm1517, %vm1515
      %v1519 = vld [vmem:[#allocation2 + $0x40] sm:$0x33]
      %v1520 = vsel %vm1518, %v1497, %v1519
      %1521 = vst [vmem:[#allocation2 + $0x40] sm:$0x33] %v1520
      %v1522 = vpack.c.bf16 %v1347, %v1345
      %v1523 = vpack.c.bf16 %v1348, %v1346
      %v1524 = vpack.c.bf16 %v1351, %v1349
      %v1525 = vpack.c.bf16 %v1352, %v1350
      %v1530 = vunpack.c.l.b16 %v1522
      %v1531 = vunpack.c.l.b16 %v1523
      %v1532 = vunpack.c.h.b16 %v1522
      %v1533 = vunpack.c.h.b16 %v1523
      %v1534 = vunpack.c.l.b16 %v1524
      %v1535 = vunpack.c.l.b16 %v1525
      %v1536 = vunpack.c.h.b16 %v1524
      %v1537 = vunpack.c.h.b16 %v1525
      %v1538 = vpack.c.b16 %v1531, %v1530
      %v1539 = vpack.c.b16 %v1533, %v1532
      %v1540 = vpack.c.b16 %v1535, %v1534
      %v1541 = vpack.c.b16 %v1537, %v1536
      %vm1542 = vsmask.f32 6416
      %vm1543 = vmor %vm509, %vm1542
      %v1545 = vshrl.u32 %v1538, 16
      %v1547 = vrot.slane %v1545, 5
      %v1548 = vshll.u32 %v1538, 16
      %v1550 = vrot.slane %v1548, 6
      %v1551 = vor.u32 %v1547, %v1550
      %v1552 = vrot.slane %v1551, 4
      %v1554 = vshrl.u32 %v1539, 16
      %v1556 = vrot.slane %v1554, 5
      %v1557 = vshll.u32 %v1539, 16
      %v1559 = vrot.slane %v1557, 6
      %v1560 = vor.u32 %v1556, %v1559
      %v1561 = vsel %vm1543, %v1552, %v1560
      %v1562 = vrot.slane %v1560, 4
      %v1564 = vshrl.u32 %v1540, 16
      %v1566 = vrot.slane %v1564, 5
      %v1567 = vshll.u32 %v1540, 16
      %v1569 = vrot.slane %v1567, 6
      %v1570 = vor.u32 %v1566, %v1569
      %v1571 = vsel %vm1543, %v1562, %v1570
      %v1572 = vrot.slane %v1570, 4
      %v1574 = vshrl.u32 %v1541, 16
      %v1576 = vrot.slane %v1574, 5
      %v1577 = vshll.u32 %v1541, 16
      %v1579 = vrot.slane %v1577, 6
      %v1580 = vor.u32 %v1576, %v1579
      %v1581 = vsel %vm1543, %v1572, %v1580
      %v1582 = vrot.slane %v1580, 4
      %vm1588 = vcmask 1043458
      %vm1589 = vmand %vm1588, %vm518
      %vm1590 = vcmask 1047558
      %vm1591 = vmand %vm1590, %vm520
      %vm1592 = vmor %vm1591, %vm1589
      %v1593 = vld [vmem:[#allocation2 + $0x40] sm:$0xcc]
      %v1594 = vsel %vm1592, %v1551, %v1593
      %1595 = vst [vmem:[#allocation2 + $0x40] sm:$0xcc] %v1594
      %1596 = vst [vmem:[#allocation2 + $0x48] sm:$0xff] %v1561
      %1597 = vst [vmem:[#allocation2 + $0x50] sm:$0xff] %v1571
      %1598 = vst [vmem:[#allocation2 + $0x58] sm:$0xff] %v1581
      %vm1599 = vcmask 1042432
      %vm1600 = vmand %vm1599, %vm509
      %vm1601 = vcmask 1046532
      %vm1602 = vmand %vm1601, %vm512
      %vm1603 = vmor %vm1602, %vm1600
      %v1604 = vld [vmem:[#allocation2 + $0x60] sm:$0x77]
      %v1605 = vsel %vm1603, %v1582, %v1604
      %1606 = vst [vmem:[#allocation2 + $0x60] sm:$0x77] %v1605
      %v1607 = vpack.c.bf16 %v1355, %v1353
      %v1608 = vpack.c.bf16 %v1356, %v1354
      %v1609 = vpack.c.bf16 %v1359, %v1357
      %v1610 = vpack.c.bf16 %v1360, %v1358
      %v1615 = vunpack.c.l.b16 %v1607
      %v1616 = vunpack.c.l.b16 %v1608
      %v1617 = vunpack.c.h.b16 %v1607
      %v1618 = vunpack.c.h.b16 %v1608
      %v1619 = vunpack.c.l.b16 %v1609
      %v1620 = vunpack.c.l.b16 %v1610
      %v1621 = vunpack.c.h.b16 %v1609
      %v1622 = vunpack.c.h.b16 %v1610
      %v1623 = vpack.c.b16 %v1616, %v1615
      %v1624 = vpack.c.b16 %v1618, %v1617
      %v1625 = vpack.c.b16 %v1620, %v1619
      %v1626 = vpack.c.b16 %v1622, %v1621
      %vm1627 = vsmask.f32 7440
      %vm1628 = vmor %vm527, %vm1627
      %v1630 = vshll.u32 %v1623, 16
      %v1632 = vrot.slane %v1630, 5
      %v1633 = vshrl.u32 %v1623, 16
      %v1635 = vrot.slane %v1633, 4
      %v1636 = vor.u32 %v1635, %v1632
      %v1637 = vrot.slane %v1636, 4
      %v1639 = vshll.u32 %v1624, 16
      %v1641 = vrot.slane %v1639, 5
      %v1642 = vsel %vm1628, %v1637, %v1641
      %v1643 = vshrl.u32 %v1624, 16
      %v1645 = vrot.slane %v1643, 4
      %v1646 = vor.u32 %v1645, %v1641
      %v1647 = vrot.slane %v1646, 4
      %v1649 = vshll.u32 %v1625, 16
      %v1651 = vrot.slane %v1649, 5
      %v1652 = vsel %vm1628, %v1647, %v1651
      %v1653 = vshrl.u32 %v1625, 16
      %v1655 = vrot.slane %v1653, 4
      %v1656 = vor.u32 %v1655, %v1651
      %v1657 = vrot.slane %v1656, 4
      %v1659 = vshll.u32 %v1626, 16
      %v1661 = vrot.slane %v1659, 5
      %v1662 = vsel %vm1628, %v1657, %v1661
      %v1663 = vshrl.u32 %v1626, 16
      %v1665 = vrot.slane %v1663, 4
      %v1666 = vor.u32 %v1665, %v1661
      %v1667 = vrot.slane %v1666, 4
      %v1673 = vld [vmem:[#allocation2 + $0x60] sm:$0x88]
      %v1674 = vsel %vm540, %v1632, %v1673
      %1675 = vst [vmem:[#allocation2 + $0x60] sm:$0x88] %v1674
      %1676 = vst [vmem:[#allocation2 + $0x68] sm:$0xff] %v1642
      %1677 = vst [vmem:[#allocation2 + $0x70] sm:$0xff] %v1652
      %1678 = vst [vmem:[#allocation2 + $0x78] sm:$0xff] %v1662
      %vm1679 = vmand %vm1423, %vm527
      %vm1680 = vmand %vm1425, %vm530
      %vm1681 = vmor %vm1680, %vm1679
      %v1682 = vld [vmem:[#allocation2 + $0x80] sm:$0xff]
      %v1683 = vsel %vm1681, %v1667, %v1682
      %1684 = vst [vmem:[#allocation2 + $0x80] sm:$0xff] %v1683
      %v1685 = vld [vmem:[#allocation2] sm:$0xff]
      %v1686 = vld [vmem:[#allocation2 + $0x8] sm:$0xff]
      %v1687 = vld [vmem:[#allocation2 + $0x10] sm:$0xff]
      %v1688 = vld [vmem:[#allocation2 + $0x18] sm:$0xff]
      %v1689 = vld [vmem:[#allocation2 + $0x20] sm:$0xff]
      %v1690 = vld [vmem:[#allocation2 + $0x28] sm:$0xff]
      %v1691 = vld [vmem:[#allocation2 + $0x30] sm:$0xff]
      %v1692 = vld [vmem:[#allocation2 + $0x38] sm:$0xff]
      %v1693 = vld [vmem:[#allocation2 + $0x40] sm:$0xff]
      %v1694 = vld [vmem:[#allocation2 + $0x48] sm:$0xff]
      %v1695 = vld [vmem:[#allocation2 + $0x50] sm:$0xff]
      %v1696 = vld [vmem:[#allocation2 + $0x58] sm:$0xff]
      %v1697 = vld [vmem:[#allocation2 + $0x60] sm:$0xff]
      %v1698 = vld [vmem:[#allocation2 + $0x68] sm:$0xff]
      %v1699 = vld [vmem:[#allocation2 + $0x70] sm:$0xff]
      %v1700 = vld [vmem:[#allocation2 + $0x78] sm:$0xff]
      %v1701 = vld [vmem:[#allocation2 + $0x80] sm:$0x77]
      %v1702 = vld [vmem:[%s5] sm:$0xf]
      %v1703 = vld [vmem:[%s5 + $0x4] sm:$0xf]
      %v1704 = vld [vmem:[%s5 + $0x8] sm:$0xf]
      %v1705 = vld [vmem:[%s5 + $0xc] sm:$0xf]
      %v1706 = vld [vmem:[%s5 + $0x10] sm:$0xf]
      %v1707 = vld [vmem:[%s5 + $0x14] sm:$0xf]
      %v1708 = vld [vmem:[%s5 + $0x18] sm:$0xf]
      %v1709 = vld [vmem:[%s5 + $0x1c] sm:$0xf]
      %v1710 = vld [vmem:[%s5 + $0x20] sm:$0xf]
      %v1711 = vld [vmem:[%s5 + $0x24] sm:$0xf]
      %v1712 = vld [vmem:[%s5 + $0x28] sm:$0xf]
      %v1713 = vld [vmem:[%s5 + $0x2c] sm:$0xf]
      %v1714 = vld [vmem:[%s5 + $0x30] sm:$0xf]
      %v1715 = vld [vmem:[%s5 + $0x34] sm:$0xf]
      %v1716 = vld [vmem:[%s5 + $0x38] sm:$0xf]
      %v1717 = vld [vmem:[%s5 + $0x3c] sm:$0xf]
      %v1718 = vld [vmem:[%s5 + $0x40] sm:$0xf]
      %v1719 = vld [vmem:[%s5 + $0x44] sm:$0xf]
      %v1720 = vld [vmem:[%s5 + $0x48] sm:$0xf]
      %v1721 = vld [vmem:[%s5 + $0x4c] sm:$0xf]
      %v1722 = vld [vmem:[%s5 + $0x50] sm:$0xf]
      %v1723 = vld [vmem:[%s5 + $0x54] sm:$0xf]
      %v1724 = vld [vmem:[%s5 + $0x58] sm:$0xf]
      %v1725 = vld [vmem:[%s5 + $0x5c] sm:$0xf]
      %v1726 = vld [vmem:[%s5 + $0x60] sm:$0xf]
      %v1727 = vld [vmem:[%s5 + $0x64] sm:$0xf]
      %v1728 = vld [vmem:[%s5 + $0x68] sm:$0xf]
      %v1729 = vld [vmem:[%s5 + $0x6c] sm:$0xf]
      %v1730 = vld [vmem:[%s5 + $0x70] sm:$0xf]
      %v1731 = vld [vmem:[%s5 + $0x74] sm:$0xf]
      %v1732 = vld [vmem:[%s5 + $0x78] sm:$0xf]
      %v1733 = vld [vmem:[%s5 + $0x7c] sm:$0xf]
      %v1734 = vld [vmem:[#allocation2 + $0x80] sm:$0xff]
      %s1735 = scalar_lea.vmem %s5, 128
      %v1736 = vld [vmem:[%s1735] sm:$0xf]
      %v1737 = vld [vmem:[%s1735 + $0x4] sm:$0xf]
      %v1738 = vld [vmem:[%s1735 + $0x8] sm:$0xf]
      %v1739 = vld [vmem:[%s1735 + $0xc] sm:$0xf]
      %v1740 = vld [vmem:[%s1735 + $0x10] sm:$0xf]
      %v1741 = vld [vmem:[%s1735 + $0x14] sm:$0xf]
      %v1742 = vld [vmem:[%s1735 + $0x18] sm:$0xf]
      %v1743 = vld [vmem:[%s1735 + $0x1c] sm:$0xf]
      %v1744 = vld [vmem:[%s1735 + $0x20] sm:$0xf]
      %v1745 = vld [vmem:[%s1735 + $0x24] sm:$0xf]
      %v1746 = vld [vmem:[%s1735 + $0x28] sm:$0xf]
      %v1747 = vld [vmem:[%s1735 + $0x2c] sm:$0xf]
      %v1748 = vld [vmem:[%s1735 + $0x30] sm:$0xf]
      %v1749 = vld [vmem:[%s1735 + $0x34] sm:$0xf]
      %v1750 = vld [vmem:[%s1735 + $0x38] sm:$0xf]
      %v1751 = vld [vmem:[%s1735 + $0x3c] sm:$0xf]
      %v1752 = vld [vmem:[%s1735 + $0x40] sm:$0xf]
      %v1753 = vld [vmem:[%s1735 + $0x44] sm:$0xf]
      %v1754 = vld [vmem:[%s1735 + $0x48] sm:$0xf]
      %v1755 = vld [vmem:[%s1735 + $0x4c] sm:$0xf]
      %v1756 = vld [vmem:[%s1735 + $0x50] sm:$0xf]
      %v1757 = vld [vmem:[%s1735 + $0x54] sm:$0xf]
      %v1758 = vld [vmem:[%s1735 + $0x58] sm:$0xf]
      %v1759 = vld [vmem:[%s1735 + $0x5c] sm:$0xf]
      %v1760 = vld [vmem:[%s1735 + $0x60] sm:$0xf]
      %v1761 = vld [vmem:[%s1735 + $0x64] sm:$0xf]
      %v1762 = vld [vmem:[%s1735 + $0x68] sm:$0xf]
      %v1763 = vld [vmem:[%s1735 + $0x6c] sm:$0xf]
      %v1764 = vld [vmem:[%s1735 + $0x70] sm:$0xf]
      %v1765 = vld [vmem:[%s1735 + $0x74] sm:$0xf]
      %v1766 = vld [vmem:[%s1735 + $0x78] sm:$0xf]
      %v1767 = vld [vmem:[%s1735 + $0x7c] sm:$0xf]
      %v1785 = vunpack.c.l.b16 %v1685
      %v1786 = vunpack.c.h.b16 %v1685
      %v1787 = vunpack.c.l.b16 %v1686
      %v1788 = vunpack.c.h.b16 %v1686
      %v1789 = vunpack.c.l.b16 %v1687
      %v1790 = vunpack.c.h.b16 %v1687
      %v1791 = vunpack.c.l.b16 %v1688
      %v1792 = vunpack.c.h.b16 %v1688
      %v1793 = vunpack.c.l.b16 %v1689
      %v1794 = vunpack.c.h.b16 %v1689
      %v1795 = vunpack.c.l.b16 %v1690
      %v1796 = vunpack.c.h.b16 %v1690
      %v1797 = vunpack.c.l.b16 %v1691
      %v1798 = vunpack.c.h.b16 %v1691
      %v1799 = vunpack.c.l.b16 %v1692
      %v1800 = vunpack.c.h.b16 %v1692
      %v1801 = vunpack.c.l.b16 %v1693
      %v1802 = vunpack.c.h.b16 %v1693
      %v1803 = vunpack.c.l.b16 %v1694
      %v1804 = vunpack.c.h.b16 %v1694
      %v1805 = vunpack.c.l.b16 %v1695
      %v1806 = vunpack.c.h.b16 %v1695
      %v1807 = vunpack.c.l.b16 %v1696
      %v1808 = vunpack.c.h.b16 %v1696
      %v1809 = vunpack.c.l.b16 %v1697
      %v1810 = vunpack.c.h.b16 %v1697
      %v1811 = vunpack.c.l.b16 %v1698
      %v1812 = vunpack.c.h.b16 %v1698
      %v1813 = vunpack.c.l.b16 %v1699
      %v1814 = vunpack.c.h.b16 %v1699
      %v1815 = vunpack.c.l.b16 %v1700
      %v1816 = vunpack.c.h.b16 %v1700
      %v1817 = vunpack.c.l.b16 %v1734
      %v1818 = vunpack.c.h.b16 %v1734
      %v1819 = vpack.c.b16 %v1787, %v1785
      %v1820 = vpack.c.b16 %v1788, %v1786
      %v1821 = vpack.c.b16 %v1791, %v1789
      %v1822 = vpack.c.b16 %v1792, %v1790
      %v1823 = vpack.c.b16 %v1795, %v1793
      %v1824 = vpack.c.b16 %v1796, %v1794
      %v1825 = vpack.c.b16 %v1799, %v1797
      %v1826 = vpack.c.b16 %v1800, %v1798
      %v1827 = vpack.c.b16 %v1803, %v1801
      %v1828 = vpack.c.b16 %v1804, %v1802
      %v1829 = vpack.c.b16 %v1807, %v1805
      %v1830 = vpack.c.b16 %v1808, %v1806
      %v1831 = vpack.c.b16 %v1811, %v1809
      %v1832 = vpack.c.b16 %v1812, %v1810
      %v1833 = vpack.c.b16 %v1815, %v1813
      %v1834 = vpack.c.b16 %v1816, %v1814
      %v1835 = vpack.c.b16 %v1817, %v1817
      %v1836 = vpack.c.b16 %v1818, %v1818
      %v1838 = vshrl.u32 %v1819, 16
      %v1840 = vshll.u32 %v1819, 16
      %v1842 = vrot.slane %v1840, 1
      %v1843 = vor.u32 %v1838, %v1842
      %v1845 = vshll.u32 %v1821, 16
      %v1847 = vrot.slane %v1845, 1
      %v1848 = vsel %vm530, %v1843, %v1847
      %v1850 = vshrl.u32 %v1820, 16
      %v1852 = vshll.u32 %v1820, 16
      %v1854 = vrot.slane %v1852, 1
      %v1855 = vor.u32 %v1850, %v1854
      %v1857 = vshll.u32 %v1822, 16
      %v1859 = vrot.slane %v1857, 1
      %v1860 = vsel %vm530, %v1855, %v1859
      %v1861 = vshrl.u32 %v1821, 16
      %v1863 = vor.u32 %v1861, %v1847
      %v1865 = vshll.u32 %v1823, 16
      %v1867 = vrot.slane %v1865, 1
      %v1868 = vsel %vm530, %v1863, %v1867
      %v1869 = vshrl.u32 %v1822, 16
      %v1871 = vor.u32 %v1869, %v1859
      %v1873 = vshll.u32 %v1824, 16
      %v1875 = vrot.slane %v1873, 1
      %v1876 = vsel %vm530, %v1871, %v1875
      %v1877 = vshrl.u32 %v1823, 16
      %v1879 = vor.u32 %v1877, %v1867
      %v1881 = vshll.u32 %v1825, 16
      %v1883 = vrot.slane %v1881, 1
      %v1884 = vsel %vm530, %v1879, %v1883
      %v1885 = vshrl.u32 %v1824, 16
      %v1887 = vor.u32 %v1885, %v1875
      %v1889 = vshll.u32 %v1826, 16
      %v1891 = vrot.slane %v1889, 1
      %v1892 = vsel %vm530, %v1887, %v1891
      %v1893 = vshrl.u32 %v1825, 16
      %v1895 = vor.u32 %v1893, %v1883
      %v1897 = vshll.u32 %v1827, 16
      %v1899 = vrot.slane %v1897, 1
      %v1900 = vsel %vm530, %v1895, %v1899
      %v1901 = vshrl.u32 %v1826, 16
      %v1903 = vor.u32 %v1901, %v1891
      %v1905 = vshll.u32 %v1828, 16
      %v1907 = vrot.slane %v1905, 1
      %v1908 = vsel %vm530, %v1903, %v1907
      %v1909 = vshrl.u32 %v1827, 16
      %v1911 = vor.u32 %v1909, %v1899
      %v1913 = vshll.u32 %v1829, 16
      %v1915 = vrot.slane %v1913, 1
      %v1916 = vsel %vm530, %v1911, %v1915
      %v1917 = vshrl.u32 %v1828, 16
      %v1919 = vor.u32 %v1917, %v1907
      %v1921 = vshll.u32 %v1830, 16
      %v1923 = vrot.slane %v1921, 1
      %v1924 = vsel %vm530, %v1919, %v1923
      %v1925 = vshrl.u32 %v1829, 16
      %v1927 = vor.u32 %v1925, %v1915
      %v1929 = vshll.u32 %v1831, 16
      %v1931 = vrot.slane %v1929, 1
      %v1932 = vsel %vm530, %v1927, %v1931
      %v1933 = vshrl.u32 %v1830, 16
      %v1935 = vor.u32 %v1933, %v1923
      %v1937 = vshll.u32 %v1832, 16
      %v1939 = vrot.slane %v1937, 1
      %v1940 = vsel %vm530, %v1935, %v1939
      %v1941 = vshrl.u32 %v1831, 16
      %v1943 = vor.u32 %v1941, %v1931
      %v1945 = vshll.u32 %v1833, 16
      %v1947 = vrot.slane %v1945, 1
      %v1948 = vsel %vm530, %v1943, %v1947
      %v1949 = vshrl.u32 %v1832, 16
      %v1951 = vor.u32 %v1949, %v1939
      %v1953 = vshll.u32 %v1834, 16
      %v1955 = vrot.slane %v1953, 1
      %v1956 = vsel %vm530, %v1951, %v1955
      %v1957 = vshrl.u32 %v1833, 16
      %v1959 = vor.u32 %v1957, %v1947
      %v1961 = vshll.u32 %v1835, 16
      %v1963 = vrot.slane %v1961, 1
      %v1964 = vsel %vm530, %v1959, %v1963
      %v1965 = vshrl.u32 %v1834, 16
      %v1967 = vor.u32 %v1965, %v1955
      %v1969 = vshll.u32 %v1836, 16
      %v1971 = vrot.slane %v1969, 1
      %v1972 = vsel %vm530, %v1967, %v1971
      %v1973 = vshrl.u32 %v1835, 16
      %v1975 = vor.u32 %v1973, %v1963
      %v1976 = vshrl.u32 %v1836, 16
      %v1978 = vor.u32 %v1976, %v1971
      %v2029 = vunpack.c.l.b16 %v1736
      %v2030 = vunpack.c.l.b16 %v1737
      %v2031 = vunpack.c.l.b16 %v1738
      %v2032 = vunpack.c.l.b16 %v1739
      %v2033 = vunpack.c.l.b16 %v1740
      %v2034 = vunpack.c.l.b16 %v1741
      %v2035 = vunpack.c.l.b16 %v1742
      %v2036 = vunpack.c.l.b16 %v1743
      %v2037 = vunpack.c.l.b16 %v1744
      %v2038 = vunpack.c.l.b16 %v1745
      %v2039 = vunpack.c.l.b16 %v1746
      %v2040 = vunpack.c.l.b16 %v1747
      %v2041 = vunpack.c.l.b16 %v1748
      %v2042 = vunpack.c.l.b16 %v1749
      %v2043 = vunpack.c.l.b16 %v1750
      %v2044 = vunpack.c.l.b16 %v1751
      %v2045 = vunpack.c.l.b16 %v1752
      %v2046 = vunpack.c.l.b16 %v1753
      %v2047 = vunpack.c.l.b16 %v1754
      %v2048 = vunpack.c.l.b16 %v1755
      %v2049 = vunpack.c.l.b16 %v1756
      %v2050 = vunpack.c.l.b16 %v1757
      %v2051 = vunpack.c.l.b16 %v1758
      %v2052 = vunpack.c.l.b16 %v1759
      %v2053 = vunpack.c.l.b16 %v1760
      %v2054 = vunpack.c.l.b16 %v1761
      %v2055 = vunpack.c.l.b16 %v1762
      %v2056 = vunpack.c.l.b16 %v1763
      %v2057 = vunpack.c.l.b16 %v1764
      %v2058 = vunpack.c.l.b16 %v1765
      %v2059 = vunpack.c.l.b16 %v1766
      %v2060 = vunpack.c.l.b16 %v1767
      %v2061 = vpack.c.b16 %v2030, %v2029
      %v2062 = vpack.c.b16 %v2032, %v2031
      %v2063 = vpack.c.b16 %v2034, %v2033
      %v2064 = vpack.c.b16 %v2036, %v2035
      %v2065 = vpack.c.b16 %v2038, %v2037
      %v2066 = vpack.c.b16 %v2040, %v2039
      %v2067 = vpack.c.b16 %v2042, %v2041
      %v2068 = vpack.c.b16 %v2044, %v2043
      %v2069 = vpack.c.b16 %v2046, %v2045
      %v2070 = vpack.c.b16 %v2048, %v2047
      %v2071 = vpack.c.b16 %v2050, %v2049
      %v2072 = vpack.c.b16 %v2052, %v2051
      %v2073 = vpack.c.b16 %v2054, %v2053
      %v2074 = vpack.c.b16 %v2056, %v2055
      %v2075 = vpack.c.b16 %v2058, %v2057
      %v2076 = vpack.c.b16 %v2060, %v2059
      %2093 = vmatprep.subr.bf16.mxu0 0
      %2094 = vmatpush1.bf16.msra.mxu0 %v2061
      %2095 = vmatprep.subr.bf16.mxu0 0
      %2096 = vmatpush1.bf16.msra.mxu0 %v2062
      %2097 = vmatprep.subr.bf16.mxu0 0
      %2098 = vmatpush1.bf16.msra.mxu0 %v2063
      %2099 = vmatprep.subr.bf16.mxu0 0
      %2100 = vmatpush1.bf16.msra.mxu0 %v2064
      %2101 = vmatprep.subr.bf16.mxu0 0
      %2102 = vmatpush1.bf16.msra.mxu0 %v2065
      %2103 = vmatprep.subr.bf16.mxu0 0
      %2104 = vmatpush1.bf16.msra.mxu0 %v2066
      %2105 = vmatprep.subr.bf16.mxu0 0
      %2106 = vmatpush1.bf16.msra.mxu0 %v2067
      %2107 = vmatprep.subr.bf16.mxu0 0
      %2108 = vmatpush1.bf16.msra.mxu0 %v2068
      %2109 = vmatprep.subr.bf16.mxu0 0
      %2110 = vmatpush1.bf16.msra.mxu0 %v2069
      %2111 = vmatprep.subr.bf16.mxu0 0
      %2112 = vmatpush1.bf16.msra.mxu0 %v2070
      %2113 = vmatprep.subr.bf16.mxu0 0
      %2114 = vmatpush1.bf16.msra.mxu0 %v2071
      %2115 = vmatprep.subr.bf16.mxu0 0
      %2116 = vmatpush1.bf16.msra.mxu0 %v2072
      %2117 = vmatprep.subr.bf16.mxu0 0
      %2118 = vmatpush1.bf16.msra.mxu0 %v2073
      %2119 = vmatprep.subr.bf16.mxu0 0
      %2120 = vmatpush1.bf16.msra.mxu0 %v2074
      %2121 = vmatprep.subr.bf16.mxu0 0
      %2122 = vmatpush1.bf16.msra.mxu0 %v2075
      %2123 = vmatprep.subr.bf16.mxu0 0
      %2124 = vmatpush1.bf16.msra.mxu0 %v2076
      %2125 = vmatprep.mubr.bf16.mxu0 %v1860
      %2126 = vmatmul.mubr.bf16.gmra.mrb[0].mxu0 %v1848
      %v2127 = vpop.f32.mrb[0].mxu0
      %v2128 = vadd.f32 0.0, %v2127
      %v2129 = vpop.f32.mrb[0].mxu0
      %v2130 = vpop.f32.mrb[0].mxu0
      %v2131 = vadd.f32 0.0, %v2130
      %v2132 = vpop.f32.mrb[0].mxu0
      %2133 = vmatprep.mubr.bf16.mxu0 %v1876
      %2134 = vmatmul.mubr.bf16.gmra.mrb[0].mxu0 %v1868
      %v2135 = vpop.f32.mrb[0].mxu0
      %v2136 = vadd.f32 0.0, %v2135
      %v2137 = vpop.f32.mrb[0].mxu0
      %v2138 = vpop.f32.mrb[0].mxu0
      %v2139 = vadd.f32 0.0, %v2138
      %v2140 = vpop.f32.mrb[0].mxu0
      %2141 = vmatprep.mubr.bf16.mxu0 %v1892
      %2142 = vmatmul.mubr.bf16.gmra.mrb[0].mxu0 %v1884
      %v2143 = vpop.f32.mrb[0].mxu0
      %v2144 = vadd.f32 0.0, %v2143
      %v2145 = vpop.f32.mrb[0].mxu0
      %v2146 = vpop.f32.mrb[0].mxu0
      %v2147 = vadd.f32 0.0, %v2146
      %v2148 = vpop.f32.mrb[0].mxu0
      %2149 = vmatprep.mubr.bf16.mxu0 %v1908
      %2150 = vmatmul.mubr.bf16.gmra.mrb[0].mxu0 %v1900
      %v2151 = vpop.f32.mrb[0].mxu0
      %v2152 = vadd.f32 0.0, %v2151
      %v2153 = vpop.f32.mrb[0].mxu0
      %v2154 = vpop.f32.mrb[0].mxu0
      %v2155 = vadd.f32 0.0, %v2154
      %v2156 = vpop.f32.mrb[0].mxu0
      %2157 = vmatprep.mubr.bf16.mxu0 %v1924
      %2158 = vmatmul.mubr.bf16.gmra.mrb[0].mxu0 %v1916
      %v2159 = vpop.f32.mrb[0].mxu0
      %v2160 = vadd.f32 0.0, %v2159
      %v2161 = vpop.f32.mrb[0].mxu0
      %v2162 = vpop.f32.mrb[0].mxu0
      %v2163 = vadd.f32 0.0, %v2162
      %v2164 = vpop.f32.mrb[0].mxu0
      %2165 = vmatprep.mubr.bf16.mxu0 %v1940
      %2166 = vmatmul.mubr.bf16.gmra.mrb[0].mxu0 %v1932
      %v2167 = vpop.f32.mrb[0].mxu0
      %v2168 = vadd.f32 0.0, %v2167
      %v2169 = vpop.f32.mrb[0].mxu0
      %v2170 = vpop.f32.mrb[0].mxu0
      %v2171 = vadd.f32 0.0, %v2170
      %v2172 = vpop.f32.mrb[0].mxu0
      %2173 = vmatprep.mubr.bf16.mxu0 %v1956
      %2174 = vmatmul.mubr.bf16.gmra.mrb[0].mxu0 %v1948
      %v2175 = vpop.f32.mrb[0].mxu0
      %v2176 = vadd.f32 0.0, %v2175
      %v2177 = vpop.f32.mrb[0].mxu0
      %v2178 = vpop.f32.mrb[0].mxu0
      %v2179 = vadd.f32 0.0, %v2178
      %v2180 = vpop.f32.mrb[0].mxu0
      %2181 = vmatprep.mubr.bf16.mxu0 %v1972
      %2182 = vmatmul.mubr.bf16.gmra.mrb[0].mxu0 %v1964
      %v2183 = vpop.f32.mrb[0].mxu0
      %v2184 = vadd.f32 0.0, %v2183
      %v2185 = vpop.f32.mrb[0].mxu0
      %v2186 = vpop.f32.mrb[0].mxu0
      %v2187 = vadd.f32 0.0, %v2186
      %v2188 = vpop.f32.mrb[0].mxu0
      %2189 = vmatprep.mubr.bf16.mxu0 %v1978
      %2190 = vmatmul.mubr.bf16.gmra.mrb[0].mxu0 %v1975
      %v2191 = vpop.f32.mrb[0].mxu0
      %v2192 = vadd.f32 0.0, %v2191
      %v2193 = vpop.f32.mrb[0].mxu0
      %v2194 = vpop.f32.mrb[0].mxu0
      %v2195 = vpop.f32.mrb[0].mxu0
      %2196 = vdwg.mxu0
      %v2198 = vunpack.c.l.b16 %v1701
      %v2199 = vunpack.c.h.b16 %v1701
      %v2200 = vpack.c.b16 %v2198, %v2198
      %v2201 = vpack.c.b16 %v2199, %v2199
      %v2252 = vunpack.c.l.b16 %v1702
      %v2253 = vunpack.c.l.b16 %v1703
      %v2254 = vunpack.c.l.b16 %v1704
      %v2255 = vunpack.c.l.b16 %v1705
      %v2256 = vunpack.c.l.b16 %v1706
      %v2257 = vunpack.c.l.b16 %v1707
      %v2258 = vunpack.c.l.b16 %v1708
      %v2259 = vunpack.c.l.b16 %v1709
      %v2260 = vunpack.c.l.b16 %v1710
      %v2261 = vunpack.c.l.b16 %v1711
      %v2262 = vunpack.c.l.b16 %v1712
      %v2263 = vunpack.c.l.b16 %v1713
      %v2264 = vunpack.c.l.b16 %v1714
      %v2265 = vunpack.c.l.b16 %v1715
      %v2266 = vunpack.c.l.b16 %v1716
      %v2267 = vunpack.c.l.b16 %v1717
      %v2268 = vunpack.c.l.b16 %v1718
      %v2269 = vunpack.c.l.b16 %v1719
      %v2270 = vunpack.c.l.b16 %v1720
      %v2271 = vunpack.c.l.b16 %v1721
      %v2272 = vunpack.c.l.b16 %v1722
      %v2273 = vunpack.c.l.b16 %v1723
      %v2274 = vunpack.c.l.b16 %v1724
      %v2275 = vunpack.c.l.b16 %v1725
      %v2276 = vunpack.c.l.b16 %v1726
      %v2277 = vunpack.c.l.b16 %v1727
      %v2278 = vunpack.c.l.b16 %v1728
      %v2279 = vunpack.c.l.b16 %v1729
      %v2280 = vunpack.c.l.b16 %v1730
      %v2281 = vunpack.c.l.b16 %v1731
      %v2282 = vunpack.c.l.b16 %v1732
      %v2283 = vunpack.c.l.b16 %v1733
      %v2284 = vpack.c.b16 %v2253, %v2252
      %v2285 = vpack.c.b16 %v2255, %v2254
      %v2286 = vpack.c.b16 %v2257, %v2256
      %v2287 = vpack.c.b16 %v2259, %v2258
      %v2288 = vpack.c.b16 %v2261, %v2260
      %v2289 = vpack.c.b16 %v2263, %v2262
      %v2290 = vpack.c.b16 %v2265, %v2264
      %v2291 = vpack.c.b16 %v2267, %v2266
      %v2292 = vpack.c.b16 %v2269, %v2268
      %v2293 = vpack.c.b16 %v2271, %v2270
      %v2294 = vpack.c.b16 %v2273, %v2272
      %v2295 = vpack.c.b16 %v2275, %v2274
      %v2296 = vpack.c.b16 %v2277, %v2276
      %v2297 = vpack.c.b16 %v2279, %v2278
      %v2298 = vpack.c.b16 %v2281, %v2280
      %v2299 = vpack.c.b16 %v2283, %v2282
      %2316 = vmatprep.subr.bf16.mxu0 0
      %2317 = vmatpush1.bf16.msra.mxu0 %v2284
      %2318 = vmatprep.subr.bf16.mxu0 0
      %2319 = vmatpush1.bf16.msra.mxu0 %v2285
      %2320 = vmatprep.subr.bf16.mxu0 0
      %2321 = vmatpush1.bf16.msra.mxu0 %v2286
      %2322 = vmatprep.subr.bf16.mxu0 0
      %2323 = vmatpush1.bf16.msra.mxu0 %v2287
      %2324 = vmatprep.subr.bf16.mxu0 0
      %2325 = vmatpush1.bf16.msra.mxu0 %v2288
      %2326 = vmatprep.subr.bf16.mxu0 0
      %2327 = vmatpush1.bf16.msra.mxu0 %v2289
      %2328 = vmatprep.subr.bf16.mxu0 0
      %2329 = vmatpush1.bf16.msra.mxu0 %v2290
      %2330 = vmatprep.subr.bf16.mxu0 0
      %2331 = vmatpush1.bf16.msra.mxu0 %v2291
      %2332 = vmatprep.subr.bf16.mxu0 0
      %2333 = vmatpush1.bf16.msra.mxu0 %v2292
      %2334 = vmatprep.subr.bf16.mxu0 0
      %2335 = vmatpush1.bf16.msra.mxu0 %v2293
      %2336 = vmatprep.subr.bf16.mxu0 0
      %2337 = vmatpush1.bf16.msra.mxu0 %v2294
      %2338 = vmatprep.subr.bf16.mxu0 0
      %2339 = vmatpush1.bf16.msra.mxu0 %v2295
      %2340 = vmatprep.subr.bf16.mxu0 0
      %2341 = vmatpush1.bf16.msra.mxu0 %v2296
      %2342 = vmatprep.subr.bf16.mxu0 0
      %2343 = vmatpush1.bf16.msra.mxu0 %v2297
      %2344 = vmatprep.subr.bf16.mxu0 0
      %2345 = vmatpush1.bf16.msra.mxu0 %v2298
      %2346 = vmatprep.subr.bf16.mxu0 0
      %2347 = vmatpush1.bf16.msra.mxu0 %v2299
      %2348 = vmatprep.mubr.bf16.mxu0 %v1820
      %2349 = vmatmul.mubr.bf16.gmra.mrb[0].mxu0 %v1819
      %v2350 = vpop.f32.mrb[0].mxu0
      %v2351 = vadd.f32 %v2128, %v2350
      %v2352 = vpop.f32.mrb[0].mxu0
      %v2353 = vpop.f32.mrb[0].mxu0
      %v2354 = vadd.f32 %v2131, %v2353
      %v2355 = vpop.f32.mrb[0].mxu0
      %2356 = vmatprep.mubr.bf16.mxu0 %v1822
      %2357 = vmatmul.mubr.bf16.gmra.mrb[0].mxu0 %v1821
      %v2358 = vpop.f32.mrb[0].mxu0
      %v2359 = vadd.f32 %v2136, %v2358
      %v2360 = vpop.f32.mrb[0].mxu0
      %v2361 = vpop.f32.mrb[0].mxu0
      %v2362 = vadd.f32 %v2139, %v2361
      %v2363 = vpop.f32.mrb[0].mxu0
      %2364 = vmatprep.mubr.bf16.mxu0 %v1824
      %2365 = vmatmul.mubr.bf16.gmra.mrb[0].mxu0 %v1823
      %v2366 = vpop.f32.mrb[0].mxu0
      %v2367 = vadd.f32 %v2144, %v2366
      %v2368 = vpop.f32.mrb[0].mxu0
      %v2369 = vpop.f32.mrb[0].mxu0
      %v2370 = vadd.f32 %v2147, %v2369
      %v2371 = vpop.f32.mrb[0].mxu0
      %2372 = vmatprep.mubr.bf16.mxu0 %v1826
      %2373 = vmatmul.mubr.bf16.gmra.mrb[0].mxu0 %v1825
      %v2374 = vpop.f32.mrb[0].mxu0
      %v2375 = vadd.f32 %v2152, %v2374
      %v2376 = vpop.f32.mrb[0].mxu0
      %v2377 = vpop.f32.mrb[0].mxu0
      %v2378 = vadd.f32 %v2155, %v2377
      %v2379 = vpop.f32.mrb[0].mxu0
      %2380 = vmatprep.mubr.bf16.mxu0 %v1828
      %2381 = vmatmul.mubr.bf16.gmra.mrb[0].mxu0 %v1827
      %v2382 = vpop.f32.mrb[0].mxu0
      %v2383 = vadd.f32 %v2160, %v2382
      %v2384 = vpop.f32.mrb[0].mxu0
      %v2385 = vpop.f32.mrb[0].mxu0
      %v2386 = vadd.f32 %v2163, %v2385
      %v2387 = vpop.f32.mrb[0].mxu0
      %2388 = vmatprep.mubr.bf16.mxu0 %v1830
      %2389 = vmatmul.mubr.bf16.gmra.mrb[0].mxu0 %v1829
      %v2390 = vpop.f32.mrb[0].mxu0
      %v2391 = vadd.f32 %v2168, %v2390
      %v2392 = vpop.f32.mrb[0].mxu0
      %v2393 = vpop.f32.mrb[0].mxu0
      %v2394 = vadd.f32 %v2171, %v2393
      %v2395 = vpop.f32.mrb[0].mxu0
      %2396 = vmatprep.mubr.bf16.mxu0 %v1832
      %2397 = vmatmul.mubr.bf16.gmra.mrb[0].mxu0 %v1831
      %v2398 = vpop.f32.mrb[0].mxu0
      %v2399 = vadd.f32 %v2176, %v2398
      %v2400 = vpop.f32.mrb[0].mxu0
      %v2401 = vpop.f32.mrb[0].mxu0
      %v2402 = vadd.f32 %v2179, %v2401
      %v2403 = vpop.f32.mrb[0].mxu0
      %2404 = vmatprep.mubr.bf16.mxu0 %v1834
      %2405 = vmatmul.mubr.bf16.gmra.mrb[0].mxu0 %v1833
      %v2406 = vpop.f32.mrb[0].mxu0
      %v2407 = vadd.f32 %v2184, %v2406
      %v2408 = vpop.f32.mrb[0].mxu0
      %v2409 = vpop.f32.mrb[0].mxu0
      %v2410 = vadd.f32 %v2187, %v2409
      %v2411 = vpop.f32.mrb[0].mxu0
      %2412 = vmatprep.mubr.bf16.mxu0 %v2201
      %2413 = vmatmul.mubr.bf16.gmra.mrb[0].mxu0 %v2200
      %v2414 = vpop.f32.mrb[0].mxu0
      %v2415 = vadd.f32 %v2192, %v2414
      %v2416 = vpop.f32.mrb[0].mxu0
      %v2417 = vpop.f32.mrb[0].mxu0
      %v2418 = vpop.f32.mrb[0].mxu0
      %2419 = vdwg.mxu0
      %v2420 = vld [vmem:[#allocation2] sm:$0xee]
      %s2421 = scalar_lea.vmem %s5, 256
      %v2422 = vld [vmem:[%s2421] sm:$0xf]
      %v2423 = vld [vmem:[%s2421 + $0x4] sm:$0xf]
      %v2424 = vld [vmem:[%s2421 + $0x8] sm:$0xf]
      %v2425 = vld [vmem:[%s2421 + $0xc] sm:$0xf]
      %v2426 = vld [vmem:[%s2421 + $0x10] sm:$0xf]
      %v2427 = vld [vmem:[%s2421 + $0x14] sm:$0xf]
      %v2428 = vld [vmem:[%s2421 + $0x18] sm:$0xf]
      %v2429 = vld [vmem:[%s2421 + $0x1c] sm:$0xf]
      %v2430 = vld [vmem:[%s2421 + $0x20] sm:$0xf]
      %v2431 = vld [vmem:[%s2421 + $0x24] sm:$0xf]
      %v2432 = vld [vmem:[%s2421 + $0x28] sm:$0xf]
      %v2433 = vld [vmem:[%s2421 + $0x2c] sm:$0xf]
      %v2434 = vld [vmem:[%s2421 + $0x30] sm:$0xf]
      %v2435 = vld [vmem:[%s2421 + $0x34] sm:$0xf]
      %v2436 = vld [vmem:[%s2421 + $0x38] sm:$0xf]
      %v2437 = vld [vmem:[%s2421 + $0x3c] sm:$0xf]
      %v2438 = vld [vmem:[%s2421 + $0x40] sm:$0xf]
      %v2439 = vld [vmem:[%s2421 + $0x44] sm:$0xf]
      %v2440 = vld [vmem:[%s2421 + $0x48] sm:$0xf]
      %v2441 = vld [vmem:[%s2421 + $0x4c] sm:$0xf]
      %v2442 = vld [vmem:[%s2421 + $0x50] sm:$0xf]
      %v2443 = vld [vmem:[%s2421 + $0x54] sm:$0xf]
      %v2444 = vld [vmem:[%s2421 + $0x58] sm:$0xf]
      %v2445 = vld [vmem:[%s2421 + $0x5c] sm:$0xf]
      %v2446 = vld [vmem:[%s2421 + $0x60] sm:$0xf]
      %v2447 = vld [vmem:[%s2421 + $0x64] sm:$0xf]
      %v2448 = vld [vmem:[%s2421 + $0x68] sm:$0xf]
      %v2449 = vld [vmem:[%s2421 + $0x6c] sm:$0xf]
      %v2450 = vld [vmem:[%s2421 + $0x70] sm:$0xf]
      %v2451 = vld [vmem:[%s2421 + $0x74] sm:$0xf]
      %v2452 = vld [vmem:[%s2421 + $0x78] sm:$0xf]
      %v2453 = vld [vmem:[%s2421 + $0x7c] sm:$0xf]
      %v2455 = vunpack.c.l.b16 %v2420
      %v2456 = vunpack.c.h.b16 %v2420
      %v2457 = vpack.c.b16 %v1787, %v2455
      %v2458 = vpack.c.b16 %v1788, %v2456
      %vm2459 = vcmask 1046528
      %v2460 = vrot.slane %v2457, 1
      %v2461 = vrot.slane %v1821, 1
      %v2462 = vsel %vm2459, %v2460, %v2461
      %v2463 = vrot.slane %v2458, 1
      %v2464 = vrot.slane %v1822, 1
      %v2465 = vsel %vm2459, %v2463, %v2464
      %v2466 = vrot.slane %v1823, 1
      %v2467 = vsel %vm2459, %v2461, %v2466
      %v2468 = vrot.slane %v1824, 1
      %v2469 = vsel %vm2459, %v2464, %v2468
      %v2470 = vrot.slane %v1825, 1
      %v2471 = vsel %vm2459, %v2466, %v2470
      %v2472 = vrot.slane %v1826, 1
      %v2473 = vsel %vm2459, %v2468, %v2472
      %v2474 = vrot.slane %v1827, 1
      %v2475 = vsel %vm2459, %v2470, %v2474
      %v2476 = vrot.slane %v1828, 1
      %v2477 = vsel %vm2459, %v2472, %v2476
      %v2478 = vrot.slane %v1829, 1
      %v2479 = vsel %vm2459, %v2474, %v2478
      %v2480 = vrot.slane %v1830, 1
      %v2481 = vsel %vm2459, %v2476, %v2480
      %v2482 = vrot.slane %v1831, 1
      %v2483 = vsel %vm2459, %v2478, %v2482
      %v2484 = vrot.slane %v1832, 1
      %v2485 = vsel %vm2459, %v2480, %v2484
      %v2486 = vrot.slane %v1833, 1
      %v2487 = vsel %vm2459, %v2482, %v2486
      %v2488 = vrot.slane %v1834, 1
      %v2489 = vsel %vm2459, %v2484, %v2488
      %v2490 = vrot.slane %v1835, 1
      %v2491 = vsel %vm2459, %v2486, %v2490
      %v2492 = vrot.slane %v1836, 1
      %v2493 = vsel %vm2459, %v2488, %v2492
      %v2544 = vunpack.c.l.b16 %v2422
      %v2545 = vunpack.c.l.b16 %v2423
      %v2546 = vunpack.c.l.b16 %v2424
      %v2547 = vunpack.c.l.b16 %v2425
      %v2548 = vunpack.c.l.b16 %v2426
      %v2549 = vunpack.c.l.b16 %v2427
      %v2550 = vunpack.c.l.b16 %v2428
      %v2551 = vunpack.c.l.b16 %v2429
      %v2552 = vunpack.c.l.b16 %v2430
      %v2553 = vunpack.c.l.b16 %v2431
      %v2554 = vunpack.c.l.b16 %v2432
      %v2555 = vunpack.c.l.b16 %v2433
      %v2556 = vunpack.c.l.b16 %v2434
      %v2557 = vunpack.c.l.b16 %v2435
      %v2558 = vunpack.c.l.b16 %v2436
      %v2559 = vunpack.c.l.b16 %v2437
      %v2560 = vunpack.c.l.b16 %v2438
      %v2561 = vunpack.c.l.b16 %v2439
      %v2562 = vunpack.c.l.b16 %v2440
      %v2563 = vunpack.c.l.b16 %v2441
      %v2564 = vunpack.c.l.b16 %v2442
      %v2565 = vunpack.c.l.b16 %v2443
      %v2566 = vunpack.c.l.b16 %v2444
      %v2567 = vunpack.c.l.b16 %v2445
      %v2568 = vunpack.c.l.b16 %v2446
      %v2569 = vunpack.c.l.b16 %v2447
      %v2570 = vunpack.c.l.b16 %v2448
      %v2571 = vunpack.c.l.b16 %v2449
      %v2572 = vunpack.c.l.b16 %v2450
      %v2573 = vunpack.c.l.b16 %v2451
      %v2574 = vunpack.c.l.b16 %v2452
      %v2575 = vunpack.c.l.b16 %v2453
      %v2576 = vpack.c.b16 %v2545, %v2544
      %v2577 = vpack.c.b16 %v2547, %v2546
      %v2578 = vpack.c.b16 %v2549, %v2548
      %v2579 = vpack.c.b16 %v2551, %v2550
      %v2580 = vpack.c.b16 %v2553, %v2552
      %v2581 = vpack.c.b16 %v2555, %v2554
      %v2582 = vpack.c.b16 %v2557, %v2556
      %v2583 = vpack.c.b16 %v2559, %v2558
      %v2584 = vpack.c.b16 %v2561, %v2560
      %v2585 = vpack.c.b16 %v2563, %v2562
      %v2586 = vpack.c.b16 %v2565, %v2564
      %v2587 = vpack.c.b16 %v2567, %v2566
      %v2588 = vpack.c.b16 %v2569, %v2568
      %v2589 = vpack.c.b16 %v2571, %v2570
      %v2590 = vpack.c.b16 %v2573, %v2572
      %v2591 = vpack.c.b16 %v2575, %v2574
      %2608 = vmatprep.subr.bf16.mxu0 0
      %2609 = vmatpush1.bf16.msra.mxu0 %v2576
      %2610 = vmatprep.subr.bf16.mxu0 0
      %2611 = vmatpush1.bf16.msra.mxu0 %v2577
      %2612 = vmatprep.subr.bf16.mxu0 0
      %2613 = vmatpush1.bf16.msra.mxu0 %v2578
      %2614 = vmatprep.subr.bf16.mxu0 0
      %2615 = vmatpush1.bf16.msra.mxu0 %v2579
      %2616 = vmatprep.subr.bf16.mxu0 0
      %2617 = vmatpush1.bf16.msra.mxu0 %v2580
      %2618 = vmatprep.subr.bf16.mxu0 0
      %2619 = vmatpush1.bf16.msra.mxu0 %v2581
      %2620 = vmatprep.subr.bf16.mxu0 0
      %2621 = vmatpush1.bf16.msra.mxu0 %v2582
      %2622 = vmatprep.subr.bf16.mxu0 0
      %2623 = vmatpush1.bf16.msra.mxu0 %v2583
      %2624 = vmatprep.subr.bf16.mxu0 0
      %2625 = vmatpush1.bf16.msra.mxu0 %v2584
      %2626 = vmatprep.subr.bf16.mxu0 0
      %2627 = vmatpush1.bf16.msra.mxu0 %v2585
      %2628 = vmatprep.subr.bf16.mxu0 0
      %2629 = vmatpush1.bf16.msra.mxu0 %v2586
      %2630 = vmatprep.subr.bf16.mxu0 0
      %2631 = vmatpush1.bf16.msra.mxu0 %v2587
      %2632 = vmatprep.subr.bf16.mxu0 0
      %2633 = vmatpush1.bf16.msra.mxu0 %v2588
      %2634 = vmatprep.subr.bf16.mxu0 0
      %2635 = vmatpush1.bf16.msra.mxu0 %v2589
      %2636 = vmatprep.subr.bf16.mxu0 0
      %2637 = vmatpush1.bf16.msra.mxu0 %v2590
      %2638 = vmatprep.subr.bf16.mxu0 0
      %2639 = vmatpush1.bf16.msra.mxu0 %v2591
      %2640 = vmatprep.mubr.bf16.mxu0 %v2465
      %2641 = vmatmul.mubr.bf16.gmra.mrb[0].mxu0 %v2462
      %v2642 = vpop.f32.mrb[0].mxu0
      %v2643 = vadd.f32 0.0, %v2642
      %v2644 = vpop.f32.mrb[0].mxu0
      %v2645 = vpop.f32.mrb[0].mxu0
      %v2646 = vadd.f32 0.0, %v2645
      %v2647 = vpop.f32.mrb[0].mxu0
      %2648 = vmatprep.mubr.bf16.mxu0 %v2469
      %2649 = vmatmul.mubr.bf16.gmra.mrb[0].mxu0 %v2467
      %v2650 = vpop.f32.mrb[0].mxu0
      %v2651 = vadd.f32 0.0, %v2650
      %v2652 = vpop.f32.mrb[0].mxu0
      %v2653 = vpop.f32.mrb[0].mxu0
      %v2654 = vadd.f32 0.0, %v2653
      %v2655 = vpop.f32.mrb[0].mxu0
      %2656 = vmatprep.mubr.bf16.mxu0 %v2473
      %2657 = vmatmul.mubr.bf16.gmra.mrb[0].mxu0 %v2471
      %v2658 = vpop.f32.mrb[0].mxu0
      %v2659 = vadd.f32 0.0, %v2658
      %v2660 = vpop.f32.mrb[0].mxu0
      %v2661 = vpop.f32.mrb[0].mxu0
      %v2662 = vadd.f32 0.0, %v2661
      %v2663 = vpop.f32.mrb[0].mxu0
      %2664 = vmatprep.mubr.bf16.mxu0 %v2477
      %2665 = vmatmul.mubr.bf16.gmra.mrb[0].mxu0 %v2475
      %v2666 = vpop.f32.mrb[0].mxu0
      %v2667 = vadd.f32 0.0, %v2666
      %v2668 = vpop.f32.mrb[0].mxu0
      %v2669 = vpop.f32.mrb[0].mxu0
      %v2670 = vadd.f32 0.0, %v2669
      %v2671 = vpop.f32.mrb[0].mxu0
      %2672 = vmatprep.mubr.bf16.mxu0 %v2481
      %2673 = vmatmul.mubr.bf16.gmra.mrb[0].mxu0 %v2479
      %v2674 = vpop.f32.mrb[0].mxu0
      %v2675 = vadd.f32 0.0, %v2674
      %v2676 = vpop.f32.mrb[0].mxu0
      %v2677 = vpop.f32.mrb[0].mxu0
      %v2678 = vadd.f32 0.0, %v2677
      %v2679 = vpop.f32.mrb[0].mxu0
      %2680 = vmatprep.mubr.bf16.mxu0 %v2485
      %2681 = vmatmul.mubr.bf16.gmra.mrb[0].mxu0 %v2483
      %v2682 = vpop.f32.mrb[0].mxu0
      %v2683 = vadd.f32 0.0, %v2682
      %v2684 = vpop.f32.mrb[0].mxu0
      %v2685 = vpop.f32.mrb[0].mxu0
      %v2686 = vadd.f32 0.0, %v2685
      %v2687 = vpop.f32.mrb[0].mxu0
      %2688 = vmatprep.mubr.bf16.mxu0 %v2489
      %2689 = vmatmul.mubr.bf16.gmra.mrb[0].mxu0 %v2487
      %v2690 = vpop.f32.mrb[0].mxu0
      %v2691 = vadd.f32 0.0, %v2690
      %v2692 = vpop.f32.mrb[0].mxu0
      %v2693 = vpop.f32.mrb[0].mxu0
      %v2694 = vadd.f32 0.0, %v2693
      %v2695 = vpop.f32.mrb[0].mxu0
      %2696 = vmatprep.mubr.bf16.mxu0 %v2493
      %2697 = vmatmul.mubr.bf16.gmra.mrb[0].mxu0 %v2491
      %v2698 = vpop.f32.mrb[0].mxu0
      %v2699 = vadd.f32 0.0, %v2698
      %v2700 = vpop.f32.mrb[0].mxu0
      %v2701 = vpop.f32.mrb[0].mxu0
      %v2702 = vadd.f32 0.0, %v2701
      %v2703 = vpop.f32.mrb[0].mxu0
      %2704 = vmatprep.mubr.bf16.mxu0 %v2492
      %2705 = vmatmul.mubr.bf16.gmra.mrb[0].mxu0 %v2490
      %v2706 = vpop.f32.mrb[0].mxu0
      %v2707 = vadd.f32 0.0, %v2706
      %v2708 = vpop.f32.mrb[0].mxu0
      %v2709 = vpop.f32.mrb[0].mxu0
      %v2710 = vpop.f32.mrb[0].mxu0
      %2711 = vdwg.mxu0
      %v2712 = vadd.f32 %v2351, %v2643
      %v2713 = vadd.f32 %v2354, %v2646
      %v2714 = vadd.f32 %v2359, %v2651
      %v2715 = vadd.f32 %v2362, %v2654
      %v2716 = vadd.f32 %v2367, %v2659
      %v2717 = vadd.f32 %v2370, %v2662
      %v2718 = vadd.f32 %v2375, %v2667
      %v2719 = vadd.f32 %v2378, %v2670
      %v2720 = vadd.f32 %v2383, %v2675
      %v2721 = vadd.f32 %v2386, %v2678
      %v2722 = vadd.f32 %v2391, %v2683
      %v2723 = vadd.f32 %v2394, %v2686
      %v2724 = vadd.f32 %v2399, %v2691
      %v2725 = vadd.f32 %v2402, %v2694
      %v2726 = vadd.f32 %v2407, %v2699
      %v2727 = vadd.f32 %v2410, %v2702
      %v2728 = vadd.f32 %v2415, %v2707
      %v2729 = vld [vmem:[%s6] sm:$0x1]
      %v2731 = vlaneseq
      %v2732 = vshrl.u32 %v2731, 7
      %v2733 = vsub.s32 0, %v2732
      %v2734 = vrot.slane %v2729, %v2733
      %v2736 = vmul.f32 %v2712, %v2734
      %v2737 = vmul.f32 %v2713, %v2734
      %v2738 = vmul.f32 %v2714, %v2734
      %v2739 = vmul.f32 %v2715, %v2734
      %v2740 = vmul.f32 %v2716, %v2734
      %v2741 = vmul.f32 %v2717, %v2734
      %v2742 = vmul.f32 %v2718, %v2734
      %v2743 = vmul.f32 %v2719, %v2734
      %v2744 = vmul.f32 %v2720, %v2734
      %v2745 = vmul.f32 %v2721, %v2734
      %v2746 = vmul.f32 %v2722, %v2734
      %v2747 = vmul.f32 %v2723, %v2734
      %v2748 = vmul.f32 %v2724, %v2734
      %v2749 = vmul.f32 %v2725, %v2734
      %v2750 = vmul.f32 %v2726, %v2734
      %v2751 = vmul.f32 %v2727, %v2734
      %v2752 = vmul.f32 %v2728, %v2734
      %v2753 = vld [vmem:[%s7] sm:$0x1]
      %v2755 = vlaneseq
      %v2756 = vshrl.u32 %v2755, 7
      %v2757 = vsub.s32 0, %v2756
      %v2758 = vrot.slane %v2753, %v2757
      %v2760 = vadd.f32 %v2736, %v2758
      %v2761 = vadd.f32 %v2737, %v2758
      %v2762 = vadd.f32 %v2738, %v2758
      %v2763 = vadd.f32 %v2739, %v2758
      %v2764 = vadd.f32 %v2740, %v2758
      %v2765 = vadd.f32 %v2741, %v2758
      %v2766 = vadd.f32 %v2742, %v2758
      %v2767 = vadd.f32 %v2743, %v2758
      %v2768 = vadd.f32 %v2744, %v2758
      %v2769 = vadd.f32 %v2745, %v2758
      %v2770 = vadd.f32 %v2746, %v2758
      %v2771 = vadd.f32 %v2747, %v2758
      %v2772 = vadd.f32 %v2748, %v2758
      %v2773 = vadd.f32 %v2749, %v2758
      %v2774 = vadd.f32 %v2750, %v2758
      %v2775 = vadd.f32 %v2751, %v2758
      %v2776 = vadd.f32 %v2752, %v2758
      %v2777 = vmax.f32 %v2760, 0.0
      %v2778 = vmax.f32 %v2761, 0.0
      %v2779 = vmax.f32 %v2762, 0.0
      %v2780 = vmax.f32 %v2763, 0.0
      %v2781 = vmax.f32 %v2764, 0.0
      %v2782 = vmax.f32 %v2765, 0.0
      %v2783 = vmax.f32 %v2766, 0.0
      %v2784 = vmax.f32 %v2767, 0.0
      %v2785 = vmax.f32 %v2768, 0.0
      %v2786 = vmax.f32 %v2769, 0.0
      %v2787 = vmax.f32 %v2770, 0.0
      %v2788 = vmax.f32 %v2771, 0.0
      %v2789 = vmax.f32 %v2772, 0.0
      %v2790 = vmax.f32 %v2773, 0.0
      %v2791 = vmax.f32 %v2774, 0.0
      %v2792 = vmax.f32 %v2775, 0.0
      %v2793 = vmax.f32 %v2776, 0.0
      %v2794 = vpack.c.bf16 %v2778, %v2777
      %v2795 = vpack.c.bf16 %v2780, %v2779
      %v2798 = vunpack.c.l.b16 %v2794
      %v2799 = vunpack.c.h.b16 %v2794
      %v2800 = vunpack.c.l.b16 %v2795
      %v2801 = vunpack.c.h.b16 %v2795
      %v2802 = vpack.c.b16 %v2798, %v2798
      %v2803 = vpack.c.b16 %v2799, %v2799
      %v2804 = vpack.c.b16 %v2800, %v2800
      %v2805 = vpack.c.b16 %v2801, %v2801
      %v2807 = vshrl.u32 %v2802, 16
      %v2809 = vrot.slane %v2807, 7
      %v2810 = vshll.u32 %v2802, 16
      %v2812 = vor.u32 %v2809, %v2810
      %v2813 = vrot.slane %v2809, 4
      %v2815 = vshrl.u32 %v2803, 16
      %v2817 = vrot.slane %v2815, 7
      %v2818 = vshll.u32 %v2803, 16
      %v2820 = vor.u32 %v2817, %v2818
      %v2821 = vsel %vm1382, %v2813, %v2820
      %v2822 = vrot.slane %v2817, 4
      %v2824 = vshrl.u32 %v2804, 16
      %v2826 = vrot.slane %v2824, 7
      %v2827 = vshll.u32 %v2804, 16
      %v2829 = vor.u32 %v2826, %v2827
      %v2830 = vsel %vm1382, %v2822, %v2829
      %v2831 = vrot.slane %v2826, 4
      %v2833 = vshrl.u32 %v2805, 16
      %v2835 = vrot.slane %v2833, 7
      %v2836 = vshll.u32 %v2805, 16
      %v2838 = vor.u32 %v2835, %v2836
      %v2839 = vsel %vm1382, %v2831, %v2838
      %v2840 = vrot.slane %v2835, 4
      %v2846 = vld [vmem:[#allocation2] sm:$0xf]
      %v2847 = vsel %vm1424, %v2812, %v2846
      %2848 = vst [vmem:[#allocation2] sm:$0xf] %v2847
      %2849 = vst [vmem:[#allocation2 + $0x8] sm:$0xf] %v2821
      %2850 = vst [vmem:[#allocation2 + $0x10] sm:$0xf] %v2830
      %2851 = vst [vmem:[#allocation2 + $0x18] sm:$0xf] %v2839
      %v2852 = vld [vmem:[#allocation2 + $0x20] sm:$0x1]
      %v2853 = vsel %vm474, %v2840, %v2852
      %2854 = vst [vmem:[#allocation2 + $0x20] sm:$0x1] %v2853
      %v2855 = vpack.c.bf16 %v2782, %v2781
      %v2856 = vpack.c.bf16 %v2784, %v2783
      %v2857 = vpack.c.bf16 %v2785, %v2785
      %v2861 = vunpack.c.l.b16 %v2855
      %v2862 = vunpack.c.h.b16 %v2855
      %v2863 = vunpack.c.l.b16 %v2856
      %v2864 = vunpack.c.h.b16 %v2856
      %v2865 = vunpack.c.l.b16 %v2857
      %v2866 = vpack.c.b16 %v2861, %v2861
      %v2867 = vpack.c.b16 %v2862, %v2862
      %v2868 = vpack.c.b16 %v2863, %v2863
      %v2869 = vpack.c.b16 %v2864, %v2864
      %v2870 = vpack.c.b16 %v2865, %v2865
      %v2872 = vshrl.u32 %v2866, 16
      %v2874 = vrot.slane %v2872, 7
      %v2875 = vshll.u32 %v2866, 16
      %v2877 = vor.u32 %v2874, %v2875
      %v2878 = vrot.slane %v2874, 4
      %v2880 = vshrl.u32 %v2867, 16
      %v2882 = vrot.slane %v2880, 7
      %v2883 = vshll.u32 %v2867, 16
      %v2885 = vor.u32 %v2882, %v2883
      %v2886 = vsel %vm1382, %v2878, %v2885
      %v2887 = vrot.slane %v2882, 4
      %v2889 = vshrl.u32 %v2868, 16
      %v2891 = vrot.slane %v2889, 7
      %v2892 = vshll.u32 %v2868, 16
      %v2894 = vor.u32 %v2891, %v2892
      %v2895 = vsel %vm1382, %v2887, %v2894
      %v2896 = vrot.slane %v2891, 4
      %v2898 = vshrl.u32 %v2869, 16
      %v2900 = vrot.slane %v2898, 7
      %v2901 = vshll.u32 %v2869, 16
      %v2903 = vor.u32 %v2900, %v2901
      %v2904 = vsel %vm1382, %v2896, %v2903
      %v2905 = vrot.slane %v2900, 4
      %v2907 = vshrl.u32 %v2870, 16
      %v2909 = vrot.slane %v2907, 7
      %v2910 = vshll.u32 %v2870, 16
      %v2912 = vor.u32 %v2909, %v2910
      %v2913 = vsel %vm1382, %v2905, %v2912
      %v2919 = vld [vmem:[#allocation2 + $0x20] sm:$0xe]
      %v2920 = vsel %vm1504, %v2877, %v2919
      %2921 = vst [vmem:[#allocation2 + $0x20] sm:$0xe] %v2920
      %2922 = vst [vmem:[#allocation2 + $0x28] sm:$0xf] %v2886
      %2923 = vst [vmem:[#allocation2 + $0x30] sm:$0xf] %v2895
      %2924 = vst [vmem:[#allocation2 + $0x38] sm:$0xf] %v2904
      %v2925 = vld [vmem:[#allocation2 + $0x40] sm:$0x3]
      %v2926 = vsel %vm1515, %v2913, %v2925
      %2927 = vst [vmem:[#allocation2 + $0x40] sm:$0x3] %v2926
      %v2928 = vpack.c.bf16 %v2786, %v2785
      %v2929 = vpack.c.bf16 %v2788, %v2787
      %v2930 = vpack.c.bf16 %v2789, %v2789
      %v2934 = vunpack.c.l.b16 %v2928
      %v2935 = vunpack.c.h.b16 %v2928
      %v2936 = vunpack.c.l.b16 %v2929
      %v2937 = vunpack.c.h.b16 %v2929
      %v2938 = vunpack.c.l.b16 %v2930
      %v2939 = vpack.c.b16 %v2934, %v2934
      %v2940 = vpack.c.b16 %v2935, %v2935
      %v2941 = vpack.c.b16 %v2936, %v2936
      %v2942 = vpack.c.b16 %v2937, %v2937
      %v2943 = vpack.c.b16 %v2938, %v2938
      %v2945 = vshrl.u32 %v2939, 16
      %v2947 = vrot.slane %v2945, 7
      %v2948 = vshll.u32 %v2939, 16
      %v2950 = vor.u32 %v2947, %v2948
      %v2951 = vrot.slane %v2947, 4
      %v2953 = vshrl.u32 %v2940, 16
      %v2955 = vrot.slane %v2953, 7
      %v2956 = vshll.u32 %v2940, 16
      %v2958 = vor.u32 %v2955, %v2956
      %v2959 = vsel %vm1382, %v2951, %v2958
      %v2960 = vrot.slane %v2955, 4
      %v2962 = vshrl.u32 %v2941, 16
      %v2964 = vrot.slane %v2962, 7
      %v2965 = vshll.u32 %v2941, 16
      %v2967 = vor.u32 %v2964, %v2965
      %v2968 = vsel %vm1382, %v2960, %v2967
      %v2969 = vrot.slane %v2964, 4
      %v2971 = vshrl.u32 %v2942, 16
      %v2973 = vrot.slane %v2971, 7
      %v2974 = vshll.u32 %v2942, 16
      %v2976 = vor.u32 %v2973, %v2974
      %v2977 = vsel %vm1382, %v2969, %v2976
      %v2978 = vrot.slane %v2973, 4
      %v2980 = vshrl.u32 %v2943, 16
      %v2982 = vrot.slane %v2980, 7
      %v2983 = vshll.u32 %v2943, 16
      %v2985 = vor.u32 %v2982, %v2983
      %v2986 = vsel %vm1382, %v2978, %v2985
      %v2992 = vld [vmem:[#allocation2 + $0x40] sm:$0xc]
      %v2993 = vsel %vm1589, %v2950, %v2992
      %2994 = vst [vmem:[#allocation2 + $0x40] sm:$0xc] %v2993
      %2995 = vst [vmem:[#allocation2 + $0x48] sm:$0xf] %v2959
      %2996 = vst [vmem:[#allocation2 + $0x50] sm:$0xf] %v2968
      %2997 = vst [vmem:[#allocation2 + $0x58] sm:$0xf] %v2977
      %v2998 = vld [vmem:[#allocation2 + $0x60] sm:$0x7]
      %v2999 = vsel %vm1600, %v2986, %v2998
      %3000 = vst [vmem:[#allocation2 + $0x60] sm:$0x7] %v2999
      %v3001 = vpack.c.bf16 %v2790, %v2789
      %v3002 = vpack.c.bf16 %v2792, %v2791
      %v3003 = vpack.c.bf16 %v2793, %v2793
      %v3007 = vunpack.c.l.b16 %v3001
      %v3008 = vunpack.c.h.b16 %v3001
      %v3009 = vunpack.c.l.b16 %v3002
      %v3010 = vunpack.c.h.b16 %v3002
      %v3011 = vunpack.c.l.b16 %v3003
      %v3012 = vpack.c.b16 %v3007, %v3007
      %v3013 = vpack.c.b16 %v3008, %v3008
      %v3014 = vpack.c.b16 %v3009, %v3009
      %v3015 = vpack.c.b16 %v3010, %v3010
      %v3016 = vpack.c.b16 %v3011, %v3011
      %v3018 = vshll.u32 %v3012, 16
      %v3020 = vshrl.u32 %v3012, 16
      %v3022 = vrot.slane %v3020, 7
      %v3023 = vrot.slane %v3022, 4
      %v3025 = vshrl.u32 %v3013, 16
      %v3027 = vrot.slane %v3025, 7
      %v3028 = vshll.u32 %v3013, 16
      %v3030 = vor.u32 %v3027, %v3028
      %v3031 = vsel %vm1382, %v3023, %v3030
      %v3032 = vrot.slane %v3027, 4
      %v3034 = vshrl.u32 %v3014, 16
      %v3036 = vrot.slane %v3034, 7
      %v3037 = vshll.u32 %v3014, 16
      %v3039 = vor.u32 %v3036, %v3037
      %v3040 = vsel %vm1382, %v3032, %v3039
      %v3041 = vrot.slane %v3036, 4
      %v3043 = vshrl.u32 %v3015, 16
      %v3045 = vrot.slane %v3043, 7
      %v3046 = vshll.u32 %v3015, 16
      %v3048 = vor.u32 %v3045, %v3046
      %v3049 = vsel %vm1382, %v3041, %v3048
      %v3050 = vrot.slane %v3045, 4
      %v3052 = vshrl.u32 %v3016, 16
      %v3054 = vrot.slane %v3052, 7
      %v3055 = vshll.u32 %v3016, 16
      %v3057 = vor.u32 %v3054, %v3055
      %v3058 = vsel %vm1382, %v3050, %v3057
      %v3064 = vld [vmem:[#allocation2 + $0x60] sm:$0x8]
      %v3065 = vsel %vm537, %v3018, %v3064
      %3066 = vst [vmem:[#allocation2 + $0x60] sm:$0x8] %v3065
      %3067 = vst [vmem:[#allocation2 + $0x68] sm:$0xf] %v3031
      %3068 = vst [vmem:[#allocation2 + $0x70] sm:$0xf] %v3040
      %3069 = vst [vmem:[#allocation2 + $0x78] sm:$0xf] %v3049
      %v3070 = vld [vmem:[#allocation2 + $0x80] sm:$0xf]
      %v3071 = vsel %vm1679, %v3058, %v3070
      %3072 = vst [vmem:[#allocation2 + $0x80] sm:$0xf] %v3071
      %v3073 = vld [vmem:[#allocation2] sm:$0xf]
      %v3074 = vld [vmem:[#allocation2 + $0x8] sm:$0xf]
      %v3075 = vld [vmem:[#allocation2 + $0x10] sm:$0xf]
      %v3076 = vld [vmem:[#allocation2 + $0x18] sm:$0xf]
      %v3077 = vld [vmem:[#allocation2 + $0x20] sm:$0xf]
      %v3078 = vld [vmem:[#allocation2 + $0x28] sm:$0xf]
      %v3079 = vld [vmem:[#allocation2 + $0x30] sm:$0xf]
      %v3080 = vld [vmem:[#allocation2 + $0x38] sm:$0xf]
      %v3081 = vld [vmem:[#allocation2 + $0x40] sm:$0xf]
      %v3082 = vld [vmem:[#allocation2 + $0x48] sm:$0xf]
      %v3083 = vld [vmem:[#allocation2 + $0x50] sm:$0xf]
      %v3084 = vld [vmem:[#allocation2 + $0x58] sm:$0xf]
      %v3085 = vld [vmem:[#allocation2 + $0x60] sm:$0xf]
      %v3086 = vld [vmem:[#allocation2 + $0x68] sm:$0xf]
      %v3087 = vld [vmem:[#allocation2 + $0x70] sm:$0xf]
      %v3088 = vld [vmem:[#allocation2 + $0x78] sm:$0xf]
      %v3089 = vld [vmem:[#allocation2 + $0x80] sm:$0x7]
      %v3090 = vld [vmem:[%s8] sm:$0xf]
      %v3091 = vld [vmem:[%s8 + $0x4] sm:$0xf]
      %v3092 = vld [vmem:[%s8 + $0x8] sm:$0xf]
      %v3093 = vld [vmem:[%s8 + $0xc] sm:$0xf]
      %v3094 = vld [vmem:[%s8 + $0x10] sm:$0xf]
      %v3095 = vld [vmem:[%s8 + $0x14] sm:$0xf]
      %v3096 = vld [vmem:[%s8 + $0x18] sm:$0xf]
      %v3097 = vld [vmem:[%s8 + $0x1c] sm:$0xf]
      %v3098 = vld [vmem:[%s8 + $0x20] sm:$0xf]
      %v3099 = vld [vmem:[%s8 + $0x24] sm:$0xf]
      %v3100 = vld [vmem:[%s8 + $0x28] sm:$0xf]
      %v3101 = vld [vmem:[%s8 + $0x2c] sm:$0xf]
      %v3102 = vld [vmem:[%s8 + $0x30] sm:$0xf]
      %v3103 = vld [vmem:[%s8 + $0x34] sm:$0xf]
      %v3104 = vld [vmem:[%s8 + $0x38] sm:$0xf]
      %v3105 = vld [vmem:[%s8 + $0x3c] sm:$0xf]
      %v3106 = vld [vmem:[#allocation2 + $0x80] sm:$0xf]
      %s3107 = scalar_lea.vmem %s8, 64
      %v3108 = vld [vmem:[%s3107] sm:$0xf]
      %v3109 = vld [vmem:[%s3107 + $0x4] sm:$0xf]
      %v3110 = vld [vmem:[%s3107 + $0x8] sm:$0xf]
      %v3111 = vld [vmem:[%s3107 + $0xc] sm:$0xf]
      %v3112 = vld [vmem:[%s3107 + $0x10] sm:$0xf]
      %v3113 = vld [vmem:[%s3107 + $0x14] sm:$0xf]
      %v3114 = vld [vmem:[%s3107 + $0x18] sm:$0xf]
      %v3115 = vld [vmem:[%s3107 + $0x1c] sm:$0xf]
      %v3116 = vld [vmem:[%s3107 + $0x20] sm:$0xf]
      %v3117 = vld [vmem:[%s3107 + $0x24] sm:$0xf]
      %v3118 = vld [vmem:[%s3107 + $0x28] sm:$0xf]
      %v3119 = vld [vmem:[%s3107 + $0x2c] sm:$0xf]
      %v3120 = vld [vmem:[%s3107 + $0x30] sm:$0xf]
      %v3121 = vld [vmem:[%s3107 + $0x34] sm:$0xf]
      %v3122 = vld [vmem:[%s3107 + $0x38] sm:$0xf]
      %v3123 = vld [vmem:[%s3107 + $0x3c] sm:$0xf]
      %v3141 = vunpack.c.l.b16 %v3073
      %v3142 = vunpack.c.l.b16 %v3074
      %v3143 = vunpack.c.l.b16 %v3075
      %v3144 = vunpack.c.l.b16 %v3076
      %v3145 = vunpack.c.l.b16 %v3077
      %v3146 = vunpack.c.l.b16 %v3078
      %v3147 = vunpack.c.l.b16 %v3079
      %v3148 = vunpack.c.l.b16 %v3080
      %v3149 = vunpack.c.l.b16 %v3081
      %v3150 = vunpack.c.l.b16 %v3082
      %v3151 = vunpack.c.l.b16 %v3083
      %v3152 = vunpack.c.l.b16 %v3084
      %v3153 = vunpack.c.l.b16 %v3085
      %v3154 = vunpack.c.l.b16 %v3086
      %v3155 = vunpack.c.l.b16 %v3087
      %v3156 = vunpack.c.l.b16 %v3088
      %v3157 = vunpack.c.l.b16 %v3106
      %v3158 = vpack.c.b16 %v3142, %v3141
      %v3159 = vpack.c.b16 %v3144, %v3143
      %v3160 = vpack.c.b16 %v3146, %v3145
      %v3161 = vpack.c.b16 %v3148, %v3147
      %v3162 = vpack.c.b16 %v3150, %v3149
      %v3163 = vpack.c.b16 %v3152, %v3151
      %v3164 = vpack.c.b16 %v3154, %v3153
      %v3165 = vpack.c.b16 %v3156, %v3155
      %v3166 = vpack.c.b16 %v3157, %v3157
      %v3168 = vshrl.u32 %v3158, 16
      %v3170 = vshll.u32 %v3158, 16
      %v3172 = vrot.slane %v3170, 1
      %v3173 = vor.u32 %v3168, %v3172
      %v3175 = vshll.u32 %v3159, 16
      %v3177 = vrot.slane %v3175, 1
      %v3178 = vsel %vm530, %v3173, %v3177
      %v3179 = vshrl.u32 %v3159, 16
      %v3181 = vor.u32 %v3179, %v3177
      %v3183 = vshll.u32 %v3160, 16
      %v3185 = vrot.slane %v3183, 1
      %v3186 = vsel %vm530, %v3181, %v3185
      %v3187 = vshrl.u32 %v3160, 16
      %v3189 = vor.u32 %v3187, %v3185
      %v3191 = vshll.u32 %v3161, 16
      %v3193 = vrot.slane %v3191, 1
      %v3194 = vsel %vm530, %v3189, %v3193
      %v3195 = vshrl.u32 %v3161, 16
      %v3197 = vor.u32 %v3195, %v3193
      %v3199 = vshll.u32 %v3162, 16
      %v3201 = vrot.slane %v3199, 1
      %v3202 = vsel %vm530, %v3197, %v3201
      %v3203 = vshrl.u32 %v3162, 16
      %v3205 = vor.u32 %v3203, %v3201
      %v3207 = vshll.u32 %v3163, 16
      %v3209 = vrot.slane %v3207, 1
      %v3210 = vsel %vm530, %v3205, %v3209
      %v3211 = vshrl.u32 %v3163, 16
      %v3213 = vor.u32 %v3211, %v3209
      %v3215 = vshll.u32 %v3164, 16
      %v3217 = vrot.slane %v3215, 1
      %v3218 = vsel %vm530, %v3213, %v3217
      %v3219 = vshrl.u32 %v3164, 16
      %v3221 = vor.u32 %v3219, %v3217
      %v3223 = vshll.u32 %v3165, 16
      %v3225 = vrot.slane %v3223, 1
      %v3226 = vsel %vm530, %v3221, %v3225
      %v3227 = vshrl.u32 %v3165, 16
      %v3229 = vor.u32 %v3227, %v3225
      %v3231 = vshll.u32 %v3166, 16
      %v3233 = vrot.slane %v3231, 1
      %v3234 = vsel %vm530, %v3229, %v3233
      %v3235 = vshrl.u32 %v3166, 16
      %v3237 = vor.u32 %v3235, %v3233
      %v3263 = vunpack.c.l.b16 %v3108
      %v3264 = vunpack.c.l.b16 %v3109
      %v3265 = vunpack.c.l.b16 %v3110
      %v3266 = vunpack.c.l.b16 %v3111
      %v3267 = vunpack.c.l.b16 %v3112
      %v3268 = vunpack.c.l.b16 %v3113
      %v3269 = vunpack.c.l.b16 %v3114
      %v3270 = vunpack.c.l.b16 %v3115
      %v3271 = vunpack.c.l.b16 %v3116
      %v3272 = vunpack.c.l.b16 %v3117
      %v3273 = vunpack.c.l.b16 %v3118
      %v3274 = vunpack.c.l.b16 %v3119
      %v3275 = vunpack.c.l.b16 %v3120
      %v3276 = vunpack.c.l.b16 %v3121
      %v3277 = vunpack.c.l.b16 %v3122
      %v3278 = vunpack.c.l.b16 %v3123
      %v3279 = vpack.c.b16 %v3264, %v3263
      %v3280 = vpack.c.b16 %v3266, %v3265
      %v3281 = vpack.c.b16 %v3268, %v3267
      %v3282 = vpack.c.b16 %v3270, %v3269
      %v3283 = vpack.c.b16 %v3272, %v3271
      %v3284 = vpack.c.b16 %v3274, %v3273
      %v3285 = vpack.c.b16 %v3276, %v3275
      %v3286 = vpack.c.b16 %v3278, %v3277
      %3295 = vmatprep.subr.bf16.mxu0 0
      %3296 = vmatpush1.bf16.msra.mxu0 %v3279
      %3297 = vmatprep.subr.bf16.mxu0 0
      %3298 = vmatpush1.bf16.msra.mxu0 %v3280
      %3299 = vmatprep.subr.bf16.mxu0 0
      %3300 = vmatpush1.bf16.msra.mxu0 %v3281
      %3301 = vmatprep.subr.bf16.mxu0 0
      %3302 = vmatpush1.bf16.msra.mxu0 %v3282
      %3303 = vmatprep.subr.bf16.mxu0 0
      %3304 = vmatpush1.bf16.msra.mxu0 %v3283
      %3305 = vmatprep.subr.bf16.mxu0 0
      %3306 = vmatpush1.bf16.msra.mxu0 %v3284
      %3307 = vmatprep.subr.bf16.mxu0 0
      %3308 = vmatpush1.bf16.msra.mxu0 %v3285
      %3309 = vmatprep.subr.bf16.mxu0 0
      %3310 = vmatpush1.bf16.msra.mxu0 %v3286
      %3311 = vmatprep.subr.bf16.mxu0 0
      %3312 = vmatpush1.bf16.msra.mxu0 0
      %3313 = vmatprep.subr.bf16.mxu0 0
      %3314 = vmatpush1.bf16.msra.mxu0 0
      %3315 = vmatprep.subr.bf16.mxu0 0
      %3316 = vmatpush1.bf16.msra.mxu0 0
      %3317 = vmatprep.subr.bf16.mxu0 0
      %3318 = vmatpush1.bf16.msra.mxu0 0
      %3319 = vmatprep.subr.bf16.mxu0 0
      %3320 = vmatpush1.bf16.msra.mxu0 0
      %3321 = vmatprep.subr.bf16.mxu0 0
      %3322 = vmatpush1.bf16.msra.mxu0 0
      %3323 = vmatprep.subr.bf16.mxu0 0
      %3324 = vmatpush1.bf16.msra.mxu0 0
      %3325 = vmatprep.subr.bf16.mxu0 0
      %3326 = vmatpush1.bf16.msra.mxu0 0
      %3327 = vmatprep.mubr.bf16.mxu0 0
      %3328 = vmatmul.mubr.bf16.gmra.mrb[0].mxu0 %v3178
      %v3329 = vpop.f32.mrb[0].mxu0
      %v3330 = vadd.f32 0.0, %v3329
      %v3331 = vpop.f32.mrb[0].mxu0
      %v3332 = vpop.f32.mrb[0].mxu0
      %v3333 = vadd.f32 0.0, %v3332
      %v3334 = vpop.f32.mrb[0].mxu0
      %3335 = vmatprep.mubr.bf16.mxu0 0
      %3336 = vmatmul.mubr.bf16.gmra.mrb[0].mxu0 %v3186
      %v3337 = vpop.f32.mrb[0].mxu0
      %v3338 = vadd.f32 0.0, %v3337
      %v3339 = vpop.f32.mrb[0].mxu0
      %v3340 = vpop.f32.mrb[0].mxu0
      %v3341 = vadd.f32 0.0, %v3340
      %v3342 = vpop.f32.mrb[0].mxu0
      %3343 = vmatprep.mubr.bf16.mxu0 0
      %3344 = vmatmul.mubr.bf16.gmra.mrb[0].mxu0 %v3194
      %v3345 = vpop.f32.mrb[0].mxu0
      %v3346 = vadd.f32 0.0, %v3345
      %v3347 = vpop.f32.mrb[0].mxu0
      %v3348 = vpop.f32.mrb[0].mxu0
      %v3349 = vadd.f32 0.0, %v3348
      %v3350 = vpop.f32.mrb[0].mxu0
      %3351 = vmatprep.mubr.bf16.mxu0 0
      %3352 = vmatmul.mubr.bf16.gmra.mrb[0].mxu0 %v3202
      %v3353 = vpop.f32.mrb[0].mxu0
      %v3354 = vadd.f32 0.0, %v3353
      %v3355 = vpop.f32.mrb[0].mxu0
      %v3356 = vpop.f32.mrb[0].mxu0
      %v3357 = vadd.f32 0.0, %v3356
      %v3358 = vpop.f32.mrb[0].mxu0
      %3359 = vmatprep.mubr.bf16.mxu0 0
      %3360 = vmatmul.mubr.bf16.gmra.mrb[0].mxu0 %v3210
      %v3361 = vpop.f32.mrb[0].mxu0
      %v3362 = vadd.f32 0.0, %v3361
      %v3363 = vpop.f32.mrb[0].mxu0
      %v3364 = vpop.f32.mrb[0].mxu0
      %v3365 = vadd.f32 0.0, %v3364
      %v3366 = vpop.f32.mrb[0].mxu0
      %3367 = vmatprep.mubr.bf16.mxu0 0
      %3368 = vmatmul.mubr.bf16.gmra.mrb[0].mxu0 %v3218
      %v3369 = vpop.f32.mrb[0].mxu0
      %v3370 = vadd.f32 0.0, %v3369
      %v3371 = vpop.f32.mrb[0].mxu0
      %v3372 = vpop.f32.mrb[0].mxu0
      %v3373 = vadd.f32 0.0, %v3372
      %v3374 = vpop.f32.mrb[0].mxu0
      %3375 = vmatprep.mubr.bf16.mxu0 0
      %3376 = vmatmul.mubr.bf16.gmra.mrb[0].mxu0 %v3226
      %v3377 = vpop.f32.mrb[0].mxu0
      %v3378 = vadd.f32 0.0, %v3377
      %v3379 = vpop.f32.mrb[0].mxu0
      %v3380 = vpop.f32.mrb[0].mxu0
      %v3381 = vadd.f32 0.0, %v3380
      %v3382 = vpop.f32.mrb[0].mxu0
      %3383 = vmatprep.mubr.bf16.mxu0 0
      %3384 = vmatmul.mubr.bf16.gmra.mrb[0].mxu0 %v3234
      %v3385 = vpop.f32.mrb[0].mxu0
      %v3386 = vadd.f32 0.0, %v3385
      %v3387 = vpop.f32.mrb[0].mxu0
      %v3388 = vpop.f32.mrb[0].mxu0
      %v3389 = vadd.f32 0.0, %v3388
      %v3390 = vpop.f32.mrb[0].mxu0
      %3391 = vmatprep.mubr.bf16.mxu0 0
      %3392 = vmatmul.mubr.bf16.gmra.mrb[0].mxu0 %v3237
      %v3393 = vpop.f32.mrb[0].mxu0
      %v3394 = vadd.f32 0.0, %v3393
      %v3395 = vpop.f32.mrb[0].mxu0
      %v3396 = vpop.f32.mrb[0].mxu0
      %v3397 = vpop.f32.mrb[0].mxu0
      %3398 = vdwg.mxu0
      %v3400 = vunpack.c.l.b16 %v3089
      %v3401 = vpack.c.b16 %v3400, %v3400
      %v3427 = vunpack.c.l.b16 %v3090
      %v3428 = vunpack.c.l.b16 %v3091
      %v3429 = vunpack.c.l.b16 %v3092
      %v3430 = vunpack.c.l.b16 %v3093
      %v3431 = vunpack.c.l.b16 %v3094
      %v3432 = vunpack.c.l.b16 %v3095
      %v3433 = vunpack.c.l.b16 %v3096
      %v3434 = vunpack.c.l.b16 %v3097
      %v3435 = vunpack.c.l.b16 %v3098
      %v3436 = vunpack.c.l.b16 %v3099
      %v3437 = vunpack.c.l.b16 %v3100
      %v3438 = vunpack.c.l.b16 %v3101
      %v3439 = vunpack.c.l.b16 %v3102
      %v3440 = vunpack.c.l.b16 %v3103
      %v3441 = vunpack.c.l.b16 %v3104
      %v3442 = vunpack.c.l.b16 %v3105
      %v3443 = vpack.c.b16 %v3428, %v3427
      %v3444 = vpack.c.b16 %v3430, %v3429
      %v3445 = vpack.c.b16 %v3432, %v3431
      %v3446 = vpack.c.b16 %v3434, %v3433
      %v3447 = vpack.c.b16 %v3436, %v3435
      %v3448 = vpack.c.b16 %v3438, %v3437
      %v3449 = vpack.c.b16 %v3440, %v3439
      %v3450 = vpack.c.b16 %v3442, %v3441
      %3459 = vmatprep.subr.bf16.mxu0 0
      %3460 = vmatpush1.bf16.msra.mxu0 %v3443
      %3461 = vmatprep.subr.bf16.mxu0 0
      %3462 = vmatpush1.bf16.msra.mxu0 %v3444
      %3463 = vmatprep.subr.bf16.mxu0 0
      %3464 = vmatpush1.bf16.msra.mxu0 %v3445
      %3465 = vmatprep.subr.bf16.mxu0 0
      %3466 = vmatpush1.bf16.msra.mxu0 %v3446
      %3467 = vmatprep.subr.bf16.mxu0 0
      %3468 = vmatpush1.bf16.msra.mxu0 %v3447
      %3469 = vmatprep.subr.bf16.mxu0 0
      %3470 = vmatpush1.bf16.msra.mxu0 %v3448
      %3471 = vmatprep.subr.bf16.mxu0 0
      %3472 = vmatpush1.bf16.msra.mxu0 %v3449
      %3473 = vmatprep.subr.bf16.mxu0 0
      %3474 = vmatpush1.bf16.msra.mxu0 %v3450
      %3475 = vmatprep.subr.bf16.mxu0 0
      %3476 = vmatpush1.bf16.msra.mxu0 0
      %3477 = vmatprep.subr.bf16.mxu0 0
      %3478 = vmatpush1.bf16.msra.mxu0 0
      %3479 = vmatprep.subr.bf16.mxu0 0
      %3480 = vmatpush1.bf16.msra.mxu0 0
      %3481 = vmatprep.subr.bf16.mxu0 0
      %3482 = vmatpush1.bf16.msra.mxu0 0
      %3483 = vmatprep.subr.bf16.mxu0 0
      %3484 = vmatpush1.bf16.msra.mxu0 0
      %3485 = vmatprep.subr.bf16.mxu0 0
      %3486 = vmatpush1.bf16.msra.mxu0 0
      %3487 = vmatprep.subr.bf16.mxu0 0
      %3488 = vmatpush1.bf16.msra.mxu0 0
      %3489 = vmatprep.subr.bf16.mxu0 0
      %3490 = vmatpush1.bf16.msra.mxu0 0
      %3491 = vmatprep.mubr.bf16.mxu0 0
      %3492 = vmatmul.mubr.bf16.gmra.mrb[0].mxu0 %v3158
      %v3493 = vpop.f32.mrb[0].mxu0
      %v3494 = vadd.f32 %v3330, %v3493
      %v3495 = vpop.f32.mrb[0].mxu0
      %v3496 = vpop.f32.mrb[0].mxu0
      %v3497 = vadd.f32 %v3333, %v3496
      %v3498 = vpop.f32.mrb[0].mxu0
      %3499 = vmatprep.mubr.bf16.mxu0 0
      %3500 = vmatmul.mubr.bf16.gmra.mrb[0].mxu0 %v3159
      %v3501 = vpop.f32.mrb[0].mxu0
      %v3502 = vadd.f32 %v3338, %v3501
      %v3503 = vpop.f32.mrb[0].mxu0
      %v3504 = vpop.f32.mrb[0].mxu0
      %v3505 = vadd.f32 %v3341, %v3504
      %v3506 = vpop.f32.mrb[0].mxu0
      %3507 = vmatprep.mubr.bf16.mxu0 0
      %3508 = vmatmul.mubr.bf16.gmra.mrb[0].mxu0 %v3160
      %v3509 = vpop.f32.mrb[0].mxu0
      %v3510 = vadd.f32 %v3346, %v3509
      %v3511 = vpop.f32.mrb[0].mxu0
      %v3512 = vpop.f32.mrb[0].mxu0
      %v3513 = vadd.f32 %v3349, %v3512
      %v3514 = vpop.f32.mrb[0].mxu0
      %3515 = vmatprep.mubr.bf16.mxu0 0
      %3516 = vmatmul.mubr.bf16.gmra.mrb[0].mxu0 %v3161
      %v3517 = vpop.f32.mrb[0].mxu0
      %v3518 = vadd.f32 %v3354, %v3517
      %v3519 = vpop.f32.mrb[0].mxu0
      %v3520 = vpop.f32.mrb[0].mxu0
      %v3521 = vadd.f32 %v3357, %v3520
      %v3522 = vpop.f32.mrb[0].mxu0
      %3523 = vmatprep.mubr.bf16.mxu0 0
      %3524 = vmatmul.mubr.bf16.gmra.mrb[0].mxu0 %v3162
      %v3525 = vpop.f32.mrb[0].mxu0
      %v3526 = vadd.f32 %v3362, %v3525
      %v3527 = vpop.f32.mrb[0].mxu0
      %v3528 = vpop.f32.mrb[0].mxu0
      %v3529 = vadd.f32 %v3365, %v3528
      %v3530 = vpop.f32.mrb[0].mxu0
      %3531 = vmatprep.mubr.bf16.mxu0 0
      %3532 = vmatmul.mubr.bf16.gmra.mrb[0].mxu0 %v3163
      %v3533 = vpop.f32.mrb[0].mxu0
      %v3534 = vadd.f32 %v3370, %v3533
      %v3535 = vpop.f32.mrb[0].mxu0
      %v3536 = vpop.f32.mrb[0].mxu0
      %v3537 = vadd.f32 %v3373, %v3536
      %v3538 = vpop.f32.mrb[0].mxu0
      %3539 = vmatprep.mubr.bf16.mxu0 0
      %3540 = vmatmul.mubr.bf16.gmra.mrb[0].mxu0 %v3164
      %v3541 = vpop.f32.mrb[0].mxu0
      %v3542 = vadd.f32 %v3378, %v3541
      %v3543 = vpop.f32.mrb[0].mxu0
      %v3544 = vpop.f32.mrb[0].mxu0
      %v3545 = vadd.f32 %v3381, %v3544
      %v3546 = vpop.f32.mrb[0].mxu0
      %3547 = vmatprep.mubr.bf16.mxu0 0
      %3548 = vmatmul.mubr.bf16.gmra.mrb[0].mxu0 %v3165
      %v3549 = vpop.f32.mrb[0].mxu0
      %v3550 = vadd.f32 %v3386, %v3549
      %v3551 = vpop.f32.mrb[0].mxu0
      %v3552 = vpop.f32.mrb[0].mxu0
      %v3553 = vadd.f32 %v3389, %v3552
      %v3554 = vpop.f32.mrb[0].mxu0
      %3555 = vmatprep.mubr.bf16.mxu0 0
      %3556 = vmatmul.mubr.bf16.gmra.mrb[0].mxu0 %v3401
      %v3557 = vpop.f32.mrb[0].mxu0
      %v3558 = vadd.f32 %v3394, %v3557
      %v3559 = vpop.f32.mrb[0].mxu0
      %v3560 = vpop.f32.mrb[0].mxu0
      %v3561 = vpop.f32.mrb[0].mxu0
      %3562 = vdwg.mxu0
      %v3563 = vld [vmem:[#allocation2] sm:$0xe]
      %s3564 = scalar_lea.vmem %s8, 128
      %v3565 = vld [vmem:[%s3564] sm:$0xf]
      %v3566 = vld [vmem:[%s3564 + $0x4] sm:$0xf]
      %v3567 = vld [vmem:[%s3564 + $0x8] sm:$0xf]
      %v3568 = vld [vmem:[%s3564 + $0xc] sm:$0xf]
      %v3569 = vld [vmem:[%s3564 + $0x10] sm:$0xf]
      %v3570 = vld [vmem:[%s3564 + $0x14] sm:$0xf]
      %v3571 = vld [vmem:[%s3564 + $0x18] sm:$0xf]
      %v3572 = vld [vmem:[%s3564 + $0x1c] sm:$0xf]
      %v3573 = vld [vmem:[%s3564 + $0x20] sm:$0xf]
      %v3574 = vld [vmem:[%s3564 + $0x24] sm:$0xf]
      %v3575 = vld [vmem:[%s3564 + $0x28] sm:$0xf]
      %v3576 = vld [vmem:[%s3564 + $0x2c] sm:$0xf]
      %v3577 = vld [vmem:[%s3564 + $0x30] sm:$0xf]
      %v3578 = vld [vmem:[%s3564 + $0x34] sm:$0xf]
      %v3579 = vld [vmem:[%s3564 + $0x38] sm:$0xf]
      %v3580 = vld [vmem:[%s3564 + $0x3c] sm:$0xf]
      %v3582 = vunpack.c.l.b16 %v3563
      %v3583 = vpack.c.b16 %v3142, %v3582
      %v3584 = vrot.slane %v3583, 1
      %v3585 = vrot.slane %v3159, 1
      %v3586 = vsel %vm2459, %v3584, %v3585
      %v3587 = vrot.slane %v3160, 1
      %v3588 = vsel %vm2459, %v3585, %v3587
      %v3589 = vrot.slane %v3161, 1
      %v3590 = vsel %vm2459, %v3587, %v3589
      %v3591 = vrot.slane %v3162, 1
      %v3592 = vsel %vm2459, %v3589, %v3591
      %v3593 = vrot.slane %v3163, 1
      %v3594 = vsel %vm2459, %v3591, %v3593
      %v3595 = vrot.slane %v3164, 1
      %v3596 = vsel %vm2459, %v3593, %v3595
      %v3597 = vrot.slane %v3165, 1
      %v3598 = vsel %vm2459, %v3595, %v3597
      %v3599 = vrot.slane %v3166, 1
      %v3600 = vsel %vm2459, %v3597, %v3599
      %v3626 = vunpack.c.l.b16 %v3565
      %v3627 = vunpack.c.l.b16 %v3566
      %v3628 = vunpack.c.l.b16 %v3567
      %v3629 = vunpack.c.l.b16 %v3568
      %v3630 = vunpack.c.l.b16 %v3569
      %v3631 = vunpack.c.l.b16 %v3570
      %v3632 = vunpack.c.l.b16 %v3571
      %v3633 = vunpack.c.l.b16 %v3572
      %v3634 = vunpack.c.l.b16 %v3573
      %v3635 = vunpack.c.l.b16 %v3574
      %v3636 = vunpack.c.l.b16 %v3575
      %v3637 = vunpack.c.l.b16 %v3576
      %v3638 = vunpack.c.l.b16 %v3577
      %v3639 = vunpack.c.l.b16 %v3578
      %v3640 = vunpack.c.l.b16 %v3579
      %v3641 = vunpack.c.l.b16 %v3580
      %v3642 = vpack.c.b16 %v3627, %v3626
      %v3643 = vpack.c.b16 %v3629, %v3628
      %v3644 = vpack.c.b16 %v3631, %v3630
      %v3645 = vpack.c.b16 %v3633, %v3632
      %v3646 = vpack.c.b16 %v3635, %v3634
      %v3647 = vpack.c.b16 %v3637, %v3636
      %v3648 = vpack.c.b16 %v3639, %v3638
      %v3649 = vpack.c.b16 %v3641, %v3640
      %3658 = vmatprep.subr.bf16.mxu0 0
      %3659 = vmatpush1.bf16.msra.mxu0 %v3642
      %3660 = vmatprep.subr.bf16.mxu0 0
      %3661 = vmatpush1.bf16.msra.mxu0 %v3643
      %3662 = vmatprep.subr.bf16.mxu0 0
      %3663 = vmatpush1.bf16.msra.mxu0 %v3644
      %3664 = vmatprep.subr.bf16.mxu0 0
      %3665 = vmatpush1.bf16.msra.mxu0 %v3645
      %3666 = vmatprep.subr.bf16.mxu0 0
      %3667 = vmatpush1.bf16.msra.mxu0 %v3646
      %3668 = vmatprep.subr.bf16.mxu0 0
      %3669 = vmatpush1.bf16.msra.mxu0 %v3647
      %3670 = vmatprep.subr.bf16.mxu0 0
      %3671 = vmatpush1.bf16.msra.mxu0 %v3648
      %3672 = vmatprep.subr.bf16.mxu0 0
      %3673 = vmatpush1.bf16.msra.mxu0 %v3649
      %3674 = vmatprep.subr.bf16.mxu0 0
      %3675 = vmatpush1.bf16.msra.mxu0 0
      %3676 = vmatprep.subr.bf16.mxu0 0
      %3677 = vmatpush1.bf16.msra.mxu0 0
      %3678 = vmatprep.subr.bf16.mxu0 0
      %3679 = vmatpush1.bf16.msra.mxu0 0
      %3680 = vmatprep.subr.bf16.mxu0 0
      %3681 = vmatpush1.bf16.msra.mxu0 0
      %3682 = vmatprep.subr.bf16.mxu0 0
      %3683 = vmatpush1.bf16.msra.mxu0 0
      %3684 = vmatprep.subr.bf16.mxu0 0
      %3685 = vmatpush1.bf16.msra.mxu0 0
      %3686 = vmatprep.subr.bf16.mxu0 0
      %3687 = vmatpush1.bf16.msra.mxu0 0
      %3688 = vmatprep.subr.bf16.mxu0 0
      %3689 = vmatpush1.bf16.msra.mxu0 0
      %3690 = vmatprep.mubr.bf16.mxu0 0
      %3691 = vmatmul.mubr.bf16.gmra.mrb[0].mxu0 %v3586
      %v3692 = vpop.f32.mrb[0].mxu0
      %v3693 = vadd.f32 0.0, %v3692
      %v3694 = vpop.f32.mrb[0].mxu0
      %v3695 = vpop.f32.mrb[0].mxu0
      %v3696 = vadd.f32 0.0, %v3695
      %v3697 = vpop.f32.mrb[0].mxu0
      %3698 = vmatprep.mubr.bf16.mxu0 0
      %3699 = vmatmul.mubr.bf16.gmra.mrb[0].mxu0 %v3588
      %v3700 = vpop.f32.mrb[0].mxu0
      %v3701 = vadd.f32 0.0, %v3700
      %v3702 = vpop.f32.mrb[0].mxu0
      %v3703 = vpop.f32.mrb[0].mxu0
      %v3704 = vadd.f32 0.0, %v3703
      %v3705 = vpop.f32.mrb[0].mxu0
      %3706 = vmatprep.mubr.bf16.mxu0 0
      %3707 = vmatmul.mubr.bf16.gmra.mrb[0].mxu0 %v3590
      %v3708 = vpop.f32.mrb[0].mxu0
      %v3709 = vadd.f32 0.0, %v3708
      %v3710 = vpop.f32.mrb[0].mxu0
      %v3711 = vpop.f32.mrb[0].mxu0
      %v3712 = vadd.f32 0.0, %v3711
      %v3713 = vpop.f32.mrb[0].mxu0
      %3714 = vmatprep.mubr.bf16.mxu0 0
      %3715 = vmatmul.mubr.bf16.gmra.mrb[0].mxu0 %v3592
      %v3716 = vpop.f32.mrb[0].mxu0
      %v3717 = vadd.f32 0.0, %v3716
      %v3718 = vpop.f32.mrb[0].mxu0
      %v3719 = vpop.f32.mrb[0].mxu0
      %v3720 = vadd.f32 0.0, %v3719
      %v3721 = vpop.f32.mrb[0].mxu0
      %3722 = vmatprep.mubr.bf16.mxu0 0
      %3723 = vmatmul.mubr.bf16.gmra.mrb[0].mxu0 %v3594
      %v3724 = vpop.f32.mrb[0].mxu0
      %v3725 = vadd.f32 0.0, %v3724
      %v3726 = vpop.f32.mrb[0].mxu0
      %v3727 = vpop.f32.mrb[0].mxu0
      %v3728 = vadd.f32 0.0, %v3727
      %v3729 = vpop.f32.mrb[0].mxu0
      %3730 = vmatprep.mubr.bf16.mxu0 0
      %3731 = vmatmul.mubr.bf16.gmra.mrb[0].mxu0 %v3596
      %v3732 = vpop.f32.mrb[0].mxu0
      %v3733 = vadd.f32 0.0, %v3732
      %v3734 = vpop.f32.mrb[0].mxu0
      %v3735 = vpop.f32.mrb[0].mxu0
      %v3736 = vadd.f32 0.0, %v3735
      %v3737 = vpop.f32.mrb[0].mxu0
      %3738 = vmatprep.mubr.bf16.mxu0 0
      %3739 = vmatmul.mubr.bf16.gmra.mrb[0].mxu0 %v3598
      %v3740 = vpop.f32.mrb[0].mxu0
      %v3741 = vadd.f32 0.0, %v3740
      %v3742 = vpop.f32.mrb[0].mxu0
      %v3743 = vpop.f32.mrb[0].mxu0
      %v3744 = vadd.f32 0.0, %v3743
      %v3745 = vpop.f32.mrb[0].mxu0
      %3746 = vmatprep.mubr.bf16.mxu0 0
      %3747 = vmatmul.mubr.bf16.gmra.mrb[0].mxu0 %v3600
      %v3748 = vpop.f32.mrb[0].mxu0
      %v3749 = vadd.f32 0.0, %v3748
      %v3750 = vpop.f32.mrb[0].mxu0
      %v3751 = vpop.f32.mrb[0].mxu0
      %v3752 = vadd.f32 0.0, %v3751
      %v3753 = vpop.f32.mrb[0].mxu0
      %3754 = vmatprep.mubr.bf16.mxu0 0
      %3755 = vmatmul.mubr.bf16.gmra.mrb[0].mxu0 %v3599
      %v3756 = vpop.f32.mrb[0].mxu0
      %v3757 = vadd.f32 0.0, %v3756
      %v3758 = vpop.f32.mrb[0].mxu0
      %v3759 = vpop.f32.mrb[0].mxu0
      %v3760 = vpop.f32.mrb[0].mxu0
      %3761 = vdwg.mxu0
      %v3762 = vadd.f32 %v3494, %v3693
      %v3763 = vadd.f32 %v3497, %v3696
      %v3764 = vadd.f32 %v3502, %v3701
      %v3765 = vadd.f32 %v3505, %v3704
      %v3766 = vadd.f32 %v3510, %v3709
      %v3767 = vadd.f32 %v3513, %v3712
      %v3768 = vadd.f32 %v3518, %v3717
      %v3769 = vadd.f32 %v3521, %v3720
      %v3770 = vadd.f32 %v3526, %v3725
      %v3771 = vadd.f32 %v3529, %v3728
      %v3772 = vadd.f32 %v3534, %v3733
      %v3773 = vadd.f32 %v3537, %v3736
      %v3774 = vadd.f32 %v3542, %v3741
      %v3775 = vadd.f32 %v3545, %v3744
      %v3776 = vadd.f32 %v3550, %v3749
      %v3777 = vadd.f32 %v3553, %v3752
      %v3778 = vadd.f32 %v3558, %v3757
      %v3779 = vld [vmem:[%s9] sm:$0x1]
      %v3781 = vlaneseq
      %v3782 = vshrl.u32 %v3781, 7
      %v3783 = vsub.s32 0, %v3782
      %v3784 = vrot.slane %v3779, %v3783
      %v3786 = vmul.f32 %v3762, %v3784
      %v3787 = vmul.f32 %v3763, %v3784
      %v3788 = vmul.f32 %v3764, %v3784
      %v3789 = vmul.f32 %v3765, %v3784
      %v3790 = vmul.f32 %v3766, %v3784
      %v3791 = vmul.f32 %v3767, %v3784
      %v3792 = vmul.f32 %v3768, %v3784
      %v3793 = vmul.f32 %v3769, %v3784
      %v3794 = vmul.f32 %v3770, %v3784
      %v3795 = vmul.f32 %v3771, %v3784
      %v3796 = vmul.f32 %v3772, %v3784
      %v3797 = vmul.f32 %v3773, %v3784
      %v3798 = vmul.f32 %v3774, %v3784
      %v3799 = vmul.f32 %v3775, %v3784
      %v3800 = vmul.f32 %v3776, %v3784
      %v3801 = vmul.f32 %v3777, %v3784
      %v3802 = vmul.f32 %v3778, %v3784
      %v3803 = vld [vmem:[%s10] sm:$0x1]
      %v3805 = vlaneseq
      %v3806 = vshrl.u32 %v3805, 7
      %v3807 = vsub.s32 0, %v3806
      %v3808 = vrot.slane %v3803, %v3807
      %v3810 = vadd.f32 %v3786, %v3808
      %v3811 = vadd.f32 %v3787, %v3808
      %v3812 = vadd.f32 %v3788, %v3808
      %v3813 = vadd.f32 %v3789, %v3808
      %v3814 = vadd.f32 %v3790, %v3808
      %v3815 = vadd.f32 %v3791, %v3808
      %v3816 = vadd.f32 %v3792, %v3808
      %v3817 = vadd.f32 %v3793, %v3808
      %v3818 = vadd.f32 %v3794, %v3808
      %v3819 = vadd.f32 %v3795, %v3808
      %v3820 = vadd.f32 %v3796, %v3808
      %v3821 = vadd.f32 %v3797, %v3808
      %v3822 = vadd.f32 %v3798, %v3808
      %v3823 = vadd.f32 %v3799, %v3808
      %v3824 = vadd.f32 %v3800, %v3808
      %v3825 = vadd.f32 %v3801, %v3808
      %v3826 = vadd.f32 %v3802, %v3808
      %v3827 = vmax.f32 %v3810, 0.0
      %v3828 = vmax.f32 %v3811, 0.0
      %v3829 = vmax.f32 %v3812, 0.0
      %v3830 = vmax.f32 %v3813, 0.0
      %v3831 = vmax.f32 %v3814, 0.0
      %v3832 = vmax.f32 %v3815, 0.0
      %v3833 = vmax.f32 %v3816, 0.0
      %v3834 = vmax.f32 %v3817, 0.0
      %v3835 = vmax.f32 %v3818, 0.0
      %v3836 = vmax.f32 %v3819, 0.0
      %v3837 = vmax.f32 %v3820, 0.0
      %v3838 = vmax.f32 %v3821, 0.0
      %v3839 = vmax.f32 %v3822, 0.0
      %v3840 = vmax.f32 %v3823, 0.0
      %v3841 = vmax.f32 %v3824, 0.0
      %v3842 = vmax.f32 %v3825, 0.0
      %v3843 = vmax.f32 %v3826, 0.0
      %v3844 = vpack.c.bf16 %v3828, %v3827
      %v3845 = vpack.c.bf16 %v3830, %v3829
      %v3848 = vunpack.c.l.b16 %v3844
      %v3849 = vunpack.c.h.b16 %v3844
      %v3850 = vunpack.c.l.b16 %v3845
      %v3851 = vunpack.c.h.b16 %v3845
      %v3852 = vpack.c.b16 %v3848, %v3848
      %v3853 = vpack.c.b16 %v3849, %v3849
      %v3854 = vpack.c.b16 %v3850, %v3850
      %v3855 = vpack.c.b16 %v3851, %v3851
      %v3857 = vshrl.u32 %v3852, 16
      %v3859 = vrot.slane %v3857, 7
      %v3860 = vshll.u32 %v3852, 16
      %v3862 = vor.u32 %v3859, %v3860
      %v3863 = vrot.slane %v3859, 4
      %v3865 = vshrl.u32 %v3853, 16
      %v3867 = vrot.slane %v3865, 7
      %v3868 = vshll.u32 %v3853, 16
      %v3870 = vor.u32 %v3867, %v3868
      %v3871 = vsel %vm1382, %v3863, %v3870
      %v3872 = vrot.slane %v3867, 4
      %v3874 = vshrl.u32 %v3854, 16
      %v3876 = vrot.slane %v3874, 7
      %v3877 = vshll.u32 %v3854, 16
      %v3879 = vor.u32 %v3876, %v3877
      %v3880 = vsel %vm1382, %v3872, %v3879
      %v3881 = vrot.slane %v3876, 4
      %v3883 = vshrl.u32 %v3855, 16
      %v3885 = vrot.slane %v3883, 7
      %v3886 = vshll.u32 %v3855, 16
      %v3888 = vor.u32 %v3885, %v3886
      %v3889 = vsel %vm1382, %v3881, %v3888
      %v3890 = vrot.slane %v3885, 4
      %v3896 = vld [vmem:[#allocation2] sm:$0xf]
      %v3897 = vsel %vm1424, %v3862, %v3896
      %3898 = vst [vmem:[#allocation2] sm:$0xf] %v3897
      %3899 = vst [vmem:[#allocation2 + $0x8] sm:$0xf] %v3871
      %3900 = vst [vmem:[#allocation2 + $0x10] sm:$0xf] %v3880
      %3901 = vst [vmem:[#allocation2 + $0x18] sm:$0xf] %v3889
      %v3902 = vld [vmem:[#allocation2 + $0x20] sm:$0x1]
      %v3903 = vsel %vm474, %v3890, %v3902
      %3904 = vst [vmem:[#allocation2 + $0x20] sm:$0x1] %v3903
      %v3905 = vpack.c.bf16 %v3832, %v3831
      %v3906 = vpack.c.bf16 %v3834, %v3833
      %v3907 = vpack.c.bf16 %v3835, %v3835
      %v3911 = vunpack.c.l.b16 %v3905
      %v3912 = vunpack.c.h.b16 %v3905
      %v3913 = vunpack.c.l.b16 %v3906
      %v3914 = vunpack.c.h.b16 %v3906
      %v3915 = vunpack.c.l.b16 %v3907
      %v3916 = vpack.c.b16 %v3911, %v3911
      %v3917 = vpack.c.b16 %v3912, %v3912
      %v3918 = vpack.c.b16 %v3913, %v3913
      %v3919 = vpack.c.b16 %v3914, %v3914
      %v3920 = vpack.c.b16 %v3915, %v3915
      %v3922 = vshrl.u32 %v3916, 16
      %v3924 = vrot.slane %v3922, 7
      %v3925 = vshll.u32 %v3916, 16
      %v3927 = vor.u32 %v3924, %v3925
      %v3928 = vrot.slane %v3924, 4
      %v3930 = vshrl.u32 %v3917, 16
      %v3932 = vrot.slane %v3930, 7
      %v3933 = vshll.u32 %v3917, 16
      %v3935 = vor.u32 %v3932, %v3933
      %v3936 = vsel %vm1382, %v3928, %v3935
      %v3937 = vrot.slane %v3932, 4
      %v3939 = vshrl.u32 %v3918, 16
      %v3941 = vrot.slane %v3939, 7
      %v3942 = vshll.u32 %v3918, 16
      %v3944 = vor.u32 %v3941, %v3942
      %v3945 = vsel %vm1382, %v3937, %v3944
      %v3946 = vrot.slane %v3941, 4
      %v3948 = vshrl.u32 %v3919, 16
      %v3950 = vrot.slane %v3948, 7
      %v3951 = vshll.u32 %v3919, 16
      %v3953 = vor.u32 %v3950, %v3951
      %v3954 = vsel %vm1382, %v3946, %v3953
      %v3955 = vrot.slane %v3950, 4
      %v3957 = vshrl.u32 %v3920, 16
      %v3959 = vrot.slane %v3957, 7
      %v3960 = vshll.u32 %v3920, 16
      %v3962 = vor.u32 %v3959, %v3960
      %v3963 = vsel %vm1382, %v3955, %v3962
      %v3969 = vld [vmem:[#allocation2 + $0x20] sm:$0xe]
      %v3970 = vsel %vm1504, %v3927, %v3969
      %3971 = vst [vmem:[#allocation2 + $0x20] sm:$0xe] %v3970
      %3972 = vst [vmem:[#allocation2 + $0x28] sm:$0xf] %v3936
      %3973 = vst [vmem:[#allocation2 + $0x30] sm:$0xf] %v3945
      %3974 = vst [vmem:[#allocation2 + $0x38] sm:$0xf] %v3954
      %v3975 = vld [vmem:[#allocation2 + $0x40] sm:$0x3]
      %v3976 = vsel %vm1515, %v3963, %v3975
      %3977 = vst [vmem:[#allocation2 + $0x40] sm:$0x3] %v3976
      %v3978 = vpack.c.bf16 %v3836, %v3835
      %v3979 = vpack.c.bf16 %v3838, %v3837
      %v3980 = vpack.c.bf16 %v3839, %v3839
      %v3984 = vunpack.c.l.b16 %v3978
      %v3985 = vunpack.c.h.b16 %v3978
      %v3986 = vunpack.c.l.b16 %v3979
      %v3987 = vunpack.c.h.b16 %v3979
      %v3988 = vunpack.c.l.b16 %v3980
      %v3989 = vpack.c.b16 %v3984, %v3984
      %v3990 = vpack.c.b16 %v3985, %v3985
      %v3991 = vpack.c.b16 %v3986, %v3986
      %v3992 = vpack.c.b16 %v3987, %v3987
      %v3993 = vpack.c.b16 %v3988, %v3988
      %v3995 = vshrl.u32 %v3989, 16
      %v3997 = vrot.slane %v3995, 7
      %v3998 = vshll.u32 %v3989, 16
      %v4000 = vor.u32 %v3997, %v3998
      %v4001 = vrot.slane %v3997, 4
      %v4003 = vshrl.u32 %v3990, 16
      %v4005 = vrot.slane %v4003, 7
      %v4006 = vshll.u32 %v3990, 16
      %v4008 = vor.u32 %v4005, %v4006
      %v4009 = vsel %vm1382, %v4001, %v4008
      %v4010 = vrot.slane %v4005, 4
      %v4012 = vshrl.u32 %v3991, 16
      %v4014 = vrot.slane %v4012, 7
      %v4015 = vshll.u32 %v3991, 16
      %v4017 = vor.u32 %v4014, %v4015
      %v4018 = vsel %vm1382, %v4010, %v4017
      %v4019 = vrot.slane %v4014, 4
      %v4021 = vshrl.u32 %v3992, 16
      %v4023 = vrot.slane %v4021, 7
      %v4024 = vshll.u32 %v3992, 16
      %v4026 = vor.u32 %v4023, %v4024
      %v4027 = vsel %vm1382, %v4019, %v4026
      %v4028 = vrot.slane %v4023, 4
      %v4030 = vshrl.u32 %v3993, 16
      %v4032 = vrot.slane %v4030, 7
      %v4033 = vshll.u32 %v3993, 16
      %v4035 = vor.u32 %v4032, %v4033
      %v4036 = vsel %vm1382, %v4028, %v4035
      %v4042 = vld [vmem:[#allocation2 + $0x40] sm:$0xc]
      %v4043 = vsel %vm1589, %v4000, %v4042
      %4044 = vst [vmem:[#allocation2 + $0x40] sm:$0xc] %v4043
      %4045 = vst [vmem:[#allocation2 + $0x48] sm:$0xf] %v4009
      %4046 = vst [vmem:[#allocation2 + $0x50] sm:$0xf] %v4018
      %4047 = vst [vmem:[#allocation2 + $0x58] sm:$0xf] %v4027
      %v4048 = vld [vmem:[#allocation2 + $0x60] sm:$0x7]
      %v4049 = vsel %vm1600, %v4036, %v4048
      %4050 = vst [vmem:[#allocation2 + $0x60] sm:$0x7] %v4049
      %v4051 = vpack.c.bf16 %v3840, %v3839
      %v4052 = vpack.c.bf16 %v3842, %v3841
      %v4053 = vpack.c.bf16 %v3843, %v3843
      %v4057 = vunpack.c.l.b16 %v4051
      %v4058 = vunpack.c.h.b16 %v4051
      %v4059 = vunpack.c.l.b16 %v4052
      %v4060 = vunpack.c.h.b16 %v4052
      %v4061 = vunpack.c.l.b16 %v4053
      %v4062 = vpack.c.b16 %v4057, %v4057
      %v4063 = vpack.c.b16 %v4058, %v4058
      %v4064 = vpack.c.b16 %v4059, %v4059
      %v4065 = vpack.c.b16 %v4060, %v4060
      %v4066 = vpack.c.b16 %v4061, %v4061
      %v4068 = vshll.u32 %v4062, 16
      %v4070 = vshrl.u32 %v4062, 16
      %v4072 = vrot.slane %v4070, 7
      %v4073 = vrot.slane %v4072, 4
      %v4075 = vshrl.u32 %v4063, 16
      %v4077 = vrot.slane %v4075, 7
      %v4078 = vshll.u32 %v4063, 16
      %v4080 = vor.u32 %v4077, %v4078
      %v4081 = vsel %vm1382, %v4073, %v4080
      %v4082 = vrot.slane %v4077, 4
      %v4084 = vshrl.u32 %v4064, 16
      %v4086 = vrot.slane %v4084, 7
      %v4087 = vshll.u32 %v4064, 16
      %v4089 = vor.u32 %v4086, %v4087
      %v4090 = vsel %vm1382, %v4082, %v4089
      %v4091 = vrot.slane %v4086, 4
      %v4093 = vshrl.u32 %v4065, 16
      %v4095 = vrot.slane %v4093, 7
      %v4096 = vshll.u32 %v4065, 16
      %v4098 = vor.u32 %v4095, %v4096
      %v4099 = vsel %vm1382, %v4091, %v4098
      %v4100 = vrot.slane %v4095, 4
      %v4102 = vshrl.u32 %v4066, 16
      %v4104 = vrot.slane %v4102, 7
      %v4105 = vshll.u32 %v4066, 16
      %v4107 = vor.u32 %v4104, %v4105
      %v4108 = vsel %vm1382, %v4100, %v4107
      %v4114 = vld [vmem:[#allocation2 + $0x60] sm:$0x8]
      %v4115 = vsel %vm537, %v4068, %v4114
      %4116 = vst [vmem:[#allocation2 + $0x60] sm:$0x8] %v4115
      %4117 = vst [vmem:[#allocation2 + $0x68] sm:$0xf] %v4081
      %4118 = vst [vmem:[#allocation2 + $0x70] sm:$0xf] %v4090
      %4119 = vst [vmem:[#allocation2 + $0x78] sm:$0xf] %v4099
      %v4120 = vld [vmem:[#allocation2 + $0x80] sm:$0xf]
      %v4121 = vsel %vm1679, %v4108, %v4120
      %4122 = vst [vmem:[#allocation2 + $0x80] sm:$0xf] %v4121
      %v4123 = vld [vmem:[#allocation2] sm:$0xf]
      %v4124 = vld [vmem:[#allocation2 + $0x8] sm:$0xf]
      %v4125 = vld [vmem:[#allocation2 + $0x10] sm:$0xf]
      %v4126 = vld [vmem:[#allocation2 + $0x18] sm:$0xf]
      %v4127 = vld [vmem:[#allocation2 + $0x20] sm:$0xf]
      %v4128 = vld [vmem:[#allocation2 + $0x28] sm:$0xf]
      %v4129 = vld [vmem:[#allocation2 + $0x30] sm:$0xf]
      %v4130 = vld [vmem:[#allocation2 + $0x38] sm:$0xf]
      %v4131 = vld [vmem:[#allocation2 + $0x40] sm:$0xf]
      %v4132 = vld [vmem:[#allocation2 + $0x48] sm:$0xf]
      %v4133 = vld [vmem:[#allocation2 + $0x50] sm:$0xf]
      %v4134 = vld [vmem:[#allocation2 + $0x58] sm:$0xf]
      %v4135 = vld [vmem:[#allocation2 + $0x60] sm:$0xf]
      %v4136 = vld [vmem:[#allocation2 + $0x68] sm:$0xf]
      %v4137 = vld [vmem:[#allocation2 + $0x70] sm:$0xf]
      %v4138 = vld [vmem:[#allocation2 + $0x78] sm:$0xf]
      %v4139 = vld [vmem:[#allocation2 + $0x80] sm:$0x7]
      %v4140 = vld [vmem:[%s11] sm:$0xf]
      %v4141 = vld [vmem:[%s11 + $0x4] sm:$0xf]
      %v4142 = vld [vmem:[%s11 + $0x8] sm:$0xf]
      %v4143 = vld [vmem:[%s11 + $0xc] sm:$0xf]
      %v4144 = vld [vmem:[%s11 + $0x10] sm:$0xf]
      %v4145 = vld [vmem:[%s11 + $0x14] sm:$0xf]
      %v4146 = vld [vmem:[%s11 + $0x18] sm:$0xf]
      %v4147 = vld [vmem:[%s11 + $0x1c] sm:$0xf]
      %v4148 = vld [vmem:[%s11 + $0x20] sm:$0xf]
      %v4149 = vld [vmem:[%s11 + $0x24] sm:$0xf]
      %v4150 = vld [vmem:[%s11 + $0x28] sm:$0xf]
      %v4151 = vld [vmem:[%s11 + $0x2c] sm:$0xf]
      %v4152 = vld [vmem:[%s11 + $0x30] sm:$0xf]
      %v4153 = vld [vmem:[%s11 + $0x34] sm:$0xf]
      %v4154 = vld [vmem:[%s11 + $0x38] sm:$0xf]
      %v4155 = vld [vmem:[%s11 + $0x3c] sm:$0xf]
      %v4156 = vld [vmem:[#allocation2 + $0x80] sm:$0xf]
      %s4157 = scalar_lea.vmem %s11, 64
      %v4158 = vld [vmem:[%s4157] sm:$0xf]
      %v4159 = vld [vmem:[%s4157 + $0x4] sm:$0xf]
      %v4160 = vld [vmem:[%s4157 + $0x8] sm:$0xf]
      %v4161 = vld [vmem:[%s4157 + $0xc] sm:$0xf]
      %v4162 = vld [vmem:[%s4157 + $0x10] sm:$0xf]
      %v4163 = vld [vmem:[%s4157 + $0x14] sm:$0xf]
      %v4164 = vld [vmem:[%s4157 + $0x18] sm:$0xf]
      %v4165 = vld [vmem:[%s4157 + $0x1c] sm:$0xf]
      %v4166 = vld [vmem:[%s4157 + $0x20] sm:$0xf]
      %v4167 = vld [vmem:[%s4157 + $0x24] sm:$0xf]
      %v4168 = vld [vmem:[%s4157 + $0x28] sm:$0xf]
      %v4169 = vld [vmem:[%s4157 + $0x2c] sm:$0xf]
      %v4170 = vld [vmem:[%s4157 + $0x30] sm:$0xf]
      %v4171 = vld [vmem:[%s4157 + $0x34] sm:$0xf]
      %v4172 = vld [vmem:[%s4157 + $0x38] sm:$0xf]
      %v4173 = vld [vmem:[%s4157 + $0x3c] sm:$0xf]
      %v4191 = vunpack.c.l.b16 %v4123
      %v4192 = vunpack.c.l.b16 %v4124
      %v4193 = vunpack.c.l.b16 %v4125
      %v4194 = vunpack.c.l.b16 %v4126
      %v4195 = vunpack.c.l.b16 %v4127
      %v4196 = vunpack.c.l.b16 %v4128
      %v4197 = vunpack.c.l.b16 %v4129
      %v4198 = vunpack.c.l.b16 %v4130
      %v4199 = vunpack.c.l.b16 %v4131
      %v4200 = vunpack.c.l.b16 %v4132
      %v4201 = vunpack.c.l.b16 %v4133
      %v4202 = vunpack.c.l.b16 %v4134
      %v4203 = vunpack.c.l.b16 %v4135
      %v4204 = vunpack.c.l.b16 %v4136
      %v4205 = vunpack.c.l.b16 %v4137
      %v4206 = vunpack.c.l.b16 %v4138
      %v4207 = vunpack.c.l.b16 %v4156
      %v4208 = vpack.c.b16 %v4192, %v4191
      %v4209 = vpack.c.b16 %v4194, %v4193
      %v4210 = vpack.c.b16 %v4196, %v4195
      %v4211 = vpack.c.b16 %v4198, %v4197
      %v4212 = vpack.c.b16 %v4200, %v4199
      %v4213 = vpack.c.b16 %v4202, %v4201
      %v4214 = vpack.c.b16 %v4204, %v4203
      %v4215 = vpack.c.b16 %v4206, %v4205
      %v4216 = vpack.c.b16 %v4207, %v4207
      %v4218 = vshrl.u32 %v4208, 16
      %v4220 = vshll.u32 %v4208, 16
      %v4222 = vrot.slane %v4220, 1
      %v4223 = vor.u32 %v4218, %v4222
      %v4225 = vshll.u32 %v4209, 16
      %v4227 = vrot.slane %v4225, 1
      %v4228 = vsel %vm530, %v4223, %v4227
      %v4229 = vshrl.u32 %v4209, 16
      %v4231 = vor.u32 %v4229, %v4227
      %v4233 = vshll.u32 %v4210, 16
      %v4235 = vrot.slane %v4233, 1
      %v4236 = vsel %vm530, %v4231, %v4235
      %v4237 = vshrl.u32 %v4210, 16
      %v4239 = vor.u32 %v4237, %v4235
      %v4241 = vshll.u32 %v4211, 16
      %v4243 = vrot.slane %v4241, 1
      %v4244 = vsel %vm530, %v4239, %v4243
      %v4245 = vshrl.u32 %v4211, 16
      %v4247 = vor.u32 %v4245, %v4243
      %v4249 = vshll.u32 %v4212, 16
      %v4251 = vrot.slane %v4249, 1
      %v4252 = vsel %vm530, %v4247, %v4251
      %v4253 = vshrl.u32 %v4212, 16
      %v4255 = vor.u32 %v4253, %v4251
      %v4257 = vshll.u32 %v4213, 16
      %v4259 = vrot.slane %v4257, 1
      %v4260 = vsel %vm530, %v4255, %v4259
      %v4261 = vshrl.u32 %v4213, 16
      %v4263 = vor.u32 %v4261, %v4259
      %v4265 = vshll.u32 %v4214, 16
      %v4267 = vrot.slane %v4265, 1
      %v4268 = vsel %vm530, %v4263, %v4267
      %v4269 = vshrl.u32 %v4214, 16
      %v4271 = vor.u32 %v4269, %v4267
      %v4273 = vshll.u32 %v4215, 16
      %v4275 = vrot.slane %v4273, 1
      %v4276 = vsel %vm530, %v4271, %v4275
      %v4277 = vshrl.u32 %v4215, 16
      %v4279 = vor.u32 %v4277, %v4275
      %v4281 = vshll.u32 %v4216, 16
      %v4283 = vrot.slane %v4281, 1
      %v4284 = vsel %vm530, %v4279, %v4283
      %v4285 = vshrl.u32 %v4216, 16
      %v4287 = vor.u32 %v4285, %v4283
      %v4313 = vunpack.c.l.b16 %v4158
      %v4314 = vunpack.c.l.b16 %v4159
      %v4315 = vunpack.c.l.b16 %v4160
      %v4316 = vunpack.c.l.b16 %v4161
      %v4317 = vunpack.c.l.b16 %v4162
      %v4318 = vunpack.c.l.b16 %v4163
      %v4319 = vunpack.c.l.b16 %v4164
      %v4320 = vunpack.c.l.b16 %v4165
      %v4321 = vunpack.c.l.b16 %v4166
      %v4322 = vunpack.c.l.b16 %v4167
      %v4323 = vunpack.c.l.b16 %v4168
      %v4324 = vunpack.c.l.b16 %v4169
      %v4325 = vunpack.c.l.b16 %v4170
      %v4326 = vunpack.c.l.b16 %v4171
      %v4327 = vunpack.c.l.b16 %v4172
      %v4328 = vunpack.c.l.b16 %v4173
      %v4329 = vpack.c.b16 %v4314, %v4313
      %v4330 = vpack.c.b16 %v4316, %v4315
      %v4331 = vpack.c.b16 %v4318, %v4317
      %v4332 = vpack.c.b16 %v4320, %v4319
      %v4333 = vpack.c.b16 %v4322, %v4321
      %v4334 = vpack.c.b16 %v4324, %v4323
      %v4335 = vpack.c.b16 %v4326, %v4325
      %v4336 = vpack.c.b16 %v4328, %v4327
      %4345 = vmatprep.subr.bf16.mxu0 0
      %4346 = vmatpush1.bf16.msra.mxu0 %v4329
      %4347 = vmatprep.subr.bf16.mxu0 0
      %4348 = vmatpush1.bf16.msra.mxu0 %v4330
      %4349 = vmatprep.subr.bf16.mxu0 0
      %4350 = vmatpush1.bf16.msra.mxu0 %v4331
      %4351 = vmatprep.subr.bf16.mxu0 0
      %4352 = vmatpush1.bf16.msra.mxu0 %v4332
      %4353 = vmatprep.subr.bf16.mxu0 0
      %4354 = vmatpush1.bf16.msra.mxu0 %v4333
      %4355 = vmatprep.subr.bf16.mxu0 0
      %4356 = vmatpush1.bf16.msra.mxu0 %v4334
      %4357 = vmatprep.subr.bf16.mxu0 0
      %4358 = vmatpush1.bf16.msra.mxu0 %v4335
      %4359 = vmatprep.subr.bf16.mxu0 0
      %4360 = vmatpush1.bf16.msra.mxu0 %v4336
      %4361 = vmatprep.subr.bf16.mxu0 0
      %4362 = vmatpush1.bf16.msra.mxu0 0
      %4363 = vmatprep.subr.bf16.mxu0 0
      %4364 = vmatpush1.bf16.msra.mxu0 0
      %4365 = vmatprep.subr.bf16.mxu0 0
      %4366 = vmatpush1.bf16.msra.mxu0 0
      %4367 = vmatprep.subr.bf16.mxu0 0
      %4368 = vmatpush1.bf16.msra.mxu0 0
      %4369 = vmatprep.subr.bf16.mxu0 0
      %4370 = vmatpush1.bf16.msra.mxu0 0
      %4371 = vmatprep.subr.bf16.mxu0 0
      %4372 = vmatpush1.bf16.msra.mxu0 0
      %4373 = vmatprep.subr.bf16.mxu0 0
      %4374 = vmatpush1.bf16.msra.mxu0 0
      %4375 = vmatprep.subr.bf16.mxu0 0
      %4376 = vmatpush1.bf16.msra.mxu0 0
      %4377 = vmatprep.mubr.bf16.mxu0 0
      %4378 = vmatmul.mubr.bf16.gmra.mrb[0].mxu0 %v4228
      %v4379 = vpop.f32.mrb[0].mxu0
      %v4380 = vadd.f32 0.0, %v4379
      %v4381 = vpop.f32.mrb[0].mxu0
      %v4382 = vpop.f32.mrb[0].mxu0
      %v4383 = vadd.f32 0.0, %v4382
      %v4384 = vpop.f32.mrb[0].mxu0
      %4385 = vmatprep.mubr.bf16.mxu0 0
      %4386 = vmatmul.mubr.bf16.gmra.mrb[0].mxu0 %v4236
      %v4387 = vpop.f32.mrb[0].mxu0
      %v4388 = vadd.f32 0.0, %v4387
      %v4389 = vpop.f32.mrb[0].mxu0
      %v4390 = vpop.f32.mrb[0].mxu0
      %v4391 = vadd.f32 0.0, %v4390
      %v4392 = vpop.f32.mrb[0].mxu0
      %4393 = vmatprep.mubr.bf16.mxu0 0
      %4394 = vmatmul.mubr.bf16.gmra.mrb[0].mxu0 %v4244
      %v4395 = vpop.f32.mrb[0].mxu0
      %v4396 = vadd.f32 0.0, %v4395
      %v4397 = vpop.f32.mrb[0].mxu0
      %v4398 = vpop.f32.mrb[0].mxu0
      %v4399 = vadd.f32 0.0, %v4398
      %v4400 = vpop.f32.mrb[0].mxu0
      %4401 = vmatprep.mubr.bf16.mxu0 0
      %4402 = vmatmul.mubr.bf16.gmra.mrb[0].mxu0 %v4252
      %v4403 = vpop.f32.mrb[0].mxu0
      %v4404 = vadd.f32 0.0, %v4403
      %v4405 = vpop.f32.mrb[0].mxu0
      %v4406 = vpop.f32.mrb[0].mxu0
      %v4407 = vadd.f32 0.0, %v4406
      %v4408 = vpop.f32.mrb[0].mxu0
      %4409 = vmatprep.mubr.bf16.mxu0 0
      %4410 = vmatmul.mubr.bf16.gmra.mrb[0].mxu0 %v4260
      %v4411 = vpop.f32.mrb[0].mxu0
      %v4412 = vadd.f32 0.0, %v4411
      %v4413 = vpop.f32.mrb[0].mxu0
      %v4414 = vpop.f32.mrb[0].mxu0
      %v4415 = vadd.f32 0.0, %v4414
      %v4416 = vpop.f32.mrb[0].mxu0
      %4417 = vmatprep.mubr.bf16.mxu0 0
      %4418 = vmatmul.mubr.bf16.gmra.mrb[0].mxu0 %v4268
      %v4419 = vpop.f32.mrb[0].mxu0
      %v4420 = vadd.f32 0.0, %v4419
      %v4421 = vpop.f32.mrb[0].mxu0
      %v4422 = vpop.f32.mrb[0].mxu0
      %v4423 = vadd.f32 0.0, %v4422
      %v4424 = vpop.f32.mrb[0].mxu0
      %4425 = vmatprep.mubr.bf16.mxu0 0
      %4426 = vmatmul.mubr.bf16.gmra.mrb[0].mxu0 %v4276
      %v4427 = vpop.f32.mrb[0].mxu0
      %v4428 = vadd.f32 0.0, %v4427
      %v4429 = vpop.f32.mrb[0].mxu0
      %v4430 = vpop.f32.mrb[0].mxu0
      %v4431 = vadd.f32 0.0, %v4430
      %v4432 = vpop.f32.mrb[0].mxu0
      %4433 = vmatprep.mubr.bf16.mxu0 0
      %4434 = vmatmul.mubr.bf16.gmra.mrb[0].mxu0 %v4284
      %v4435 = vpop.f32.mrb[0].mxu0
      %v4436 = vadd.f32 0.0, %v4435
      %v4437 = vpop.f32.mrb[0].mxu0
      %v4438 = vpop.f32.mrb[0].mxu0
      %v4439 = vadd.f32 0.0, %v4438
      %v4440 = vpop.f32.mrb[0].mxu0
      %4441 = vmatprep.mubr.bf16.mxu0 0
      %4442 = vmatmul.mubr.bf16.gmra.mrb[0].mxu0 %v4287
      %v4443 = vpop.f32.mrb[0].mxu0
      %v4444 = vadd.f32 0.0, %v4443
      %v4445 = vpop.f32.mrb[0].mxu0
      %v4446 = vpop.f32.mrb[0].mxu0
      %v4447 = vpop.f32.mrb[0].mxu0
      %4448 = vdwg.mxu0
      %v4450 = vunpack.c.l.b16 %v4139
      %v4451 = vpack.c.b16 %v4450, %v4450
      %v4477 = vunpack.c.l.b16 %v4140
      %v4478 = vunpack.c.l.b16 %v4141
      %v4479 = vunpack.c.l.b16 %v4142
      %v4480 = vunpack.c.l.b16 %v4143
      %v4481 = vunpack.c.l.b16 %v4144
      %v4482 = vunpack.c.l.b16 %v4145
      %v4483 = vunpack.c.l.b16 %v4146
      %v4484 = vunpack.c.l.b16 %v4147
      %v4485 = vunpack.c.l.b16 %v4148
      %v4486 = vunpack.c.l.b16 %v4149
      %v4487 = vunpack.c.l.b16 %v4150
      %v4488 = vunpack.c.l.b16 %v4151
      %v4489 = vunpack.c.l.b16 %v4152
      %v4490 = vunpack.c.l.b16 %v4153
      %v4491 = vunpack.c.l.b16 %v4154
      %v4492 = vunpack.c.l.b16 %v4155
      %v4493 = vpack.c.b16 %v4478, %v4477
      %v4494 = vpack.c.b16 %v4480, %v4479
      %v4495 = vpack.c.b16 %v4482, %v4481
      %v4496 = vpack.c.b16 %v4484, %v4483
      %v4497 = vpack.c.b16 %v4486, %v4485
      %v4498 = vpack.c.b16 %v4488, %v4487
      %v4499 = vpack.c.b16 %v4490, %v4489
      %v4500 = vpack.c.b16 %v4492, %v4491
      %4509 = vmatprep.subr.bf16.mxu0 0
      %4510 = vmatpush1.bf16.msra.mxu0 %v4493
      %4511 = vmatprep.subr.bf16.mxu0 0
      %4512 = vmatpush1.bf16.msra.mxu0 %v4494
      %4513 = vmatprep.subr.bf16.mxu0 0
      %4514 = vmatpush1.bf16.msra.mxu0 %v4495
      %4515 = vmatprep.subr.bf16.mxu0 0
      %4516 = vmatpush1.bf16.msra.mxu0 %v4496
      %4517 = vmatprep.subr.bf16.mxu0 0
      %4518 = vmatpush1.bf16.msra.mxu0 %v4497
      %4519 = vmatprep.subr.bf16.mxu0 0
      %4520 = vmatpush1.bf16.msra.mxu0 %v4498
      %4521 = vmatprep.subr.bf16.mxu0 0
      %4522 = vmatpush1.bf16.msra.mxu0 %v4499
      %4523 = vmatprep.subr.bf16.mxu0 0
      %4524 = vmatpush1.bf16.msra.mxu0 %v4500
      %4525 = vmatprep.subr.bf16.mxu0 0
      %4526 = vmatpush1.bf16.msra.mxu0 0
      %4527 = vmatprep.subr.bf16.mxu0 0
      %4528 = vmatpush1.bf16.msra.mxu0 0
      %4529 = vmatprep.subr.bf16.mxu0 0
      %4530 = vmatpush1.bf16.msra.mxu0 0
      %4531 = vmatprep.subr.bf16.mxu0 0
      %4532 = vmatpush1.bf16.msra.mxu0 0
      %4533 = vmatprep.subr.bf16.mxu0 0
      %4534 = vmatpush1.bf16.msra.mxu0 0
      %4535 = vmatprep.subr.bf16.mxu0 0
      %4536 = vmatpush1.bf16.msra.mxu0 0
      %4537 = vmatprep.subr.bf16.mxu0 0
      %4538 = vmatpush1.bf16.msra.mxu0 0
      %4539 = vmatprep.subr.bf16.mxu0 0
      %4540 = vmatpush1.bf16.msra.mxu0 0
      %4541 = vmatprep.mubr.bf16.mxu0 0
      %4542 = vmatmul.mubr.bf16.gmra.mrb[0].mxu0 %v4208
      %v4543 = vpop.f32.mrb[0].mxu0
      %v4544 = vadd.f32 %v4380, %v4543
      %v4545 = vpop.f32.mrb[0].mxu0
      %v4546 = vpop.f32.mrb[0].mxu0
      %v4547 = vadd.f32 %v4383, %v4546
      %v4548 = vpop.f32.mrb[0].mxu0
      %4549 = vmatprep.mubr.bf16.mxu0 0
      %4550 = vmatmul.mubr.bf16.gmra.mrb[0].mxu0 %v4209
      %v4551 = vpop.f32.mrb[0].mxu0
      %v4552 = vadd.f32 %v4388, %v4551
      %v4553 = vpop.f32.mrb[0].mxu0
      %v4554 = vpop.f32.mrb[0].mxu0
      %v4555 = vadd.f32 %v4391, %v4554
      %v4556 = vpop.f32.mrb[0].mxu0
      %4557 = vmatprep.mubr.bf16.mxu0 0
      %4558 = vmatmul.mubr.bf16.gmra.mrb[0].mxu0 %v4210
      %v4559 = vpop.f32.mrb[0].mxu0
      %v4560 = vadd.f32 %v4396, %v4559
      %v4561 = vpop.f32.mrb[0].mxu0
      %v4562 = vpop.f32.mrb[0].mxu0
      %v4563 = vadd.f32 %v4399, %v4562
      %v4564 = vpop.f32.mrb[0].mxu0
      %4565 = vmatprep.mubr.bf16.mxu0 0
      %4566 = vmatmul.mubr.bf16.gmra.mrb[0].mxu0 %v4211
      %v4567 = vpop.f32.mrb[0].mxu0
      %v4568 = vadd.f32 %v4404, %v4567
      %v4569 = vpop.f32.mrb[0].mxu0
      %v4570 = vpop.f32.mrb[0].mxu0
      %v4571 = vadd.f32 %v4407, %v4570
      %v4572 = vpop.f32.mrb[0].mxu0
      %4573 = vmatprep.mubr.bf16.mxu0 0
      %4574 = vmatmul.mubr.bf16.gmra.mrb[0].mxu0 %v4212
      %v4575 = vpop.f32.mrb[0].mxu0
      %v4576 = vadd.f32 %v4412, %v4575
      %v4577 = vpop.f32.mrb[0].mxu0
      %v4578 = vpop.f32.mrb[0].mxu0
      %v4579 = vadd.f32 %v4415, %v4578
      %v4580 = vpop.f32.mrb[0].mxu0
      %4581 = vmatprep.mubr.bf16.mxu0 0
      %4582 = vmatmul.mubr.bf16.gmra.mrb[0].mxu0 %v4213
      %v4583 = vpop.f32.mrb[0].mxu0
      %v4584 = vadd.f32 %v4420, %v4583
      %v4585 = vpop.f32.mrb[0].mxu0
      %v4586 = vpop.f32.mrb[0].mxu0
      %v4587 = vadd.f32 %v4423, %v4586
      %v4588 = vpop.f32.mrb[0].mxu0
      %4589 = vmatprep.mubr.bf16.mxu0 0
      %4590 = vmatmul.mubr.bf16.gmra.mrb[0].mxu0 %v4214
      %v4591 = vpop.f32.mrb[0].mxu0
      %v4592 = vadd.f32 %v4428, %v4591
      %v4593 = vpop.f32.mrb[0].mxu0
      %v4594 = vpop.f32.mrb[0].mxu0
      %v4595 = vadd.f32 %v4431, %v4594
      %v4596 = vpop.f32.mrb[0].mxu0
      %4597 = vmatprep.mubr.bf16.mxu0 0
      %4598 = vmatmul.mubr.bf16.gmra.mrb[0].mxu0 %v4215
      %v4599 = vpop.f32.mrb[0].mxu0
      %v4600 = vadd.f32 %v4436, %v4599
      %v4601 = vpop.f32.mrb[0].mxu0
      %v4602 = vpop.f32.mrb[0].mxu0
      %v4603 = vadd.f32 %v4439, %v4602
      %v4604 = vpop.f32.mrb[0].mxu0
      %4605 = vmatprep.mubr.bf16.mxu0 0
      %4606 = vmatmul.mubr.bf16.gmra.mrb[0].mxu0 %v4451
      %v4607 = vpop.f32.mrb[0].mxu0
      %v4608 = vadd.f32 %v4444, %v4607
      %v4609 = vpop.f32.mrb[0].mxu0
      %v4610 = vpop.f32.mrb[0].mxu0
      %v4611 = vpop.f32.mrb[0].mxu0
      %4612 = vdwg.mxu0
      %v4613 = vld [vmem:[#allocation2] sm:$0xe]
      %s4614 = scalar_lea.vmem %s11, 128
      %v4615 = vld [vmem:[%s4614] sm:$0xf]
      %v4616 = vld [vmem:[%s4614 + $0x4] sm:$0xf]
      %v4617 = vld [vmem:[%s4614 + $0x8] sm:$0xf]
      %v4618 = vld [vmem:[%s4614 + $0xc] sm:$0xf]
      %v4619 = vld [vmem:[%s4614 + $0x10] sm:$0xf]
      %v4620 = vld [vmem:[%s4614 + $0x14] sm:$0xf]
      %v4621 = vld [vmem:[%s4614 + $0x18] sm:$0xf]
      %v4622 = vld [vmem:[%s4614 + $0x1c] sm:$0xf]
      %v4623 = vld [vmem:[%s4614 + $0x20] sm:$0xf]
      %v4624 = vld [vmem:[%s4614 + $0x24] sm:$0xf]
      %v4625 = vld [vmem:[%s4614 + $0x28] sm:$0xf]
      %v4626 = vld [vmem:[%s4614 + $0x2c] sm:$0xf]
      %v4627 = vld [vmem:[%s4614 + $0x30] sm:$0xf]
      %v4628 = vld [vmem:[%s4614 + $0x34] sm:$0xf]
      %v4629 = vld [vmem:[%s4614 + $0x38] sm:$0xf]
      %v4630 = vld [vmem:[%s4614 + $0x3c] sm:$0xf]
      %v4632 = vunpack.c.l.b16 %v4613
      %v4633 = vpack.c.b16 %v4192, %v4632
      %v4634 = vrot.slane %v4633, 1
      %v4635 = vrot.slane %v4209, 1
      %v4636 = vsel %vm2459, %v4634, %v4635
      %v4637 = vrot.slane %v4210, 1
      %v4638 = vsel %vm2459, %v4635, %v4637
      %v4639 = vrot.slane %v4211, 1
      %v4640 = vsel %vm2459, %v4637, %v4639
      %v4641 = vrot.slane %v4212, 1
      %v4642 = vsel %vm2459, %v4639, %v4641
      %v4643 = vrot.slane %v4213, 1
      %v4644 = vsel %vm2459, %v4641, %v4643
      %v4645 = vrot.slane %v4214, 1
      %v4646 = vsel %vm2459, %v4643, %v4645
      %v4647 = vrot.slane %v4215, 1
      %v4648 = vsel %vm2459, %v4645, %v4647
      %v4649 = vrot.slane %v4216, 1
      %v4650 = vsel %vm2459, %v4647, %v4649
      %v4676 = vunpack.c.l.b16 %v4615
      %v4677 = vunpack.c.l.b16 %v4616
      %v4678 = vunpack.c.l.b16 %v4617
      %v4679 = vunpack.c.l.b16 %v4618
      %v4680 = vunpack.c.l.b16 %v4619
      %v4681 = vunpack.c.l.b16 %v4620
      %v4682 = vunpack.c.l.b16 %v4621
      %v4683 = vunpack.c.l.b16 %v4622
      %v4684 = vunpack.c.l.b16 %v4623
      %v4685 = vunpack.c.l.b16 %v4624
      %v4686 = vunpack.c.l.b16 %v4625
      %v4687 = vunpack.c.l.b16 %v4626
      %v4688 = vunpack.c.l.b16 %v4627
      %v4689 = vunpack.c.l.b16 %v4628
      %v4690 = vunpack.c.l.b16 %v4629
      %v4691 = vunpack.c.l.b16 %v4630
      %v4692 = vpack.c.b16 %v4677, %v4676
      %v4693 = vpack.c.b16 %v4679, %v4678
      %v4694 = vpack.c.b16 %v4681, %v4680
      %v4695 = vpack.c.b16 %v4683, %v4682
      %v4696 = vpack.c.b16 %v4685, %v4684
      %v4697 = vpack.c.b16 %v4687, %v4686
      %v4698 = vpack.c.b16 %v4689, %v4688
      %v4699 = vpack.c.b16 %v4691, %v4690
      %4708 = vmatprep.subr.bf16.mxu0 0
      %4709 = vmatpush1.bf16.msra.mxu0 %v4692
      %4710 = vmatprep.subr.bf16.mxu0 0
      %4711 = vmatpush1.bf16.msra.mxu0 %v4693
      %4712 = vmatprep.subr.bf16.mxu0 0
      %4713 = vmatpush1.bf16.msra.mxu0 %v4694
      %4714 = vmatprep.subr.bf16.mxu0 0
      %4715 = vmatpush1.bf16.msra.mxu0 %v4695
      %4716 = vmatprep.subr.bf16.mxu0 0
      %4717 = vmatpush1.bf16.msra.mxu0 %v4696
      %4718 = vmatprep.subr.bf16.mxu0 0
      %4719 = vmatpush1.bf16.msra.mxu0 %v4697
      %4720 = vmatprep.subr.bf16.mxu0 0
      %4721 = vmatpush1.bf16.msra.mxu0 %v4698
      %4722 = vmatprep.subr.bf16.mxu0 0
      %4723 = vmatpush1.bf16.msra.mxu0 %v4699
      %4724 = vmatprep.subr.bf16.mxu0 0
      %4725 = vmatpush1.bf16.msra.mxu0 0
      %4726 = vmatprep.subr.bf16.mxu0 0
      %4727 = vmatpush1.bf16.msra.mxu0 0
      %4728 = vmatprep.subr.bf16.mxu0 0
      %4729 = vmatpush1.bf16.msra.mxu0 0
      %4730 = vmatprep.subr.bf16.mxu0 0
      %4731 = vmatpush1.bf16.msra.mxu0 0
      %4732 = vmatprep.subr.bf16.mxu0 0
      %4733 = vmatpush1.bf16.msra.mxu0 0
      %4734 = vmatprep.subr.bf16.mxu0 0
      %4735 = vmatpush1.bf16.msra.mxu0 0
      %4736 = vmatprep.subr.bf16.mxu0 0
      %4737 = vmatpush1.bf16.msra.mxu0 0
      %4738 = vmatprep.subr.bf16.mxu0 0
      %4739 = vmatpush1.bf16.msra.mxu0 0
      %4740 = vmatprep.mubr.bf16.mxu0 0
      %4741 = vmatmul.mubr.bf16.gmra.mrb[0].mxu0 %v4636
      %v4742 = vpop.f32.mrb[0].mxu0
      %v4743 = vadd.f32 0.0, %v4742
      %v4744 = vpop.f32.mrb[0].mxu0
      %v4745 = vpop.f32.mrb[0].mxu0
      %v4746 = vadd.f32 0.0, %v4745
      %v4747 = vpop.f32.mrb[0].mxu0
      %4748 = vmatprep.mubr.bf16.mxu0 0
      %4749 = vmatmul.mubr.bf16.gmra.mrb[0].mxu0 %v4638
      %v4750 = vpop.f32.mrb[0].mxu0
      %v4751 = vadd.f32 0.0, %v4750
      %v4752 = vpop.f32.mrb[0].mxu0
      %v4753 = vpop.f32.mrb[0].mxu0
      %v4754 = vadd.f32 0.0, %v4753
      %v4755 = vpop.f32.mrb[0].mxu0
      %4756 = vmatprep.mubr.bf16.mxu0 0
      %4757 = vmatmul.mubr.bf16.gmra.mrb[0].mxu0 %v4640
      %v4758 = vpop.f32.mrb[0].mxu0
      %v4759 = vadd.f32 0.0, %v4758
      %v4760 = vpop.f32.mrb[0].mxu0
      %v4761 = vpop.f32.mrb[0].mxu0
      %v4762 = vadd.f32 0.0, %v4761
      %v4763 = vpop.f32.mrb[0].mxu0
      %4764 = vmatprep.mubr.bf16.mxu0 0
      %4765 = vmatmul.mubr.bf16.gmra.mrb[0].mxu0 %v4642
      %v4766 = vpop.f32.mrb[0].mxu0
      %v4767 = vadd.f32 0.0, %v4766
      %v4768 = vpop.f32.mrb[0].mxu0
      %v4769 = vpop.f32.mrb[0].mxu0
      %v4770 = vadd.f32 0.0, %v4769
      %v4771 = vpop.f32.mrb[0].mxu0
      %4772 = vmatprep.mubr.bf16.mxu0 0
      %4773 = vmatmul.mubr.bf16.gmra.mrb[0].mxu0 %v4644
      %v4774 = vpop.f32.mrb[0].mxu0
      %v4775 = vadd.f32 0.0, %v4774
      %v4776 = vpop.f32.mrb[0].mxu0
      %v4777 = vpop.f32.mrb[0].mxu0
      %v4778 = vadd.f32 0.0, %v4777
      %v4779 = vpop.f32.mrb[0].mxu0
      %4780 = vmatprep.mubr.bf16.mxu0 0
      %4781 = vmatmul.mubr.bf16.gmra.mrb[0].mxu0 %v4646
      %v4782 = vpop.f32.mrb[0].mxu0
      %v4783 = vadd.f32 0.0, %v4782
      %v4784 = vpop.f32.mrb[0].mxu0
      %v4785 = vpop.f32.mrb[0].mxu0
      %v4786 = vadd.f32 0.0, %v4785
      %v4787 = vpop.f32.mrb[0].mxu0
      %4788 = vmatprep.mubr.bf16.mxu0 0
      %4789 = vmatmul.mubr.bf16.gmra.mrb[0].mxu0 %v4648
      %v4790 = vpop.f32.mrb[0].mxu0
      %v4791 = vadd.f32 0.0, %v4790
      %v4792 = vpop.f32.mrb[0].mxu0
      %v4793 = vpop.f32.mrb[0].mxu0
      %v4794 = vadd.f32 0.0, %v4793
      %v4795 = vpop.f32.mrb[0].mxu0
      %4796 = vmatprep.mubr.bf16.mxu0 0
      %4797 = vmatmul.mubr.bf16.gmra.mrb[0].mxu0 %v4650
      %v4798 = vpop.f32.mrb[0].mxu0
      %v4799 = vadd.f32 0.0, %v4798
      %v4800 = vpop.f32.mrb[0].mxu0
      %v4801 = vpop.f32.mrb[0].mxu0
      %v4802 = vadd.f32 0.0, %v4801
      %v4803 = vpop.f32.mrb[0].mxu0
      %4804 = vmatprep.mubr.bf16.mxu0 0
      %4805 = vmatmul.mubr.bf16.gmra.mrb[0].mxu0 %v4649
      %v4806 = vpop.f32.mrb[0].mxu0
      %v4807 = vadd.f32 0.0, %v4806
      %v4808 = vpop.f32.mrb[0].mxu0
      %v4809 = vpop.f32.mrb[0].mxu0
      %v4810 = vpop.f32.mrb[0].mxu0
      %4811 = vdwg.mxu0
      %v4812 = vadd.f32 %v4544, %v4743
      %v4813 = vadd.f32 %v4547, %v4746
      %v4814 = vadd.f32 %v4552, %v4751
      %v4815 = vadd.f32 %v4555, %v4754
      %v4816 = vadd.f32 %v4560, %v4759
      %v4817 = vadd.f32 %v4563, %v4762
      %v4818 = vadd.f32 %v4568, %v4767
      %v4819 = vadd.f32 %v4571, %v4770
      %v4820 = vadd.f32 %v4576, %v4775
      %v4821 = vadd.f32 %v4579, %v4778
      %v4822 = vadd.f32 %v4584, %v4783
      %v4823 = vadd.f32 %v4587, %v4786
      %v4824 = vadd.f32 %v4592, %v4791
      %v4825 = vadd.f32 %v4595, %v4794
      %v4826 = vadd.f32 %v4600, %v4799
      %v4827 = vadd.f32 %v4603, %v4802
      %v4828 = vadd.f32 %v4608, %v4807
      %v4829 = vld [vmem:[%s12] sm:$0x1]
      %v4831 = vlaneseq
      %v4832 = vshrl.u32 %v4831, 7
      %v4833 = vsub.s32 0, %v4832
      %v4834 = vrot.slane %v4829, %v4833
      %v4836 = vmul.f32 %v4812, %v4834
      %v4837 = vmul.f32 %v4813, %v4834
      %v4838 = vmul.f32 %v4814, %v4834
      %v4839 = vmul.f32 %v4815, %v4834
      %v4840 = vmul.f32 %v4816, %v4834
      %v4841 = vmul.f32 %v4817, %v4834
      %v4842 = vmul.f32 %v4818, %v4834
      %v4843 = vmul.f32 %v4819, %v4834
      %v4844 = vmul.f32 %v4820, %v4834
      %v4845 = vmul.f32 %v4821, %v4834
      %v4846 = vmul.f32 %v4822, %v4834
      %v4847 = vmul.f32 %v4823, %v4834
      %v4848 = vmul.f32 %v4824, %v4834
      %v4849 = vmul.f32 %v4825, %v4834
      %v4850 = vmul.f32 %v4826, %v4834
      %v4851 = vmul.f32 %v4827, %v4834
      %v4852 = vmul.f32 %v4828, %v4834
      %v4853 = vld [vmem:[%s13] sm:$0x1]
      %v4855 = vlaneseq
      %v4856 = vshrl.u32 %v4855, 7
      %v4857 = vsub.s32 0, %v4856
      %v4858 = vrot.slane %v4853, %v4857
      %v4860 = vadd.f32 %v4836, %v4858
      %v4861 = vadd.f32 %v4837, %v4858
      %v4862 = vadd.f32 %v4838, %v4858
      %v4863 = vadd.f32 %v4839, %v4858
      %v4864 = vadd.f32 %v4840, %v4858
      %v4865 = vadd.f32 %v4841, %v4858
      %v4866 = vadd.f32 %v4842, %v4858
      %v4867 = vadd.f32 %v4843, %v4858
      %v4868 = vadd.f32 %v4844, %v4858
      %v4869 = vadd.f32 %v4845, %v4858
      %v4870 = vadd.f32 %v4846, %v4858
      %v4871 = vadd.f32 %v4847, %v4858
      %v4872 = vadd.f32 %v4848, %v4858
      %v4873 = vadd.f32 %v4849, %v4858
      %v4874 = vadd.f32 %v4850, %v4858
      %v4875 = vadd.f32 %v4851, %v4858
      %v4876 = vadd.f32 %v4852, %v4858
      %v4877 = vmax.f32 %v4860, 0.0
      %v4878 = vmax.f32 %v4861, 0.0
      %v4879 = vmax.f32 %v4862, 0.0
      %v4880 = vmax.f32 %v4863, 0.0
      %v4881 = vmax.f32 %v4864, 0.0
      %v4882 = vmax.f32 %v4865, 0.0
      %v4883 = vmax.f32 %v4866, 0.0
      %v4884 = vmax.f32 %v4867, 0.0
      %v4885 = vmax.f32 %v4868, 0.0
      %v4886 = vmax.f32 %v4869, 0.0
      %v4887 = vmax.f32 %v4870, 0.0
      %v4888 = vmax.f32 %v4871, 0.0
      %v4889 = vmax.f32 %v4872, 0.0
      %v4890 = vmax.f32 %v4873, 0.0
      %v4891 = vmax.f32 %v4874, 0.0
      %v4892 = vmax.f32 %v4875, 0.0
      %v4893 = vmax.f32 %v4876, 0.0
      %4894 = vst [vmem:[%s469] sm:$0xff] %v4877
      %4895 = vst [vmem:[%s469 + $0x8] sm:$0xff] %v4878
      %4896 = vst [vmem:[%s469 + $0x10] sm:$0xff] %v4879
      %4897 = vst [vmem:[%s469 + $0x18] sm:$0xff] %v4880
      %4898 = vst [vmem:[%s469 + $0x1e] sm:$0xfc] %v4881
      %4899 = vst [vmem:[%s469 + $0x26] sm:$0xff] %v4882
      %4900 = vst [vmem:[%s469 + $0x2e] sm:$0xff] %v4883
      %4901 = vst [vmem:[%s469 + $0x36] sm:$0xff] %v4884
      %4902 = vst [vmem:[%s469 + $0x3e] sm:$0x3] %v4885
      %4903 = vst [vmem:[%s469 + $0x3c] sm:$0xf0] %v4885
      %4904 = vst [vmem:[%s469 + $0x44] sm:$0xff] %v4886
      %4905 = vst [vmem:[%s469 + $0x4c] sm:$0xff] %v4887
      %4906 = vst [vmem:[%s469 + $0x54] sm:$0xff] %v4888
      %4907 = vst [vmem:[%s469 + $0x5c] sm:$0xf] %v4889
      %4908 = vst [vmem:[%s469 + $0x5a] sm:$0xc0] %v4889
      %4909 = vst [vmem:[%s469 + $0x62] sm:$0xff] %v4890
      %4910 = vst [vmem:[%s469 + $0x6a] sm:$0xff] %v4891
      %4911 = vst [vmem:[%s469 + $0x72] sm:$0xff] %v4892
      %4912 = vst [vmem:[%s469 + $0x7a] sm:$0x3f] %v4893
      %s4913 = smul.u32 16, %s25
      %p4914 = scmp.lt.s32.totalorder %s4913, 63
      %s4915 = scalar_select %p4914, %s4913, 63
      %s4916 = smul.addr %s4915, 8
      %s4917 = scalar_lea.vmem %s14, %s4916
      // Predicated region
      $region77: #{decoder_block_forward.1} parent=75 // pred_check
        %p4918 = pneg %p342
      $region78: #{decoder_block_forward.1} parent=75 // pred_check_branch
        %4920 = sbr.rel (%p4918) target = $region80
      $region79: #{decoder_block_forward.1} parent=75 // pred_region
        %s4921 = smul.u32 16, %s25
      $region80: #{decoder_block_forward.1} parent=75 // pred_fallthru
        _
    $region76: #{decoder_block_forward.1} parent=5 // pred_fallthru
      _
    %p4922 = scmp.le.s32.totalorder 2, %s20
    // Predicated region
    $region81: #{decoder_block_forward.1} parent=5 // pred_check
      %p4923 = pneg %p4922
    $region82: #{decoder_block_forward.1} parent=5 // pred_check_branch
      %4925 = sbr.rel (%p4923) target = $region84
    $region83: #{decoder_block_forward.1} parent=5 // pred_region
      %s4926 = ssub.s32 %s20, 2
      // Predicated region
      $region85: #{decoder_block_forward.1} parent=83 // pred_check
        %p4927 = pneg %p348
      $region86: #{decoder_block_forward.1} parent=83 // pred_check_branch
        %4929 = sbr.rel (%p4927) target = $region88
      $region87: #{decoder_block_forward.1} parent=83 // pred_region
        %s4930 = smul.u32 16, %s26
        %p4931 = scmp.lt.s32.totalorder %s4930, 63
        %s4932 = scalar_select %p4931, %s4930, 63
        %s4933 = smul.addr %s4932, 8
        %s4934 = scalar_lea.vmem %s14, %s4933
      $region88: #{decoder_block_forward.1} parent=83 // pred_fallthru
        _
    $region84: #{decoder_block_forward.1} parent=5 // pred_fallthru
      _
  $region6: #{decoder_block_forward.1} parent=0 // loop_footer
    %s24 = sadd.s32 1, %s20
  $region7: #{decoder_block_forward.1} parent=0 // loop_footer_branch
    %19 = sbr.rel target = $region3
  $region8: #{decoder_block_forward.1} parent=0 // loop_exit
    _

// kernel: decoder_block_forward.1
$region0: #{decoder_block_forward.1}
  #allocation0 [shape = 'u32[]', space=smem, size = 0x4, offset = 0x4, fixed_abs, tag = 'smem constant byte address 0x4 - core index']
  #allocation1 [shape = 'u32[144,128]{1,0:T(1,128)}', space=vmem, size = 0x12000, scoped, tag = 'internal scratch']
  #allocation2 [shape = 'bf16[136,256]{1,0:T(8,128)(2,1)}', space=vmem, size = 0x11000, scoped, tag = 'scratch operand']
  %s0 = inlined_call_operand.vmem [shape: bf16[256,128], index: 0, kind: input, shape index: {}]
  %s1 = inlined_call_operand.vmem [shape: bf16[128,512], index: 1, kind: input, shape index: {}]
  %s2 = inlined_call_operand.vmem [shape: bf16[128,64], index: 2, kind: input, shape index: {}]
  %s3 = inlined_call_operand.vmem [shape: bf16[128,64], index: 3, kind: input, shape index: {}]
  %s4 = inlined_call_operand.vmem [shape: f32[1,256], index: 4, kind: input, shape index: {}]
  %s5 = inlined_call_operand.vmem [shape: bf16[3,256,128], index: 5, kind: input, shape index: {}]
  %s6 = inlined_call_operand.vmem [shape: f32[1,128], index: 6, kind: input, shape index: {}]
  %s7 = inlined_call_operand.vmem [shape: f32[1,128], index: 7, kind: input, shape index: {}]
  %s8 = inlined_call_operand.vmem [shape: bf16[3,128,128], index: 8, kind: input, shape index: {}]
  %s9 = inlined_call_operand.vmem [shape: f32[1,128], index: 9, kind: input, shape index: {}]
  %s10 = inlined_call_operand.vmem [shape: f32[1,128], index: 10, kind: input, shape index: {}]
  %s11 = inlined_call_operand.vmem [shape: bf16[3,128,128], index: 11, kind: input, shape index: {}]
  %s12 = inlined_call_operand.vmem [shape: f32[1,128], index: 12, kind: input, shape index: {}]
  %s13 = inlined_call_operand.vmem [shape: f32[1,128], index: 13, kind: input, shape index: {}]
  %s14 = inlined_call_operand.vmem [shape: f32[512,128], index: 14, kind: output, shape index: {}]
  %s15 = sld [smem:[#allocation0]]
  $region89: #{decoder_block_forward.1} parent=0
    _
  %s17 = ssub.s32 1, %s15
  %s18 = scalar_select 0, %s17, %s15
  loop: start=0, step=1, limit=6
  $region2: #{decoder_block_forward.1} parent=0 // loop_pre_header
    _
  $region3: #{decoder_block_forward.1} parent=0 // loop_header
    %s20 = sphi 0, %s24
    %p21 = scmp.ge.s32.totalorder %s20, 6
    %s30 = sphi 0, %s32
    %s33 = sphi 0, %s30
    %s34 = sphi 0, %s33
    %s50 = sphi 0, %s34
    %s54 = sphi 0, %s54
    %s56 = sphi 0, %s54
    %s57 = sphi 0, %s56
    %s71 = sphi 0, %s57
    %s75 = sphi 0, %s75
    %s77 = sphi 0, %s75
    %s78 = sphi 0, %s77
    %s92 = sphi 0, %s78
    %s96 = sphi 0, %s96
    %s98 = sphi 0, %s96
    %s99 = sphi 0, %s98
    %s113 = sphi 0, %s99
    %s117 = sphi 0, %s117
    %s119 = sphi 0, %s117
    %s120 = sphi 0, %s119
    %s134 = sphi 0, %s120
    %s138 = sphi 0, %s138
    %s140 = sphi 0, %s138
    %s141 = sphi 0, %s140
    %s155 = sphi 0, %s141
    %s159 = sphi 0, %s159
    %s161 = sphi 0, %s159
    %s162 = sphi 0, %s161
    %s176 = sphi 0, %s162
    %s180 = sphi 0, %s180
    %s182 = sphi 0, %s180
    %s183 = sphi 0, %s182
    %s197 = sphi 0, %s183
    %s201 = sphi 0, %s201
    %s203 = sphi 0, %s201
    %s204 = sphi 0, %s203
    %s218 = sphi 0, %s204
    %s222 = sphi 0, %s222
    %s224 = sphi 0, %s222
    %s225 = sphi 0, %s224
    %s239 = sphi 0, %s225
    %s243 = sphi 0, %s243
    %s245 = sphi 0, %s243
    %s246 = sphi 0, %s245
    %s260 = sphi 0, %s246
    %s264 = sphi 0, %s264
    %s266 = sphi 0, %s264
    %s267 = sphi 0, %s266
    %s281 = sphi 0, %s267
    %s285 = sphi 0, %s285
    %s287 = sphi 0, %s285
    %s288 = sphi 0, %s287
    %s302 = sphi 0, %s288
    %s306 = sphi 0, %s306
    %s308 = sphi 0, %s306
    %s309 = sphi 0, %s308
    %s323 = sphi 0, %s309
    %s329 = sphi 0, %s331
    %s332 = sphi 0, %s329
    %s333 = sphi 0, %s332
    %s349 = sphi 0, %s333
  $region4: #{decoder_block_forward.1} parent=0 // loop_header_branch
    %23 = sbr.rel (%p21) target = $region8
  $region5: #{decoder_block_forward.1} parent=0 // loop_body
    %s25 = ssub.s32 %s20, 1
    %s26 = ssub.s32 %s20, 2
    %s27 = sadd.s32 %s20, 1
    %s28 = ssub.s32 %s20, %s27
    %p29 = scmp.eq.s32.totalorder %s28, 0
    %s31 = sadd.s32 %s30, 1
    %s32 = scalar_select %p29, %s30, %s31
    %p35 = pneg %p29
    %p36 = scmp.eq.s32.totalorder %s20, 3
    %p37 = por %p35, %p36
    %p38 = scmp.ne.s32.totalorder %s30, %s33
    %p39 = scmp.eq.s32.totalorder %s20, 0
    %p40 = por %p38, %p39
    %p41 = scmp.ne.s32.totalorder %s30, %s33
    %p42 = scmp.eq.s32.totalorder %s25, 3
    %p43 = por %p41, %p42
    %p44 = scmp.ne.s32.totalorder %s33, %s34
    %p45 = scmp.eq.s32.totalorder %s25, 0
    %p46 = por %p44, %p45
    %p47 = scmp.ne.s32.totalorder %s33, %s34
    %p48 = scmp.eq.s32.totalorder %s26, 3
    %p49 = por %p47, %p48
    %p51 = scmp.ne.s32.totalorder %s34, %s50
    %p52 = scmp.eq.s32.totalorder %s26, 0
    %p53 = por %p51, %p52
    %s55 = sadd.s32 %s54, 1
    %p58 = scmp.eq.s32.totalorder %s20, 3
    %p59 = scmp.ne.s32.totalorder %s54, %s56
    %p60 = scmp.eq.s32.totalorder %s20, 0
    %p61 = por %p59, %p60
    %p62 = scmp.ne.s32.totalorder %s54, %s56
    %p63 = scmp.eq.s32.totalorder %s25, 3
    %p64 = por %p62, %p63
    %p65 = scmp.ne.s32.totalorder %s56, %s57
    %p66 = scmp.eq.s32.totalorder %s25, 0
    %p67 = por %p65, %p66
    %p68 = scmp.ne.s32.totalorder %s56, %s57
    %p69 = scmp.eq.s32.totalorder %s26, 3
    %p70 = por %p68, %p69
    %p72 = scmp.ne.s32.totalorder %s57, %s71
    %p73 = scmp.eq.s32.totalorder %s26, 0
    %p74 = por %p72, %p73
    %s76 = sadd.s32 %s75, 1
    %p79 = scmp.eq.s32.totalorder %s20, 3
    %p80 = scmp.ne.s32.totalorder %s75, %s77
    %p81 = scmp.eq.s32.totalorder %s20, 0
    %p82 = por %p80, %p81
    %p83 = scmp.ne.s32.totalorder %s75, %s77
    %p84 = scmp.eq.s32.totalorder %s25, 3
    %p85 = por %p83, %p84
    %p86 = scmp.ne.s32.totalorder %s77, %s78
    %p87 = scmp.eq.s32.totalorder %s25, 0
    %p88 = por %p86, %p87
    %p89 = scmp.ne.s32.totalorder %s77, %s78
    %p90 = scmp.eq.s32.totalorder %s26, 3
    %p91 = por %p89, %p90
    %p93 = scmp.ne.s32.totalorder %s78, %s92
    %p94 = scmp.eq.s32.totalorder %s26, 0
    %p95 = por %p93, %p94
    %s97 = sadd.s32 %s96, 1
    %p100 = scmp.eq.s32.totalorder %s20, 3
    %p101 = scmp.ne.s32.totalorder %s96, %s98
    %p102 = scmp.eq.s32.totalorder %s20, 0
    %p103 = por %p101, %p102
    %p104 = scmp.ne.s32.totalorder %s96, %s98
    %p105 = scmp.eq.s32.totalorder %s25, 3
    %p106 = por %p104, %p105
    %p107 = scmp.ne.s32.totalorder %s98, %s99
    %p108 = scmp.eq.s32.totalorder %s25, 0
    %p109 = por %p107, %p108
    %p110 = scmp.ne.s32.totalorder %s98, %s99
    %p111 = scmp.eq.s32.totalorder %s26, 3
    %p112 = por %p110, %p111
    %p114 = scmp.ne.s32.totalorder %s99, %s113
    %p115 = scmp.eq.s32.totalorder %s26, 0
    %p116 = por %p114, %p115
    %s118 = sadd.s32 %s117, 1
    %p121 = scmp.eq.s32.totalorder %s20, 3
    %p122 = scmp.ne.s32.totalorder %s117, %s119
    %p123 = scmp.eq.s32.totalorder %s20, 0
    %p124 = por %p122, %p123
    %p125 = scmp.ne.s32.totalorder %s117, %s119
    %p126 = scmp.eq.s32.totalorder %s25, 3
    %p127 = por %p125, %p126
    %p128 = scmp.ne.s32.totalorder %s119, %s120
    %p129 = scmp.eq.s32.totalorder %s25, 0
    %p130 = por %p128, %p129
    %p131 = scmp.ne.s32.totalorder %s119, %s120
    %p132 = scmp.eq.s32.totalorder %s26, 3
    %p133 = por %p131, %p132
    %p135 = scmp.ne.s32.totalorder %s120, %s134
    %p136 = scmp.eq.s32.totalorder %s26, 0
    %p137 = por %p135, %p136
    %s139 = sadd.s32 %s138, 1
    %p142 = scmp.eq.s32.totalorder %s20, 3
    %p143 = scmp.ne.s32.totalorder %s138, %s140
    %p144 = scmp.eq.s32.totalorder %s20, 0
    %p145 = por %p143, %p144
    %p146 = scmp.ne.s32.totalorder %s138, %s140
    %p147 = scmp.eq.s32.totalorder %s25, 3
    %p148 = por %p146, %p147
    %p149 = scmp.ne.s32.totalorder %s140, %s141
    %p150 = scmp.eq.s32.totalorder %s25, 0
    %p151 = por %p149, %p150
    %p152 = scmp.ne.s32.totalorder %s140, %s141
    %p153 = scmp.eq.s32.totalorder %s26, 3
    %p154 = por %p152, %p153
    %p156 = scmp.ne.s32.totalorder %s141, %s155
    %p157 = scmp.eq.s32.totalorder %s26, 0
    %p158 = por %p156, %p157
    %s160 = sadd.s32 %s159, 1
    %p163 = scmp.eq.s32.totalorder %s20, 3
    %p164 = scmp.ne.s32.totalorder %s159, %s161
    %p165 = scmp.eq.s32.totalorder %s20, 0
    %p166 = por %p164, %p165
    %p167 = scmp.ne.s32.totalorder %s159, %s161
    %p168 = scmp.eq.s32.totalorder %s25, 3
    %p169 = por %p167, %p168
    %p170 = scmp.ne.s32.totalorder %s161, %s162
    %p171 = scmp.eq.s32.totalorder %s25, 0
    %p172 = por %p170, %p171
    %p173 = scmp.ne.s32.totalorder %s161, %s162
    %p174 = scmp.eq.s32.totalorder %s26, 3
    %p175 = por %p173, %p174
    %p177 = scmp.ne.s32.totalorder %s162, %s176
    %p178 = scmp.eq.s32.totalorder %s26, 0
    %p179 = por %p177, %p178
    %s181 = sadd.s32 %s180, 1
    %p184 = scmp.eq.s32.totalorder %s20, 3
    %p185 = scmp.ne.s32.totalorder %s180, %s182
    %p186 = scmp.eq.s32.totalorder %s20, 0
    %p187 = por %p185, %p186
    %p188 = scmp.ne.s32.totalorder %s180, %s182
    %p189 = scmp.eq.s32.totalorder %s25, 3
    %p190 = por %p188, %p189
    %p191 = scmp.ne.s32.totalorder %s182, %s183
    %p192 = scmp.eq.s32.totalorder %s25, 0
    %p193 = por %p191, %p192
    %p194 = scmp.ne.s32.totalorder %s182, %s183
    %p195 = scmp.eq.s32.totalorder %s26, 3
    %p196 = por %p194, %p195
    %p198 = scmp.ne.s32.totalorder %s183, %s197
    %p199 = scmp.eq.s32.totalorder %s26, 0
    %p200 = por %p198, %p199
    %s202 = sadd.s32 %s201, 1
    %p205 = scmp.eq.s32.totalorder %s20, 3
    %p206 = scmp.ne.s32.totalorder %s201, %s203
    %p207 = scmp.eq.s32.totalorder %s20, 0
    %p208 = por %p206, %p207
    %p209 = scmp.ne.s32.totalorder %s201, %s203
    %p210 = scmp.eq.s32.totalorder %s25, 3
    %p211 = por %p209, %p210
    %p212 = scmp.ne.s32.totalorder %s203, %s204
    %p213 = scmp.eq.s32.totalorder %s25, 0
    %p214 = por %p212, %p213
    %p215 = scmp.ne.s32.totalorder %s203, %s204
    %p216 = scmp.eq.s32.totalorder %s26, 3
    %p217 = por %p215, %p216
    %p219 = scmp.ne.s32.totalorder %s204, %s218
    %p220 = scmp.eq.s32.totalorder %s26, 0
    %p221 = por %p219, %p220
    %s223 = sadd.s32 %s222, 1
    %p226 = scmp.eq.s32.totalorder %s20, 3
    %p227 = scmp.ne.s32.totalorder %s222, %s224
    %p228 = scmp.eq.s32.totalorder %s20, 0
    %p229 = por %p227, %p228
    %p230 = scmp.ne.s32.totalorder %s222, %s224
    %p231 = scmp.eq.s32.totalorder %s25, 3
    %p232 = por %p230, %p231
    %p233 = scmp.ne.s32.totalorder %s224, %s225
    %p234 = scmp.eq.s32.totalorder %s25, 0
    %p235 = por %p233, %p234
    %p236 = scmp.ne.s32.totalorder %s224, %s225
    %p237 = scmp.eq.s32.totalorder %s26, 3
    %p238 = por %p236, %p237
    %p240 = scmp.ne.s32.totalorder %s225, %s239
    %p241 = scmp.eq.s32.totalorder %s26, 0
    %p242 = por %p240, %p241
    %s244 = sadd.s32 %s243, 1
    %p247 = scmp.eq.s32.totalorder %s20, 3
    %p248 = scmp.ne.s32.totalorder %s243, %s245
    %p249 = scmp.eq.s32.totalorder %s20, 0
    %p250 = por %p248, %p249
    %p251 = scmp.ne.s32.totalorder %s243, %s245
    %p252 = scmp.eq.s32.totalorder %s25, 3
    %p253 = por %p251, %p252
    %p254 = scmp.ne.s32.totalorder %s245, %s246
    %p255 = scmp.eq.s32.totalorder %s25, 0
    %p256 = por %p254, %p255
    %p257 = scmp.ne.s32.totalorder %s245, %s246
    %p258 = scmp.eq.s32.totalorder %s26, 3
    %p259 = por %p257, %p258
    %p261 = scmp.ne.s32.totalorder %s246, %s260
    %p262 = scmp.eq.s32.totalorder %s26, 0
    %p263 = por %p261, %p262
    %s265 = sadd.s32 %s264, 1
    %p268 = scmp.eq.s32.totalorder %s20, 3
    %p269 = scmp.ne.s32.totalorder %s264, %s266
    %p270 = scmp.eq.s32.totalorder %s20, 0
    %p271 = por %p269, %p270
    %p272 = scmp.ne.s32.totalorder %s264, %s266
    %p273 = scmp.eq.s32.totalorder %s25, 3
    %p274 = por %p272, %p273
    %p275 = scmp.ne.s32.totalorder %s266, %s267
    %p276 = scmp.eq.s32.totalorder %s25, 0
    %p277 = por %p275, %p276
    %p278 = scmp.ne.s32.totalorder %s266, %s267
    %p279 = scmp.eq.s32.totalorder %s26, 3
    %p280 = por %p278, %p279
    %p282 = scmp.ne.s32.totalorder %s267, %s281
    %p283 = scmp.eq.s32.totalorder %s26, 0
    %p284 = por %p282, %p283
    %s286 = sadd.s32 %s285, 1
    %p289 = scmp.eq.s32.totalorder %s20, 3
    %p290 = scmp.ne.s32.totalorder %s285, %s287
    %p291 = scmp.eq.s32.totalorder %s20, 0
    %p292 = por %p290, %p291
    %p293 = scmp.ne.s32.totalorder %s285, %s287
    %p294 = scmp.eq.s32.totalorder %s25, 3
    %p295 = por %p293, %p294
    %p296 = scmp.ne.s32.totalorder %s287, %s288
    %p297 = scmp.eq.s32.totalorder %s25, 0
    %p298 = por %p296, %p297
    %p299 = scmp.ne.s32.totalorder %s287, %s288
    %p300 = scmp.eq.s32.totalorder %s26, 3
    %p301 = por %p299, %p300
    %p303 = scmp.ne.s32.totalorder %s288, %s302
    %p304 = scmp.eq.s32.totalorder %s26, 0
    %p305 = por %p303, %p304
    %s307 = sadd.s32 %s306, 1
    %p310 = scmp.eq.s32.totalorder %s20, 3
    %p311 = scmp.ne.s32.totalorder %s306, %s308
    %p312 = scmp.eq.s32.totalorder %s20, 0
    %p313 = por %p311, %p312
    %p314 = scmp.ne.s32.totalorder %s306, %s308
    %p315 = scmp.eq.s32.totalorder %s25, 3
    %p316 = por %p314, %p315
    %p317 = scmp.ne.s32.totalorder %s308, %s309
    %p318 = scmp.eq.s32.totalorder %s25, 0
    %p319 = por %p317, %p318
    %p320 = scmp.ne.s32.totalorder %s308, %s309
    %p321 = scmp.eq.s32.totalorder %s26, 3
    %p322 = por %p320, %p321
    %p324 = scmp.ne.s32.totalorder %s309, %s323
    %p325 = scmp.eq.s32.totalorder %s26, 0
    %p326 = por %p324, %p325
    %s327 = ssub.s32 %s20, %s27
    %p328 = scmp.eq.s32.totalorder %s327, 0
    %s330 = sadd.s32 %s329, 1
    %s331 = scalar_select %p328, %s329, %s330
    %p334 = pneg %p328
    %p335 = scmp.eq.s32.totalorder %s20, 3
    %p336 = por %p334, %p335
    %p337 = scmp.ne.s32.totalorder %s329, %s332
    %p338 = scmp.eq.s32.totalorder %s20, 0
    %p339 = por %p337, %p338
    %p340 = scmp.ne.s32.totalorder %s329, %s332
    %p341 = scmp.eq.s32.totalorder %s25, 3
    %p342 = por %p340, %p341
    %p343 = scmp.ne.s32.totalorder %s332, %s333
    %p344 = scmp.eq.s32.totalorder %s25, 0
    %p345 = por %p343, %p344
    %p346 = scmp.ne.s32.totalorder %s332, %s333
    %p347 = scmp.eq.s32.totalorder %s26, 3
    %p348 = por %p346, %p347
    %p350 = scmp.ne.s32.totalorder %s333, %s349
    %p351 = scmp.eq.s32.totalorder %s26, 0
    %p352 = por %p350, %p351
    %p353 = scmp.le.s32.totalorder 1, %s20
    %p354 = scmp.lt.s32.totalorder %s20, 5
    %p355 = pnand %p353, %p354
    %p356 = pneg %p355
    // Predicated region
    $region9: #{decoder_block_forward.1} parent=5 // pred_check
      _
    $region10: #{decoder_block_forward.1} parent=5 // pred_check_branch
      %358 = sbr.rel (%p355) target = $region12
    $region11: #{decoder_block_forward.1} parent=5 // pred_region
      %s359 = ssub.s32 %s20, 1
      // Predicated region
      $region13: #{decoder_block_forward.1} parent=11 // pred_check
        %p360 = pneg %p67
      $region14: #{decoder_block_forward.1} parent=11 // pred_check_branch
        %362 = sbr.rel (%p360) target = $region16
      $region15: #{decoder_block_forward.1} parent=11 // pred_region
        _
      $region16: #{decoder_block_forward.1} parent=11 // pred_fallthru
        _
      // Predicated region
      $region17: #{decoder_block_forward.1} parent=11 // pred_check
        %p363 = pneg %p88
      $region18: #{decoder_block_forward.1} parent=11 // pred_check_branch
        %365 = sbr.rel (%p363) target = $region20
      $region19: #{decoder_block_forward.1} parent=11 // pred_region
        _
      $region20: #{decoder_block_forward.1} parent=11 // pred_fallthru
        _
      // Predicated region
      $region21: #{decoder_block_forward.1} parent=11 // pred_check
        %p366 = pneg %p109
      $region22: #{decoder_block_forward.1} parent=11 // pred_check_branch
        %368 = sbr.rel (%p366) target = $region24
      $region23: #{decoder_block_forward.1} parent=11 // pred_region
        _
      $region24: #{decoder_block_forward.1} parent=11 // pred_fallthru
        _
      // Predicated region
      $region25: #{decoder_block_forward.1} parent=11 // pred_check
        %p369 = pneg %p130
      $region26: #{decoder_block_forward.1} parent=11 // pred_check_branch
        %371 = sbr.rel (%p369) target = $region28
      $region27: #{decoder_block_forward.1} parent=11 // pred_region
        _
      $region28: #{decoder_block_forward.1} parent=11 // pred_fallthru
        _
      // Predicated region
      $region29: #{decoder_block_forward.1} parent=11 // pred_check
        %p372 = pneg %p151
      $region30: #{decoder_block_forward.1} parent=11 // pred_check_branch
        %374 = sbr.rel (%p372) target = $region32
      $region31: #{decoder_block_forward.1} parent=11 // pred_region
        _
      $region32: #{decoder_block_forward.1} parent=11 // pred_fallthru
        _
      // Predicated region
      $region33: #{decoder_block_forward.1} parent=11 // pred_check
        %p375 = pneg %p172
      $region34: #{decoder_block_forward.1} parent=11 // pred_check_branch
        %377 = sbr.rel (%p375) target = $region36
      $region35: #{decoder_block_forward.1} parent=11 // pred_region
        _
      $region36: #{decoder_block_forward.1} parent=11 // pred_fallthru
        _
      // Predicated region
      $region37: #{decoder_block_forward.1} parent=11 // pred_check
        %p378 = pneg %p193
      $region38: #{decoder_block_forward.1} parent=11 // pred_check_branch
        %380 = sbr.rel (%p378) target = $region40
      $region39: #{decoder_block_forward.1} parent=11 // pred_region
        _
      $region40: #{decoder_block_forward.1} parent=11 // pred_fallthru
        _
      // Predicated region
      $region41: #{decoder_block_forward.1} parent=11 // pred_check
        %p381 = pneg %p214
      $region42: #{decoder_block_forward.1} parent=11 // pred_check_branch
        %383 = sbr.rel (%p381) target = $region44
      $region43: #{decoder_block_forward.1} parent=11 // pred_region
        _
      $region44: #{decoder_block_forward.1} parent=11 // pred_fallthru
        _
      // Predicated region
      $region45: #{decoder_block_forward.1} parent=11 // pred_check
        %p384 = pneg %p235
      $region46: #{decoder_block_forward.1} parent=11 // pred_check_branch
        %386 = sbr.rel (%p384) target = $region48
      $region47: #{decoder_block_forward.1} parent=11 // pred_region
        _
      $region48: #{decoder_block_forward.1} parent=11 // pred_fallthru
        _
      // Predicated region
      $region49: #{decoder_block_forward.1} parent=11 // pred_check
        %p387 = pneg %p256
      $region50: #{decoder_block_forward.1} parent=11 // pred_check_branch
        %389 = sbr.rel (%p387) target = $region52
      $region51: #{decoder_block_forward.1} parent=11 // pred_region
        _
      $region52: #{decoder_block_forward.1} parent=11 // pred_fallthru
        _
      // Predicated region
      $region53: #{decoder_block_forward.1} parent=11 // pred_check
        %p390 = pneg %p277
      $region54: #{decoder_block_forward.1} parent=11 // pred_check_branch
        %392 = sbr.rel (%p390) target = $region56
      $region55: #{decoder_block_forward.1} parent=11 // pred_region
        _
      $region56: #{decoder_block_forward.1} parent=11 // pred_fallthru
        _
      // Predicated region
      $region57: #{decoder_block_forward.1} parent=11 // pred_check
        %p393 = pneg %p298
      $region58: #{decoder_block_forward.1} parent=11 // pred_check_branch
        %395 = sbr.rel (%p393) target = $region60
      $region59: #{decoder_block_forward.1} parent=11 // pred_region
        _
      $region60: #{decoder_block_forward.1} parent=11 // pred_fallthru
        _
      // Predicated region
      $region61: #{decoder_block_forward.1} parent=11 // pred_check
        %p396 = pneg %p319
      $region62: #{decoder_block_forward.1} parent=11 // pred_check_branch
        %398 = sbr.rel (%p396) target = $region64
      $region63: #{decoder_block_forward.1} parent=11 // pred_region
        _
      $region64: #{decoder_block_forward.1} parent=11 // pred_fallthru
        _
    $region12: #{decoder_block_forward.1} parent=5 // pred_fallthru
      _
    %p399 = scmp.lt.s32.totalorder %s20, 4
    // Predicated region
    $region65: #{decoder_block_forward.1} parent=5 // pred_check
      %p400 = pneg %p399
    $region66: #{decoder_block_forward.1} parent=5 // pred_check_branch
      %402 = sbr.rel (%p400) target = $region68
    $region67: #{decoder_block_forward.1} parent=5 // pred_region
      // Predicated region
      $region69: #{decoder_block_forward.1} parent=67 // pred_check
        %p403 = pneg %p40
      $region70: #{decoder_block_forward.1} parent=67 // pred_check_branch
        %405 = sbr.rel (%p403) target = $region72
      $region71: #{decoder_block_forward.1} parent=67 // pred_region
        %s406 = smul.u32 8, %s20
        %p407 = scmp.lt.s32.totalorder %s406, 31
        %s408 = scalar_select %p407, %s406, 31
        %s409 = smul.addr %s408, 4
        %s410 = scalar_lea.vmem %s0, %s409
        %s411 = smul.u32 8, %s20
      $region72: #{decoder_block_forward.1} parent=67 // pred_fallthru
        _
    $region68: #{decoder_block_forward.1} parent=5 // pred_fallthru
      _
    %p412 = scmp.le.s32.totalorder 1, %s20
    %p413 = scmp.lt.s32.totalorder %s20, 5
    %p414 = pnand %p412, %p413
    %p415 = pneg %p414
    // Predicated region
    $region73: #{decoder_block_forward.1} parent=5 // pred_check
      _
    $region74: #{decoder_block_forward.1} parent=5 // pred_check_branch
      %417 = sbr.rel (%p414) target = $region76
    $region75: #{decoder_block_forward.1} parent=5 // pred_region
      %s418 = ssub.s32 %s20, 1
      %s419 = smul.u32 8, %s25
      %p420 = scmp.lt.s32.totalorder %s419, 31
      %s421 = scalar_select %p420, %s419, 31
      %s422 = smul.addr %s421, 4
      %s423 = scalar_lea.vmem %s0, %s422
      %p424 = pneg %p46
      %p425 = pneg %p43
      %p426 = pneg %p67
      %p427 = pneg %p64
      %p428 = pneg %p88
      %p429 = pneg %p85
      %p430 = pneg %p109
      %p431 = pneg %p106
      %p432 = pneg %p130
      %p433 = pneg %p127
      %p434 = pneg %p151
      %p435 = pneg %p148
      %p436 = pneg %p172
      %p437 = pneg %p169
      %p438 = pneg %p193
      %p439 = pneg %p190
      %p440 = pneg %p214
      %p441 = pneg %p211
      %p442 = pneg %p235
      %p443 = pneg %p232
      %p444 = pneg %p256
      %p445 = pneg %p253
      %p446 = pneg %p277
      %p447 = pneg %p274
      %p448 = pneg %p298
      %p449 = pneg %p295
      %p450 = pneg %p319
      %p451 = pneg %p316
      %p452 = pneg %p345
      %p453 = pneg %p342
      %s454 = smul.u32 16, %s25
      %p455 = scmp.lt.s32.totalorder %s454, 63
      %s456 = scalar_select %p455, %s454, 63
      %s457 = smul.addr %s456, 8
      %s458 = scalar_lea.vmem %s14, %s457
      %s459 = smul.u32 8, %s25
      %p460 = scmp.lt.s32.totalorder %s459, 31
      %s461 = scalar_select %p460, %s459, 31
      %s462 = smul.addr %s461, 4
      %s463 = scalar_lea.vmem %s0, %s462
      %s464 = smul.u32 8, %s25
      %s465 = smul.u32 16, %s25
      %p466 = scmp.lt.s32.totalorder %s465, 63
      %s467 = scalar_select %p466, %s465, 63
      %s468 = smul.addr %s467, 8
      %s469 = scalar_lea.vmem %s14, %s468
      %s470 = smul.u32 16, %s25
      %vm472 = vcmask 1040384
      %vm473 = vsmask.f32 256
      %vm474 = vmand %vm472, %vm473
      %vm475 = vcmask 1044484
      %vm476 = vsmask.f32 4352
      %vm477 = vmand %vm475, %vm476
      %vm478 = vmor %vm477, %vm474
      %v479 = vld [vmem:[#allocation2] sm:$0x11]
      %v480 = vsel %vm478, 0, %v479
      %481 = vst [vmem:[#allocation2] sm:$0x11] %v480
      %vm482 = vsmask.f32 7938
      %vm483 = vmand %vm472, %vm482
      %vm484 = vsmask.f32 7954
      %vm485 = vmand %vm475, %vm484
      %vm486 = vmor %vm485, %vm483
      %v487 = vld [vmem:[#allocation2 + $0x20] sm:$0x11]
      %v488 = vsel %vm486, 0, %v487
      %489 = vst [vmem:[#allocation2 + $0x20] sm:$0x11] %v488
      %vm490 = vcmask 1041409
      %vm491 = vsmask.f32 1280
      %vm492 = vmand %vm490, %vm491
      %vm493 = vcmask 1045509
      %vm494 = vsmask.f32 5376
      %vm495 = vmand %vm493, %vm494
      %vm496 = vmor %vm495, %vm492
      %v497 = vld [vmem:[#allocation2 + $0x20] sm:$0x22]
      %v498 = vsel %vm496, 0, %v497
      %499 = vst [vmem:[#allocation2 + $0x20] sm:$0x22] %v498
      %vm500 = vsmask.f32 7942
      %vm501 = vmand %vm490, %vm500
      %vm502 = vsmask.f32 7958
      %vm503 = vmand %vm493, %vm502
      %vm504 = vmor %vm503, %vm501
      %v505 = vld [vmem:[#allocation2 + $0x40] sm:$0x22]
      %v506 = vsel %vm504, 0, %v505
      %507 = vst [vmem:[#allocation2 + $0x40] sm:$0x22] %v506
      %vm508 = vcmask 1042434
      %vm509 = vsmask.f32 2304
      %vm510 = vmand %vm508, %vm509
      %vm511 = vcmask 1046534
      %vm512 = vsmask.f32 6400
      %vm513 = vmand %vm511, %vm512
      %vm514 = vmor %vm513, %vm510
      %v515 = vld [vmem:[#allocation2 + $0x40] sm:$0x44]
      %v516 = vsel %vm514, 0, %v515
      %517 = vst [vmem:[#allocation2 + $0x40] sm:$0x44] %v516
      %vm518 = vsmask.f32 7946
      %vm519 = vmand %vm508, %vm518
      %vm520 = vsmask.f32 7962
      %vm521 = vmand %vm511, %vm520
      %vm522 = vmor %vm521, %vm519
      %v523 = vld [vmem:[#allocation2 + $0x60] sm:$0x44]
      %v524 = vsel %vm522, 0, %v523
      %525 = vst [vmem:[#allocation2 + $0x60] sm:$0x44] %v524
      %vm526 = vcmask 1043459
      %vm527 = vsmask.f32 3328
      %vm528 = vmand %vm526, %vm527
      %vm529 = vcmask 1047559
      %vm530 = vsmask.f32 7424
      %vm531 = vmand %vm529, %vm530
      %vm532 = vmor %vm531, %vm528
      %v533 = vld [vmem:[#allocation2 + $0x60] sm:$0x88]
      %v534 = vsel %vm532, 0, %v533
      %535 = vst [vmem:[#allocation2 + $0x60] sm:$0x88] %v534
      %vm536 = vsmask.f32 7950
      %vm537 = vmand %vm526, %vm536
      %vm538 = vsmask.f32 7966
      %vm539 = vmand %vm529, %vm538
      %vm540 = vmor %vm539, %vm537
      %v541 = vld [vmem:[#allocation2 + $0x80] sm:$0x88]
      %v542 = vsel %vm540, 0, %v541
      %543 = vst [vmem:[#allocation2 + $0x80] sm:$0x88] %v542
      %v544 = vld [vmem:[%s463] sm:$0xf]
      %v545 = vld [vmem:[%s463 + $0x4] sm:$0xf]
      %v546 = vld [vmem:[%s463 + $0x8] sm:$0xf]
      %v547 = vld [vmem:[%s463 + $0xc] sm:$0xf]
      %v548 = vld [vmem:[%s463 + $0x10] sm:$0xf]
      %v549 = vld [vmem:[%s463 + $0x14] sm:$0xf]
      %v550 = vld [vmem:[%s463 + $0x18] sm:$0xf]
      %v551 = vld [vmem:[%s463 + $0x1c] sm:$0xf]
      %v552 = vld [vmem:[%s1] sm:$0xff]
      %v553 = vld [vmem:[%s1 + $0x8] sm:$0xff]
      %v554 = vld [vmem:[%s1 + $0x10] sm:$0xff]
      %v555 = vld [vmem:[%s1 + $0x18] sm:$0xff]
      %v556 = vld [vmem:[%s1 + $0x20] sm:$0xff]
      %v557 = vld [vmem:[%s1 + $0x28] sm:$0xff]
      %v558 = vld [vmem:[%s1 + $0x30] sm:$0xff]
      %v559 = vld [vmem:[%s1 + $0x38] sm:$0xff]
      %v560 = vld [vmem:[%s1 + $0x40] sm:$0xff]
      %v561 = vld [vmem:[%s1 + $0x48] sm:$0xff]
      %v562 = vld [vmem:[%s1 + $0x50] sm:$0xff]
      %v563 = vld [vmem:[%s1 + $0x58] sm:$0xff]
      %v564 = vld [vmem:[%s1 + $0x60] sm:$0xff]
      %v565 = vld [vmem:[%s1 + $0x68] sm:$0xff]
      %v566 = vld [vmem:[%s1 + $0x70] sm:$0xff]
      %v567 = vld [vmem:[%s1 + $0x78] sm:$0xff]
      %v568 = vld [vmem:[%s1 + $0x80] sm:$0xff]
      %v569 = vld [vmem:[%s1 + $0x88] sm:$0xff]
      %v570 = vld [vmem:[%s1 + $0x90] sm:$0xff]
      %v571 = vld [vmem:[%s1 + $0x98] sm:$0xff]
      %v572 = vld [vmem:[%s1 + $0xa0] sm:$0xff]
      %v573 = vld [vmem:[%s1 + $0xa8] sm:$0xff]
      %v574 = vld [vmem:[%s1 + $0xb0] sm:$0xff]
      %v575 = vld [vmem:[%s1 + $0xb8] sm:$0xff]
      %v576 = vld [vmem:[%s1 + $0xc0] sm:$0xff]
      %v577 = vld [vmem:[%s1 + $0xc8] sm:$0xff]
      %v578 = vld [vmem:[%s1 + $0xd0] sm:$0xff]
      %v579 = vld [vmem:[%s1 + $0xd8] sm:$0xff]
      %v580 = vld [vmem:[%s1 + $0xe0] sm:$0xff]
      %v581 = vld [vmem:[%s1 + $0xe8] sm:$0xff]
      %v582 = vld [vmem:[%s1 + $0xf0] sm:$0xff]
      %v583 = vld [vmem:[%s1 + $0xf8] sm:$0xff]
      %v592 = vunpack.c.l.b16 %v544
      %v593 = vunpack.c.l.b16 %v545
      %v594 = vunpack.c.l.b16 %v546
      %v595 = vunpack.c.l.b16 %v547
      %v596 = vunpack.c.l.b16 %v548
      %v597 = vunpack.c.l.b16 %v549
      %v598 = vunpack.c.l.b16 %v550
      %v599 = vunpack.c.l.b16 %v551
      %v600 = vpack.c.b16 %v593, %v592
      %v601 = vpack.c.b16 %v595, %v594
      %v602 = vpack.c.b16 %v597, %v596
      %v603 = vpack.c.b16 %v599, %v598
      %v640 = vunpack.c.l.b16 %v552
      %v641 = vunpack.c.h.b16 %v552
      %v642 = vunpack.c.l.b16 %v553
      %v643 = vunpack.c.h.b16 %v553
      %v644 = vunpack.c.l.b16 %v554
      %v645 = vunpack.c.h.b16 %v554
      %v646 = vunpack.c.l.b16 %v555
      %v647 = vunpack.c.h.b16 %v555
      %v648 = vunpack.c.l.b16 %v556
      %v649 = vunpack.c.h.b16 %v556
      %v650 = vunpack.c.l.b16 %v557
      %v651 = vunpack.c.h.b16 %v557
      %v652 = vunpack.c.l.b16 %v558
      %v653 = vunpack.c.h.b16 %v558
      %v654 = vunpack.c.l.b16 %v559
      %v655 = vunpack.c.h.b16 %v559
      %v656 = vunpack.c.l.b16 %v560
      %v657 = vunpack.c.h.b16 %v560
      %v658 = vunpack.c.l.b16 %v561
      %v659 = vunpack.c.h.b16 %v561
      %v660 = vunpack.c.l.b16 %v562
      %v661 = vunpack.c.h.b16 %v562
      %v662 = vunpack.c.l.b16 %v563
      %v663 = vunpack.c.h.b16 %v563
      %v664 = vunpack.c.l.b16 %v564
      %v665 = vunpack.c.h.b16 %v564
      %v666 = vunpack.c.l.b16 %v565
      %v667 = vunpack.c.h.b16 %v565
      %v668 = vunpack.c.l.b16 %v566
      %v669 = vunpack.c.h.b16 %v566
      %v670 = vunpack.c.l.b16 %v567
      %v671 = vunpack.c.h.b16 %v567
      %v672 = vunpack.c.l.b16 %v568
      %v673 = vunpack.c.h.b16 %v568
      %v674 = vunpack.c.l.b16 %v569
      %v675 = vunpack.c.h.b16 %v569
      %v676 = vunpack.c.l.b16 %v570
      %v677 = vunpack.c.h.b16 %v570
      %v678 = vunpack.c.l.b16 %v571
      %v679 = vunpack.c.h.b16 %v571
      %v680 = vunpack.c.l.b16 %v572
      %v681 = vunpack.c.h.b16 %v572
      %v682 = vunpack.c.l.b16 %v573
      %v683 = vunpack.c.h.b16 %v573
      %v684 = vunpack.c.l.b16 %v574
      %v685 = vunpack.c.h.b16 %v574
      %v686 = vunpack.c.l.b16 %v575
      %v687 = vunpack.c.h.b16 %v575
      %v688 = vunpack.c.l.b16 %v576
      %v689 = vunpack.c.h.b16 %v576
      %v690 = vunpack.c.l.b16 %v577
      %v691 = vunpack.c.h.b16 %v577
      %v692 = vunpack.c.l.b16 %v578
      %v693 = vunpack.c.h.b16 %v578
      %v694 = vunpack.c.l.b16 %v579
      %v695 = vunpack.c.h.b16 %v579
      %v696 = vunpack.c.l.b16 %v580
      %v697 = vunpack.c.h.b16 %v580
      %v698 = vunpack.c.l.b16 %v581
      %v699 = vunpack.c.h.b16 %v581
      %v700 = vunpack.c.l.b16 %v582
      %v701 = vunpack.c.h.b16 %v582
      %v702 = vunpack.c.l.b16 %v583
      %v703 = vunpack.c.h.b16 %v583
      %v704 = vpack.c.b16 %v644, %v640
      %v705 = vpack.c.b16 %v645, %v641
      %v706 = vpack.c.b16 %v646, %v642
      %v707 = vpack.c.b16 %v647, %v643
      %v708 = vpack.c.b16 %v652, %v648
      %v709 = vpack.c.b16 %v653, %v649
      %v710 = vpack.c.b16 %v654, %v650
      %v711 = vpack.c.b16 %v655, %v651
      %v712 = vpack.c.b16 %v660, %v656
      %v713 = vpack.c.b16 %v661, %v657
      %v714 = vpack.c.b16 %v662, %v658
      %v715 = vpack.c.b16 %v663, %v659
      %v716 = vpack.c.b16 %v668, %v664
      %v717 = vpack.c.b16 %v669, %v665
      %v718 = vpack.c.b16 %v670, %v666
      %v719 = vpack.c.b16 %v671, %v667
      %v720 = vpack.c.b16 %v676, %v672
      %v721 = vpack.c.b16 %v677, %v673
      %v722 = vpack.c.b16 %v678, %v674
      %v723 = vpack.c.b16 %v679, %v675
      %v724 = vpack.c.b16 %v684, %v680
      %v725 = vpack.c.b16 %v685, %v681
      %v726 = vpack.c.b16 %v686, %v682
      %v727 = vpack.c.b16 %v687, %v683
      %v728 = vpack.c.b16 %v692, %v688
      %v729 = vpack.c.b16 %v693, %v689
      %v730 = vpack.c.b16 %v694, %v690
      %v731 = vpack.c.b16 %v695, %v691
      %v732 = vpack.c.b16 %v700, %v696
      %v733 = vpack.c.b16 %v701, %v697
      %v734 = vpack.c.b16 %v702, %v698
      %v735 = vpack.c.b16 %v703, %v699
      %768 = vmatprep.subr.bf16.mxu0 %v705
      %769 = vmatpush1.bf16.msra.mxu0 %v704
      %770 = vmatprep.subr.bf16.mxu0 %v709
      %771 = vmatpush1.bf16.msra.mxu0 %v708
      %772 = vmatprep.subr.bf16.mxu0 %v713
      %773 = vmatpush1.bf16.msra.mxu0 %v712
      %774 = vmatprep.subr.bf16.mxu0 %v717
      %775 = vmatpush1.bf16.msra.mxu0 %v716
      %776 = vmatprep.subr.bf16.mxu0 %v721
      %777 = vmatpush1.bf16.msra.mxu0 %v720
      %778 = vmatprep.subr.bf16.mxu0 %v725
      %779 = vmatpush1.bf16.msra.mxu0 %v724
      %780 = vmatprep.subr.bf16.mxu0 %v729
      %781 = vmatpush1.bf16.msra.mxu0 %v728
      %782 = vmatprep.subr.bf16.mxu0 %v733
      %783 = vmatpush1.bf16.msra.mxu0 %v732
      %784 = vmatprep.subr.bf16.mxu0 0
      %785 = vmatpush1.bf16.msra.mxu0 0
      %786 = vmatprep.subr.bf16.mxu0 0
      %787 = vmatpush1.bf16.msra.mxu0 0
      %788 = vmatprep.subr.bf16.mxu0 0
      %789 = vmatpush1.bf16.msra.mxu0 0
      %790 = vmatprep.subr.bf16.mxu0 0
      %791 = vmatpush1.bf16.msra.mxu0 0
      %792 = vmatprep.subr.bf16.mxu0 0
      %793 = vmatpush1.bf16.msra.mxu0 0
      %794 = vmatprep.subr.bf16.mxu0 0
      %795 = vmatpush1.bf16.msra.mxu0 0
      %796 = vmatprep.subr.bf16.mxu0 0
      %797 = vmatpush1.bf16.msra.mxu0 0
      %798 = vmatprep.subr.bf16.mxu0 0
      %799 = vmatpush1.bf16.msra.mxu0 0
      %800 = vmatprep.mubr.bf16.mxu0 0
      %801 = vmatmul.mubr.bf16.gmra.mrb[0].mxu0 %v600
      %v802 = vpop.f32.mrb[0].mxu0
      %v803 = vadd.f32 0.0, %v802
      %v804 = vpop.f32.mrb[0].mxu0
      %v805 = vadd.f32 0.0, %v804
      %v806 = vpop.f32.mrb[0].mxu0
      %v807 = vadd.f32 0.0, %v806
      %v808 = vpop.f32.mrb[0].mxu0
      %v809 = vadd.f32 0.0, %v808
      %810 = vmatprep.mubr.bf16.mxu0 0
      %811 = vmatmul.mubr.bf16.gmra.mrb[0].mxu0 %v601
      %v812 = vpop.f32.mrb[0].mxu0
      %v813 = vadd.f32 0.0, %v812
      %v814 = vpop.f32.mrb[0].mxu0
      %v815 = vadd.f32 0.0, %v814
      %v816 = vpop.f32.mrb[0].mxu0
      %v817 = vadd.f32 0.0, %v816
      %v818 = vpop.f32.mrb[0].mxu0
      %v819 = vadd.f32 0.0, %v818
      %820 = vmatprep.mubr.bf16.mxu0 0
      %821 = vmatmul.mubr.bf16.gmra.mrb[0].mxu0 %v602
      %v822 = vpop.f32.mrb[0].mxu0
      %v823 = vadd.f32 0.0, %v822
      %v824 = vpop.f32.mrb[0].mxu0
      %v825 = vadd.f32 0.0, %v824
      %v826 = vpop.f32.mrb[0].mxu0
      %v827 = vadd.f32 0.0, %v826
      %v828 = vpop.f32.mrb[0].mxu0
      %v829 = vadd.f32 0.0, %v828
      %830 = vmatprep.mubr.bf16.mxu0 0
      %831 = vmatmul.mubr.bf16.gmra.mrb[0].mxu0 %v603
      %v832 = vpop.f32.mrb[0].mxu0
      %v833 = vadd.f32 0.0, %v832
      %v834 = vpop.f32.mrb[0].mxu0
      %v835 = vadd.f32 0.0, %v834
      %v836 = vpop.f32.mrb[0].mxu0
      %v837 = vadd.f32 0.0, %v836
      %v838 = vpop.f32.mrb[0].mxu0
      %v839 = vadd.f32 0.0, %v838
      %840 = vdwg.mxu0
      %841 = vmatprep.subr.bf16.mxu0 %v707
      %842 = vmatpush1.bf16.msra.mxu0 %v706
      %843 = vmatprep.subr.bf16.mxu0 %v711
      %844 = vmatpush1.bf16.msra.mxu0 %v710
      %845 = vmatprep.subr.bf16.mxu0 %v715
      %846 = vmatpush1.bf16.msra.mxu0 %v714
      %847 = vmatprep.subr.bf16.mxu0 %v719
      %848 = vmatpush1.bf16.msra.mxu0 %v718
      %849 = vmatprep.subr.bf16.mxu0 %v723
      %850 = vmatpush1.bf16.msra.mxu0 %v722
      %851 = vmatprep.subr.bf16.mxu0 %v727
      %852 = vmatpush1.bf16.msra.mxu0 %v726
      %853 = vmatprep.subr.bf16.mxu0 %v731
      %854 = vmatpush1.bf16.msra.mxu0 %v730
      %855 = vmatprep.subr.bf16.mxu0 %v735
      %856 = vmatpush1.bf16.msra.mxu0 %v734
      %857 = vmatprep.subr.bf16.mxu0 0
      %858 = vmatpush1.bf16.msra.mxu0 0
      %859 = vmatprep.subr.bf16.mxu0 0
      %860 = vmatpush1.bf16.msra.mxu0 0
      %861 = vmatprep.subr.bf16.mxu0 0
      %862 = vmatpush1.bf16.msra.mxu0 0
      %863 = vmatprep.subr.bf16.mxu0 0
      %864 = vmatpush1.bf16.msra.mxu0 0
      %865 = vmatprep.subr.bf16.mxu0 0
      %866 = vmatpush1.bf16.msra.mxu0 0
      %867 = vmatprep.subr.bf16.mxu0 0
      %868 = vmatpush1.bf16.msra.mxu0 0
      %869 = vmatprep.subr.bf16.mxu0 0
      %870 = vmatpush1.bf16.msra.mxu0 0
      %871 = vmatprep.subr.bf16.mxu0 0
      %872 = vmatpush1.bf16.msra.mxu0 0
      %873 = vmatprep.mubr.bf16.mxu0 0
      %874 = vmatmul.mubr.bf16.gmra.mrb[0].mxu0 %v600
      %v875 = vpop.f32.mrb[0].mxu0
      %v876 = vadd.f32 0.0, %v875
      %v877 = vpop.f32.mrb[0].mxu0
      %v878 = vadd.f32 0.0, %v877
      %v879 = vpop.f32.mrb[0].mxu0
      %v880 = vadd.f32 0.0, %v879
      %v881 = vpop.f32.mrb[0].mxu0
      %v882 = vadd.f32 0.0, %v881
      %883 = vmatprep.mubr.bf16.mxu0 0
      %884 = vmatmul.mubr.bf16.gmra.mrb[0].mxu0 %v601
      %v885 = vpop.f32.mrb[0].mxu0
      %v886 = vadd.f32 0.0, %v885
      %v887 = vpop.f32.mrb[0].mxu0
      %v888 = vadd.f32 0.0, %v887
      %v889 = vpop.f32.mrb[0].mxu0
      %v890 = vadd.f32 0.0, %v889
      %v891 = vpop.f32.mrb[0].mxu0
      %v892 = vadd.f32 0.0, %v891
      %893 = vmatprep.mubr.bf16.mxu0 0
      %894 = vmatmul.mubr.bf16.gmra.mrb[0].mxu0 %v602
      %v895 = vpop.f32.mrb[0].mxu0
      %v896 = vadd.f32 0.0, %v895
      %v897 = vpop.f32.mrb[0].mxu0
      %v898 = vadd.f32 0.0, %v897
      %v899 = vpop.f32.mrb[0].mxu0
      %v900 = vadd.f32 0.0, %v899
      %v901 = vpop.f32.mrb[0].mxu0
      %v902 = vadd.f32 0.0, %v901
      %903 = vmatprep.mubr.bf16.mxu0 0
      %904 = vmatmul.mubr.bf16.gmra.mrb[0].mxu0 %v603
      %v905 = vpop.f32.mrb[0].mxu0
      %v906 = vadd.f32 0.0, %v905
      %v907 = vpop.f32.mrb[0].mxu0
      %v908 = vadd.f32 0.0, %v907
      %v909 = vpop.f32.mrb[0].mxu0
      %v910 = vadd.f32 0.0, %v909
      %v911 = vpop.f32.mrb[0].mxu0
      %v912 = vadd.f32 0.0, %v911
      %913 = vdwg.mxu0
      %v914 = vpack.c.bf16 %v807, %v803
      %v915 = vpack.c.bf16 %v809, %v805
      %v916 = vpack.c.bf16 %v817, %v813
      %v917 = vpack.c.bf16 %v819, %v815
      %v918 = vpack.c.bf16 %v827, %v823
      %v919 = vpack.c.bf16 %v829, %v825
      %v920 = vpack.c.bf16 %v837, %v833
      %v921 = vpack.c.bf16 %v839, %v835
      %v922 = vpack.c.bf16 %v880, %v876
      %v923 = vpack.c.bf16 %v882, %v878
      %v924 = vpack.c.bf16 %v890, %v886
      %v925 = vpack.c.bf16 %v892, %v888
      %v926 = vpack.c.bf16 %v900, %v896
      %v927 = vpack.c.bf16 %v902, %v898
      %v928 = vpack.c.bf16 %v910, %v906
      %v929 = vpack.c.bf16 %v912, %v908
      %v930 = vld [vmem:[%s2] sm:$0xf]
      %v931 = vld [vmem:[%s2 + $0x4] sm:$0xf]
      %v932 = vld [vmem:[%s2 + $0x8] sm:$0xf]
      %v933 = vld [vmem:[%s2 + $0xc] sm:$0xf]
      %v934 = vld [vmem:[%s2 + $0x10] sm:$0xf]
      %v935 = vld [vmem:[%s2 + $0x14] sm:$0xf]
      %v936 = vld [vmem:[%s2 + $0x18] sm:$0xf]
      %v937 = vld [vmem:[%s2 + $0x1c] sm:$0xf]
      %v938 = vld [vmem:[%s2 + $0x20] sm:$0xf]
      %v939 = vld [vmem:[%s2 + $0x24] sm:$0xf]
      %v940 = vld [vmem:[%s2 + $0x28] sm:$0xf]
      %v941 = vld [vmem:[%s2 + $0x2c] sm:$0xf]
      %v942 = vld [vmem:[%s2 + $0x30] sm:$0xf]
      %v943 = vld [vmem:[%s2 + $0x34] sm:$0xf]
      %v944 = vld [vmem:[%s2 + $0x38] sm:$0xf]
      %v945 = vld [vmem:[%s2 + $0x3c] sm:$0xf]
      %v946 = vld [vmem:[%s3] sm:$0xf]
      %v947 = vld [vmem:[%s3 + $0x4] sm:$0xf]
      %v948 = vld [vmem:[%s3 + $0x8] sm:$0xf]
      %v949 = vld [vmem:[%s3 + $0xc] sm:$0xf]
      %v950 = vld [vmem:[%s3 + $0x10] sm:$0xf]
      %v951 = vld [vmem:[%s3 + $0x14] sm:$0xf]
      %v952 = vld [vmem:[%s3 + $0x18] sm:$0xf]
      %v953 = vld [vmem:[%s3 + $0x1c] sm:$0xf]
      %v954 = vld [vmem:[%s3 + $0x20] sm:$0xf]
      %v955 = vld [vmem:[%s3 + $0x24] sm:$0xf]
      %v956 = vld [vmem:[%s3 + $0x28] sm:$0xf]
      %v957 = vld [vmem:[%s3 + $0x2c] sm:$0xf]
      %v958 = vld [vmem:[%s3 + $0x30] sm:$0xf]
      %v959 = vld [vmem:[%s3 + $0x34] sm:$0xf]
      %v960 = vld [vmem:[%s3 + $0x38] sm:$0xf]
      %v961 = vld [vmem:[%s3 + $0x3c] sm:$0xf]
      %v978 = vunpack.c.l.b16 %v946
      %v979 = vunpack.c.l.b16 %v947
      %v980 = vunpack.c.l.b16 %v948
      %v981 = vunpack.c.l.b16 %v949
      %v982 = vunpack.c.l.b16 %v950
      %v983 = vunpack.c.l.b16 %v951
      %v984 = vunpack.c.l.b16 %v952
      %v985 = vunpack.c.l.b16 %v953
      %v986 = vunpack.c.l.b16 %v954
      %v987 = vunpack.c.l.b16 %v955
      %v988 = vunpack.c.l.b16 %v956
      %v989 = vunpack.c.l.b16 %v957
      %v990 = vunpack.c.l.b16 %v958
      %v991 = vunpack.c.l.b16 %v959
      %v992 = vunpack.c.l.b16 %v960
      %v993 = vunpack.c.l.b16 %v961
      %v994 = vpack.c.b16 %v979, %v978
      %v995 = vpack.c.b16 %v981, %v980
      %v996 = vpack.c.b16 %v983, %v982
      %v997 = vpack.c.b16 %v985, %v984
      %v998 = vpack.c.b16 %v987, %v986
      %v999 = vpack.c.b16 %v989, %v988
      %v1000 = vpack.c.b16 %v991, %v990
      %v1001 = vpack.c.b16 %v993, %v992
      %vm1002 = vcmask 523264
      %v1004 = vsel %vm1002, %v994, 0
      %v1007 = vsel %vm1002, %v995, 0
      %v1010 = vsel %vm1002, %v996, 0
      %v1013 = vsel %vm1002, %v997, 0
      %v1016 = vsel %vm1002, %v998, 0
      %v1019 = vsel %vm1002, %v999, 0
      %v1022 = vsel %vm1002, %v1000, 0
      %v1025 = vsel %vm1002, %v1001, 0
      %1027 = vmatprep.subr.bf16.mxu0 %v923
      %1028 = vmatpush1.bf16.msra.mxu0 %v922
      %1029 = vmatprep.subr.bf16.mxu0 %v925
      %1030 = vmatpush1.bf16.msra.mxu0 %v924
      %1031 = vmatprep.subr.bf16.mxu0 %v927
      %1032 = vmatpush1.bf16.msra.mxu0 %v926
      %1033 = vmatprep.subr.bf16.mxu0 %v929
      %1034 = vmatpush1.bf16.msra.mxu0 %v928
      %1035 = vmatprep.subr.bf16.mxu0 0
      %1036 = vmatpush1.bf16.msra.mxu0 0
      %1037 = vmatprep.subr.bf16.mxu0 0
      %1038 = vmatpush1.bf16.msra.mxu0 0
      %1039 = vmatprep.subr.bf16.mxu0 0
      %1040 = vmatpush1.bf16.msra.mxu0 0
      %1041 = vmatprep.subr.bf16.mxu0 0
      %1042 = vmatpush1.bf16.msra.mxu0 0
      %1043 = vmatprep.subr.bf16.mxu0 0
      %1044 = vmatpush1.bf16.msra.mxu0 0
      %1045 = vmatprep.subr.bf16.mxu0 0
      %1046 = vmatpush1.bf16.msra.mxu0 0
      %1047 = vmatprep.subr.bf16.mxu0 0
      %1048 = vmatpush1.bf16.msra.mxu0 0
      %1049 = vmatprep.subr.bf16.mxu0 0
      %1050 = vmatpush1.bf16.msra.mxu0 0
      %1051 = vmatprep.subr.bf16.mxu0 0
      %1052 = vmatpush1.bf16.msra.mxu0 0
      %1053 = vmatprep.subr.bf16.mxu0 0
      %1054 = vmatpush1.bf16.msra.mxu0 0
      %1055 = vmatprep.subr.bf16.mxu0 0
      %1056 = vmatpush1.bf16.msra.mxu0 0
      %1057 = vmatprep.subr.bf16.mxu0 0
      %1058 = vmatpush1.bf16.msra.mxu0 0
      %1059 = vmatprep.mubr.bf16.mxu0 0
      %1060 = vmatmul.mubr.bf16.gmra.mrb[0].mxu0 %v1004
      %v1061 = vpop.f32.mrb[0].mxu0
      %v1062 = vadd.f32 0.0, %v1061
      %v1063 = vpop.f32.mrb[0].mxu0
      %v1064 = vadd.f32 0.0, %v1063
      %v1065 = vpop.f32.mrb[0].mxu0
      %v1066 = vadd.f32 0.0, %v1065
      %v1067 = vpop.f32.mrb[0].mxu0
      %v1068 = vadd.f32 0.0, %v1067
      %1069 = vmatprep.mubr.bf16.mxu0 0
      %1070 = vmatmul.mubr.bf16.gmra.mrb[0].mxu0 %v1007
      %v1071 = vpop.f32.mrb[0].mxu0
      %v1072 = vadd.f32 0.0, %v1071
      %v1073 = vpop.f32.mrb[0].mxu0
      %v1074 = vadd.f32 0.0, %v1073
      %v1075 = vpop.f32.mrb[0].mxu0
      %v1076 = vadd.f32 0.0, %v1075
      %v1077 = vpop.f32.mrb[0].mxu0
      %v1078 = vadd.f32 0.0, %v1077
      %1079 = vmatprep.mubr.bf16.mxu0 0
      %1080 = vmatmul.mubr.bf16.gmra.mrb[0].mxu0 %v1010
      %v1081 = vpop.f32.mrb[0].mxu0
      %v1082 = vadd.f32 0.0, %v1081
      %v1083 = vpop.f32.mrb[0].mxu0
      %v1084 = vadd.f32 0.0, %v1083
      %v1085 = vpop.f32.mrb[0].mxu0
      %v1086 = vadd.f32 0.0, %v1085
      %v1087 = vpop.f32.mrb[0].mxu0
      %v1088 = vadd.f32 0.0, %v1087
      %1089 = vmatprep.mubr.bf16.mxu0 0
      %1090 = vmatmul.mubr.bf16.gmra.mrb[0].mxu0 %v1013
      %v1091 = vpop.f32.mrb[0].mxu0
      %v1092 = vadd.f32 0.0, %v1091
      %v1093 = vpop.f32.mrb[0].mxu0
      %v1094 = vadd.f32 0.0, %v1093
      %v1095 = vpop.f32.mrb[0].mxu0
      %v1096 = vadd.f32 0.0, %v1095
      %v1097 = vpop.f32.mrb[0].mxu0
      %v1098 = vadd.f32 0.0, %v1097
      %1099 = vmatprep.mubr.bf16.mxu0 0
      %1100 = vmatmul.mubr.bf16.gmra.mrb[0].mxu0 %v1016
      %v1101 = vpop.f32.mrb[0].mxu0
      %v1102 = vadd.f32 0.0, %v1101
      %v1103 = vpop.f32.mrb[0].mxu0
      %v1104 = vadd.f32 0.0, %v1103
      %v1105 = vpop.f32.mrb[0].mxu0
      %v1106 = vadd.f32 0.0, %v1105
      %v1107 = vpop.f32.mrb[0].mxu0
      %v1108 = vadd.f32 0.0, %v1107
      %1109 = vmatprep.mubr.bf16.mxu0 0
      %1110 = vmatmul.mubr.bf16.gmra.mrb[0].mxu0 %v1019
      %v1111 = vpop.f32.mrb[0].mxu0
      %v1112 = vadd.f32 0.0, %v1111
      %v1113 = vpop.f32.mrb[0].mxu0
      %v1114 = vadd.f32 0.0, %v1113
      %v1115 = vpop.f32.mrb[0].mxu0
      %v1116 = vadd.f32 0.0, %v1115
      %v1117 = vpop.f32.mrb[0].mxu0
      %v1118 = vadd.f32 0.0, %v1117
      %1119 = vmatprep.mubr.bf16.mxu0 0
      %1120 = vmatmul.mubr.bf16.gmra.mrb[0].mxu0 %v1022
      %v1121 = vpop.f32.mrb[0].mxu0
      %v1122 = vadd.f32 0.0, %v1121
      %v1123 = vpop.f32.mrb[0].mxu0
      %v1124 = vadd.f32 0.0, %v1123
      %v1125 = vpop.f32.mrb[0].mxu0
      %v1126 = vadd.f32 0.0, %v1125
      %v1127 = vpop.f32.mrb[0].mxu0
      %v1128 = vadd.f32 0.0, %v1127
      %1129 = vmatprep.mubr.bf16.mxu0 0
      %1130 = vmatmul.mubr.bf16.gmra.mrb[0].mxu0 %v1025
      %v1131 = vpop.f32.mrb[0].mxu0
      %v1132 = vadd.f32 0.0, %v1131
      %v1133 = vpop.f32.mrb[0].mxu0
      %v1134 = vadd.f32 0.0, %v1133
      %v1135 = vpop.f32.mrb[0].mxu0
      %v1136 = vadd.f32 0.0, %v1135
      %v1137 = vpop.f32.mrb[0].mxu0
      %v1138 = vadd.f32 0.0, %v1137
      %1139 = vdwg.mxu0
      %v1156 = vunpack.c.l.b16 %v930
      %v1157 = vunpack.c.l.b16 %v931
      %v1158 = vunpack.c.l.b16 %v932
      %v1159 = vunpack.c.l.b16 %v933
      %v1160 = vunpack.c.l.b16 %v934
      %v1161 = vunpack.c.l.b16 %v935
      %v1162 = vunpack.c.l.b16 %v936
      %v1163 = vunpack.c.l.b16 %v937
      %v1164 = vunpack.c.l.b16 %v938
      %v1165 = vunpack.c.l.b16 %v939
      %v1166 = vunpack.c.l.b16 %v940
      %v1167 = vunpack.c.l.b16 %v941
      %v1168 = vunpack.c.l.b16 %v942
      %v1169 = vunpack.c.l.b16 %v943
      %v1170 = vunpack.c.l.b16 %v944
      %v1171 = vunpack.c.l.b16 %v945
      %v1172 = vpack.c.b16 %v1157, %v1156
      %v1173 = vpack.c.b16 %v1159, %v1158
      %v1174 = vpack.c.b16 %v1161, %v1160
      %v1175 = vpack.c.b16 %v1163, %v1162
      %v1176 = vpack.c.b16 %v1165, %v1164
      %v1177 = vpack.c.b16 %v1167, %v1166
      %v1178 = vpack.c.b16 %v1169, %v1168
      %v1179 = vpack.c.b16 %v1171, %v1170
      %v1181 = vsel %vm1002, %v1172, 0
      %v1184 = vsel %vm1002, %v1173, 0
      %v1187 = vsel %vm1002, %v1174, 0
      %v1190 = vsel %vm1002, %v1175, 0
      %v1193 = vsel %vm1002, %v1176, 0
      %v1196 = vsel %vm1002, %v1177, 0
      %v1199 = vsel %vm1002, %v1178, 0
      %v1202 = vsel %vm1002, %v1179, 0
      %1204 = vmatprep.subr.bf16.mxu0 %v915
      %1205 = vmatpush1.bf16.msra.mxu0 %v914
      %1206 = vmatprep.subr.bf16.mxu0 %v917
      %1207 = vmatpush1.bf16.msra.mxu0 %v916
      %1208 = vmatprep.subr.bf16.mxu0 %v919
      %1209 = vmatpush1.bf16.msra.mxu0 %v918
      %1210 = vmatprep.subr.bf16.mxu0 %v921
      %1211 = vmatpush1.bf16.msra.mxu0 %v920
      %1212 = vmatprep.subr.bf16.mxu0 0
      %1213 = vmatpush1.bf16.msra.mxu0 0
      %1214 = vmatprep.subr.bf16.mxu0 0
      %1215 = vmatpush1.bf16.msra.mxu0 0
      %1216 = vmatprep.subr.bf16.mxu0 0
      %1217 = vmatpush1.bf16.msra.mxu0 0
      %1218 = vmatprep.subr.bf16.mxu0 0
      %1219 = vmatpush1.bf16.msra.mxu0 0
      %1220 = vmatprep.subr.bf16.mxu0 0
      %1221 = vmatpush1.bf16.msra.mxu0 0
      %1222 = vmatprep.subr.bf16.mxu0 0
      %1223 = vmatpush1.bf16.msra.mxu0 0
      %1224 = vmatprep.subr.bf16.mxu0 0
      %1225 = vmatpush1.bf16.msra.mxu0 0
      %1226 = vmatprep.subr.bf16.mxu0 0
      %1227 = vmatpush1.bf16.msra.mxu0 0
      %1228 = vmatprep.subr.bf16.mxu0 0
      %1229 = vmatpush1.bf16.msra.mxu0 0
      %1230 = vmatprep.subr.bf16.mxu0 0
      %1231 = vmatpush1.bf16.msra.mxu0 0
      %1232 = vmatprep.subr.bf16.mxu0 0
      %1233 = vmatpush1.bf16.msra.mxu0 0
      %1234 = vmatprep.subr.bf16.mxu0 0
      %1235 = vmatpush1.bf16.msra.mxu0 0
      %1236 = vmatprep.mubr.bf16.mxu0 0
      %1237 = vmatmul.mubr.bf16.gmra.mrb[0].mxu0 %v1181
      %v1238 = vpop.f32.mrb[0].mxu0
      %v1239 = vadd.f32 %v1062, %v1238
      %v1240 = vpop.f32.mrb[0].mxu0
      %v1241 = vadd.f32 %v1064, %v1240
      %v1242 = vpop.f32.mrb[0].mxu0
      %v1243 = vadd.f32 %v1066, %v1242
      %v1244 = vpop.f32.mrb[0].mxu0
      %v1245 = vadd.f32 %v1068, %v1244
      %1246 = vmatprep.mubr.bf16.mxu0 0
      %1247 = vmatmul.mubr.bf16.gmra.mrb[0].mxu0 %v1184
      %v1248 = vpop.f32.mrb[0].mxu0
      %v1249 = vadd.f32 %v1072, %v1248
      %v1250 = vpop.f32.mrb[0].mxu0
      %v1251 = vadd.f32 %v1074, %v1250
      %v1252 = vpop.f32.mrb[0].mxu0
      %v1253 = vadd.f32 %v1076, %v1252
      %v1254 = vpop.f32.mrb[0].mxu0
      %v1255 = vadd.f32 %v1078, %v1254
      %1256 = vmatprep.mubr.bf16.mxu0 0
      %1257 = vmatmul.mubr.bf16.gmra.mrb[0].mxu0 %v1187
      %v1258 = vpop.f32.mrb[0].mxu0
      %v1259 = vadd.f32 %v1082, %v1258
      %v1260 = vpop.f32.mrb[0].mxu0
      %v1261 = vadd.f32 %v1084, %v1260
      %v1262 = vpop.f32.mrb[0].mxu0
      %v1263 = vadd.f32 %v1086, %v1262
      %v1264 = vpop.f32.mrb[0].mxu0
      %v1265 = vadd.f32 %v1088, %v1264
      %1266 = vmatprep.mubr.bf16.mxu0 0
      %1267 = vmatmul.mubr.bf16.gmra.mrb[0].mxu0 %v1190
      %v1268 = vpop.f32.mrb[0].mxu0
      %v1269 = vadd.f32 %v1092, %v1268
      %v1270 = vpop.f32.mrb[0].mxu0
      %v1271 = vadd.f32 %v1094, %v1270
      %v1272 = vpop.f32.mrb[0].mxu0
      %v1273 = vadd.f32 %v1096, %v1272
      %v1274 = vpop.f32.mrb[0].mxu0
      %v1275 = vadd.f32 %v1098, %v1274
      %1276 = vmatprep.mubr.bf16.mxu0 0
      %1277 = vmatmul.mubr.bf16.gmra.mrb[0].mxu0 %v1193
      %v1278 = vpop.f32.mrb[0].mxu0
      %v1279 = vadd.f32 %v1102, %v1278
      %v1280 = vpop.f32.mrb[0].mxu0
      %v1281 = vadd.f32 %v1104, %v1280
      %v1282 = vpop.f32.mrb[0].mxu0
      %v1283 = vadd.f32 %v1106, %v1282
      %v1284 = vpop.f32.mrb[0].mxu0
      %v1285 = vadd.f32 %v1108, %v1284
      %1286 = vmatprep.mubr.bf16.mxu0 0
      %1287 = vmatmul.mubr.bf16.gmra.mrb[0].mxu0 %v1196
      %v1288 = vpop.f32.mrb[0].mxu0
      %v1289 = vadd.f32 %v1112, %v1288
      %v1290 = vpop.f32.mrb[0].mxu0
      %v1291 = vadd.f32 %v1114, %v1290
      %v1292 = vpop.f32.mrb[0].mxu0
      %v1293 = vadd.f32 %v1116, %v1292
      %v1294 = vpop.f32.mrb[0].mxu0
      %v1295 = vadd.f32 %v1118, %v1294
      %1296 = vmatprep.mubr.bf16.mxu0 0
      %1297 = vmatmul.mubr.bf16.gmra.mrb[0].mxu0 %v1199
      %v1298 = vpop.f32.mrb[0].mxu0
      %v1299 = vadd.f32 %v1122, %v1298
      %v1300 = vpop.f32.mrb[0].mxu0
      %v1301 = vadd.f32 %v1124, %v1300
      %v1302 = vpop.f32.mrb[0].mxu0
      %v1303 = vadd.f32 %v1126, %v1302
      %v1304 = vpop.f32.mrb[0].mxu0
      %v1305 = vadd.f32 %v1128, %v1304
      %1306 = vmatprep.mubr.bf16.mxu0 0
      %1307 = vmatmul.mubr.bf16.gmra.mrb[0].mxu0 %v1202
      %v1308 = vpop.f32.mrb[0].mxu0
      %v1309 = vadd.f32 %v1132, %v1308
      %v1310 = vpop.f32.mrb[0].mxu0
      %v1311 = vadd.f32 %v1134, %v1310
      %v1312 = vpop.f32.mrb[0].mxu0
      %v1313 = vadd.f32 %v1136, %v1312
      %v1314 = vpop.f32.mrb[0].mxu0
      %v1315 = vadd.f32 %v1138, %v1314
      %1316 = vdwg.mxu0
      %v1317 = vld [vmem:[%s4] sm:$0x3]
      %v1319 = vlaneseq
      %v1320 = vshrl.u32 %v1319, 7
      %v1321 = vsub.s32 0, %v1320
      %v1322 = vrot.slane %v1317, %v1321
      %v1323 = vlaneseq
      %v1324 = vshrl.u32 %v1323, 7
      %v1325 = vsub.s32 1, %v1324
      %v1326 = vrot.slane %v1317, %v1325
      %v1329 = vadd.f32 %v1239, %v1322
      %v1330 = vadd.f32 %v1241, %v1326
      %v1331 = vadd.f32 %v1243, %v1322
      %v1332 = vadd.f32 %v1245, %v1326
      %v1333 = vadd.f32 %v1249, %v1322
      %v1334 = vadd.f32 %v1251, %v1326
      %v1335 = vadd.f32 %v1253, %v1322
      %v1336 = vadd.f32 %v1255, %v1326
      %v1337 = vadd.f32 %v1259, %v1322
      %v1338 = vadd.f32 %v1261, %v1326
      %v1339 = vadd.f32 %v1263, %v1322
      %v1340 = vadd.f32 %v1265, %v1326
      %v1341 = vadd.f32 %v1269, %v1322
      %v1342 = vadd.f32 %v1271, %v1326
      %v1343 = vadd.f32 %v1273, %v1322
      %v1344 = vadd.f32 %v1275, %v1326
      %v1345 = vadd.f32 %v1279, %v1322
      %v1346 = vadd.f32 %v1281, %v1326
      %v1347 = vadd.f32 %v1283, %v1322
      %v1348 = vadd.f32 %v1285, %v1326
      %v1349 = vadd.f32 %v1289, %v1322
      %v1350 = vadd.f32 %v1291, %v1326
      %v1351 = vadd.f32 %v1293, %v1322
      %v1352 = vadd.f32 %v1295, %v1326
      %v1353 = vadd.f32 %v1299, %v1322
      %v1354 = vadd.f32 %v1301, %v1326
      %v1355 = vadd.f32 %v1303, %v1322
      %v1356 = vadd.f32 %v1305, %v1326
      %v1357 = vadd.f32 %v1309, %v1322
      %v1358 = vadd.f32 %v1311, %v1326
      %v1359 = vadd.f32 %v1313, %v1322
      %v1360 = vadd.f32 %v1315, %v1326
      %v1361 = vpack.c.bf16 %v1331, %v1329
      %v1362 = vpack.c.bf16 %v1332, %v1330
      %v1363 = vpack.c.bf16 %v1335, %v1333
      %v1364 = vpack.c.bf16 %v1336, %v1334
      %v1369 = vunpack.c.l.b16 %v1361
      %v1370 = vunpack.c.l.b16 %v1362
      %v1371 = vunpack.c.h.b16 %v1361
      %v1372 = vunpack.c.h.b16 %v1362
      %v1373 = vunpack.c.l.b16 %v1363
      %v1374 = vunpack.c.l.b16 %v1364
      %v1375 = vunpack.c.h.b16 %v1363
      %v1376 = vunpack.c.h.b16 %v1364
      %v1377 = vpack.c.b16 %v1370, %v1369
      %v1378 = vpack.c.b16 %v1372, %v1371
      %v1379 = vpack.c.b16 %v1374, %v1373
      %v1380 = vpack.c.b16 %v1376, %v1375
      %vm1381 = vsmask.f32 4368
      %vm1382 = vmor %vm473, %vm1381
      %v1384 = vshrl.u32 %v1377, 16
      %v1386 = vrot.slane %v1384, 7
      %v1387 = vshll.u32 %v1377, 16
      %v1389 = vor.u32 %v1386, %v1387
      %v1390 = vrot.slane %v1386, 4
      %v1392 = vshrl.u32 %v1378, 16
      %v1394 = vrot.slane %v1392, 7
      %v1395 = vshll.u32 %v1378, 16
      %v1397 = vor.u32 %v1394, %v1395
      %v1398 = vsel %vm1382, %v1390, %v1397
      %v1399 = vrot.slane %v1394, 4
      %v1401 = vshrl.u32 %v1379, 16
      %v1403 = vrot.slane %v1401, 7
      %v1404 = vshll.u32 %v1379, 16
      %v1406 = vor.u32 %v1403, %v1404
      %v1407 = vsel %vm1382, %v1399, %v1406
      %v1408 = vrot.slane %v1403, 4
      %v1410 = vshrl.u32 %v1380, 16
      %v1412 = vrot.slane %v1410, 7
      %v1413 = vshll.u32 %v1380, 16
      %v1415 = vor.u32 %v1412, %v1413
      %v1416 = vsel %vm1382, %v1408, %v1415
      %v1417 = vrot.slane %v1412, 4
      %vm1423 = vcmask 1043456
      %vm1424 = vmand %vm1423, %vm482
      %vm1425 = vcmask 1047556
      %vm1426 = vmand %vm1425, %vm484
      %vm1427 = vmor %vm1426, %vm1424
      %v1428 = vld [vmem:[#allocation2] sm:$0xff]
      %v1429 = vsel %vm1427, %v1389, %v1428
      %1430 = vst [vmem:[#allocation2] sm:$0xff] %v1429
      %1431 = vst [vmem:[#allocation2 + $0x8] sm:$0xff] %v1398
      %1432 = vst [vmem:[#allocation2 + $0x10] sm:$0xff] %v1407
      %1433 = vst [vmem:[#allocation2 + $0x18] sm:$0xff] %v1416
      %v1434 = vld [vmem:[#allocation2 + $0x20] sm:$0x11]
      %v1435 = vsel %vm478, %v1417, %v1434
      %1436 = vst [vmem:[#allocation2 + $0x20] sm:$0x11] %v1435
      %v1437 = vpack.c.bf16 %v1339, %v1337
      %v1438 = vpack.c.bf16 %v1340, %v1338
      %v1439 = vpack.c.bf16 %v1343, %v1341
      %v1440 = vpack.c.bf16 %v1344, %v1342
      %v1445 = vunpack.c.l.b16 %v1437
      %v1446 = vunpack.c.l.b16 %v1438
      %v1447 = vunpack.c.h.b16 %v1437
      %v1448 = vunpack.c.h.b16 %v1438
      %v1449 = vunpack.c.l.b16 %v1439
      %v1450 = vunpack.c.l.b16 %v1440
      %v1451 = vunpack.c.h.b16 %v1439
      %v1452 = vunpack.c.h.b16 %v1440
      %v1453 = vpack.c.b16 %v1446, %v1445
      %v1454 = vpack.c.b16 %v1448, %v1447
      %v1455 = vpack.c.b16 %v1450, %v1449
      %v1456 = vpack.c.b16 %v1452, %v1451
      %vm1457 = vsmask.f32 5392
      %vm1458 = vmor %vm491, %vm1457
      %v1460 = vshrl.u32 %v1453, 16
      %v1462 = vrot.slane %v1460, 6
      %v1463 = vshll.u32 %v1453, 16
      %v1465 = vrot.slane %v1463, 7
      %v1466 = vor.u32 %v1462, %v1465
      %v1467 = vrot.slane %v1466, 4
      %v1469 = vshrl.u32 %v1454, 16
      %v1471 = vrot.slane %v1469, 6
      %v1472 = vshll.u32 %v1454, 16
      %v1474 = vrot.slane %v1472, 7
      %v1475 = vor.u32 %v1471, %v1474
      %v1476 = vsel %vm1458, %v1467, %v1475
      %v1477 = vrot.slane %v1475, 4
      %v1479 = vshrl.u32 %v1455, 16
      %v1481 = vrot.slane %v1479, 6
      %v1482 = vshll.u32 %v1455, 16
      %v1484 = vrot.slane %v1482, 7
      %v1485 = vor.u32 %v1481, %v1484
      %v1486 = vsel %vm1458, %v1477, %v1485
      %v1487 = vrot.slane %v1485, 4
      %v1489 = vshrl.u32 %v1456, 16
      %v1491 = vrot.slane %v1489, 6
      %v1492 = vshll.u32 %v1456, 16
      %v1494 = vrot.slane %v1492, 7
      %v1495 = vor.u32 %v1491, %v1494
      %v1496 = vsel %vm1458, %v1487, %v1495
      %v1497 = vrot.slane %v1495, 4
      %vm1503 = vcmask 1043457
      %vm1504 = vmand %vm1503, %vm500
      %vm1505 = vcmask 1047557
      %vm1506 = vmand %vm1505, %vm502
      %vm1507 = vmor %vm1506, %vm1504
      %v1508 = vld [vmem:[#allocation2 + $0x20] sm:$0xee]
      %v1509 = vsel %vm1507, %v1466, %v1508
      %1510 = vst [vmem:[#allocation2 + $0x20] sm:$0xee] %v1509
      %1511 = vst [vmem:[#allocation2 + $0x28] sm:$0xff] %v1476
      %1512 = vst [vmem:[#allocation2 + $0x30] sm:$0xff] %v1486
      %1513 = vst [vmem:[#allocation2 + $0x38] sm:$0xff] %v1496
      %vm1514 = vcmask 1041408
      %vm1515 = vmand %vm1514, %vm491
      %vm1516 = vcmask 1045508
      %vm1517 = vmand %vm1516, %vm494
      %vm1518 = vmor %vm1517, %vm1515
      %v1519 = vld [vmem:[#allocation2 + $0x40] sm:$0x33]
      %v1520 = vsel %vm1518, %v1497, %v1519
      %1521 = vst [vmem:[#allocation2 + $0x40] sm:$0x33] %v1520
      %v1522 = vpack.c.bf16 %v1347, %v1345
      %v1523 = vpack.c.bf16 %v1348, %v1346
      %v1524 = vpack.c.bf16 %v1351, %v1349
      %v1525 = vpack.c.bf16 %v1352, %v1350
      %v1530 = vunpack.c.l.b16 %v1522
      %v1531 = vunpack.c.l.b16 %v1523
      %v1532 = vunpack.c.h.b16 %v1522
      %v1533 = vunpack.c.h.b16 %v1523
      %v1534 = vunpack.c.l.b16 %v1524
      %v1535 = vunpack.c.l.b16 %v1525
      %v1536 = vunpack.c.h.b16 %v1524
      %v1537 = vunpack.c.h.b16 %v1525
      %v1538 = vpack.c.b16 %v1531, %v1530
      %v1539 = vpack.c.b16 %v1533, %v1532
      %v1540 = vpack.c.b16 %v1535, %v1534
      %v1541 = vpack.c.b16 %v1537, %v1536
      %vm1542 = vsmask.f32 6416
      %vm1543 = vmor %vm509, %vm1542
      %v1545 = vshrl.u32 %v1538, 16
      %v1547 = vrot.slane %v1545, 5
      %v1548 = vshll.u32 %v1538, 16
      %v1550 = vrot.slane %v1548, 6
      %v1551 = vor.u32 %v1547, %v1550
      %v1552 = vrot.slane %v1551, 4
      %v1554 = vshrl.u32 %v1539, 16
      %v1556 = vrot.slane %v1554, 5
      %v1557 = vshll.u32 %v1539, 16
      %v1559 = vrot.slane %v1557, 6
      %v1560 = vor.u32 %v1556, %v1559
      %v1561 = vsel %vm1543, %v1552, %v1560
      %v1562 = vrot.slane %v1560, 4
      %v1564 = vshrl.u32 %v1540, 16
      %v1566 = vrot.slane %v1564, 5
      %v1567 = vshll.u32 %v1540, 16
      %v1569 = vrot.slane %v1567, 6
      %v1570 = vor.u32 %v1566, %v1569
      %v1571 = vsel %vm1543, %v1562, %v1570
      %v1572 = vrot.slane %v1570, 4
      %v1574 = vshrl.u32 %v1541, 16
      %v1576 = vrot.slane %v1574, 5
      %v1577 = vshll.u32 %v1541, 16
      %v1579 = vrot.slane %v1577, 6
      %v1580 = vor.u32 %v1576, %v1579
      %v1581 = vsel %vm1543, %v1572, %v1580
      %v1582 = vrot.slane %v1580, 4
      %vm1588 = vcmask 1043458
      %vm1589 = vmand %vm1588, %vm518
      %vm1590 = vcmask 1047558
      %vm1591 = vmand %vm1590, %vm520
      %vm1592 = vmor %vm1591, %vm1589
      %v1593 = vld [vmem:[#allocation2 + $0x40] sm:$0xcc]
      %v1594 = vsel %vm1592, %v1551, %v1593
      %1595 = vst [vmem:[#allocation2 + $0x40] sm:$0xcc] %v1594
      %1596 = vst [vmem:[#allocation2 + $0x48] sm:$0xff] %v1561
      %1597 = vst [vmem:[#allocation2 + $0x50] sm:$0xff] %v1571
      %1598 = vst [vmem:[#allocation2 + $0x58] sm:$0xff] %v1581
      %vm1599 = vcmask 1042432
      %vm1600 = vmand %vm1599, %vm509
      %vm1601 = vcmask 1046532
      %vm1602 = vmand %vm1601, %vm512
      %vm1603 = vmor %vm1602, %vm1600
      %v1604 = vld [vmem:[#allocation2 + $0x60] sm:$0x77]
      %v1605 = vsel %vm1603, %v1582, %v1604
      %1606 = vst [vmem:[#allocation2 + $0x60] sm:$0x77] %v1605
      %v1607 = vpack.c.bf16 %v1355, %v1353
      %v1608 = vpack.c.bf16 %v1356, %v1354
      %v1609 = vpack.c.bf16 %v1359, %v1357
      %v1610 = vpack.c.bf16 %v1360, %v1358
      %v1615 = vunpack.c.l.b16 %v1607
      %v1616 = vunpack.c.l.b16 %v1608
      %v1617 = vunpack.c.h.b16 %v1607
      %v1618 = vunpack.c.h.b16 %v1608
      %v1619 = vunpack.c.l.b16 %v1609
      %v1620 = vunpack.c.l.b16 %v1610
      %v1621 = vunpack.c.h.b16 %v1609
      %v1622 = vunpack.c.h.b16 %v1610
      %v1623 = vpack.c.b16 %v1616, %v1615
      %v1624 = vpack.c.b16 %v1618, %v1617
      %v1625 = vpack.c.b16 %v1620, %v1619
      %v1626 = vpack.c.b16 %v1622, %v1621
      %vm1627 = vsmask.f32 7440
      %vm1628 = vmor %vm527, %vm1627
      %v1630 = vshll.u32 %v1623, 16
      %v1632 = vrot.slane %v1630, 5
      %v1633 = vshrl.u32 %v1623, 16
      %v1635 = vrot.slane %v1633, 4
      %v1636 = vor.u32 %v1635, %v1632
      %v1637 = vrot.slane %v1636, 4
      %v1639 = vshll.u32 %v1624, 16
      %v1641 = vrot.slane %v1639, 5
      %v1642 = vsel %vm1628, %v1637, %v1641
      %v1643 = vshrl.u32 %v1624, 16
      %v1645 = vrot.slane %v1643, 4
      %v1646 = vor.u32 %v1645, %v1641
      %v1647 = vrot.slane %v1646, 4
      %v1649 = vshll.u32 %v1625, 16
      %v1651 = vrot.slane %v1649, 5
      %v1652 = vsel %vm1628, %v1647, %v1651
      %v1653 = vshrl.u32 %v1625, 16
      %v1655 = vrot.slane %v1653, 4
      %v1656 = vor.u32 %v1655, %v1651
      %v1657 = vrot.slane %v1656, 4
      %v1659 = vshll.u32 %v1626, 16
      %v1661 = vrot.slane %v1659, 5
      %v1662 = vsel %vm1628, %v1657, %v1661
      %v1663 = vshrl.u32 %v1626, 16
      %v1665 = vrot.slane %v1663, 4
      %v1666 = vor.u32 %v1665, %v1661
      %v1667 = vrot.slane %v1666, 4
      %v1673 = vld [vmem:[#allocation2 + $0x60] sm:$0x88]
      %v1674 = vsel %vm540, %v1632, %v1673
      %1675 = vst [vmem:[#allocation2 + $0x60] sm:$0x88] %v1674
      %1676 = vst [vmem:[#allocation2 + $0x68] sm:$0xff] %v1642
      %1677 = vst [vmem:[#allocation2 + $0x70] sm:$0xff] %v1652
      %1678 = vst [vmem:[#allocation2 + $0x78] sm:$0xff] %v1662
      %vm1679 = vmand %vm1423, %vm527
      %vm1680 = vmand %vm1425, %vm530
      %vm1681 = vmor %vm1680, %vm1679
      %v1682 = vld [vmem:[#allocation2 + $0x80] sm:$0xff]
      %v1683 = vsel %vm1681, %v1667, %v1682
      %1684 = vst [vmem:[#allocation2 + $0x80] sm:$0xff] %v1683
      %v1685 = vld [vmem:[#allocation2] sm:$0xff]
      %v1686 = vld [vmem:[#allocation2 + $0x8] sm:$0xff]
      %v1687 = vld [vmem:[#allocation2 + $0x10] sm:$0xff]
      %v1688 = vld [vmem:[#allocation2 + $0x18] sm:$0xff]
      %v1689 = vld [vmem:[#allocation2 + $0x20] sm:$0xff]
      %v1690 = vld [vmem:[#allocation2 + $0x28] sm:$0xff]
      %v1691 = vld [vmem:[#allocation2 + $0x30] sm:$0xff]
      %v1692 = vld [vmem:[#allocation2 + $0x38] sm:$0xff]
      %v1693 = vld [vmem:[#allocation2 + $0x40] sm:$0xff]
      %v1694 = vld [vmem:[#allocation2 + $0x48] sm:$0xff]
      %v1695 = vld [vmem:[#allocation2 + $0x50] sm:$0xff]
      %v1696 = vld [vmem:[#allocation2 + $0x58] sm:$0xff]
      %v1697 = vld [vmem:[#allocation2 + $0x60] sm:$0xff]
      %v1698 = vld [vmem:[#allocation2 + $0x68] sm:$0xff]
      %v1699 = vld [vmem:[#allocation2 + $0x70] sm:$0xff]
      %v1700 = vld [vmem:[#allocation2 + $0x78] sm:$0xff]
      %v1701 = vld [vmem:[#allocation2 + $0x80] sm:$0x77]
      %v1702 = vld [vmem:[%s5] sm:$0xf]
      %v1703 = vld [vmem:[%s5 + $0x4] sm:$0xf]
      %v1704 = vld [vmem:[%s5 + $0x8] sm:$0xf]
      %v1705 = vld [vmem:[%s5 + $0xc] sm:$0xf]
      %v1706 = vld [vmem:[%s5 + $0x10] sm:$0xf]
      %v1707 = vld [vmem:[%s5 + $0x14] sm:$0xf]
      %v1708 = vld [vmem:[%s5 + $0x18] sm:$0xf]
      %v1709 = vld [vmem:[%s5 + $0x1c] sm:$0xf]
      %v1710 = vld [vmem:[%s5 + $0x20] sm:$0xf]
      %v1711 = vld [vmem:[%s5 + $0x24] sm:$0xf]
      %v1712 = vld [vmem:[%s5 + $0x28] sm:$0xf]
      %v1713 = vld [vmem:[%s5 + $0x2c] sm:$0xf]
      %v1714 = vld [vmem:[%s5 + $0x30] sm:$0xf]
      %v1715 = vld [vmem:[%s5 + $0x34] sm:$0xf]
      %v1716 = vld [vmem:[%s5 + $0x38] sm:$0xf]
      %v1717 = vld [vmem:[%s5 + $0x3c] sm:$0xf]
      %v1718 = vld [vmem:[%s5 + $0x40] sm:$0xf]
      %v1719 = vld [vmem:[%s5 + $0x44] sm:$0xf]
      %v1720 = vld [vmem:[%s5 + $0x48] sm:$0xf]
      %v1721 = vld [vmem:[%s5 + $0x4c] sm:$0xf]
      %v1722 = vld [vmem:[%s5 + $0x50] sm:$0xf]
      %v1723 = vld [vmem:[%s5 + $0x54] sm:$0xf]
      %v1724 = vld [vmem:[%s5 + $0x58] sm:$0xf]
      %v1725 = vld [vmem:[%s5 + $0x5c] sm:$0xf]
      %v1726 = vld [vmem:[%s5 + $0x60] sm:$0xf]
      %v1727 = vld [vmem:[%s5 + $0x64] sm:$0xf]
      %v1728 = vld [vmem:[%s5 + $0x68] sm:$0xf]
      %v1729 = vld [vmem:[%s5 + $0x6c] sm:$0xf]
      %v1730 = vld [vmem:[%s5 + $0x70] sm:$0xf]
      %v1731 = vld [vmem:[%s5 + $0x74] sm:$0xf]
      %v1732 = vld [vmem:[%s5 + $0x78] sm:$0xf]
      %v1733 = vld [vmem:[%s5 + $0x7c] sm:$0xf]
      %v1734 = vld [vmem:[#allocation2 + $0x80] sm:$0xff]
      %s1735 = scalar_lea.vmem %s5, 128
      %v1736 = vld [vmem:[%s1735] sm:$0xf]
      %v1737 = vld [vmem:[%s1735 + $0x4] sm:$0xf]
      %v1738 = vld [vmem:[%s1735 + $0x8] sm:$0xf]
      %v1739 = vld [vmem:[%s1735 + $0xc] sm:$0xf]
      %v1740 = vld [vmem:[%s1735 + $0x10] sm:$0xf]
      %v1741 = vld [vmem:[%s1735 + $0x14] sm:$0xf]
      %v1742 = vld [vmem:[%s1735 + $0x18] sm:$0xf]
      %v1743 = vld [vmem:[%s1735 + $0x1c] sm:$0xf]
      %v1744 = vld [vmem:[%s1735 + $0x20] sm:$0xf]
      %v1745 = vld [vmem:[%s1735 + $0x24] sm:$0xf]
      %v1746 = vld [vmem:[%s1735 + $0x28] sm:$0xf]
      %v1747 = vld [vmem:[%s1735 + $0x2c] sm:$0xf]
      %v1748 = vld [vmem:[%s1735 + $0x30] sm:$0xf]
      %v1749 = vld [vmem:[%s1735 + $0x34] sm:$0xf]
      %v1750 = vld [vmem:[%s1735 + $0x38] sm:$0xf]
      %v1751 = vld [vmem:[%s1735 + $0x3c] sm:$0xf]
      %v1752 = vld [vmem:[%s1735 + $0x40] sm:$0xf]
      %v1753 = vld [vmem:[%s1735 + $0x44] sm:$0xf]
      %v1754 = vld [vmem:[%s1735 + $0x48] sm:$0xf]
      %v1755 = vld [vmem:[%s1735 + $0x4c] sm:$0xf]
      %v1756 = vld [vmem:[%s1735 + $0x50] sm:$0xf]
      %v1757 = vld [vmem:[%s1735 + $0x54] sm:$0xf]
      %v1758 = vld [vmem:[%s1735 + $0x58] sm:$0xf]
      %v1759 = vld [vmem:[%s1735 + $0x5c] sm:$0xf]
      %v1760 = vld [vmem:[%s1735 + $0x60] sm:$0xf]
      %v1761 = vld [vmem:[%s1735 + $0x64] sm:$0xf]
      %v1762 = vld [vmem:[%s1735 + $0x68] sm:$0xf]
      %v1763 = vld [vmem:[%s1735 + $0x6c] sm:$0xf]
      %v1764 = vld [vmem:[%s1735 + $0x70] sm:$0xf]
      %v1765 = vld [vmem:[%s1735 + $0x74] sm:$0xf]
      %v1766 = vld [vmem:[%s1735 + $0x78] sm:$0xf]
      %v1767 = vld [vmem:[%s1735 + $0x7c] sm:$0xf]
      %v1785 = vunpack.c.l.b16 %v1685
      %v1786 = vunpack.c.h.b16 %v1685
      %v1787 = vunpack.c.l.b16 %v1686
      %v1788 = vunpack.c.h.b16 %v1686
      %v1789 = vunpack.c.l.b16 %v1687
      %v1790 = vunpack.c.h.b16 %v1687
      %v1791 = vunpack.c.l.b16 %v1688
      %v1792 = vunpack.c.h.b16 %v1688
      %v1793 = vunpack.c.l.b16 %v1689
      %v1794 = vunpack.c.h.b16 %v1689
      %v1795 = vunpack.c.l.b16 %v1690
      %v1796 = vunpack.c.h.b16 %v1690
      %v1797 = vunpack.c.l.b16 %v1691
      %v1798 = vunpack.c.h.b16 %v1691
      %v1799 = vunpack.c.l.b16 %v1692
      %v1800 = vunpack.c.h.b16 %v1692
      %v1801 = vunpack.c.l.b16 %v1693
      %v1802 = vunpack.c.h.b16 %v1693
      %v1803 = vunpack.c.l.b16 %v1694
      %v1804 = vunpack.c.h.b16 %v1694
      %v1805 = vunpack.c.l.b16 %v1695
      %v1806 = vunpack.c.h.b16 %v1695
      %v1807 = vunpack.c.l.b16 %v1696
      %v1808 = vunpack.c.h.b16 %v1696
      %v1809 = vunpack.c.l.b16 %v1697
      %v1810 = vunpack.c.h.b16 %v1697
      %v1811 = vunpack.c.l.b16 %v1698
      %v1812 = vunpack.c.h.b16 %v1698
      %v1813 = vunpack.c.l.b16 %v1699
      %v1814 = vunpack.c.h.b16 %v1699
      %v1815 = vunpack.c.l.b16 %v1700
      %v1816 = vunpack.c.h.b16 %v1700
      %v1817 = vunpack.c.l.b16 %v1734
      %v1818 = vunpack.c.h.b16 %v1734
      %v1819 = vpack.c.b16 %v1787, %v1785
      %v1820 = vpack.c.b16 %v1788, %v1786
      %v1821 = vpack.c.b16 %v1791, %v1789
      %v1822 = vpack.c.b16 %v1792, %v1790
      %v1823 = vpack.c.b16 %v1795, %v1793
      %v1824 = vpack.c.b16 %v1796, %v1794
      %v1825 = vpack.c.b16 %v1799, %v1797
      %v1826 = vpack.c.b16 %v1800, %v1798
      %v1827 = vpack.c.b16 %v1803, %v1801
      %v1828 = vpack.c.b16 %v1804, %v1802
      %v1829 = vpack.c.b16 %v1807, %v1805
      %v1830 = vpack.c.b16 %v1808, %v1806
      %v1831 = vpack.c.b16 %v1811, %v1809
      %v1832 = vpack.c.b16 %v1812, %v1810
      %v1833 = vpack.c.b16 %v1815, %v1813
      %v1834 = vpack.c.b16 %v1816, %v1814
      %v1835 = vpack.c.b16 %v1817, %v1817
      %v1836 = vpack.c.b16 %v1818, %v1818
      %v1838 = vshrl.u32 %v1819, 16
      %v1840 = vshll.u32 %v1819, 16
      %v1842 = vrot.slane %v1840, 1
      %v1843 = vor.u32 %v1838, %v1842
      %v1845 = vshll.u32 %v1821, 16
      %v1847 = vrot.slane %v1845, 1
      %v1848 = vsel %vm530, %v1843, %v1847
      %v1850 = vshrl.u32 %v1820, 16
      %v1852 = vshll.u32 %v1820, 16
      %v1854 = vrot.slane %v1852, 1
      %v1855 = vor.u32 %v1850, %v1854
      %v1857 = vshll.u32 %v1822, 16
      %v1859 = vrot.slane %v1857, 1
      %v1860 = vsel %vm530, %v1855, %v1859
      %v1861 = vshrl.u32 %v1821, 16
      %v1863 = vor.u32 %v1861, %v1847
      %v1865 = vshll.u32 %v1823, 16
      %v1867 = vrot.slane %v1865, 1
      %v1868 = vsel %vm530, %v1863, %v1867
      %v1869 = vshrl.u32 %v1822, 16
      %v1871 = vor.u32 %v1869, %v1859
      %v1873 = vshll.u32 %v1824, 16
      %v1875 = vrot.slane %v1873, 1
      %v1876 = vsel %vm530, %v1871, %v1875
      %v1877 = vshrl.u32 %v1823, 16
      %v1879 = vor.u32 %v1877, %v1867
      %v1881 = vshll.u32 %v1825, 16
      %v1883 = vrot.slane %v1881, 1
      %v1884 = vsel %vm530, %v1879, %v1883
      %v1885 = vshrl.u32 %v1824, 16
      %v1887 = vor.u32 %v1885, %v1875
      %v1889 = vshll.u32 %v1826, 16
      %v1891 = vrot.slane %v1889, 1
      %v1892 = vsel %vm530, %v1887, %v1891
      %v1893 = vshrl.u32 %v1825, 16
      %v1895 = vor.u32 %v1893, %v1883
      %v1897 = vshll.u32 %v1827, 16
      %v1899 = vrot.slane %v1897, 1
      %v1900 = vsel %vm530, %v1895, %v1899
      %v1901 = vshrl.u32 %v1826, 16
      %v1903 = vor.u32 %v1901, %v1891
      %v1905 = vshll.u32 %v1828, 16
      %v1907 = vrot.slane %v1905, 1
      %v1908 = vsel %vm530, %v1903, %v1907
      %v1909 = vshrl.u32 %v1827, 16
      %v1911 = vor.u32 %v1909, %v1899
      %v1913 = vshll.u32 %v1829, 16
      %v1915 = vrot.slane %v1913, 1
      %v1916 = vsel %vm530, %v1911, %v1915
      %v1917 = vshrl.u32 %v1828, 16
      %v1919 = vor.u32 %v1917, %v1907
      %v1921 = vshll.u32 %v1830, 16
      %v1923 = vrot.slane %v1921, 1
      %v1924 = vsel %vm530, %v1919, %v1923
      %v1925 = vshrl.u32 %v1829, 16
      %v1927 = vor.u32 %v1925, %v1915
      %v1929 = vshll.u32 %v1831, 16
      %v1931 = vrot.slane %v1929, 1
      %v1932 = vsel %vm530, %v1927, %v1931
      %v1933 = vshrl.u32 %v1830, 16
      %v1935 = vor.u32 %v1933, %v1923
      %v1937 = vshll.u32 %v1832, 16
      %v1939 = vrot.slane %v1937, 1
      %v1940 = vsel %vm530, %v1935, %v1939
      %v1941 = vshrl.u32 %v1831, 16
      %v1943 = vor.u32 %v1941, %v1931
      %v1945 = vshll.u32 %v1833, 16
      %v1947 = vrot.slane %v1945, 1
      %v1948 = vsel %vm530, %v1943, %v1947
      %v1949 = vshrl.u32 %v1832, 16
      %v1951 = vor.u32 %v1949, %v1939
      %v1953 = vshll.u32 %v1834, 16
      %v1955 = vrot.slane %v1953, 1
      %v1956 = vsel %vm530, %v1951, %v1955
      %v1957 = vshrl.u32 %v1833, 16
      %v1959 = vor.u32 %v1957, %v1947
      %v1961 = vshll.u32 %v1835, 16
      %v1963 = vrot.slane %v1961, 1
      %v1964 = vsel %vm530, %v1959, %v1963
      %v1965 = vshrl.u32 %v1834, 16
      %v1967 = vor.u32 %v1965, %v1955
      %v1969 = vshll.u32 %v1836, 16
      %v1971 = vrot.slane %v1969, 1
      %v1972 = vsel %vm530, %v1967, %v1971
      %v1973 = vshrl.u32 %v1835, 16
      %v1975 = vor.u32 %v1973, %v1963
      %v1976 = vshrl.u32 %v1836, 16
      %v1978 = vor.u32 %v1976, %v1971
      %v2029 = vunpack.c.l.b16 %v1736
      %v2030 = vunpack.c.l.b16 %v1737
      %v2031 = vunpack.c.l.b16 %v1738
      %v2032 = vunpack.c.l.b16 %v1739
      %v2033 = vunpack.c.l.b16 %v1740
      %v2034 = vunpack.c.l.b16 %v1741
      %v2035 = vunpack.c.l.b16 %v1742
      %v2036 = vunpack.c.l.b16 %v1743
      %v2037 = vunpack.c.l.b16 %v1744
      %v2038 = vunpack.c.l.b16 %v1745
      %v2039 = vunpack.c.l.b16 %v1746
      %v2040 = vunpack.c.l.b16 %v1747
      %v2041 = vunpack.c.l.b16 %v1748
      %v2042 = vunpack.c.l.b16 %v1749
      %v2043 = vunpack.c.l.b16 %v1750
      %v2044 = vunpack.c.l.b16 %v1751
      %v2045 = vunpack.c.l.b16 %v1752
      %v2046 = vunpack.c.l.b16 %v1753
      %v2047 = vunpack.c.l.b16 %v1754
      %v2048 = vunpack.c.l.b16 %v1755
      %v2049 = vunpack.c.l.b16 %v1756
      %v2050 = vunpack.c.l.b16 %v1757
      %v2051 = vunpack.c.l.b16 %v1758
      %v2052 = vunpack.c.l.b16 %v1759
      %v2053 = vunpack.c.l.b16 %v1760
      %v2054 = vunpack.c.l.b16 %v1761
      %v2055 = vunpack.c.l.b16 %v1762
      %v2056 = vunpack.c.l.b16 %v1763
      %v2057 = vunpack.c.l.b16 %v1764
      %v2058 = vunpack.c.l.b16 %v1765
      %v2059 = vunpack.c.l.b16 %v1766
      %v2060 = vunpack.c.l.b16 %v1767
      %v2061 = vpack.c.b16 %v2030, %v2029
      %v2062 = vpack.c.b16 %v2032, %v2031
      %v2063 = vpack.c.b16 %v2034, %v2033
      %v2064 = vpack.c.b16 %v2036, %v2035
      %v2065 = vpack.c.b16 %v2038, %v2037
      %v2066 = vpack.c.b16 %v2040, %v2039
      %v2067 = vpack.c.b16 %v2042, %v2041
      %v2068 = vpack.c.b16 %v2044, %v2043
      %v2069 = vpack.c.b16 %v2046, %v2045
      %v2070 = vpack.c.b16 %v2048, %v2047
      %v2071 = vpack.c.b16 %v2050, %v2049
      %v2072 = vpack.c.b16 %v2052, %v2051
      %v2073 = vpack.c.b16 %v2054, %v2053
      %v2074 = vpack.c.b16 %v2056, %v2055
      %v2075 = vpack.c.b16 %v2058, %v2057
      %v2076 = vpack.c.b16 %v2060, %v2059
      %2093 = vmatprep.subr.bf16.mxu0 0
      %2094 = vmatpush1.bf16.msra.mxu0 %v2061
      %2095 = vmatprep.subr.bf16.mxu0 0
      %2096 = vmatpush1.bf16.msra.mxu0 %v2062
      %2097 = vmatprep.subr.bf16.mxu0 0
      %2098 = vmatpush1.bf16.msra.mxu0 %v2063
      %2099 = vmatprep.subr.bf16.mxu0 0
      %2100 = vmatpush1.bf16.msra.mxu0 %v2064
      %2101 = vmatprep.subr.bf16.mxu0 0
      %2102 = vmatpush1.bf16.msra.mxu0 %v2065
      %2103 = vmatprep.subr.bf16.mxu0 0
      %2104 = vmatpush1.bf16.msra.mxu0 %v2066
      %2105 = vmatprep.subr.bf16.mxu0 0
      %2106 = vmatpush1.bf16.msra.mxu0 %v2067
      %2107 = vmatprep.subr.bf16.mxu0 0
      %2108 = vmatpush1.bf16.msra.mxu0 %v2068
      %2109 = vmatprep.subr.bf16.mxu0 0
      %2110 = vmatpush1.bf16.msra.mxu0 %v2069
      %2111 = vmatprep.subr.bf16.mxu0 0
      %2112 = vmatpush1.bf16.msra.mxu0 %v2070
      %2113 = vmatprep.subr.bf16.mxu0 0
      %2114 = vmatpush1.bf16.msra.mxu0 %v2071
      %2115 = vmatprep.subr.bf16.mxu0 0
      %2116 = vmatpush1.bf16.msra.mxu0 %v2072
      %2117 = vmatprep.subr.bf16.mxu0 0
      %2118 = vmatpush1.bf16.msra.mxu0 %v2073
      %2119 = vmatprep.subr.bf16.mxu0 0
      %2120 = vmatpush1.bf16.msra.mxu0 %v2074
      %2121 = vmatprep.subr.bf16.mxu0 0
      %2122 = vmatpush1.bf16.msra.mxu0 %v2075
      %2123 = vmatprep.subr.bf16.mxu0 0
      %2124 = vmatpush1.bf16.msra.mxu0 %v2076
      %2125 = vmatprep.mubr.bf16.mxu0 %v1860
      %2126 = vmatmul.mubr.bf16.gmra.mrb[0].mxu0 %v1848
      %v2127 = vpop.f32.mrb[0].mxu0
      %v2128 = vadd.f32 0.0, %v2127
      %v2129 = vpop.f32.mrb[0].mxu0
      %v2130 = vpop.f32.mrb[0].mxu0
      %v2131 = vadd.f32 0.0, %v2130
      %v2132 = vpop.f32.mrb[0].mxu0
      %2133 = vmatprep.mubr.bf16.mxu0 %v1876
      %2134 = vmatmul.mubr.bf16.gmra.mrb[0].mxu0 %v1868
      %v2135 = vpop.f32.mrb[0].mxu0
      %v2136 = vadd.f32 0.0, %v2135
      %v2137 = vpop.f32.mrb[0].mxu0
      %v2138 = vpop.f32.mrb[0].mxu0
      %v2139 = vadd.f32 0.0, %v2138
      %v2140 = vpop.f32.mrb[0].mxu0
      %2141 = vmatprep.mubr.bf16.mxu0 %v1892
      %2142 = vmatmul.mubr.bf16.gmra.mrb[0].mxu0 %v1884
      %v2143 = vpop.f32.mrb[0].mxu0
      %v2144 = vadd.f32 0.0, %v2143
      %v2145 = vpop.f32.mrb[0].mxu0
      %v2146 = vpop.f32.mrb[0].mxu0
      %v2147 = vadd.f32 0.0, %v2146
      %v2148 = vpop.f32.mrb[0].mxu0
      %2149 = vmatprep.mubr.bf16.mxu0 %v1908
      %2150 = vmatmul.mubr.bf16.gmra.mrb[0].mxu0 %v1900
      %v2151 = vpop.f32.mrb[0].mxu0
      %v2152 = vadd.f32 0.0, %v2151
      %v2153 = vpop.f32.mrb[0].mxu0
      %v2154 = vpop.f32.mrb[0].mxu0
      %v2155 = vadd.f32 0.0, %v2154
      %v2156 = vpop.f32.mrb[0].mxu0
      %2157 = vmatprep.mubr.bf16.mxu0 %v1924
      %2158 = vmatmul.mubr.bf16.gmra.mrb[0].mxu0 %v1916
      %v2159 = vpop.f32.mrb[0].mxu0
      %v2160 = vadd.f32 0.0, %v2159
      %v2161 = vpop.f32.mrb[0].mxu0
      %v2162 = vpop.f32.mrb[0].mxu0
      %v2163 = vadd.f32 0.0, %v2162
      %v2164 = vpop.f32.mrb[0].mxu0
      %2165 = vmatprep.mubr.bf16.mxu0 %v1940
      %2166 = vmatmul.mubr.bf16.gmra.mrb[0].mxu0 %v1932
      %v2167 = vpop.f32.mrb[0].mxu0
      %v2168 = vadd.f32 0.0, %v2167
      %v2169 = vpop.f32.mrb[0].mxu0
      %v2170 = vpop.f32.mrb[0].mxu0
      %v2171 = vadd.f32 0.0, %v2170
      %v2172 = vpop.f32.mrb[0].mxu0
      %2173 = vmatprep.mubr.bf16.mxu0 %v1956
      %2174 = vmatmul.mubr.bf16.gmra.mrb[0].mxu0 %v1948
      %v2175 = vpop.f32.mrb[0].mxu0
      %v2176 = vadd.f32 0.0, %v2175
      %v2177 = vpop.f32.mrb[0].mxu0
      %v2178 = vpop.f32.mrb[0].mxu0
      %v2179 = vadd.f32 0.0, %v2178
      %v2180 = vpop.f32.mrb[0].mxu0
      %2181 = vmatprep.mubr.bf16.mxu0 %v1972
      %2182 = vmatmul.mubr.bf16.gmra.mrb[0].mxu0 %v1964
      %v2183 = vpop.f32.mrb[0].mxu0
      %v2184 = vadd.f32 0.0, %v2183
      %v2185 = vpop.f32.mrb[0].mxu0
      %v2186 = vpop.f32.mrb[0].mxu0
      %v2187 = vadd.f32 0.0, %v2186
      %v2188 = vpop.f32.mrb[0].mxu0
      %2189 = vmatprep.mubr.bf16.mxu0 %v1978
      %2190 = vmatmul.mubr.bf16.gmra.mrb[0].mxu0 %v1975
      %v2191 = vpop.f32.mrb[0].mxu0
      %v2192 = vadd.f32 0.0, %v2191
      %v2193 = vpop.f32.mrb[0].mxu0
      %v2194 = vpop.f32.mrb[0].mxu0
      %v2195 = vpop.f32.mrb[0].mxu0
      %2196 = vdwg.mxu0
      %v2198 = vunpack.c.l.b16 %v1701
      %v2199 = vunpack.c.h.b16 %v1701
      %v2200 = vpack.c.b16 %v2198, %v2198
      %v2201 = vpack.c.b16 %v2199, %v2199
      %v2252 = vunpack.c.l.b16 %v1702
      %v2253 = vunpack.c.l.b16 %v1703
      %v2254 = vunpack.c.l.b16 %v1704
      %v2255 = vunpack.c.l.b16 %v1705
      %v2256 = vunpack.c.l.b16 %v1706
      %v2257 = vunpack.c.l.b16 %v1707
      %v2258 = vunpack.c.l.b16 %v1708
      %v2259 = vunpack.c.l.b16 %v1709
      %v2260 = vunpack.c.l.b16 %v1710
      %v2261 = vunpack.c.l.b16 %v1711
      %v2262 = vunpack.c.l.b16 %v1712
      %v2263 = vunpack.c.l.b16 %v1713
      %v2264 = vunpack.c.l.b16 %v1714
      %v2265 = vunpack.c.l.b16 %v1715
      %v2266 = vunpack.c.l.b16 %v1716
      %v2267 = vunpack.c.l.b16 %v1717
      %v2268 = vunpack.c.l.b16 %v1718
      %v2269 = vunpack.c.l.b16 %v1719
      %v2270 = vunpack.c.l.b16 %v1720
      %v2271 = vunpack.c.l.b16 %v1721
      %v2272 = vunpack.c.l.b16 %v1722
      %v2273 = vunpack.c.l.b16 %v1723
      %v2274 = vunpack.c.l.b16 %v1724
      %v2275 = vunpack.c.l.b16 %v1725
      %v2276 = vunpack.c.l.b16 %v1726
      %v2277 = vunpack.c.l.b16 %v1727
      %v2278 = vunpack.c.l.b16 %v1728
      %v2279 = vunpack.c.l.b16 %v1729
      %v2280 = vunpack.c.l.b16 %v1730
      %v2281 = vunpack.c.l.b16 %v1731
      %v2282 = vunpack.c.l.b16 %v1732
      %v2283 = vunpack.c.l.b16 %v1733
      %v2284 = vpack.c.b16 %v2253, %v2252
      %v2285 = vpack.c.b16 %v2255, %v2254
      %v2286 = vpack.c.b16 %v2257, %v2256
      %v2287 = vpack.c.b16 %v2259, %v2258
      %v2288 = vpack.c.b16 %v2261, %v2260
      %v2289 = vpack.c.b16 %v2263, %v2262
      %v2290 = vpack.c.b16 %v2265, %v2264
      %v2291 = vpack.c.b16 %v2267, %v2266
      %v2292 = vpack.c.b16 %v2269, %v2268
      %v2293 = vpack.c.b16 %v2271, %v2270
      %v2294 = vpack.c.b16 %v2273, %v2272
      %v2295 = vpack.c.b16 %v2275, %v2274
      %v2296 = vpack.c.b16 %v2277, %v2276
      %v2297 = vpack.c.b16 %v2279, %v2278
      %v2298 = vpack.c.b16 %v2281, %v2280
      %v2299 = vpack.c.b16 %v2283, %v2282
      %2316 = vmatprep.subr.bf16.mxu0 0
      %2317 = vmatpush1.bf16.msra.mxu0 %v2284
      %2318 = vmatprep.subr.bf16.mxu0 0
      %2319 = vmatpush1.bf16.msra.mxu0 %v2285
      %2320 = vmatprep.subr.bf16.mxu0 0
      %2321 = vmatpush1.bf16.msra.mxu0 %v2286
      %2322 = vmatprep.subr.bf16.mxu0 0
      %2323 = vmatpush1.bf16.msra.mxu0 %v2287
      %2324 = vmatprep.subr.bf16.mxu0 0
      %2325 = vmatpush1.bf16.msra.mxu0 %v2288
      %2326 = vmatprep.subr.bf16.mxu0 0
      %2327 = vmatpush1.bf16.msra.mxu0 %v2289
      %2328 = vmatprep.subr.bf16.mxu0 0
      %2329 = vmatpush1.bf16.msra.mxu0 %v2290
      %2330 = vmatprep.subr.bf16.mxu0 0
      %2331 = vmatpush1.bf16.msra.mxu0 %v2291
      %2332 = vmatprep.subr.bf16.mxu0 0
      %2333 = vmatpush1.bf16.msra.mxu0 %v2292
      %2334 = vmatprep.subr.bf16.mxu0 0
      %2335 = vmatpush1.bf16.msra.mxu0 %v2293
      %2336 = vmatprep.subr.bf16.mxu0 0
      %2337 = vmatpush1.bf16.msra.mxu0 %v2294
      %2338 = vmatprep.subr.bf16.mxu0 0
      %2339 = vmatpush1.bf16.msra.mxu0 %v2295
      %2340 = vmatprep.subr.bf16.mxu0 0
      %2341 = vmatpush1.bf16.msra.mxu0 %v2296
      %2342 = vmatprep.subr.bf16.mxu0 0
      %2343 = vmatpush1.bf16.msra.mxu0 %v2297
      %2344 = vmatprep.subr.bf16.mxu0 0
      %2345 = vmatpush1.bf16.msra.mxu0 %v2298
      %2346 = vmatprep.subr.bf16.mxu0 0
      %2347 = vmatpush1.bf16.msra.mxu0 %v2299
      %2348 = vmatprep.mubr.bf16.mxu0 %v1820
      %2349 = vmatmul.mubr.bf16.gmra.mrb[0].mxu0 %v1819
      %v2350 = vpop.f32.mrb[0].mxu0
      %v2351 = vadd.f32 %v2128, %v2350
      %v2352 = vpop.f32.mrb[0].mxu0
      %v2353 = vpop.f32.mrb[0].mxu0
      %v2354 = vadd.f32 %v2131, %v2353
      %v2355 = vpop.f32.mrb[0].mxu0
      %2356 = vmatprep.mubr.bf16.mxu0 %v1822
      %2357 = vmatmul.mubr.bf16.gmra.mrb[0].mxu0 %v1821
      %v2358 = vpop.f32.mrb[0].mxu0
      %v2359 = vadd.f32 %v2136, %v2358
      %v2360 = vpop.f32.mrb[0].mxu0
      %v2361 = vpop.f32.mrb[0].mxu0
      %v2362 = vadd.f32 %v2139, %v2361
      %v2363 = vpop.f32.mrb[0].mxu0
      %2364 = vmatprep.mubr.bf16.mxu0 %v1824
      %2365 = vmatmul.mubr.bf16.gmra.mrb[0].mxu0 %v1823
      %v2366 = vpop.f32.mrb[0].mxu0
      %v2367 = vadd.f32 %v2144, %v2366
      %v2368 = vpop.f32.mrb[0].mxu0
      %v2369 = vpop.f32.mrb[0].mxu0
      %v2370 = vadd.f32 %v2147, %v2369
      %v2371 = vpop.f32.mrb[0].mxu0
      %2372 = vmatprep.mubr.bf16.mxu0 %v1826
      %2373 = vmatmul.mubr.bf16.gmra.mrb[0].mxu0 %v1825
      %v2374 = vpop.f32.mrb[0].mxu0
      %v2375 = vadd.f32 %v2152, %v2374
      %v2376 = vpop.f32.mrb[0].mxu0
      %v2377 = vpop.f32.mrb[0].mxu0
      %v2378 = vadd.f32 %v2155, %v2377
      %v2379 = vpop.f32.mrb[0].mxu0
      %2380 = vmatprep.mubr.bf16.mxu0 %v1828
      %2381 = vmatmul.mubr.bf16.gmra.mrb[0].mxu0 %v1827
      %v2382 = vpop.f32.mrb[0].mxu0
      %v2383 = vadd.f32 %v2160, %v2382
      %v2384 = vpop.f32.mrb[0].mxu0
      %v2385 = vpop.f32.mrb[0].mxu0
      %v2386 = vadd.f32 %v2163, %v2385
      %v2387 = vpop.f32.mrb[0].mxu0
      %2388 = vmatprep.mubr.bf16.mxu0 %v1830
      %2389 = vmatmul.mubr.bf16.gmra.mrb[0].mxu0 %v1829
      %v2390 = vpop.f32.mrb[0].mxu0
      %v2391 = vadd.f32 %v2168, %v2390
      %v2392 = vpop.f32.mrb[0].mxu0
      %v2393 = vpop.f32.mrb[0].mxu0
      %v2394 = vadd.f32 %v2171, %v2393
      %v2395 = vpop.f32.mrb[0].mxu0
      %2396 = vmatprep.mubr.bf16.mxu0 %v1832
      %2397 = vmatmul.mubr.bf16.gmra.mrb[0].mxu0 %v1831
      %v2398 = vpop.f32.mrb[0].mxu0
      %v2399 = vadd.f32 %v2176, %v2398
      %v2400 = vpop.f32.mrb[0].mxu0
      %v2401 = vpop.f32.mrb[0].mxu0
      %v2402 = vadd.f32 %v2179, %v2401
      %v2403 = vpop.f32.mrb[0].mxu0
      %2404 = vmatprep.mubr.bf16.mxu0 %v1834
      %2405 = vmatmul.mubr.bf16.gmra.mrb[0].mxu0 %v1833
      %v2406 = vpop.f32.mrb[0].mxu0
      %v2407 = vadd.f32 %v2184, %v2406
      %v2408 = vpop.f32.mrb[0].mxu0
      %v2409 = vpop.f32.mrb[0].mxu0
      %v2410 = vadd.f32 %v2187, %v2409
      %v2411 = vpop.f32.mrb[0].mxu0
      %2412 = vmatprep.mubr.bf16.mxu0 %v2201
      %2413 = vmatmul.mubr.bf16.gmra.mrb[0].mxu0 %v2200
      %v2414 = vpop.f32.mrb[0].mxu0
      %v2415 = vadd.f32 %v2192, %v2414
      %v2416 = vpop.f32.mrb[0].mxu0
      %v2417 = vpop.f32.mrb[0].mxu0
      %v2418 = vpop.f32.mrb[0].mxu0
      %2419 = vdwg.mxu0
      %v2420 = vld [vmem:[#allocation2] sm:$0xee]
      %s2421 = scalar_lea.vmem %s5, 256
      %v2422 = vld [vmem:[%s2421] sm:$0xf]
      %v2423 = vld [vmem:[%s2421 + $0x4] sm:$0xf]
      %v2424 = vld [vmem:[%s2421 + $0x8] sm:$0xf]
      %v2425 = vld [vmem:[%s2421 + $0xc] sm:$0xf]
      %v2426 = vld [vmem:[%s2421 + $0x10] sm:$0xf]
      %v2427 = vld [vmem:[%s2421 + $0x14] sm:$0xf]
      %v2428 = vld [vmem:[%s2421 + $0x18] sm:$0xf]
      %v2429 = vld [vmem:[%s2421 + $0x1c] sm:$0xf]
      %v2430 = vld [vmem:[%s2421 + $0x20] sm:$0xf]
      %v2431 = vld [vmem:[%s2421 + $0x24] sm:$0xf]
      %v2432 = vld [vmem:[%s2421 + $0x28] sm:$0xf]
      %v2433 = vld [vmem:[%s2421 + $0x2c] sm:$0xf]
      %v2434 = vld [vmem:[%s2421 + $0x30] sm:$0xf]
      %v2435 = vld [vmem:[%s2421 + $0x34] sm:$0xf]
      %v2436 = vld [vmem:[%s2421 + $0x38] sm:$0xf]
      %v2437 = vld [vmem:[%s2421 + $0x3c] sm:$0xf]
      %v2438 = vld [vmem:[%s2421 + $0x40] sm:$0xf]
      %v2439 = vld [vmem:[%s2421 + $0x44] sm:$0xf]
      %v2440 = vld [vmem:[%s2421 + $0x48] sm:$0xf]
      %v2441 = vld [vmem:[%s2421 + $0x4c] sm:$0xf]
      %v2442 = vld [vmem:[%s2421 + $0x50] sm:$0xf]
      %v2443 = vld [vmem:[%s2421 + $0x54] sm:$0xf]
      %v2444 = vld [vmem:[%s2421 + $0x58] sm:$0xf]
      %v2445 = vld [vmem:[%s2421 + $0x5c] sm:$0xf]
      %v2446 = vld [vmem:[%s2421 + $0x60] sm:$0xf]
      %v2447 = vld [vmem:[%s2421 + $0x64] sm:$0xf]
      %v2448 = vld [vmem:[%s2421 + $0x68] sm:$0xf]
      %v2449 = vld [vmem:[%s2421 + $0x6c] sm:$0xf]
      %v2450 = vld [vmem:[%s2421 + $0x70] sm:$0xf]
      %v2451 = vld [vmem:[%s2421 + $0x74] sm:$0xf]
      %v2452 = vld [vmem:[%s2421 + $0x78] sm:$0xf]
      %v2453 = vld [vmem:[%s2421 + $0x7c] sm:$0xf]
      %v2455 = vunpack.c.l.b16 %v2420
      %v2456 = vunpack.c.h.b16 %v2420
      %v2457 = vpack.c.b16 %v1787, %v2455
      %v2458 = vpack.c.b16 %v1788, %v2456
      %vm2459 = vcmask 1046528
      %v2460 = vrot.slane %v2457, 1
      %v2461 = vrot.slane %v1821, 1
      %v2462 = vsel %vm2459, %v2460, %v2461
      %v2463 = vrot.slane %v2458, 1
      %v2464 = vrot.slane %v1822, 1
      %v2465 = vsel %vm2459, %v2463, %v2464
      %v2466 = vrot.slane %v1823, 1
      %v2467 = vsel %vm2459, %v2461, %v2466
      %v2468 = vrot.slane %v1824, 1
      %v2469 = vsel %vm2459, %v2464, %v2468
      %v2470 = vrot.slane %v1825, 1
      %v2471 = vsel %vm2459, %v2466, %v2470
      %v2472 = vrot.slane %v1826, 1
      %v2473 = vsel %vm2459, %v2468, %v2472
      %v2474 = vrot.slane %v1827, 1
      %v2475 = vsel %vm2459, %v2470, %v2474
      %v2476 = vrot.slane %v1828, 1
      %v2477 = vsel %vm2459, %v2472, %v2476
      %v2478 = vrot.slane %v1829, 1
      %v2479 = vsel %vm2459, %v2474, %v2478
      %v2480 = vrot.slane %v1830, 1
      %v2481 = vsel %vm2459, %v2476, %v2480
      %v2482 = vrot.slane %v1831, 1
      %v2483 = vsel %vm2459, %v2478, %v2482
      %v2484 = vrot.slane %v1832, 1
      %v2485 = vsel %vm2459, %v2480, %v2484
      %v2486 = vrot.slane %v1833, 1
      %v2487 = vsel %vm2459, %v2482, %v2486
      %v2488 = vrot.slane %v1834, 1
      %v2489 = vsel %vm2459, %v2484, %v2488
      %v2490 = vrot.slane %v1835, 1
      %v2491 = vsel %vm2459, %v2486, %v2490
      %v2492 = vrot.slane %v1836, 1
      %v2493 = vsel %vm2459, %v2488, %v2492
      %v2544 = vunpack.c.l.b16 %v2422
      %v2545 = vunpack.c.l.b16 %v2423
      %v2546 = vunpack.c.l.b16 %v2424
      %v2547 = vunpack.c.l.b16 %v2425
      %v2548 = vunpack.c.l.b16 %v2426
      %v2549 = vunpack.c.l.b16 %v2427
      %v2550 = vunpack.c.l.b16 %v2428
      %v2551 = vunpack.c.l.b16 %v2429
      %v2552 = vunpack.c.l.b16 %v2430
      %v2553 = vunpack.c.l.b16 %v2431
      %v2554 = vunpack.c.l.b16 %v2432
      %v2555 = vunpack.c.l.b16 %v2433
      %v2556 = vunpack.c.l.b16 %v2434
      %v2557 = vunpack.c.l.b16 %v2435
      %v2558 = vunpack.c.l.b16 %v2436
      %v2559 = vunpack.c.l.b16 %v2437
      %v2560 = vunpack.c.l.b16 %v2438
      %v2561 = vunpack.c.l.b16 %v2439
      %v2562 = vunpack.c.l.b16 %v2440
      %v2563 = vunpack.c.l.b16 %v2441
      %v2564 = vunpack.c.l.b16 %v2442
      %v2565 = vunpack.c.l.b16 %v2443
      %v2566 = vunpack.c.l.b16 %v2444
      %v2567 = vunpack.c.l.b16 %v2445
      %v2568 = vunpack.c.l.b16 %v2446
      %v2569 = vunpack.c.l.b16 %v2447
      %v2570 = vunpack.c.l.b16 %v2448
      %v2571 = vunpack.c.l.b16 %v2449
      %v2572 = vunpack.c.l.b16 %v2450
      %v2573 = vunpack.c.l.b16 %v2451
      %v2574 = vunpack.c.l.b16 %v2452
      %v2575 = vunpack.c.l.b16 %v2453
      %v2576 = vpack.c.b16 %v2545, %v2544
      %v2577 = vpack.c.b16 %v2547, %v2546
      %v2578 = vpack.c.b16 %v2549, %v2548
      %v2579 = vpack.c.b16 %v2551, %v2550
      %v2580 = vpack.c.b16 %v2553, %v2552
      %v2581 = vpack.c.b16 %v2555, %v2554
      %v2582 = vpack.c.b16 %v2557, %v2556
      %v2583 = vpack.c.b16 %v2559, %v2558
      %v2584 = vpack.c.b16 %v2561, %v2560
      %v2585 = vpack.c.b16 %v2563, %v2562
      %v2586 = vpack.c.b16 %v2565, %v2564
      %v2587 = vpack.c.b16 %v2567, %v2566
      %v2588 = vpack.c.b16 %v2569, %v2568
      %v2589 = vpack.c.b16 %v2571, %v2570
      %v2590 = vpack.c.b16 %v2573, %v2572
      %v2591 = vpack.c.b16 %v2575, %v2574
      %2608 = vmatprep.subr.bf16.mxu0 0
      %2609 = vmatpush1.bf16.msra.mxu0 %v2576
      %2610 = vmatprep.subr.bf16.mxu0 0
      %2611 = vmatpush1.bf16.msra.mxu0 %v2577
      %2612 = vmatprep.subr.bf16.mxu0 0
      %2613 = vmatpush1.bf16.msra.mxu0 %v2578
      %2614 = vmatprep.subr.bf16.mxu0 0
      %2615 = vmatpush1.bf16.msra.mxu0 %v2579
      %2616 = vmatprep.subr.bf16.mxu0 0
      %2617 = vmatpush1.bf16.msra.mxu0 %v2580
      %2618 = vmatprep.subr.bf16.mxu0 0
      %2619 = vmatpush1.bf16.msra.mxu0 %v2581
      %2620 = vmatprep.subr.bf16.mxu0 0
      %2621 = vmatpush1.bf16.msra.mxu0 %v2582
      %2622 = vmatprep.subr.bf16.mxu0 0
      %2623 = vmatpush1.bf16.msra.mxu0 %v2583
      %2624 = vmatprep.subr.bf16.mxu0 0
      %2625 = vmatpush1.bf16.msra.mxu0 %v2584
      %2626 = vmatprep.subr.bf16.mxu0 0
      %2627 = vmatpush1.bf16.msra.mxu0 %v2585
      %2628 = vmatprep.subr.bf16.mxu0 0
      %2629 = vmatpush1.bf16.msra.mxu0 %v2586
      %2630 = vmatprep.subr.bf16.mxu0 0
      %2631 = vmatpush1.bf16.msra.mxu0 %v2587
      %2632 = vmatprep.subr.bf16.mxu0 0
      %2633 = vmatpush1.bf16.msra.mxu0 %v2588
      %2634 = vmatprep.subr.bf16.mxu0 0
      %2635 = vmatpush1.bf16.msra.mxu0 %v2589
      %2636 = vmatprep.subr.bf16.mxu0 0
      %2637 = vmatpush1.bf16.msra.mxu0 %v2590
      %2638 = vmatprep.subr.bf16.mxu0 0
      %2639 = vmatpush1.bf16.msra.mxu0 %v2591
      %2640 = vmatprep.mubr.bf16.mxu0 %v2465
      %2641 = vmatmul.mubr.bf16.gmra.mrb[0].mxu0 %v2462
      %v2642 = vpop.f32.mrb[0].mxu0
      %v2643 = vadd.f32 0.0, %v2642
      %v2644 = vpop.f32.mrb[0].mxu0
      %v2645 = vpop.f32.mrb[0].mxu0
      %v2646 = vadd.f32 0.0, %v2645
      %v2647 = vpop.f32.mrb[0].mxu0
      %2648 = vmatprep.mubr.bf16.mxu0 %v2469
      %2649 = vmatmul.mubr.bf16.gmra.mrb[0].mxu0 %v2467
      %v2650 = vpop.f32.mrb[0].mxu0
      %v2651 = vadd.f32 0.0, %v2650
      %v2652 = vpop.f32.mrb[0].mxu0
      %v2653 = vpop.f32.mrb[0].mxu0
      %v2654 = vadd.f32 0.0, %v2653
      %v2655 = vpop.f32.mrb[0].mxu0
      %2656 = vmatprep.mubr.bf16.mxu0 %v2473
      %2657 = vmatmul.mubr.bf16.gmra.mrb[0].mxu0 %v2471
      %v2658 = vpop.f32.mrb[0].mxu0
      %v2659 = vadd.f32 0.0, %v2658
      %v2660 = vpop.f32.mrb[0].mxu0
      %v2661 = vpop.f32.mrb[0].mxu0
      %v2662 = vadd.f32 0.0, %v2661
      %v2663 = vpop.f32.mrb[0].mxu0
      %2664 = vmatprep.mubr.bf16.mxu0 %v2477
      %2665 = vmatmul.mubr.bf16.gmra.mrb[0].mxu0 %v2475
      %v2666 = vpop.f32.mrb[0].mxu0
      %v2667 = vadd.f32 0.0, %v2666
      %v2668 = vpop.f32.mrb[0].mxu0
      %v2669 = vpop.f32.mrb[0].mxu0
      %v2670 = vadd.f32 0.0, %v2669
      %v2671 = vpop.f32.mrb[0].mxu0
      %2672 = vmatprep.mubr.bf16.mxu0 %v2481
      %2673 = vmatmul.mubr.bf16.gmra.mrb[0].mxu0 %v2479
      %v2674 = vpop.f32.mrb[0].mxu0
      %v2675 = vadd.f32 0.0, %v2674
      %v2676 = vpop.f32.mrb[0].mxu0
      %v2677 = vpop.f32.mrb[0].mxu0
      %v2678 = vadd.f32 0.0, %v2677
      %v2679 = vpop.f32.mrb[0].mxu0
      %2680 = vmatprep.mubr.bf16.mxu0 %v2485
      %2681 = vmatmul.mubr.bf16.gmra.mrb[0].mxu0 %v2483
      %v2682 = vpop.f32.mrb[0].mxu0
      %v2683 = vadd.f32 0.0, %v2682
      %v2684 = vpop.f32.mrb[0].mxu0
      %v2685 = vpop.f32.mrb[0].mxu0
      %v2686 = vadd.f32 0.0, %v2685
      %v2687 = vpop.f32.mrb[0].mxu0
      %2688 = vmatprep.mubr.bf16.mxu0 %v2489
      %2689 = vmatmul.mubr.bf16.gmra.mrb[0].mxu0 %v2487
      %v2690 = vpop.f32.mrb[0].mxu0
      %v2691 = vadd.f32 0.0, %v2690
      %v2692 = vpop.f32.mrb[0].mxu0
      %v2693 = vpop.f32.mrb[0].mxu0
      %v2694 = vadd.f32 0.0, %v2693
      %v2695 = vpop.f32.mrb[0].mxu0
      %2696 = vmatprep.mubr.bf16.mxu0 %v2493
      %2697 = vmatmul.mubr.bf16.gmra.mrb[0].mxu0 %v2491
      %v2698 = vpop.f32.mrb[0].mxu0
      %v2699 = vadd.f32 0.0, %v2698
      %v2700 = vpop.f32.mrb[0].mxu0
      %v2701 = vpop.f32.mrb[0].mxu0
      %v2702 = vadd.f32 0.0, %v2701
      %v2703 = vpop.f32.mrb[0].mxu0
      %2704 = vmatprep.mubr.bf16.mxu0 %v2492
      %2705 = vmatmul.mubr.bf16.gmra.mrb[0].mxu0 %v2490
      %v2706 = vpop.f32.mrb[0].mxu0
      %v2707 = vadd.f32 0.0, %v2706
      %v2708 = vpop.f32.mrb[0].mxu0
      %v2709 = vpop.f32.mrb[0].mxu0
      %v2710 = vpop.f32.mrb[0].mxu0
      %2711 = vdwg.mxu0
      %v2712 = vadd.f32 %v2351, %v2643
      %v2713 = vadd.f32 %v2354, %v2646
      %v2714 = vadd.f32 %v2359, %v2651
      %v2715 = vadd.f32 %v2362, %v2654
      %v2716 = vadd.f32 %v2367, %v2659
      %v2717 = vadd.f32 %v2370, %v2662
      %v2718 = vadd.f32 %v2375, %v2667
      %v2719 = vadd.f32 %v2378, %v2670
      %v2720 = vadd.f32 %v2383, %v2675
      %v2721 = vadd.f32 %v2386, %v2678
      %v2722 = vadd.f32 %v2391, %v2683
      %v2723 = vadd.f32 %v2394, %v2686
      %v2724 = vadd.f32 %v2399, %v2691
      %v2725 = vadd.f32 %v2402, %v2694
      %v2726 = vadd.f32 %v2407, %v2699
      %v2727 = vadd.f32 %v2410, %v2702
      %v2728 = vadd.f32 %v2415, %v2707
      %v2729 = vld [vmem:[%s6] sm:$0x1]
      %v2731 = vlaneseq
      %v2732 = vshrl.u32 %v2731, 7
      %v2733 = vsub.s32 0, %v2732
      %v2734 = vrot.slane %v2729, %v2733
      %v2736 = vmul.f32 %v2712, %v2734
      %v2737 = vmul.f32 %v2713, %v2734
      %v2738 = vmul.f32 %v2714, %v2734
      %v2739 = vmul.f32 %v2715, %v2734
      %v2740 = vmul.f32 %v2716, %v2734
      %v2741 = vmul.f32 %v2717, %v2734
      %v2742 = vmul.f32 %v2718, %v2734
      %v2743 = vmul.f32 %v2719, %v2734
      %v2744 = vmul.f32 %v2720, %v2734
      %v2745 = vmul.f32 %v2721, %v2734
      %v2746 = vmul.f32 %v2722, %v2734
      %v2747 = vmul.f32 %v2723, %v2734
      %v2748 = vmul.f32 %v2724, %v2734
      %v2749 = vmul.f32 %v2725, %v2734
      %v2750 = vmul.f32 %v2726, %v2734
      %v2751 = vmul.f32 %v2727, %v2734
      %v2752 = vmul.f32 %v2728, %v2734
      %v2753 = vld [vmem:[%s7] sm:$0x1]
      %v2755 = vlaneseq
      %v2756 = vshrl.u32 %v2755, 7
      %v2757 = vsub.s32 0, %v2756
      %v2758 = vrot.slane %v2753, %v2757
      %v2760 = vadd.f32 %v2736, %v2758
      %v2761 = vadd.f32 %v2737, %v2758
      %v2762 = vadd.f32 %v2738, %v2758
      %v2763 = vadd.f32 %v2739, %v2758
      %v2764 = vadd.f32 %v2740, %v2758
      %v2765 = vadd.f32 %v2741, %v2758
      %v2766 = vadd.f32 %v2742, %v2758
      %v2767 = vadd.f32 %v2743, %v2758
      %v2768 = vadd.f32 %v2744, %v2758
      %v2769 = vadd.f32 %v2745, %v2758
      %v2770 = vadd.f32 %v2746, %v2758
      %v2771 = vadd.f32 %v2747, %v2758
      %v2772 = vadd.f32 %v2748, %v2758
      %v2773 = vadd.f32 %v2749, %v2758
      %v2774 = vadd.f32 %v2750, %v2758
      %v2775 = vadd.f32 %v2751, %v2758
      %v2776 = vadd.f32 %v2752, %v2758
      %v2777 = vmax.f32 %v2760, 0.0
      %v2778 = vmax.f32 %v2761, 0.0
      %v2779 = vmax.f32 %v2762, 0.0
      %v2780 = vmax.f32 %v2763, 0.0
      %v2781 = vmax.f32 %v2764, 0.0
      %v2782 = vmax.f32 %v2765, 0.0
      %v2783 = vmax.f32 %v2766, 0.0
      %v2784 = vmax.f32 %v2767, 0.0
      %v2785 = vmax.f32 %v2768, 0.0
      %v2786 = vmax.f32 %v2769, 0.0
      %v2787 = vmax.f32 %v2770, 0.0
      %v2788 = vmax.f32 %v2771, 0.0
      %v2789 = vmax.f32 %v2772, 0.0
      %v2790 = vmax.f32 %v2773, 0.0
      %v2791 = vmax.f32 %v2774, 0.0
      %v2792 = vmax.f32 %v2775, 0.0
      %v2793 = vmax.f32 %v2776, 0.0
      %v2794 = vpack.c.bf16 %v2778, %v2777
      %v2795 = vpack.c.bf16 %v2780, %v2779
      %v2798 = vunpack.c.l.b16 %v2794
      %v2799 = vunpack.c.h.b16 %v2794
      %v2800 = vunpack.c.l.b16 %v2795
      %v2801 = vunpack.c.h.b16 %v2795
      %v2802 = vpack.c.b16 %v2798, %v2798
      %v2803 = vpack.c.b16 %v2799, %v2799
      %v2804 = vpack.c.b16 %v2800, %v2800
      %v2805 = vpack.c.b16 %v2801, %v2801
      %v2807 = vshrl.u32 %v2802, 16
      %v2809 = vrot.slane %v2807, 7
      %v2810 = vshll.u32 %v2802, 16
      %v2812 = vor.u32 %v2809, %v2810
      %v2813 = vrot.slane %v2809, 4
      %v2815 = vshrl.u32 %v2803, 16
      %v2817 = vrot.slane %v2815, 7
      %v2818 = vshll.u32 %v2803, 16
      %v2820 = vor.u32 %v2817, %v2818
      %v2821 = vsel %vm1382, %v2813, %v2820
      %v2822 = vrot.slane %v2817, 4
      %v2824 = vshrl.u32 %v2804, 16
      %v2826 = vrot.slane %v2824, 7
      %v2827 = vshll.u32 %v2804, 16
      %v2829 = vor.u32 %v2826, %v2827
      %v2830 = vsel %vm1382, %v2822, %v2829
      %v2831 = vrot.slane %v2826, 4
      %v2833 = vshrl.u32 %v2805, 16
      %v2835 = vrot.slane %v2833, 7
      %v2836 = vshll.u32 %v2805, 16
      %v2838 = vor.u32 %v2835, %v2836
      %v2839 = vsel %vm1382, %v2831, %v2838
      %v2840 = vrot.slane %v2835, 4
      %v2846 = vld [vmem:[#allocation2] sm:$0xf]
      %v2847 = vsel %vm1424, %v2812, %v2846
      %2848 = vst [vmem:[#allocation2] sm:$0xf] %v2847
      %2849 = vst [vmem:[#allocation2 + $0x8] sm:$0xf] %v2821
      %2850 = vst [vmem:[#allocation2 + $0x10] sm:$0xf] %v2830
      %2851 = vst [vmem:[#allocation2 + $0x18] sm:$0xf] %v2839
      %v2852 = vld [vmem:[#allocation2 + $0x20] sm:$0x1]
      %v2853 = vsel %vm474, %v2840, %v2852
      %2854 = vst [vmem:[#allocation2 + $0x20] sm:$0x1] %v2853
      %v2855 = vpack.c.bf16 %v2782, %v2781
      %v2856 = vpack.c.bf16 %v2784, %v2783
      %v2857 = vpack.c.bf16 %v2785, %v2785
      %v2861 = vunpack.c.l.b16 %v2855
      %v2862 = vunpack.c.h.b16 %v2855
      %v2863 = vunpack.c.l.b16 %v2856
      %v2864 = vunpack.c.h.b16 %v2856
      %v2865 = vunpack.c.l.b16 %v2857
      %v2866 = vpack.c.b16 %v2861, %v2861
      %v2867 = vpack.c.b16 %v2862, %v2862
      %v2868 = vpack.c.b16 %v2863, %v2863
      %v2869 = vpack.c.b16 %v2864, %v2864
      %v2870 = vpack.c.b16 %v2865, %v2865
      %v2872 = vshrl.u32 %v2866, 16
      %v2874 = vrot.slane %v2872, 7
      %v2875 = vshll.u32 %v2866, 16
      %v2877 = vor.u32 %v2874, %v2875
      %v2878 = vrot.slane %v2874, 4
      %v2880 = vshrl.u32 %v2867, 16
      %v2882 = vrot.slane %v2880, 7
      %v2883 = vshll.u32 %v2867, 16
      %v2885 = vor.u32 %v2882, %v2883
      %v2886 = vsel %vm1382, %v2878, %v2885
      %v2887 = vrot.slane %v2882, 4
      %v2889 = vshrl.u32 %v2868, 16
      %v2891 = vrot.slane %v2889, 7
      %v2892 = vshll.u32 %v2868, 16
      %v2894 = vor.u32 %v2891, %v2892
      %v2895 = vsel %vm1382, %v2887, %v2894
      %v2896 = vrot.slane %v2891, 4
      %v2898 = vshrl.u32 %v2869, 16
      %v2900 = vrot.slane %v2898, 7
      %v2901 = vshll.u32 %v2869, 16
      %v2903 = vor.u32 %v2900, %v2901
      %v2904 = vsel %vm1382, %v2896, %v2903
      %v2905 = vrot.slane %v2900, 4
      %v2907 = vshrl.u32 %v2870, 16
      %v2909 = vrot.slane %v2907, 7
      %v2910 = vshll.u32 %v2870, 16
      %v2912 = vor.u32 %v2909, %v2910
      %v2913 = vsel %vm1382, %v2905, %v2912
      %v2919 = vld [vmem:[#allocation2 + $0x20] sm:$0xe]
      %v2920 = vsel %vm1504, %v2877, %v2919
      %2921 = vst [vmem:[#allocation2 + $0x20] sm:$0xe] %v2920
      %2922 = vst [vmem:[#allocation2 + $0x28] sm:$0xf] %v2886
      %2923 = vst [vmem:[#allocation2 + $0x30] sm:$0xf] %v2895
      %2924 = vst [vmem:[#allocation2 + $0x38] sm:$0xf] %v2904
      %v2925 = vld [vmem:[#allocation2 + $0x40] sm:$0x3]
      %v2926 = vsel %vm1515, %v2913, %v2925
      %2927 = vst [vmem:[#allocation2 + $0x40] sm:$0x3] %v2926
      %v2928 = vpack.c.bf16 %v2786, %v2785
      %v2929 = vpack.c.bf16 %v2788, %v2787
      %v2930 = vpack.c.bf16 %v2789, %v2789
      %v2934 = vunpack.c.l.b16 %v2928
      %v2935 = vunpack.c.h.b16 %v2928
      %v2936 = vunpack.c.l.b16 %v2929
      %v2937 = vunpack.c.h.b16 %v2929
      %v2938 = vunpack.c.l.b16 %v2930
      %v2939 = vpack.c.b16 %v2934, %v2934
      %v2940 = vpack.c.b16 %v2935, %v2935
      %v2941 = vpack.c.b16 %v2936, %v2936
      %v2942 = vpack.c.b16 %v2937, %v2937
      %v2943 = vpack.c.b16 %v2938, %v2938
      %v2945 = vshrl.u32 %v2939, 16
      %v2947 = vrot.slane %v2945, 7
      %v2948 = vshll.u32 %v2939, 16
      %v2950 = vor.u32 %v2947, %v2948
      %v2951 = vrot.slane %v2947, 4
      %v2953 = vshrl.u32 %v2940, 16
      %v2955 = vrot.slane %v2953, 7
      %v2956 = vshll.u32 %v2940, 16
      %v2958 = vor.u32 %v2955, %v2956
      %v2959 = vsel %vm1382, %v2951, %v2958
      %v2960 = vrot.slane %v2955, 4
      %v2962 = vshrl.u32 %v2941, 16
      %v2964 = vrot.slane %v2962, 7
      %v2965 = vshll.u32 %v2941, 16
      %v2967 = vor.u32 %v2964, %v2965
      %v2968 = vsel %vm1382, %v2960, %v2967
      %v2969 = vrot.slane %v2964, 4
      %v2971 = vshrl.u32 %v2942, 16
      %v2973 = vrot.slane %v2971, 7
      %v2974 = vshll.u32 %v2942, 16
      %v2976 = vor.u32 %v2973, %v2974
      %v2977 = vsel %vm1382, %v2969, %v2976
      %v2978 = vrot.slane %v2973, 4
      %v2980 = vshrl.u32 %v2943, 16
      %v2982 = vrot.slane %v2980, 7
      %v2983 = vshll.u32 %v2943, 16
      %v2985 = vor.u32 %v2982, %v2983
      %v2986 = vsel %vm1382, %v2978, %v2985
      %v2992 = vld [vmem:[#allocation2 + $0x40] sm:$0xc]
      %v2993 = vsel %vm1589, %v2950, %v2992
      %2994 = vst [vmem:[#allocation2 + $0x40] sm:$0xc] %v2993
      %2995 = vst [vmem:[#allocation2 + $0x48] sm:$0xf] %v2959
      %2996 = vst [vmem:[#allocation2 + $0x50] sm:$0xf] %v2968
      %2997 = vst [vmem:[#allocation2 + $0x58] sm:$0xf] %v2977
      %v2998 = vld [vmem:[#allocation2 + $0x60] sm:$0x7]
      %v2999 = vsel %vm1600, %v2986, %v2998
      %3000 = vst [vmem:[#allocation2 + $0x60] sm:$0x7] %v2999
      %v3001 = vpack.c.bf16 %v2790, %v2789
      %v3002 = vpack.c.bf16 %v2792, %v2791
      %v3003 = vpack.c.bf16 %v2793, %v2793
      %v3007 = vunpack.c.l.b16 %v3001
      %v3008 = vunpack.c.h.b16 %v3001
      %v3009 = vunpack.c.l.b16 %v3002
      %v3010 = vunpack.c.h.b16 %v3002
      %v3011 = vunpack.c.l.b16 %v3003
      %v3012 = vpack.c.b16 %v3007, %v3007
      %v3013 = vpack.c.b16 %v3008, %v3008
      %v3014 = vpack.c.b16 %v3009, %v3009
      %v3015 = vpack.c.b16 %v3010, %v3010
      %v3016 = vpack.c.b16 %v3011, %v3011
      %v3018 = vshll.u32 %v3012, 16
      %v3020 = vshrl.u32 %v3012, 16
      %v3022 = vrot.slane %v3020, 7
      %v3023 = vrot.slane %v3022, 4
      %v3025 = vshrl.u32 %v3013, 16
      %v3027 = vrot.slane %v3025, 7
      %v3028 = vshll.u32 %v3013, 16
      %v3030 = vor.u32 %v3027, %v3028
      %v3031 = vsel %vm1382, %v3023, %v3030
      %v3032 = vrot.slane %v3027, 4
      %v3034 = vshrl.u32 %v3014, 16
      %v3036 = vrot.slane %v3034, 7
      %v3037 = vshll.u32 %v3014, 16
      %v3039 = vor.u32 %v3036, %v3037
      %v3040 = vsel %vm1382, %v3032, %v3039
      %v3041 = vrot.slane %v3036, 4
      %v3043 = vshrl.u32 %v3015, 16
      %v3045 = vrot.slane %v3043, 7
      %v3046 = vshll.u32 %v3015, 16
      %v3048 = vor.u32 %v3045, %v3046
      %v3049 = vsel %vm1382, %v3041, %v3048
      %v3050 = vrot.slane %v3045, 4
      %v3052 = vshrl.u32 %v3016, 16
      %v3054 = vrot.slane %v3052, 7
      %v3055 = vshll.u32 %v3016, 16
      %v3057 = vor.u32 %v3054, %v3055
      %v3058 = vsel %vm1382, %v3050, %v3057
      %v3064 = vld [vmem:[#allocation2 + $0x60] sm:$0x8]
      %v3065 = vsel %vm537, %v3018, %v3064
      %3066 = vst [vmem:[#allocation2 + $0x60] sm:$0x8] %v3065
      %3067 = vst [vmem:[#allocation2 + $0x68] sm:$0xf] %v3031
      %3068 = vst [vmem:[#allocation2 + $0x70] sm:$0xf] %v3040
      %3069 = vst [vmem:[#allocation2 + $0x78] sm:$0xf] %v3049
      %v3070 = vld [vmem:[#allocation2 + $0x80] sm:$0xf]
      %v3071 = vsel %vm1679, %v3058, %v3070
      %3072 = vst [vmem:[#allocation2 + $0x80] sm:$0xf] %v3071
      %v3073 = vld [vmem:[#allocation2] sm:$0xf]
      %v3074 = vld [vmem:[#allocation2 + $0x8] sm:$0xf]
      %v3075 = vld [vmem:[#allocation2 + $0x10] sm:$0xf]
      %v3076 = vld [vmem:[#allocation2 + $0x18] sm:$0xf]
      %v3077 = vld [vmem:[#allocation2 + $0x20] sm:$0xf]
      %v3078 = vld [vmem:[#allocation2 + $0x28] sm:$0xf]
      %v3079 = vld [vmem:[#allocation2 + $0x30] sm:$0xf]
      %v3080 = vld [vmem:[#allocation2 + $0x38] sm:$0xf]
      %v3081 = vld [vmem:[#allocation2 + $0x40] sm:$0xf]
      %v3082 = vld [vmem:[#allocation2 + $0x48] sm:$0xf]
      %v3083 = vld [vmem:[#allocation2 + $0x50] sm:$0xf]
      %v3084 = vld [vmem:[#allocation2 + $0x58] sm:$0xf]
      %v3085 = vld [vmem:[#allocation2 + $0x60] sm:$0xf]
      %v3086 = vld [vmem:[#allocation2 + $0x68] sm:$0xf]
      %v3087 = vld [vmem:[#allocation2 + $0x70] sm:$0xf]
      %v3088 = vld [vmem:[#allocation2 + $0x78] sm:$0xf]
      %v3089 = vld [vmem:[#allocation2 + $0x80] sm:$0x7]
      %v3090 = vld [vmem:[%s8] sm:$0xf]
      %v3091 = vld [vmem:[%s8 + $0x4] sm:$0xf]
      %v3092 = vld [vmem:[%s8 + $0x8] sm:$0xf]
      %v3093 = vld [vmem:[%s8 + $0xc] sm:$0xf]
      %v3094 = vld [vmem:[%s8 + $0x10] sm:$0xf]
      %v3095 = vld [vmem:[%s8 + $0x14] sm:$0xf]
      %v3096 = vld [vmem:[%s8 + $0x18] sm:$0xf]
      %v3097 = vld [vmem:[%s8 + $0x1c] sm:$0xf]
      %v3098 = vld [vmem:[%s8 + $0x20] sm:$0xf]
      %v3099 = vld [vmem:[%s8 + $0x24] sm:$0xf]
      %v3100 = vld [vmem:[%s8 + $0x28] sm:$0xf]
      %v3101 = vld [vmem:[%s8 + $0x2c] sm:$0xf]
      %v3102 = vld [vmem:[%s8 + $0x30] sm:$0xf]
      %v3103 = vld [vmem:[%s8 + $0x34] sm:$0xf]
      %v3104 = vld [vmem:[%s8 + $0x38] sm:$0xf]
      %v3105 = vld [vmem:[%s8 + $0x3c] sm:$0xf]
      %v3106 = vld [vmem:[#allocation2 + $0x80] sm:$0xf]
      %s3107 = scalar_lea.vmem %s8, 64
      %v3108 = vld [vmem:[%s3107] sm:$0xf]
      %v3109 = vld [vmem:[%s3107 + $0x4] sm:$0xf]
      %v3110 = vld [vmem:[%s3107 + $0x8] sm:$0xf]
      %v3111 = vld [vmem:[%s3107 + $0xc] sm:$0xf]
      %v3112 = vld [vmem:[%s3107 + $0x10] sm:$0xf]
      %v3113 = vld [vmem:[%s3107 + $0x14] sm:$0xf]
      %v3114 = vld [vmem:[%s3107 + $0x18] sm:$0xf]
      %v3115 = vld [vmem:[%s3107 + $0x1c] sm:$0xf]
      %v3116 = vld [vmem:[%s3107 + $0x20] sm:$0xf]
      %v3117 = vld [vmem:[%s3107 + $0x24] sm:$0xf]
      %v3118 = vld [vmem:[%s3107 + $0x28] sm:$0xf]
      %v3119 = vld [vmem:[%s3107 + $0x2c] sm:$0xf]
      %v3120 = vld [vmem:[%s3107 + $0x30] sm:$0xf]
      %v3121 = vld [vmem:[%s3107 + $0x34] sm:$0xf]
      %v3122 = vld [vmem:[%s3107 + $0x38] sm:$0xf]
      %v3123 = vld [vmem:[%s3107 + $0x3c] sm:$0xf]
      %v3141 = vunpack.c.l.b16 %v3073
      %v3142 = vunpack.c.l.b16 %v3074
      %v3143 = vunpack.c.l.b16 %v3075
      %v3144 = vunpack.c.l.b16 %v3076
      %v3145 = vunpack.c.l.b16 %v3077
      %v3146 = vunpack.c.l.b16 %v3078
      %v3147 = vunpack.c.l.b16 %v3079
      %v3148 = vunpack.c.l.b16 %v3080
      %v3149 = vunpack.c.l.b16 %v3081
      %v3150 = vunpack.c.l.b16 %v3082
      %v3151 = vunpack.c.l.b16 %v3083
      %v3152 = vunpack.c.l.b16 %v3084
      %v3153 = vunpack.c.l.b16 %v3085
      %v3154 = vunpack.c.l.b16 %v3086
      %v3155 = vunpack.c.l.b16 %v3087
      %v3156 = vunpack.c.l.b16 %v3088
      %v3157 = vunpack.c.l.b16 %v3106
      %v3158 = vpack.c.b16 %v3142, %v3141
      %v3159 = vpack.c.b16 %v3144, %v3143
      %v3160 = vpack.c.b16 %v3146, %v3145
      %v3161 = vpack.c.b16 %v3148, %v3147
      %v3162 = vpack.c.b16 %v3150, %v3149
      %v3163 = vpack.c.b16 %v3152, %v3151
      %v3164 = vpack.c.b16 %v3154, %v3153
      %v3165 = vpack.c.b16 %v3156, %v3155
      %v3166 = vpack.c.b16 %v3157, %v3157
      %v3168 = vshrl.u32 %v3158, 16
      %v3170 = vshll.u32 %v3158, 16
      %v3172 = vrot.slane %v3170, 1
      %v3173 = vor.u32 %v3168, %v3172
      %v3175 = vshll.u32 %v3159, 16
      %v3177 = vrot.slane %v3175, 1
      %v3178 = vsel %vm530, %v3173, %v3177
      %v3179 = vshrl.u32 %v3159, 16
      %v3181 = vor.u32 %v3179, %v3177
      %v3183 = vshll.u32 %v3160, 16
      %v3185 = vrot.slane %v3183, 1
      %v3186 = vsel %vm530, %v3181, %v3185
      %v3187 = vshrl.u32 %v3160, 16
      %v3189 = vor.u32 %v3187, %v3185
      %v3191 = vshll.u32 %v3161, 16
      %v3193 = vrot.slane %v3191, 1
      %v3194 = vsel %vm530, %v3189, %v3193
      %v3195 = vshrl.u32 %v3161, 16
      %v3197 = vor.u32 %v3195, %v3193
      %v3199 = vshll.u32 %v3162, 16
      %v3201 = vrot.slane %v3199, 1
      %v3202 = vsel %vm530, %v3197, %v3201
      %v3203 = vshrl.u32 %v3162, 16
      %v3205 = vor.u32 %v3203, %v3201
      %v3207 = vshll.u32 %v3163, 16
      %v3209 = vrot.slane %v3207, 1
      %v3210 = vsel %vm530, %v3205, %v3209
      %v3211 = vshrl.u32 %v3163, 16
      %v3213 = vor.u32 %v3211, %v3209
      %v3215 = vshll.u32 %v3164, 16
      %v3217 = vrot.slane %v3215, 1
      %v3218 = vsel %vm530, %v3213, %v3217
      %v3219 = vshrl.u32 %v3164, 16
      %v3221 = vor.u32 %v3219, %v3217
      %v3223 = vshll.u32 %v3165, 16
      %v3225 = vrot.slane %v3223, 1
      %v3226 = vsel %vm530, %v3221, %v3225
      %v3227 = vshrl.u32 %v3165, 16
      %v3229 = vor.u32 %v3227, %v3225
      %v3231 = vshll.u32 %v3166, 16
      %v3233 = vrot.slane %v3231, 1
      %v3234 = vsel %vm530, %v3229, %v3233
      %v3235 = vshrl.u32 %v3166, 16
      %v3237 = vor.u32 %v3235, %v3233
      %v3263 = vunpack.c.l.b16 %v3108
      %v3264 = vunpack.c.l.b16 %v3109
      %v3265 = vunpack.c.l.b16 %v3110
      %v3266 = vunpack.c.l.b16 %v3111
      %v3267 = vunpack.c.l.b16 %v3112
      %v3268 = vunpack.c.l.b16 %v3113
      %v3269 = vunpack.c.l.b16 %v3114
      %v3270 = vunpack.c.l.b16 %v3115
      %v3271 = vunpack.c.l.b16 %v3116
      %v3272 = vunpack.c.l.b16 %v3117
      %v3273 = vunpack.c.l.b16 %v3118
      %v3274 = vunpack.c.l.b16 %v3119
      %v3275 = vunpack.c.l.b16 %v3120
      %v3276 = vunpack.c.l.b16 %v3121
      %v3277 = vunpack.c.l.b16 %v3122
      %v3278 = vunpack.c.l.b16 %v3123
      %v3279 = vpack.c.b16 %v3264, %v3263
      %v3280 = vpack.c.b16 %v3266, %v3265
      %v3281 = vpack.c.b16 %v3268, %v3267
      %v3282 = vpack.c.b16 %v3270, %v3269
      %v3283 = vpack.c.b16 %v3272, %v3271
      %v3284 = vpack.c.b16 %v3274, %v3273
      %v3285 = vpack.c.b16 %v3276, %v3275
      %v3286 = vpack.c.b16 %v3278, %v3277
      %3295 = vmatprep.subr.bf16.mxu0 0
      %3296 = vmatpush1.bf16.msra.mxu0 %v3279
      %3297 = vmatprep.subr.bf16.mxu0 0
      %3298 = vmatpush1.bf16.msra.mxu0 %v3280
      %3299 = vmatprep.subr.bf16.mxu0 0
      %3300 = vmatpush1.bf16.msra.mxu0 %v3281
      %3301 = vmatprep.subr.bf16.mxu0 0
      %3302 = vmatpush1.bf16.msra.mxu0 %v3282
      %3303 = vmatprep.subr.bf16.mxu0 0
      %3304 = vmatpush1.bf16.msra.mxu0 %v3283
      %3305 = vmatprep.subr.bf16.mxu0 0
      %3306 = vmatpush1.bf16.msra.mxu0 %v3284
      %3307 = vmatprep.subr.bf16.mxu0 0
      %3308 = vmatpush1.bf16.msra.mxu0 %v3285
      %3309 = vmatprep.subr.bf16.mxu0 0
      %3310 = vmatpush1.bf16.msra.mxu0 %v3286
      %3311 = vmatprep.subr.bf16.mxu0 0
      %3312 = vmatpush1.bf16.msra.mxu0 0
      %3313 = vmatprep.subr.bf16.mxu0 0
      %3314 = vmatpush1.bf16.msra.mxu0 0
      %3315 = vmatprep.subr.bf16.mxu0 0
      %3316 = vmatpush1.bf16.msra.mxu0 0
      %3317 = vmatprep.subr.bf16.mxu0 0
      %3318 = vmatpush1.bf16.msra.mxu0 0
      %3319 = vmatprep.subr.bf16.mxu0 0
      %3320 = vmatpush1.bf16.msra.mxu0 0
      %3321 = vmatprep.subr.bf16.mxu0 0
      %3322 = vmatpush1.bf16.msra.mxu0 0
      %3323 = vmatprep.subr.bf16.mxu0 0
      %3324 = vmatpush1.bf16.msra.mxu0 0
      %3325 = vmatprep.subr.bf16.mxu0 0
      %3326 = vmatpush1.bf16.msra.mxu0 0
      %3327 = vmatprep.mubr.bf16.mxu0 0
      %3328 = vmatmul.mubr.bf16.gmra.mrb[0].mxu0 %v3178
      %v3329 = vpop.f32.mrb[0].mxu0
      %v3330 = vadd.f32 0.0, %v3329
      %v3331 = vpop.f32.mrb[0].mxu0
      %v3332 = vpop.f32.mrb[0].mxu0
      %v3333 = vadd.f32 0.0, %v3332
      %v3334 = vpop.f32.mrb[0].mxu0
      %3335 = vmatprep.mubr.bf16.mxu0 0
      %3336 = vmatmul.mubr.bf16.gmra.mrb[0].mxu0 %v3186
      %v3337 = vpop.f32.mrb[0].mxu0
      %v3338 = vadd.f32 0.0, %v3337
      %v3339 = vpop.f32.mrb[0].mxu0
      %v3340 = vpop.f32.mrb[0].mxu0
      %v3341 = vadd.f32 0.0, %v3340
      %v3342 = vpop.f32.mrb[0].mxu0
      %3343 = vmatprep.mubr.bf16.mxu0 0
      %3344 = vmatmul.mubr.bf16.gmra.mrb[0].mxu0 %v3194
      %v3345 = vpop.f32.mrb[0].mxu0
      %v3346 = vadd.f32 0.0, %v3345
      %v3347 = vpop.f32.mrb[0].mxu0
      %v3348 = vpop.f32.mrb[0].mxu0
      %v3349 = vadd.f32 0.0, %v3348
      %v3350 = vpop.f32.mrb[0].mxu0
      %3351 = vmatprep.mubr.bf16.mxu0 0
      %3352 = vmatmul.mubr.bf16.gmra.mrb[0].mxu0 %v3202
      %v3353 = vpop.f32.mrb[0].mxu0
      %v3354 = vadd.f32 0.0, %v3353
      %v3355 = vpop.f32.mrb[0].mxu0
      %v3356 = vpop.f32.mrb[0].mxu0
      %v3357 = vadd.f32 0.0, %v3356
      %v3358 = vpop.f32.mrb[0].mxu0
      %3359 = vmatprep.mubr.bf16.mxu0 0
      %3360 = vmatmul.mubr.bf16.gmra.mrb[0].mxu0 %v3210
      %v3361 = vpop.f32.mrb[0].mxu0
      %v3362 = vadd.f32 0.0, %v3361
      %v3363 = vpop.f32.mrb[0].mxu0
      %v3364 = vpop.f32.mrb[0].mxu0
      %v3365 = vadd.f32 0.0, %v3364
      %v3366 = vpop.f32.mrb[0].mxu0
      %3367 = vmatprep.mubr.bf16.mxu0 0
      %3368 = vmatmul.mubr.bf16.gmra.mrb[0].mxu0 %v3218
      %v3369 = vpop.f32.mrb[0].mxu0
      %v3370 = vadd.f32 0.0, %v3369
      %v3371 = vpop.f32.mrb[0].mxu0
      %v3372 = vpop.f32.mrb[0].mxu0
      %v3373 = vadd.f32 0.0, %v3372
      %v3374 = vpop.f32.mrb[0].mxu0
      %3375 = vmatprep.mubr.bf16.mxu0 0
      %3376 = vmatmul.mubr.bf16.gmra.mrb[0].mxu0 %v3226
      %v3377 = vpop.f32.mrb[0].mxu0
      %v3378 = vadd.f32 0.0, %v3377
      %v3379 = vpop.f32.mrb[0].mxu0
      %v3380 = vpop.f32.mrb[0].mxu0
      %v3381 = vadd.f32 0.0, %v3380
      %v3382 = vpop.f32.mrb[0].mxu0
      %3383 = vmatprep.mubr.bf16.mxu0 0
      %3384 = vmatmul.mubr.bf16.gmra.mrb[0].mxu0 %v3234
      %v3385 = vpop.f32.mrb[0].mxu0
      %v3386 = vadd.f32 0.0, %v3385
      %v3387 = vpop.f32.mrb[0].mxu0
      %v3388 = vpop.f32.mrb[0].mxu0
      %v3389 = vadd.f32 0.0, %v3388
      %v3390 = vpop.f32.mrb[0].mxu0
      %3391 = vmatprep.mubr.bf16.mxu0 0
      %3392 = vmatmul.mubr.bf16.gmra.mrb[0].mxu0 %v3237
      %v3393 = vpop.f32.mrb[0].mxu0
      %v3394 = vadd.f32 0.0, %v3393
      %v3395 = vpop.f32.mrb[0].mxu0
      %v3396 = vpop.f32.mrb[0].mxu0
      %v3397 = vpop.f32.mrb[0].mxu0
      %3398 = vdwg.mxu0
      %v3400 = vunpack.c.l.b16 %v3089
      %v3401 = vpack.c.b16 %v3400, %v3400
      %v3427 = vunpack.c.l.b16 %v3090
      %v3428 = vunpack.c.l.b16 %v3091
      %v3429 = vunpack.c.l.b16 %v3092
      %v3430 = vunpack.c.l.b16 %v3093
      %v3431 = vunpack.c.l.b16 %v3094
      %v3432 = vunpack.c.l.b16 %v3095
      %v3433 = vunpack.c.l.b16 %v3096
      %v3434 = vunpack.c.l.b16 %v3097
      %v3435 = vunpack.c.l.b16 %v3098
      %v3436 = vunpack.c.l.b16 %v3099
      %v3437 = vunpack.c.l.b16 %v3100
      %v3438 = vunpack.c.l.b16 %v3101
      %v3439 = vunpack.c.l.b16 %v3102
      %v3440 = vunpack.c.l.b16 %v3103
      %v3441 = vunpack.c.l.b16 %v3104
      %v3442 = vunpack.c.l.b16 %v3105
      %v3443 = vpack.c.b16 %v3428, %v3427
      %v3444 = vpack.c.b16 %v3430, %v3429
      %v3445 = vpack.c.b16 %v3432, %v3431
      %v3446 = vpack.c.b16 %v3434, %v3433
      %v3447 = vpack.c.b16 %v3436, %v3435
      %v3448 = vpack.c.b16 %v3438, %v3437
      %v3449 = vpack.c.b16 %v3440, %v3439
      %v3450 = vpack.c.b16 %v3442, %v3441
      %3459 = vmatprep.subr.bf16.mxu0 0
      %3460 = vmatpush1.bf16.msra.mxu0 %v3443
      %3461 = vmatprep.subr.bf16.mxu0 0
      %3462 = vmatpush1.bf16.msra.mxu0 %v3444
      %3463 = vmatprep.subr.bf16.mxu0 0
      %3464 = vmatpush1.bf16.msra.mxu0 %v3445
      %3465 = vmatprep.subr.bf16.mxu0 0
      %3466 = vmatpush1.bf16.msra.mxu0 %v3446
      %3467 = vmatprep.subr.bf16.mxu0 0
      %3468 = vmatpush1.bf16.msra.mxu0 %v3447
      %3469 = vmatprep.subr.bf16.mxu0 0
      %3470 = vmatpush1.bf16.msra.mxu0 %v3448
      %3471 = vmatprep.subr.bf16.mxu0 0
      %3472 = vmatpush1.bf16.msra.mxu0 %v3449
      %3473 = vmatprep.subr.bf16.mxu0 0
      %3474 = vmatpush1.bf16.msra.mxu0 %v3450
      %3475 = vmatprep.subr.bf16.mxu0 0
      %3476 = vmatpush1.bf16.msra.mxu0 0
      %3477 = vmatprep.subr.bf16.mxu0 0
      %3478 = vmatpush1.bf16.msra.mxu0 0
      %3479 = vmatprep.subr.bf16.mxu0 0
      %3480 = vmatpush1.bf16.msra.mxu0 0
      %3481 = vmatprep.subr.bf16.mxu0 0
      %3482 = vmatpush1.bf16.msra.mxu0 0
      %3483 = vmatprep.subr.bf16.mxu0 0
      %3484 = vmatpush1.bf16.msra.mxu0 0
      %3485 = vmatprep.subr.bf16.mxu0 0
      %3486 = vmatpush1.bf16.msra.mxu0 0
      %3487 = vmatprep.subr.bf16.mxu0 0
      %3488 = vmatpush1.bf16.msra.mxu0 0
      %3489 = vmatprep.subr.bf16.mxu0 0
      %3490 = vmatpush1.bf16.msra.mxu0 0
      %3491 = vmatprep.mubr.bf16.mxu0 0
      %3492 = vmatmul.mubr.bf16.gmra.mrb[0].mxu0 %v3158
      %v3493 = vpop.f32.mrb[0].mxu0
      %v3494 = vadd.f32 %v3330, %v3493
      %v3495 = vpop.f32.mrb[0].mxu0
      %v3496 = vpop.f32.mrb[0].mxu0
      %v3497 = vadd.f32 %v3333, %v3496
      %v3498 = vpop.f32.mrb[0].mxu0
      %3499 = vmatprep.mubr.bf16.mxu0 0
      %3500 = vmatmul.mubr.bf16.gmra.mrb[0].mxu0 %v3159
      %v3501 = vpop.f32.mrb[0].mxu0
      %v3502 = vadd.f32 %v3338, %v3501
      %v3503 = vpop.f32.mrb[0].mxu0
      %v3504 = vpop.f32.mrb[0].mxu0
      %v3505 = vadd.f32 %v3341, %v3504
      %v3506 = vpop.f32.mrb[0].mxu0
      %3507 = vmatprep.mubr.bf16.mxu0 0
      %3508 = vmatmul.mubr.bf16.gmra.mrb[0].mxu0 %v3160
      %v3509 = vpop.f32.mrb[0].mxu0
      %v3510 = vadd.f32 %v3346, %v3509
      %v3511 = vpop.f32.mrb[0].mxu0
      %v3512 = vpop.f32.mrb[0].mxu0
      %v3513 = vadd.f32 %v3349, %v3512
      %v3514 = vpop.f32.mrb[0].mxu0
      %3515 = vmatprep.mubr.bf16.mxu0 0
      %3516 = vmatmul.mubr.bf16.gmra.mrb[0].mxu0 %v3161
      %v3517 = vpop.f32.mrb[0].mxu0
      %v3518 = vadd.f32 %v3354, %v3517
      %v3519 = vpop.f32.mrb[0].mxu0
      %v3520 = vpop.f32.mrb[0].mxu0
      %v3521 = vadd.f32 %v3357, %v3520
      %v3522 = vpop.f32.mrb[0].mxu0
      %3523 = vmatprep.mubr.bf16.mxu0 0
      %3524 = vmatmul.mubr.bf16.gmra.mrb[0].mxu0 %v3162
      %v3525 = vpop.f32.mrb[0].mxu0
      %v3526 = vadd.f32 %v3362, %v3525
      %v3527 = vpop.f32.mrb[0].mxu0
      %v3528 = vpop.f32.mrb[0].mxu0
      %v3529 = vadd.f32 %v3365, %v3528
      %v3530 = vpop.f32.mrb[0].mxu0
      %3531 = vmatprep.mubr.bf16.mxu0 0
      %3532 = vmatmul.mubr.bf16.gmra.mrb[0].mxu0 %v3163
      %v3533 = vpop.f32.mrb[0].mxu0
      %v3534 = vadd.f32 %v3370, %v3533
      %v3535 = vpop.f32.mrb[0].mxu0
      %v3536 = vpop.f32.mrb[0].mxu0
      %v3537 = vadd.f32 %v3373, %v3536
      %v3538 = vpop.f32.mrb[0].mxu0
      %3539 = vmatprep.mubr.bf16.mxu0 0
      %3540 = vmatmul.mubr.bf16.gmra.mrb[0].mxu0 %v3164
      %v3541 = vpop.f32.mrb[0].mxu0
      %v3542 = vadd.f32 %v3378, %v3541
      %v3543 = vpop.f32.mrb[0].mxu0
      %v3544 = vpop.f32.mrb[0].mxu0
      %v3545 = vadd.f32 %v3381, %v3544
      %v3546 = vpop.f32.mrb[0].mxu0
      %3547 = vmatprep.mubr.bf16.mxu0 0
      %3548 = vmatmul.mubr.bf16.gmra.mrb[0].mxu0 %v3165
      %v3549 = vpop.f32.mrb[0].mxu0
      %v3550 = vadd.f32 %v3386, %v3549
      %v3551 = vpop.f32.mrb[0].mxu0
      %v3552 = vpop.f32.mrb[0].mxu0
      %v3553 = vadd.f32 %v3389, %v3552
      %v3554 = vpop.f32.mrb[0].mxu0
      %3555 = vmatprep.mubr.bf16.mxu0 0
      %3556 = vmatmul.mubr.bf16.gmra.mrb[0].mxu0 %v3401
      %v3557 = vpop.f32.mrb[0].mxu0
      %v3558 = vadd.f32 %v3394, %v3557
      %v3559 = vpop.f32.mrb[0].mxu0
      %v3560 = vpop.f32.mrb[0].mxu0
      %v3561 = vpop.f32.mrb[0].mxu0
      %3562 = vdwg.mxu0
      %v3563 = vld [vmem:[#allocation2] sm:$0xe]
      %s3564 = scalar_lea.vmem %s8, 128
      %v3565 = vld [vmem:[%s3564] sm:$0xf]
      %v3566 = vld [vmem:[%s3564 + $0x4] sm:$0xf]
      %v3567 = vld [vmem:[%s3564 + $0x8] sm:$0xf]
      %v3568 = vld [vmem:[%s3564 + $0xc] sm:$0xf]
      %v3569 = vld [vmem:[%s3564 + $0x10] sm:$0xf]
      %v3570 = vld [vmem:[%s3564 + $0x14] sm:$0xf]
      %v3571 = vld [vmem:[%s3564 + $0x18] sm:$0xf]
      %v3572 = vld [vmem:[%s3564 + $0x1c] sm:$0xf]
      %v3573 = vld [vmem:[%s3564 + $0x20] sm:$0xf]
      %v3574 = vld [vmem:[%s3564 + $0x24] sm:$0xf]
      %v3575 = vld [vmem:[%s3564 + $0x28] sm:$0xf]
      %v3576 = vld [vmem:[%s3564 + $0x2c] sm:$0xf]
      %v3577 = vld [vmem:[%s3564 + $0x30] sm:$0xf]
      %v3578 = vld [vmem:[%s3564 + $0x34] sm:$0xf]
      %v3579 = vld [vmem:[%s3564 + $0x38] sm:$0xf]
      %v3580 = vld [vmem:[%s3564 + $0x3c] sm:$0xf]
      %v3582 = vunpack.c.l.b16 %v3563
      %v3583 = vpack.c.b16 %v3142, %v3582
      %v3584 = vrot.slane %v3583, 1
      %v3585 = vrot.slane %v3159, 1
      %v3586 = vsel %vm2459, %v3584, %v3585
      %v3587 = vrot.slane %v3160, 1
      %v3588 = vsel %vm2459, %v3585, %v3587
      %v3589 = vrot.slane %v3161, 1
      %v3590 = vsel %vm2459, %v3587, %v3589
      %v3591 = vrot.slane %v3162, 1
      %v3592 = vsel %vm2459, %v3589, %v3591
      %v3593 = vrot.slane %v3163, 1
      %v3594 = vsel %vm2459, %v3591, %v3593
      %v3595 = vrot.slane %v3164, 1
      %v3596 = vsel %vm2459, %v3593, %v3595
      %v3597 = vrot.slane %v3165, 1
      %v3598 = vsel %vm2459, %v3595, %v3597
      %v3599 = vrot.slane %v3166, 1
      %v3600 = vsel %vm2459, %v3597, %v3599
      %v3626 = vunpack.c.l.b16 %v3565
      %v3627 = vunpack.c.l.b16 %v3566
      %v3628 = vunpack.c.l.b16 %v3567
      %v3629 = vunpack.c.l.b16 %v3568
      %v3630 = vunpack.c.l.b16 %v3569
      %v3631 = vunpack.c.l.b16 %v3570
      %v3632 = vunpack.c.l.b16 %v3571
      %v3633 = vunpack.c.l.b16 %v3572
      %v3634 = vunpack.c.l.b16 %v3573
      %v3635 = vunpack.c.l.b16 %v3574
      %v3636 = vunpack.c.l.b16 %v3575
      %v3637 = vunpack.c.l.b16 %v3576
      %v3638 = vunpack.c.l.b16 %v3577
      %v3639 = vunpack.c.l.b16 %v3578
      %v3640 = vunpack.c.l.b16 %v3579
      %v3641 = vunpack.c.l.b16 %v3580
      %v3642 = vpack.c.b16 %v3627, %v3626
      %v3643 = vpack.c.b16 %v3629, %v3628
      %v3644 = vpack.c.b16 %v3631, %v3630
      %v3645 = vpack.c.b16 %v3633, %v3632
      %v3646 = vpack.c.b16 %v3635, %v3634
      %v3647 = vpack.c.b16 %v3637, %v3636
      %v3648 = vpack.c.b16 %v3639, %v3638
      %v3649 = vpack.c.b16 %v3641, %v3640
      %3658 = vmatprep.subr.bf16.mxu0 0
      %3659 = vmatpush1.bf16.msra.mxu0 %v3642
      %3660 = vmatprep.subr.bf16.mxu0 0
      %3661 = vmatpush1.bf16.msra.mxu0 %v3643
      %3662 = vmatprep.subr.bf16.mxu0 0
      %3663 = vmatpush1.bf16.msra.mxu0 %v3644
      %3664 = vmatprep.subr.bf16.mxu0 0
      %3665 = vmatpush1.bf16.msra.mxu0 %v3645
      %3666 = vmatprep.subr.bf16.mxu0 0
      %3667 = vmatpush1.bf16.msra.mxu0 %v3646
      %3668 = vmatprep.subr.bf16.mxu0 0
      %3669 = vmatpush1.bf16.msra.mxu0 %v3647
      %3670 = vmatprep.subr.bf16.mxu0 0
      %3671 = vmatpush1.bf16.msra.mxu0 %v3648
      %3672 = vmatprep.subr.bf16.mxu0 0
      %3673 = vmatpush1.bf16.msra.mxu0 %v3649
      %3674 = vmatprep.subr.bf16.mxu0 0
      %3675 = vmatpush1.bf16.msra.mxu0 0
      %3676 = vmatprep.subr.bf16.mxu0 0
      %3677 = vmatpush1.bf16.msra.mxu0 0
      %3678 = vmatprep.subr.bf16.mxu0 0
      %3679 = vmatpush1.bf16.msra.mxu0 0
      %3680 = vmatprep.subr.bf16.mxu0 0
      %3681 = vmatpush1.bf16.msra.mxu0 0
      %3682 = vmatprep.subr.bf16.mxu0 0
      %3683 = vmatpush1.bf16.msra.mxu0 0
      %3684 = vmatprep.subr.bf16.mxu0 0
      %3685 = vmatpush1.bf16.msra.mxu0 0
      %3686 = vmatprep.subr.bf16.mxu0 0
      %3687 = vmatpush1.bf16.msra.mxu0 0
      %3688 = vmatprep.subr.bf16.mxu0 0
      %3689 = vmatpush1.bf16.msra.mxu0 0
      %3690 = vmatprep.mubr.bf16.mxu0 0
      %3691 = vmatmul.mubr.bf16.gmra.mrb[0].mxu0 %v3586
      %v3692 = vpop.f32.mrb[0].mxu0
      %v3693 = vadd.f32 0.0, %v3692
      %v3694 = vpop.f32.mrb[0].mxu0
      %v3695 = vpop.f32.mrb[0].mxu0
      %v3696 = vadd.f32 0.0, %v3695
      %v3697 = vpop.f32.mrb[0].mxu0
      %3698 = vmatprep.mubr.bf16.mxu0 0
      %3699 = vmatmul.mubr.bf16.gmra.mrb[0].mxu0 %v3588
      %v3700 = vpop.f32.mrb[0].mxu0
      %v3701 = vadd.f32 0.0, %v3700
      %v3702 = vpop.f32.mrb[0].mxu0
      %v3703 = vpop.f32.mrb[0].mxu0
      %v3704 = vadd.f32 0.0, %v3703
      %v3705 = vpop.f32.mrb[0].mxu0
      %3706 = vmatprep.mubr.bf16.mxu0 0
      %3707 = vmatmul.mubr.bf16.gmra.mrb[0].mxu0 %v3590
      %v3708 = vpop.f32.mrb[0].mxu0
      %v3709 = vadd.f32 0.0, %v3708
      %v3710 = vpop.f32.mrb[0].mxu0
      %v3711 = vpop.f32.mrb[0].mxu0
      %v3712 = vadd.f32 0.0, %v3711
      %v3713 = vpop.f32.mrb[0].mxu0
      %3714 = vmatprep.mubr.bf16.mxu0 0
      %3715 = vmatmul.mubr.bf16.gmra.mrb[0].mxu0 %v3592
      %v3716 = vpop.f32.mrb[0].mxu0
      %v3717 = vadd.f32 0.0, %v3716
      %v3718 = vpop.f32.mrb[0].mxu0
      %v3719 = vpop.f32.mrb[0].mxu0
      %v3720 = vadd.f32 0.0, %v3719
      %v3721 = vpop.f32.mrb[0].mxu0
      %3722 = vmatprep.mubr.bf16.mxu0 0
      %3723 = vmatmul.mubr.bf16.gmra.mrb[0].mxu0 %v3594
      %v3724 = vpop.f32.mrb[0].mxu0
      %v3725 = vadd.f32 0.0, %v3724
      %v3726 = vpop.f32.mrb[0].mxu0
      %v3727 = vpop.f32.mrb[0].mxu0
      %v3728 = vadd.f32 0.0, %v3727
      %v3729 = vpop.f32.mrb[0].mxu0
      %3730 = vmatprep.mubr.bf16.mxu0 0
      %3731 = vmatmul.mubr.bf16.gmra.mrb[0].mxu0 %v3596
      %v3732 = vpop.f32.mrb[0].mxu0
      %v3733 = vadd.f32 0.0, %v3732
      %v3734 = vpop.f32.mrb[0].mxu0
      %v3735 = vpop.f32.mrb[0].mxu0
      %v3736 = vadd.f32 0.0, %v3735
      %v3737 = vpop.f32.mrb[0].mxu0
      %3738 = vmatprep.mubr.bf16.mxu0 0
      %3739 = vmatmul.mubr.bf16.gmra.mrb[0].mxu0 %v3598
      %v3740 = vpop.f32.mrb[0].mxu0
      %v3741 = vadd.f32 0.0, %v3740
      %v3742 = vpop.f32.mrb[0].mxu0
      %v3743 = vpop.f32.mrb[0].mxu0
      %v3744 = vadd.f32 0.0, %v3743
      %v3745 = vpop.f32.mrb[0].mxu0
      %3746 = vmatprep.mubr.bf16.mxu0 0
      %3747 = vmatmul.mubr.bf16.gmra.mrb[0].mxu0 %v3600
      %v3748 = vpop.f32.mrb[0].mxu0
      %v3749 = vadd.f32 0.0, %v3748
      %v3750 = vpop.f32.mrb[0].mxu0
      %v3751 = vpop.f32.mrb[0].mxu0
      %v3752 = vadd.f32 0.0, %v3751
      %v3753 = vpop.f32.mrb[0].mxu0
      %3754 = vmatprep.mubr.bf16.mxu0 0
      %3755 = vmatmul.mubr.bf16.gmra.mrb[0].mxu0 %v3599
      %v3756 = vpop.f32.mrb[0].mxu0
      %v3757 = vadd.f32 0.0, %v3756
      %v3758 = vpop.f32.mrb[0].mxu0
      %v3759 = vpop.f32.mrb[0].mxu0
      %v3760 = vpop.f32.mrb[0].mxu0
      %3761 = vdwg.mxu0
      %v3762 = vadd.f32 %v3494, %v3693
      %v3763 = vadd.f32 %v3497, %v3696
      %v3764 = vadd.f32 %v3502, %v3701
      %v3765 = vadd.f32 %v3505, %v3704
      %v3766 = vadd.f32 %v3510, %v3709
      %v3767 = vadd.f32 %v3513, %v3712
      %v3768 = vadd.f32 %v3518, %v3717
      %v3769 = vadd.f32 %v3521, %v3720
      %v3770 = vadd.f32 %v3526, %v3725
      %v3771 = vadd.f32 %v3529, %v3728
      %v3772 = vadd.f32 %v3534, %v3733
      %v3773 = vadd.f32 %v3537, %v3736
      %v3774 = vadd.f32 %v3542, %v3741
      %v3775 = vadd.f32 %v3545, %v3744
      %v3776 = vadd.f32 %v3550, %v3749
      %v3777 = vadd.f32 %v3553, %v3752
      %v3778 = vadd.f32 %v3558, %v3757
      %v3779 = vld [vmem:[%s9] sm:$0x1]
      %v3781 = vlaneseq
      %v3782 = vshrl.u32 %v3781, 7
      %v3783 = vsub.s32 0, %v3782
      %v3784 = vrot.slane %v3779, %v3783
      %v3786 = vmul.f32 %v3762, %v3784
      %v3787 = vmul.f32 %v3763, %v3784
      %v3788 = vmul.f32 %v3764, %v3784
      %v3789 = vmul.f32 %v3765, %v3784
      %v3790 = vmul.f32 %v3766, %v3784
      %v3791 = vmul.f32 %v3767, %v3784
      %v3792 = vmul.f32 %v3768, %v3784
      %v3793 = vmul.f32 %v3769, %v3784
      %v3794 = vmul.f32 %v3770, %v3784
      %v3795 = vmul.f32 %v3771, %v3784
      %v3796 = vmul.f32 %v3772, %v3784
      %v3797 = vmul.f32 %v3773, %v3784
      %v3798 = vmul.f32 %v3774, %v3784
      %v3799 = vmul.f32 %v3775, %v3784
      %v3800 = vmul.f32 %v3776, %v3784
      %v3801 = vmul.f32 %v3777, %v3784
      %v3802 = vmul.f32 %v3778, %v3784
      %v3803 = vld [vmem:[%s10] sm:$0x1]
      %v3805 = vlaneseq
      %v3806 = vshrl.u32 %v3805, 7
      %v3807 = vsub.s32 0, %v3806
      %v3808 = vrot.slane %v3803, %v3807
      %v3810 = vadd.f32 %v3786, %v3808
      %v3811 = vadd.f32 %v3787, %v3808
      %v3812 = vadd.f32 %v3788, %v3808
      %v3813 = vadd.f32 %v3789, %v3808
      %v3814 = vadd.f32 %v3790, %v3808
      %v3815 = vadd.f32 %v3791, %v3808
      %v3816 = vadd.f32 %v3792, %v3808
      %v3817 = vadd.f32 %v3793, %v3808
      %v3818 = vadd.f32 %v3794, %v3808
      %v3819 = vadd.f32 %v3795, %v3808
      %v3820 = vadd.f32 %v3796, %v3808
      %v3821 = vadd.f32 %v3797, %v3808
      %v3822 = vadd.f32 %v3798, %v3808
      %v3823 = vadd.f32 %v3799, %v3808
      %v3824 = vadd.f32 %v3800, %v3808
      %v3825 = vadd.f32 %v3801, %v3808
      %v3826 = vadd.f32 %v3802, %v3808
      %v3827 = vmax.f32 %v3810, 0.0
      %v3828 = vmax.f32 %v3811, 0.0
      %v3829 = vmax.f32 %v3812, 0.0
      %v3830 = vmax.f32 %v3813, 0.0
      %v3831 = vmax.f32 %v3814, 0.0
      %v3832 = vmax.f32 %v3815, 0.0
      %v3833 = vmax.f32 %v3816, 0.0
      %v3834 = vmax.f32 %v3817, 0.0
      %v3835 = vmax.f32 %v3818, 0.0
      %v3836 = vmax.f32 %v3819, 0.0
      %v3837 = vmax.f32 %v3820, 0.0
      %v3838 = vmax.f32 %v3821, 0.0
      %v3839 = vmax.f32 %v3822, 0.0
      %v3840 = vmax.f32 %v3823, 0.0
      %v3841 = vmax.f32 %v3824, 0.0
      %v3842 = vmax.f32 %v3825, 0.0
      %v3843 = vmax.f32 %v3826, 0.0
      %v3844 = vpack.c.bf16 %v3828, %v3827
      %v3845 = vpack.c.bf16 %v3830, %v3829
      %v3848 = vunpack.c.l.b16 %v3844
      %v3849 = vunpack.c.h.b16 %v3844
      %v3850 = vunpack.c.l.b16 %v3845
      %v3851 = vunpack.c.h.b16 %v3845
      %v3852 = vpack.c.b16 %v3848, %v3848
      %v3853 = vpack.c.b16 %v3849, %v3849
      %v3854 = vpack.c.b16 %v3850, %v3850
      %v3855 = vpack.c.b16 %v3851, %v3851
      %v3857 = vshrl.u32 %v3852, 16
      %v3859 = vrot.slane %v3857, 7
      %v3860 = vshll.u32 %v3852, 16
      %v3862 = vor.u32 %v3859, %v3860
      %v3863 = vrot.slane %v3859, 4
      %v3865 = vshrl.u32 %v3853, 16
      %v3867 = vrot.slane %v3865, 7
      %v3868 = vshll.u32 %v3853, 16
      %v3870 = vor.u32 %v3867, %v3868
      %v3871 = vsel %vm1382, %v3863, %v3870
      %v3872 = vrot.slane %v3867, 4
      %v3874 = vshrl.u32 %v3854, 16
      %v3876 = vrot.slane %v3874, 7
      %v3877 = vshll.u32 %v3854, 16
      %v3879 = vor.u32 %v3876, %v3877
      %v3880 = vsel %vm1382, %v3872, %v3879
      %v3881 = vrot.slane %v3876, 4
      %v3883 = vshrl.u32 %v3855, 16
      %v3885 = vrot.slane %v3883, 7
      %v3886 = vshll.u32 %v3855, 16
      %v3888 = vor.u32 %v3885, %v3886
      %v3889 = vsel %vm1382, %v3881, %v3888
      %v3890 = vrot.slane %v3885, 4
      %v3896 = vld [vmem:[#allocation2] sm:$0xf]
      %v3897 = vsel %vm1424, %v3862, %v3896
      %3898 = vst [vmem:[#allocation2] sm:$0xf] %v3897
      %3899 = vst [vmem:[#allocation2 + $0x8] sm:$0xf] %v3871
      %3900 = vst [vmem:[#allocation2 + $0x10] sm:$0xf] %v3880
      %3901 = vst [vmem:[#allocation2 + $0x18] sm:$0xf] %v3889
      %v3902 = vld [vmem:[#allocation2 + $0x20] sm:$0x1]
      %v3903 = vsel %vm474, %v3890, %v3902
      %3904 = vst [vmem:[#allocation2 + $0x20] sm:$0x1] %v3903
      %v3905 = vpack.c.bf16 %v3832, %v3831
      %v3906 = vpack.c.bf16 %v3834, %v3833
      %v3907 = vpack.c.bf16 %v3835, %v3835
      %v3911 = vunpack.c.l.b16 %v3905
      %v3912 = vunpack.c.h.b16 %v3905
      %v3913 = vunpack.c.l.b16 %v3906
      %v3914 = vunpack.c.h.b16 %v3906
      %v3915 = vunpack.c.l.b16 %v3907
      %v3916 = vpack.c.b16 %v3911, %v3911
      %v3917 = vpack.c.b16 %v3912, %v3912
      %v3918 = vpack.c.b16 %v3913, %v3913
      %v3919 = vpack.c.b16 %v3914, %v3914
      %v3920 = vpack.c.b16 %v3915, %v3915
      %v3922 = vshrl.u32 %v3916, 16
      %v3924 = vrot.slane %v3922, 7
      %v3925 = vshll.u32 %v3916, 16
      %v3927 = vor.u32 %v3924, %v3925
      %v3928 = vrot.slane %v3924, 4
      %v3930 = vshrl.u32 %v3917, 16
      %v3932 = vrot.slane %v3930, 7
      %v3933 = vshll.u32 %v3917, 16
      %v3935 = vor.u32 %v3932, %v3933
      %v3936 = vsel %vm1382, %v3928, %v3935
      %v3937 = vrot.slane %v3932, 4
      %v3939 = vshrl.u32 %v3918, 16
      %v3941 = vrot.slane %v3939, 7
      %v3942 = vshll.u32 %v3918, 16
      %v3944 = vor.u32 %v3941, %v3942
      %v3945 = vsel %vm1382, %v3937, %v3944
      %v3946 = vrot.slane %v3941, 4
      %v3948 = vshrl.u32 %v3919, 16
      %v3950 = vrot.slane %v3948, 7
      %v3951 = vshll.u32 %v3919, 16
      %v3953 = vor.u32 %v3950, %v3951
      %v3954 = vsel %vm1382, %v3946, %v3953
      %v3955 = vrot.slane %v3950, 4
      %v3957 = vshrl.u32 %v3920, 16
      %v3959 = vrot.slane %v3957, 7
      %v3960 = vshll.u32 %v3920, 16
      %v3962 = vor.u32 %v3959, %v3960
      %v3963 = vsel %vm1382, %v3955, %v3962
      %v3969 = vld [vmem:[#allocation2 + $0x20] sm:$0xe]
      %v3970 = vsel %vm1504, %v3927, %v3969
      %3971 = vst [vmem:[#allocation2 + $0x20] sm:$0xe] %v3970
      %3972 = vst [vmem:[#allocation2 + $0x28] sm:$0xf] %v3936
      %3973 = vst [vmem:[#allocation2 + $0x30] sm:$0xf] %v3945
      %3974 = vst [vmem:[#allocation2 + $0x38] sm:$0xf] %v3954
      %v3975 = vld [vmem:[#allocation2 + $0x40] sm:$0x3]
      %v3976 = vsel %vm1515, %v3963, %v3975
      %3977 = vst [vmem:[#allocation2 + $0x40] sm:$0x3] %v3976
      %v3978 = vpack.c.bf16 %v3836, %v3835
      %v3979 = vpack.c.bf16 %v3838, %v3837
      %v3980 = vpack.c.bf16 %v3839, %v3839
      %v3984 = vunpack.c.l.b16 %v3978
      %v3985 = vunpack.c.h.b16 %v3978
      %v3986 = vunpack.c.l.b16 %v3979
      %v3987 = vunpack.c.h.b16 %v3979
      %v3988 = vunpack.c.l.b16 %v3980
      %v3989 = vpack.c.b16 %v3984, %v3984
      %v3990 = vpack.c.b16 %v3985, %v3985
      %v3991 = vpack.c.b16 %v3986, %v3986
      %v3992 = vpack.c.b16 %v3987, %v3987
      %v3993 = vpack.c.b16 %v3988, %v3988
      %v3995 = vshrl.u32 %v3989, 16
      %v3997 = vrot.slane %v3995, 7
      %v3998 = vshll.u32 %v3989, 16
      %v4000 = vor.u32 %v3997, %v3998
      %v4001 = vrot.slane %v3997, 4
      %v4003 = vshrl.u32 %v3990, 16
      %v4005 = vrot.slane %v4003, 7
      %v4006 = vshll.u32 %v3990, 16
      %v4008 = vor.u32 %v4005, %v4006
      %v4009 = vsel %vm1382, %v4001, %v4008
      %v4010 = vrot.slane %v4005, 4
      %v4012 = vshrl.u32 %v3991, 16
      %v4014 = vrot.slane %v4012, 7
      %v4015 = vshll.u32 %v3991, 16
      %v4017 = vor.u32 %v4014, %v4015
      %v4018 = vsel %vm1382, %v4010, %v4017
      %v4019 = vrot.slane %v4014, 4
      %v4021 = vshrl.u32 %v3992, 16
      %v4023 = vrot.slane %v4021, 7
      %v4024 = vshll.u32 %v3992, 16
      %v4026 = vor.u32 %v4023, %v4024
      %v4027 = vsel %vm1382, %v4019, %v4026
      %v4028 = vrot.slane %v4023, 4
      %v4030 = vshrl.u32 %v3993, 16
      %v4032 = vrot.slane %v4030, 7
      %v4033 = vshll.u32 %v3993, 16
      %v4035 = vor.u32 %v4032, %v4033
      %v4036 = vsel %vm1382, %v4028, %v4035
      %v4042 = vld [vmem:[#allocation2 + $0x40] sm:$0xc]
      %v4043 = vsel %vm1589, %v4000, %v4042
      %4044 = vst [vmem:[#allocation2 + $0x40] sm:$0xc] %v4043
      %4045 = vst [vmem:[#allocation2 + $0x48] sm:$0xf] %v4009
      %4046 = vst [vmem:[#allocation2 + $0x50] sm:$0xf] %v4018
      %4047 = vst [vmem:[#allocation2 + $0x58] sm:$0xf] %v4027
      %v4048 = vld [vmem:[#allocation2 + $0x60] sm:$0x7]
      %v4049 = vsel %vm1600, %v4036, %v4048
      %4050 = vst [vmem:[#allocation2 + $0x60] sm:$0x7] %v4049
      %v4051 = vpack.c.bf16 %v3840, %v3839
      %v4052 = vpack.c.bf16 %v3842, %v3841
      %v4053 = vpack.c.bf16 %v3843, %v3843
      %v4057 = vunpack.c.l.b16 %v4051
      %v4058 = vunpack.c.h.b16 %v4051
      %v4059 = vunpack.c.l.b16 %v4052
      %v4060 = vunpack.c.h.b16 %v4052
      %v4061 = vunpack.c.l.b16 %v4053
      %v4062 = vpack.c.b16 %v4057, %v4057
      %v4063 = vpack.c.b16 %v4058, %v4058
      %v4064 = vpack.c.b16 %v4059, %v4059
      %v4065 = vpack.c.b16 %v4060, %v4060
      %v4066 = vpack.c.b16 %v4061, %v4061
      %v4068 = vshll.u32 %v4062, 16
      %v4070 = vshrl.u32 %v4062, 16
      %v4072 = vrot.slane %v4070, 7
      %v4073 = vrot.slane %v4072, 4
      %v4075 = vshrl.u32 %v4063, 16
      %v4077 = vrot.slane %v4075, 7
      %v4078 = vshll.u32 %v4063, 16
      %v4080 = vor.u32 %v4077, %v4078
      %v4081 = vsel %vm1382, %v4073, %v4080
      %v4082 = vrot.slane %v4077, 4
      %v4084 = vshrl.u32 %v4064, 16
      %v4086 = vrot.slane %v4084, 7
      %v4087 = vshll.u32 %v4064, 16
      %v4089 = vor.u32 %v4086, %v4087
      %v4090 = vsel %vm1382, %v4082, %v4089
      %v4091 = vrot.slane %v4086, 4
      %v4093 = vshrl.u32 %v4065, 16
      %v4095 = vrot.slane %v4093, 7
      %v4096 = vshll.u32 %v4065, 16
      %v4098 = vor.u32 %v4095, %v4096
      %v4099 = vsel %vm1382, %v4091, %v4098
      %v4100 = vrot.slane %v4095, 4
      %v4102 = vshrl.u32 %v4066, 16
      %v4104 = vrot.slane %v4102, 7
      %v4105 = vshll.u32 %v4066, 16
      %v4107 = vor.u32 %v4104, %v4105
      %v4108 = vsel %vm1382, %v4100, %v4107
      %v4114 = vld [vmem:[#allocation2 + $0x60] sm:$0x8]
      %v4115 = vsel %vm537, %v4068, %v4114
      %4116 = vst [vmem:[#allocation2 + $0x60] sm:$0x8] %v4115
      %4117 = vst [vmem:[#allocation2 + $0x68] sm:$0xf] %v4081
      %4118 = vst [vmem:[#allocation2 + $0x70] sm:$0xf] %v4090
      %4119 = vst [vmem:[#allocation2 + $0x78] sm:$0xf] %v4099
      %v4120 = vld [vmem:[#allocation2 + $0x80] sm:$0xf]
      %v4121 = vsel %vm1679, %v4108, %v4120
      %4122 = vst [vmem:[#allocation2 + $0x80] sm:$0xf] %v4121
      %v4123 = vld [vmem:[#allocation2] sm:$0xf]
      %v4124 = vld [vmem:[#allocation2 + $0x8] sm:$0xf]
      %v4125 = vld [vmem:[#allocation2 + $0x10] sm:$0xf]
      %v4126 = vld [vmem:[#allocation2 + $0x18] sm:$0xf]
      %v4127 = vld [vmem:[#allocation2 + $0x20] sm:$0xf]
      %v4128 = vld [vmem:[#allocation2 + $0x28] sm:$0xf]
      %v4129 = vld [vmem:[#allocation2 + $0x30] sm:$0xf]
      %v4130 = vld [vmem:[#allocation2 + $0x38] sm:$0xf]
      %v4131 = vld [vmem:[#allocation2 + $0x40] sm:$0xf]
      %v4132 = vld [vmem:[#allocation2 + $0x48] sm:$0xf]
      %v4133 = vld [vmem:[#allocation2 + $0x50] sm:$0xf]
      %v4134 = vld [vmem:[#allocation2 + $0x58] sm:$0xf]
      %v4135 = vld [vmem:[#allocation2 + $0x60] sm:$0xf]
      %v4136 = vld [vmem:[#allocation2 + $0x68] sm:$0xf]
      %v4137 = vld [vmem:[#allocation2 + $0x70] sm:$0xf]
      %v4138 = vld [vmem:[#allocation2 + $0x78] sm:$0xf]
      %v4139 = vld [vmem:[#allocation2 + $0x80] sm:$0x7]
      %v4140 = vld [vmem:[%s11] sm:$0xf]
      %v4141 = vld [vmem:[%s11 + $0x4] sm:$0xf]
      %v4142 = vld [vmem:[%s11 + $0x8] sm:$0xf]
      %v4143 = vld [vmem:[%s11 + $0xc] sm:$0xf]
      %v4144 = vld [vmem:[%s11 + $0x10] sm:$0xf]
      %v4145 = vld [vmem:[%s11 + $0x14] sm:$0xf]
      %v4146 = vld [vmem:[%s11 + $0x18] sm:$0xf]
      %v4147 = vld [vmem:[%s11 + $0x1c] sm:$0xf]
      %v4148 = vld [vmem:[%s11 + $0x20] sm:$0xf]
      %v4149 = vld [vmem:[%s11 + $0x24] sm:$0xf]
      %v4150 = vld [vmem:[%s11 + $0x28] sm:$0xf]
      %v4151 = vld [vmem:[%s11 + $0x2c] sm:$0xf]
      %v4152 = vld [vmem:[%s11 + $0x30] sm:$0xf]
      %v4153 = vld [vmem:[%s11 + $0x34] sm:$0xf]
      %v4154 = vld [vmem:[%s11 + $0x38] sm:$0xf]
      %v4155 = vld [vmem:[%s11 + $0x3c] sm:$0xf]
      %v4156 = vld [vmem:[#allocation2 + $0x80] sm:$0xf]
      %s4157 = scalar_lea.vmem %s11, 64
      %v4158 = vld [vmem:[%s4157] sm:$0xf]
      %v4159 = vld [vmem:[%s4157 + $0x4] sm:$0xf]
      %v4160 = vld [vmem:[%s4157 + $0x8] sm:$0xf]
      %v4161 = vld [vmem:[%s4157 + $0xc] sm:$0xf]
      %v4162 = vld [vmem:[%s4157 + $0x10] sm:$0xf]
      %v4163 = vld [vmem:[%s4157 + $0x14] sm:$0xf]
      %v4164 = vld [vmem:[%s4157 + $0x18] sm:$0xf]
      %v4165 = vld [vmem:[%s4157 + $0x1c] sm:$0xf]
      %v4166 = vld [vmem:[%s4157 + $0x20] sm:$0xf]
      %v4167 = vld [vmem:[%s4157 + $0x24] sm:$0xf]
      %v4168 = vld [vmem:[%s4157 + $0x28] sm:$0xf]
      %v4169 = vld [vmem:[%s4157 + $0x2c] sm:$0xf]
      %v4170 = vld [vmem:[%s4157 + $0x30] sm:$0xf]
      %v4171 = vld [vmem:[%s4157 + $0x34] sm:$0xf]
      %v4172 = vld [vmem:[%s4157 + $0x38] sm:$0xf]
      %v4173 = vld [vmem:[%s4157 + $0x3c] sm:$0xf]
      %v4191 = vunpack.c.l.b16 %v4123
      %v4192 = vunpack.c.l.b16 %v4124
      %v4193 = vunpack.c.l.b16 %v4125
      %v4194 = vunpack.c.l.b16 %v4126
      %v4195 = vunpack.c.l.b16 %v4127
      %v4196 = vunpack.c.l.b16 %v4128
      %v4197 = vunpack.c.l.b16 %v4129
      %v4198 = vunpack.c.l.b16 %v4130
      %v4199 = vunpack.c.l.b16 %v4131
      %v4200 = vunpack.c.l.b16 %v4132
      %v4201 = vunpack.c.l.b16 %v4133
      %v4202 = vunpack.c.l.b16 %v4134
      %v4203 = vunpack.c.l.b16 %v4135
      %v4204 = vunpack.c.l.b16 %v4136
      %v4205 = vunpack.c.l.b16 %v4137
      %v4206 = vunpack.c.l.b16 %v4138
      %v4207 = vunpack.c.l.b16 %v4156
      %v4208 = vpack.c.b16 %v4192, %v4191
      %v4209 = vpack.c.b16 %v4194, %v4193
      %v4210 = vpack.c.b16 %v4196, %v4195
      %v4211 = vpack.c.b16 %v4198, %v4197
      %v4212 = vpack.c.b16 %v4200, %v4199
      %v4213 = vpack.c.b16 %v4202, %v4201
      %v4214 = vpack.c.b16 %v4204, %v4203
      %v4215 = vpack.c.b16 %v4206, %v4205
      %v4216 = vpack.c.b16 %v4207, %v4207
      %v4218 = vshrl.u32 %v4208, 16
      %v4220 = vshll.u32 %v4208, 16
      %v4222 = vrot.slane %v4220, 1
      %v4223 = vor.u32 %v4218, %v4222
      %v4225 = vshll.u32 %v4209, 16
      %v4227 = vrot.slane %v4225, 1
      %v4228 = vsel %vm530, %v4223, %v4227
      %v4229 = vshrl.u32 %v4209, 16
      %v4231 = vor.u32 %v4229, %v4227
      %v4233 = vshll.u32 %v4210, 16
      %v4235 = vrot.slane %v4233, 1
      %v4236 = vsel %vm530, %v4231, %v4235
      %v4237 = vshrl.u32 %v4210, 16
      %v4239 = vor.u32 %v4237, %v4235
      %v4241 = vshll.u32 %v4211, 16
      %v4243 = vrot.slane %v4241, 1
      %v4244 = vsel %vm530, %v4239, %v4243
      %v4245 = vshrl.u32 %v4211, 16
      %v4247 = vor.u32 %v4245, %v4243
      %v4249 = vshll.u32 %v4212, 16
      %v4251 = vrot.slane %v4249, 1
      %v4252 = vsel %vm530, %v4247, %v4251
      %v4253 = vshrl.u32 %v4212, 16
      %v4255 = vor.u32 %v4253, %v4251
      %v4257 = vshll.u32 %v4213, 16
      %v4259 = vrot.slane %v4257, 1
      %v4260 = vsel %vm530, %v4255, %v4259
      %v4261 = vshrl.u32 %v4213, 16
      %v4263 = vor.u32 %v4261, %v4259
      %v4265 = vshll.u32 %v4214, 16
      %v4267 = vrot.slane %v4265, 1
      %v4268 = vsel %vm530, %v4263, %v4267
      %v4269 = vshrl.u32 %v4214, 16
      %v4271 = vor.u32 %v4269, %v4267
      %v4273 = vshll.u32 %v4215, 16
      %v4275 = vrot.slane %v4273, 1
      %v4276 = vsel %vm530, %v4271, %v4275
      %v4277 = vshrl.u32 %v4215, 16
      %v4279 = vor.u32 %v4277, %v4275
      %v4281 = vshll.u32 %v4216, 16
      %v4283 = vrot.slane %v4281, 1
      %v4284 = vsel %vm530, %v4279, %v4283
      %v4285 = vshrl.u32 %v4216, 16
      %v4287 = vor.u32 %v4285, %v4283
      %v4313 = vunpack.c.l.b16 %v4158
      %v4314 = vunpack.c.l.b16 %v4159
      %v4315 = vunpack.c.l.b16 %v4160
      %v4316 = vunpack.c.l.b16 %v4161
      %v4317 = vunpack.c.l.b16 %v4162
      %v4318 = vunpack.c.l.b16 %v4163
      %v4319 = vunpack.c.l.b16 %v4164
      %v4320 = vunpack.c.l.b16 %v4165
      %v4321 = vunpack.c.l.b16 %v4166
      %v4322 = vunpack.c.l.b16 %v4167
      %v4323 = vunpack.c.l.b16 %v4168
      %v4324 = vunpack.c.l.b16 %v4169
      %v4325 = vunpack.c.l.b16 %v4170
      %v4326 = vunpack.c.l.b16 %v4171
      %v4327 = vunpack.c.l.b16 %v4172
      %v4328 = vunpack.c.l.b16 %v4173
      %v4329 = vpack.c.b16 %v4314, %v4313
      %v4330 = vpack.c.b16 %v4316, %v4315
      %v4331 = vpack.c.b16 %v4318, %v4317
      %v4332 = vpack.c.b16 %v4320, %v4319
      %v4333 = vpack.c.b16 %v4322, %v4321
      %v4334 = vpack.c.b16 %v4324, %v4323
      %v4335 = vpack.c.b16 %v4326, %v4325
      %v4336 = vpack.c.b16 %v4328, %v4327
      %4345 = vmatprep.subr.bf16.mxu0 0
      %4346 = vmatpush1.bf16.msra.mxu0 %v4329
      %4347 = vmatprep.subr.bf16.mxu0 0
      %4348 = vmatpush1.bf16.msra.mxu0 %v4330
      %4349 = vmatprep.subr.bf16.mxu0 0
      %4350 = vmatpush1.bf16.msra.mxu0 %v4331
      %4351 = vmatprep.subr.bf16.mxu0 0
      %4352 = vmatpush1.bf16.msra.mxu0 %v4332
      %4353 = vmatprep.subr.bf16.mxu0 0
      %4354 = vmatpush1.bf16.msra.mxu0 %v4333
      %4355 = vmatprep.subr.bf16.mxu0 0
      %4356 = vmatpush1.bf16.msra.mxu0 %v4334
      %4357 = vmatprep.subr.bf16.mxu0 0
      %4358 = vmatpush1.bf16.msra.mxu0 %v4335
      %4359 = vmatprep.subr.bf16.mxu0 0
      %4360 = vmatpush1.bf16.msra.mxu0 %v4336
      %4361 = vmatprep.subr.bf16.mxu0 0
      %4362 = vmatpush1.bf16.msra.mxu0 0
      %4363 = vmatprep.subr.bf16.mxu0 0
      %4364 = vmatpush1.bf16.msra.mxu0 0
      %4365 = vmatprep.subr.bf16.mxu0 0
      %4366 = vmatpush1.bf16.msra.mxu0 0
      %4367 = vmatprep.subr.bf16.mxu0 0
      %4368 = vmatpush1.bf16.msra.mxu0 0
      %4369 = vmatprep.subr.bf16.mxu0 0
      %4370 = vmatpush1.bf16.msra.mxu0 0
      %4371 = vmatprep.subr.bf16.mxu0 0
      %4372 = vmatpush1.bf16.msra.mxu0 0
      %4373 = vmatprep.subr.bf16.mxu0 0
      %4374 = vmatpush1.bf16.msra.mxu0 0
      %4375 = vmatprep.subr.bf16.mxu0 0
      %4376 = vmatpush1.bf16.msra.mxu0 0
      %4377 = vmatprep.mubr.bf16.mxu0 0
      %4378 = vmatmul.mubr.bf16.gmra.mrb[0].mxu0 %v4228
      %v4379 = vpop.f32.mrb[0].mxu0
      %v4380 = vadd.f32 0.0, %v4379
      %v4381 = vpop.f32.mrb[0].mxu0
      %v4382 = vpop.f32.mrb[0].mxu0
      %v4383 = vadd.f32 0.0, %v4382
      %v4384 = vpop.f32.mrb[0].mxu0
      %4385 = vmatprep.mubr.bf16.mxu0 0
      %4386 = vmatmul.mubr.bf16.gmra.mrb[0].mxu0 %v4236
      %v4387 = vpop.f32.mrb[0].mxu0
      %v4388 = vadd.f32 0.0, %v4387
      %v4389 = vpop.f32.mrb[0].mxu0
      %v4390 = vpop.f32.mrb[0].mxu0
      %v4391 = vadd.f32 0.0, %v4390
      %v4392 = vpop.f32.mrb[0].mxu0
      %4393 = vmatprep.mubr.bf16.mxu0 0
      %4394 = vmatmul.mubr.bf16.gmra.mrb[0].mxu0 %v4244
      %v4395 = vpop.f32.mrb[0].mxu0
      %v4396 = vadd.f32 0.0, %v4395
      %v4397 = vpop.f32.mrb[0].mxu0
      %v4398 = vpop.f32.mrb[0].mxu0
      %v4399 = vadd.f32 0.0, %v4398
      %v4400 = vpop.f32.mrb[0].mxu0
      %4401 = vmatprep.mubr.bf16.mxu0 0
      %4402 = vmatmul.mubr.bf16.gmra.mrb[0].mxu0 %v4252
      %v4403 = vpop.f32.mrb[0].mxu0
      %v4404 = vadd.f32 0.0, %v4403
      %v4405 = vpop.f32.mrb[0].mxu0
      %v4406 = vpop.f32.mrb[0].mxu0
      %v4407 = vadd.f32 0.0, %v4406
      %v4408 = vpop.f32.mrb[0].mxu0
      %4409 = vmatprep.mubr.bf16.mxu0 0
      %4410 = vmatmul.mubr.bf16.gmra.mrb[0].mxu0 %v4260
      %v4411 = vpop.f32.mrb[0].mxu0
      %v4412 = vadd.f32 0.0, %v4411
      %v4413 = vpop.f32.mrb[0].mxu0
      %v4414 = vpop.f32.mrb[0].mxu0
      %v4415 = vadd.f32 0.0, %v4414
      %v4416 = vpop.f32.mrb[0].mxu0
      %4417 = vmatprep.mubr.bf16.mxu0 0
      %4418 = vmatmul.mubr.bf16.gmra.mrb[0].mxu0 %v4268
      %v4419 = vpop.f32.mrb[0].mxu0
      %v4420 = vadd.f32 0.0, %v4419
      %v4421 = vpop.f32.mrb[0].mxu0
      %v4422 = vpop.f32.mrb[0].mxu0
      %v4423 = vadd.f32 0.0, %v4422
      %v4424 = vpop.f32.mrb[0].mxu0
      %4425 = vmatprep.mubr.bf16.mxu0 0
      %4426 = vmatmul.mubr.bf16.gmra.mrb[0].mxu0 %v4276
      %v4427 = vpop.f32.mrb[0].mxu0
      %v4428 = vadd.f32 0.0, %v4427
      %v4429 = vpop.f32.mrb[0].mxu0
      %v4430 = vpop.f32.mrb[0].mxu0
      %v4431 = vadd.f32 0.0, %v4430
      %v4432 = vpop.f32.mrb[0].mxu0
      %4433 = vmatprep.mubr.bf16.mxu0 0
      %4434 = vmatmul.mubr.bf16.gmra.mrb[0].mxu0 %v4284
      %v4435 = vpop.f32.mrb[0].mxu0
      %v4436 = vadd.f32 0.0, %v4435
      %v4437 = vpop.f32.mrb[0].mxu0
      %v4438 = vpop.f32.mrb[0].mxu0
      %v4439 = vadd.f32 0.0, %v4438
      %v4440 = vpop.f32.mrb[0].mxu0
      %4441 = vmatprep.mubr.bf16.mxu0 0
      %4442 = vmatmul.mubr.bf16.gmra.mrb[0].mxu0 %v4287
      %v4443 = vpop.f32.mrb[0].mxu0
      %v4444 = vadd.f32 0.0, %v4443
      %v4445 = vpop.f32.mrb[0].mxu0
      %v4446 = vpop.f32.mrb[0].mxu0
      %v4447 = vpop.f32.mrb[0].mxu0
      %4448 = vdwg.mxu0
      %v4450 = vunpack.c.l.b16 %v4139
      %v4451 = vpack.c.b16 %v4450, %v4450
      %v4477 = vunpack.c.l.b16 %v4140
      %v4478 = vunpack.c.l.b16 %v4141
      %v4479 = vunpack.c.l.b16 %v4142
      %v4480 = vunpack.c.l.b16 %v4143
      %v4481 = vunpack.c.l.b16 %v4144
      %v4482 = vunpack.c.l.b16 %v4145
      %v4483 = vunpack.c.l.b16 %v4146
      %v4484 = vunpack.c.l.b16 %v4147
      %v4485 = vunpack.c.l.b16 %v4148
      %v4486 = vunpack.c.l.b16 %v4149
      %v4487 = vunpack.c.l.b16 %v4150
      %v4488 = vunpack.c.l.b16 %v4151
      %v4489 = vunpack.c.l.b16 %v4152
      %v4490 = vunpack.c.l.b16 %v4153
      %v4491 = vunpack.c.l.b16 %v4154
      %v4492 = vunpack.c.l.b16 %v4155
      %v4493 = vpack.c.b16 %v4478, %v4477
      %v4494 = vpack.c.b16 %v4480, %v4479
      %v4495 = vpack.c.b16 %v4482, %v4481
      %v4496 = vpack.c.b16 %v4484, %v4483
      %v4497 = vpack.c.b16 %v4486, %v4485
      %v4498 = vpack.c.b16 %v4488, %v4487
      %v4499 = vpack.c.b16 %v4490, %v4489
      %v4500 = vpack.c.b16 %v4492, %v4491
      %4509 = vmatprep.subr.bf16.mxu0 0
      %4510 = vmatpush1.bf16.msra.mxu0 %v4493
      %4511 = vmatprep.subr.bf16.mxu0 0
      %4512 = vmatpush1.bf16.msra.mxu0 %v4494
      %4513 = vmatprep.subr.bf16.mxu0 0
      %4514 = vmatpush1.bf16.msra.mxu0 %v4495
      %4515 = vmatprep.subr.bf16.mxu0 0
      %4516 = vmatpush1.bf16.msra.mxu0 %v4496
      %4517 = vmatprep.subr.bf16.mxu0 0
      %4518 = vmatpush1.bf16.msra.mxu0 %v4497
      %4519 = vmatprep.subr.bf16.mxu0 0
      %4520 = vmatpush1.bf16.msra.mxu0 %v4498
      %4521 = vmatprep.subr.bf16.mxu0 0
      %4522 = vmatpush1.bf16.msra.mxu0 %v4499
      %4523 = vmatprep.subr.bf16.mxu0 0
      %4524 = vmatpush1.bf16.msra.mxu0 %v4500
      %4525 = vmatprep.subr.bf16.mxu0 0
      %4526 = vmatpush1.bf16.msra.mxu0 0
      %4527 = vmatprep.subr.bf16.mxu0 0
      %4528 = vmatpush1.bf16.msra.mxu0 0
      %4529 = vmatprep.subr.bf16.mxu0 0
      %4530 = vmatpush1.bf16.msra.mxu0 0
      %4531 = vmatprep.subr.bf16.mxu0 0
      %4532 = vmatpush1.bf16.msra.mxu0 0
      %4533 = vmatprep.subr.bf16.mxu0 0
      %4534 = vmatpush1.bf16.msra.mxu0 0
      %4535 = vmatprep.subr.bf16.mxu0 0
      %4536 = vmatpush1.bf16.msra.mxu0 0
      %4537 = vmatprep.subr.bf16.mxu0 0
      %4538 = vmatpush1.bf16.msra.mxu0 0
      %4539 = vmatprep.subr.bf16.mxu0 0
      %4540 = vmatpush1.bf16.msra.mxu0 0
      %4541 = vmatprep.mubr.bf16.mxu0 0
      %4542 = vmatmul.mubr.bf16.gmra.mrb[0].mxu0 %v4208
      %v4543 = vpop.f32.mrb[0].mxu0
      %v4544 = vadd.f32 %v4380, %v4543
      %v4545 = vpop.f32.mrb[0].mxu0
      %v4546 = vpop.f32.mrb[0].mxu0
      %v4547 = vadd.f32 %v4383, %v4546
      %v4548 = vpop.f32.mrb[0].mxu0
      %4549 = vmatprep.mubr.bf16.mxu0 0
      %4550 = vmatmul.mubr.bf16.gmra.mrb[0].mxu0 %v4209
      %v4551 = vpop.f32.mrb[0].mxu0
      %v4552 = vadd.f32 %v4388, %v4551
      %v4553 = vpop.f32.mrb[0].mxu0
      %v4554 = vpop.f32.mrb[0].mxu0
      %v4555 = vadd.f32 %v4391, %v4554
      %v4556 = vpop.f32.mrb[0].mxu0
      %4557 = vmatprep.mubr.bf16.mxu0 0
      %4558 = vmatmul.mubr.bf16.gmra.mrb[0].mxu0 %v4210
      %v4559 = vpop.f32.mrb[0].mxu0
      %v4560 = vadd.f32 %v4396, %v4559
      %v4561 = vpop.f32.mrb[0].mxu0
      %v4562 = vpop.f32.mrb[0].mxu0
      %v4563 = vadd.f32 %v4399, %v4562
      %v4564 = vpop.f32.mrb[0].mxu0
      %4565 = vmatprep.mubr.bf16.mxu0 0
      %4566 = vmatmul.mubr.bf16.gmra.mrb[0].mxu0 %v4211
      %v4567 = vpop.f32.mrb[0].mxu0
      %v4568 = vadd.f32 %v4404, %v4567
      %v4569 = vpop.f32.mrb[0].mxu0
      %v4570 = vpop.f32.mrb[0].mxu0
      %v4571 = vadd.f32 %v4407, %v4570
      %v4572 = vpop.f32.mrb[0].mxu0
      %4573 = vmatprep.mubr.bf16.mxu0 0
      %4574 = vmatmul.mubr.bf16.gmra.mrb[0].mxu0 %v4212
      %v4575 = vpop.f32.mrb[0].mxu0
      %v4576 = vadd.f32 %v4412, %v4575
      %v4577 = vpop.f32.mrb[0].mxu0
      %v4578 = vpop.f32.mrb[0].mxu0
      %v4579 = vadd.f32 %v4415, %v4578
      %v4580 = vpop.f32.mrb[0].mxu0
      %4581 = vmatprep.mubr.bf16.mxu0 0
      %4582 = vmatmul.mubr.bf16.gmra.mrb[0].mxu0 %v4213
      %v4583 = vpop.f32.mrb[0].mxu0
      %v4584 = vadd.f32 %v4420, %v4583
      %v4585 = vpop.f32.mrb[0].mxu0
      %v4586 = vpop.f32.mrb[0].mxu0
      %v4587 = vadd.f32 %v4423, %v4586
      %v4588 = vpop.f32.mrb[0].mxu0
      %4589 = vmatprep.mubr.bf16.mxu0 0
      %4590 = vmatmul.mubr.bf16.gmra.mrb[0].mxu0 %v4214
      %v4591 = vpop.f32.mrb[0].mxu0
      %v4592 = vadd.f32 %v4428, %v4591
      %v4593 = vpop.f32.mrb[0].mxu0
      %v4594 = vpop.f32.mrb[0].mxu0
      %v4595 = vadd.f32 %v4431, %v4594
      %v4596 = vpop.f32.mrb[0].mxu0
      %4597 = vmatprep.mubr.bf16.mxu0 0
      %4598 = vmatmul.mubr.bf16.gmra.mrb[0].mxu0 %v4215
      %v4599 = vpop.f32.mrb[0].mxu0
      %v4600 = vadd.f32 %v4436, %v4599
      %v4601 = vpop.f32.mrb[0].mxu0
      %v4602 = vpop.f32.mrb[0].mxu0
      %v4603 = vadd.f32 %v4439, %v4602
      %v4604 = vpop.f32.mrb[0].mxu0
      %4605 = vmatprep.mubr.bf16.mxu0 0
      %4606 = vmatmul.mubr.bf16.gmra.mrb[0].mxu0 %v4451
      %v4607 = vpop.f32.mrb[0].mxu0
      %v4608 = vadd.f32 %v4444, %v4607
      %v4609 = vpop.f32.mrb[0].mxu0
      %v4610 = vpop.f32.mrb[0].mxu0
      %v4611 = vpop.f32.mrb[0].mxu0
      %4612 = vdwg.mxu0
      %v4613 = vld [vmem:[#allocation2] sm:$0xe]
      %s4614 = scalar_lea.vmem %s11, 128
      %v4615 = vld [vmem:[%s4614] sm:$0xf]
      %v4616 = vld [vmem:[%s4614 + $0x4] sm:$0xf]
      %v4617 = vld [vmem:[%s4614 + $0x8] sm:$0xf]
      %v4618 = vld [vmem:[%s4614 + $0xc] sm:$0xf]
      %v4619 = vld [vmem:[%s4614 + $0x10] sm:$0xf]
      %v4620 = vld [vmem:[%s4614 + $0x14] sm:$0xf]
      %v4621 = vld [vmem:[%s4614 + $0x18] sm:$0xf]
      %v4622 = vld [vmem:[%s4614 + $0x1c] sm:$0xf]
      %v4623 = vld [vmem:[%s4614 + $0x20] sm:$0xf]
      %v4624 = vld [vmem:[%s4614 + $0x24] sm:$0xf]
      %v4625 = vld [vmem:[%s4614 + $0x28] sm:$0xf]
      %v4626 = vld [vmem:[%s4614 + $0x2c] sm:$0xf]
      %v4627 = vld [vmem:[%s4614 + $0x30] sm:$0xf]
      %v4628 = vld [vmem:[%s4614 + $0x34] sm:$0xf]
      %v4629 = vld [vmem:[%s4614 + $0x38] sm:$0xf]
      %v4630 = vld [vmem:[%s4614 + $0x3c] sm:$0xf]
      %v4632 = vunpack.c.l.b16 %v4613
      %v4633 = vpack.c.b16 %v4192, %v4632
      %v4634 = vrot.slane %v4633, 1
      %v4635 = vrot.slane %v4209, 1
      %v4636 = vsel %vm2459, %v4634, %v4635
      %v4637 = vrot.slane %v4210, 1
      %v4638 = vsel %vm2459, %v4635, %v4637
      %v4639 = vrot.slane %v4211, 1
      %v4640 = vsel %vm2459, %v4637, %v4639
      %v4641 = vrot.slane %v4212, 1
      %v4642 = vsel %vm2459, %v4639, %v4641
      %v4643 = vrot.slane %v4213, 1
      %v4644 = vsel %vm2459, %v4641, %v4643
      %v4645 = vrot.slane %v4214, 1
      %v4646 = vsel %vm2459, %v4643, %v4645
      %v4647 = vrot.slane %v4215, 1
      %v4648 = vsel %vm2459, %v4645, %v4647
      %v4649 = vrot.slane %v4216, 1
      %v4650 = vsel %vm2459, %v4647, %v4649
      %v4676 = vunpack.c.l.b16 %v4615
      %v4677 = vunpack.c.l.b16 %v4616
      %v4678 = vunpack.c.l.b16 %v4617
      %v4679 = vunpack.c.l.b16 %v4618
      %v4680 = vunpack.c.l.b16 %v4619
      %v4681 = vunpack.c.l.b16 %v4620
      %v4682 = vunpack.c.l.b16 %v4621
      %v4683 = vunpack.c.l.b16 %v4622
      %v4684 = vunpack.c.l.b16 %v4623
      %v4685 = vunpack.c.l.b16 %v4624
      %v4686 = vunpack.c.l.b16 %v4625
      %v4687 = vunpack.c.l.b16 %v4626
      %v4688 = vunpack.c.l.b16 %v4627
      %v4689 = vunpack.c.l.b16 %v4628
      %v4690 = vunpack.c.l.b16 %v4629
      %v4691 = vunpack.c.l.b16 %v4630
      %v4692 = vpack.c.b16 %v4677, %v4676
      %v4693 = vpack.c.b16 %v4679, %v4678
      %v4694 = vpack.c.b16 %v4681, %v4680
      %v4695 = vpack.c.b16 %v4683, %v4682
      %v4696 = vpack.c.b16 %v4685, %v4684
      %v4697 = vpack.c.b16 %v4687, %v4686
      %v4698 = vpack.c.b16 %v4689, %v4688
      %v4699 = vpack.c.b16 %v4691, %v4690
      %4708 = vmatprep.subr.bf16.mxu0 0
      %4709 = vmatpush1.bf16.msra.mxu0 %v4692
      %4710 = vmatprep.subr.bf16.mxu0 0
      %4711 = vmatpush1.bf16.msra.mxu0 %v4693
      %4712 = vmatprep.subr.bf16.mxu0 0
      %4713 = vmatpush1.bf16.msra.mxu0 %v4694
      %4714 = vmatprep.subr.bf16.mxu0 0
      %4715 = vmatpush1.bf16.msra.mxu0 %v4695
      %4716 = vmatprep.subr.bf16.mxu0 0
      %4717 = vmatpush1.bf16.msra.mxu0 %v4696
      %4718 = vmatprep.subr.bf16.mxu0 0
      %4719 = vmatpush1.bf16.msra.mxu0 %v4697
      %4720 = vmatprep.subr.bf16.mxu0 0
      %4721 = vmatpush1.bf16.msra.mxu0 %v4698
      %4722 = vmatprep.subr.bf16.mxu0 0
      %4723 = vmatpush1.bf16.msra.mxu0 %v4699
      %4724 = vmatprep.subr.bf16.mxu0 0
      %4725 = vmatpush1.bf16.msra.mxu0 0
      %4726 = vmatprep.subr.bf16.mxu0 0
      %4727 = vmatpush1.bf16.msra.mxu0 0
      %4728 = vmatprep.subr.bf16.mxu0 0
      %4729 = vmatpush1.bf16.msra.mxu0 0
      %4730 = vmatprep.subr.bf16.mxu0 0
      %4731 = vmatpush1.bf16.msra.mxu0 0
      %4732 = vmatprep.subr.bf16.mxu0 0
      %4733 = vmatpush1.bf16.msra.mxu0 0
      %4734 = vmatprep.subr.bf16.mxu0 0
      %4735 = vmatpush1.bf16.msra.mxu0 0
      %4736 = vmatprep.subr.bf16.mxu0 0
      %4737 = vmatpush1.bf16.msra.mxu0 0
      %4738 = vmatprep.subr.bf16.mxu0 0
      %4739 = vmatpush1.bf16.msra.mxu0 0
      %4740 = vmatprep.mubr.bf16.mxu0 0
      %4741 = vmatmul.mubr.bf16.gmra.mrb[0].mxu0 %v4636
      %v4742 = vpop.f32.mrb[0].mxu0
      %v4743 = vadd.f32 0.0, %v4742
      %v4744 = vpop.f32.mrb[0].mxu0
      %v4745 = vpop.f32.mrb[0].mxu0
      %v4746 = vadd.f32 0.0, %v4745
      %v4747 = vpop.f32.mrb[0].mxu0
      %4748 = vmatprep.mubr.bf16.mxu0 0
      %4749 = vmatmul.mubr.bf16.gmra.mrb[0].mxu0 %v4638
      %v4750 = vpop.f32.mrb[0].mxu0
      %v4751 = vadd.f32 0.0, %v4750
      %v4752 = vpop.f32.mrb[0].mxu0
      %v4753 = vpop.f32.mrb[0].mxu0
      %v4754 = vadd.f32 0.0, %v4753
      %v4755 = vpop.f32.mrb[0].mxu0
      %4756 = vmatprep.mubr.bf16.mxu0 0
      %4757 = vmatmul.mubr.bf16.gmra.mrb[0].mxu0 %v4640
      %v4758 = vpop.f32.mrb[0].mxu0
      %v4759 = vadd.f32 0.0, %v4758
      %v4760 = vpop.f32.mrb[0].mxu0
      %v4761 = vpop.f32.mrb[0].mxu0
      %v4762 = vadd.f32 0.0, %v4761
      %v4763 = vpop.f32.mrb[0].mxu0
      %4764 = vmatprep.mubr.bf16.mxu0 0
      %4765 = vmatmul.mubr.bf16.gmra.mrb[0].mxu0 %v4642
      %v4766 = vpop.f32.mrb[0].mxu0
      %v4767 = vadd.f32 0.0, %v4766
      %v4768 = vpop.f32.mrb[0].mxu0
      %v4769 = vpop.f32.mrb[0].mxu0
      %v4770 = vadd.f32 0.0, %v4769
      %v4771 = vpop.f32.mrb[0].mxu0
      %4772 = vmatprep.mubr.bf16.mxu0 0
      %4773 = vmatmul.mubr.bf16.gmra.mrb[0].mxu0 %v4644
      %v4774 = vpop.f32.mrb[0].mxu0
      %v4775 = vadd.f32 0.0, %v4774
      %v4776 = vpop.f32.mrb[0].mxu0
      %v4777 = vpop.f32.mrb[0].mxu0
      %v4778 = vadd.f32 0.0, %v4777
      %v4779 = vpop.f32.mrb[0].mxu0
      %4780 = vmatprep.mubr.bf16.mxu0 0
      %4781 = vmatmul.mubr.bf16.gmra.mrb[0].mxu0 %v4646
      %v4782 = vpop.f32.mrb[0].mxu0
      %v4783 = vadd.f32 0.0, %v4782
      %v4784 = vpop.f32.mrb[0].mxu0
      %v4785 = vpop.f32.mrb[0].mxu0
      %v4786 = vadd.f32 0.0, %v4785
      %v4787 = vpop.f32.mrb[0].mxu0
      %4788 = vmatprep.mubr.bf16.mxu0 0
      %4789 = vmatmul.mubr.bf16.gmra.mrb[0].mxu0 %v4648
      %v4790 = vpop.f32.mrb[0].mxu0
      %v4791 = vadd.f32 0.0, %v4790
      %v4792 = vpop.f32.mrb[0].mxu0
      %v4793 = vpop.f32.mrb[0].mxu0
      %v4794 = vadd.f32 0.0, %v4793
      %v4795 = vpop.f32.mrb[0].mxu0
      %4796 = vmatprep.mubr.bf16.mxu0 0
      %4797 = vmatmul.mubr.bf16.gmra.mrb[0].mxu0 %v4650
      %v4798 = vpop.f32.mrb[0].mxu0
      %v4799 = vadd.f32 0.0, %v4798
      %v4800 = vpop.f32.mrb[0].mxu0
      %v4801 = vpop.f32.mrb[0].mxu0
      %v4802 = vadd.f32 0.0, %v4801
      %v4803 = vpop.f32.mrb[0].mxu0
      %4804 = vmatprep.mubr.bf16.mxu0 0
      %4805 = vmatmul.mubr.bf16.gmra.mrb[0].mxu0 %v4649
      %v4806 = vpop.f32.mrb[0].mxu0
      %v4807 = vadd.f32 0.0, %v4806
      %v4808 = vpop.f32.mrb[0].mxu0
      %v4809 = vpop.f32.mrb[0].mxu0
      %v4810 = vpop.f32.mrb[0].mxu0
      %4811 = vdwg.mxu0
      %v4812 = vadd.f32 %v4544, %v4743
      %v4813 = vadd.f32 %v4547, %v4746
      %v4814 = vadd.f32 %v4552, %v4751
      %v4815 = vadd.f32 %v4555, %v4754
      %v4816 = vadd.f32 %v4560, %v4759
      %v4817 = vadd.f32 %v4563, %v4762
      %v4818 = vadd.f32 %v4568, %v4767
      %v4819 = vadd.f32 %v4571, %v4770
      %v4820 = vadd.f32 %v4576, %v4775
      %v4821 = vadd.f32 %v4579, %v4778
      %v4822 = vadd.f32 %v4584, %v4783
      %v4823 = vadd.f32 %v4587, %v4786
      %v4824 = vadd.f32 %v4592, %v4791
      %v4825 = vadd.f32 %v4595, %v4794
      %v4826 = vadd.f32 %v4600, %v4799
      %v4827 = vadd.f32 %v4603, %v4802
      %v4828 = vadd.f32 %v4608, %v4807
      %v4829 = vld [vmem:[%s12] sm:$0x1]
      %v4831 = vlaneseq
      %v4832 = vshrl.u32 %v4831, 7
      %v4833 = vsub.s32 0, %v4832
      %v4834 = vrot.slane %v4829, %v4833
      %v4836 = vmul.f32 %v4812, %v4834
      %v4837 = vmul.f32 %v4813, %v4834
      %v4838 = vmul.f32 %v4814, %v4834
      %v4839 = vmul.f32 %v4815, %v4834
      %v4840 = vmul.f32 %v4816, %v4834
      %v4841 = vmul.f32 %v4817, %v4834
      %v4842 = vmul.f32 %v4818, %v4834
      %v4843 = vmul.f32 %v4819, %v4834
      %v4844 = vmul.f32 %v4820, %v4834
      %v4845 = vmul.f32 %v4821, %v4834
      %v4846 = vmul.f32 %v4822, %v4834
      %v4847 = vmul.f32 %v4823, %v4834
      %v4848 = vmul.f32 %v4824, %v4834
      %v4849 = vmul.f32 %v4825, %v4834
      %v4850 = vmul.f32 %v4826, %v4834
      %v4851 = vmul.f32 %v4827, %v4834
      %v4852 = vmul.f32 %v4828, %v4834
      %v4853 = vld [vmem:[%s13] sm:$0x1]
      %v4855 = vlaneseq
      %v4856 = vshrl.u32 %v4855, 7
      %v4857 = vsub.s32 0, %v4856
      %v4858 = vrot.slane %v4853, %v4857
      %v4860 = vadd.f32 %v4836, %v4858
      %v4861 = vadd.f32 %v4837, %v4858
      %v4862 = vadd.f32 %v4838, %v4858
      %v4863 = vadd.f32 %v4839, %v4858
      %v4864 = vadd.f32 %v4840, %v4858
      %v4865 = vadd.f32 %v4841, %v4858
      %v4866 = vadd.f32 %v4842, %v4858
      %v4867 = vadd.f32 %v4843, %v4858
      %v4868 = vadd.f32 %v4844, %v4858
      %v4869 = vadd.f32 %v4845, %v4858
      %v4870 = vadd.f32 %v4846, %v4858
      %v4871 = vadd.f32 %v4847, %v4858
      %v4872 = vadd.f32 %v4848, %v4858
      %v4873 = vadd.f32 %v4849, %v4858
      %v4874 = vadd.f32 %v4850, %v4858
      %v4875 = vadd.f32 %v4851, %v4858
      %v4876 = vadd.f32 %v4852, %v4858
      %v4877 = vmax.f32 %v4860, 0.0
      %v4878 = vmax.f32 %v4861, 0.0
      %v4879 = vmax.f32 %v4862, 0.0
      %v4880 = vmax.f32 %v4863, 0.0
      %v4881 = vmax.f32 %v4864, 0.0
      %v4882 = vmax.f32 %v4865, 0.0
      %v4883 = vmax.f32 %v4866, 0.0
      %v4884 = vmax.f32 %v4867, 0.0
      %v4885 = vmax.f32 %v4868, 0.0
      %v4886 = vmax.f32 %v4869, 0.0
      %v4887 = vmax.f32 %v4870, 0.0
      %v4888 = vmax.f32 %v4871, 0.0
      %v4889 = vmax.f32 %v4872, 0.0
      %v4890 = vmax.f32 %v4873, 0.0
      %v4891 = vmax.f32 %v4874, 0.0
      %v4892 = vmax.f32 %v4875, 0.0
      %v4893 = vmax.f32 %v4876, 0.0
      %4894 = vst [vmem:[%s469] sm:$0xff] %v4877
      %4895 = vst [vmem:[%s469 + $0x8] sm:$0xff] %v4878
      %4896 = vst [vmem:[%s469 + $0x10] sm:$0xff] %v4879
      %4897 = vst [vmem:[%s469 + $0x18] sm:$0xff] %v4880
      %4898 = vst [vmem:[%s469 + $0x1e] sm:$0xfc] %v4881
      %4899 = vst [vmem:[%s469 + $0x26] sm:$0xff] %v4882
      %4900 = vst [vmem:[%s469 + $0x2e] sm:$0xff] %v4883
      %4901 = vst [vmem:[%s469 + $0x36] sm:$0xff] %v4884
      %4902 = vst [vmem:[%s469 + $0x3e] sm:$0x3] %v4885
      %4903 = vst [vmem:[%s469 + $0x3c] sm:$0xf0] %v4885
      %4904 = vst [vmem:[%s469 + $0x44] sm:$0xff] %v4886
      %4905 = vst [vmem:[%s469 + $0x4c] sm:$0xff] %v4887
      %4906 = vst [vmem:[%s469 + $0x54] sm:$0xff] %v4888
      %4907 = vst [vmem:[%s469 + $0x5c] sm:$0xf] %v4889
      %4908 = vst [vmem:[%s469 + $0x5a] sm:$0xc0] %v4889
      %4909 = vst [vmem:[%s469 + $0x62] sm:$0xff] %v4890
      %4910 = vst [vmem:[%s469 + $0x6a] sm:$0xff] %v4891
      %4911 = vst [vmem:[%s469 + $0x72] sm:$0xff] %v4892
      %4912 = vst [vmem:[%s469 + $0x7a] sm:$0x3f] %v4893
      %s4913 = smul.u32 16, %s25
      %p4914 = scmp.lt.s32.totalorder %s4913, 63
      %s4915 = scalar_select %p4914, %s4913, 63
      %s4916 = smul.addr %s4915, 8
      %s4917 = scalar_lea.vmem %s14, %s4916
      // Predicated region
      $region77: #{decoder_block_forward.1} parent=75 // pred_check
        %p4918 = pneg %p342
      $region78: #{decoder_block_forward.1} parent=75 // pred_check_branch
        %4920 = sbr.rel (%p4918) target = $region80
      $region79: #{decoder_block_forward.1} parent=75 // pred_region
        %s4921 = smul.u32 16, %s25
      $region80: #{decoder_block_forward.1} parent=75 // pred_fallthru
        _
    $region76: #{decoder_block_forward.1} parent=5 // pred_fallthru
      _
    %p4922 = scmp.le.s32.totalorder 2, %s20
    // Predicated region
    $region81: #{decoder_block_forward.1} parent=5 // pred_check
      %p4923 = pneg %p4922
    $region82: #{decoder_block_forward.1} parent=5 // pred_check_branch
      %4925 = sbr.rel (%p4923) target = $region84
    $region83: #{decoder_block_forward.1} parent=5 // pred_region
      %s4926 = ssub.s32 %s20, 2
      // Predicated region
      $region85: #{decoder_block_forward.1} parent=83 // pred_check
        %p4927 = pneg %p348
      $region86: #{decoder_block_forward.1} parent=83 // pred_check_branch
        %4929 = sbr.rel (%p4927) target = $region88
      $region87: #{decoder_block_forward.1} parent=83 // pred_region
        %s4930 = smul.u32 16, %s26
        %p4931 = scmp.lt.s32.totalorder %s4930, 63
        %s4932 = scalar_select %p4931, %s4930, 63
        %s4933 = smul.addr %s4932, 8
        %s4934 = scalar_lea.vmem %s14, %s4933
      $region88: #{decoder_block_forward.1} parent=83 // pred_fallthru
        _
    $region84: #{decoder_block_forward.1} parent=5 // pred_fallthru
      _
  $region6: #{decoder_block_forward.1} parent=0 // loop_footer
    %s24 = sadd.s32 1, %s20
  $region7: #{decoder_block_forward.1} parent=0 // loop_footer_branch
    %19 = sbr.rel target = $region3
  $region8: #{decoder_block_forward.1} parent=0 // loop_exit
    _

</llo_original>
